<compile_context>
chip_gen: v5e
topology: v5e:2x2
jax: 0.10.0
libtpu: 0.0.40
codegen_flags: <defaults>
</compile_context>

<pallas_src>
import functools

import numpy as np
import jax
import jax.numpy as jnp
from jax.experimental import pallas as pl
from jax.experimental.pallas import tpu as pltpu

CLIP_SIZE = 224
CLIP_MEAN = (0.48145466, 0.4578275, 0.40821073)
CLIP_STD = (0.26862954, 0.26130258, 0.27577711)
# (x - mean) / std  ==  x * INV_STD + BIAS   (compile-time constants)
CLIP_INV_STD = tuple(1.0 / s for s in CLIP_STD)
CLIP_BIAS = tuple(-m / s for m, s in zip(CLIP_MEAN, CLIP_STD))

# float32 (default) keeps results within 5e-4 of the host reference.  Set to
# jnp.bfloat16 on v5e for ~3x MXU throughput on the resize matmuls (relax the
# verification tolerance to ~1e-2 if you do).
RESIZE_COMPUTE_DTYPE = jnp.float32

_MAX_BATCH_BLOCK = 8          # review guidance: B ~ 8 on v5e/v6e; VMEM caps it lower on v7x
_VMEM_BUDGET_FRACTION = 0.7   # leave headroom for compiler-internal scratch
_VMEM_SLACK = 4 << 20


def _vmem_capacity_bytes() -> int:
    try:
        return int(pltpu.get_tpu_info().vmem_capacity_bytes)
    except Exception:
        return 64 * 1024 * 1024   # conservative (v7x per-TC capacity)


def _pick_batch_block(n: int, cap: int) -> int:
    """Largest divisor of n that is <= cap; keep >= 2 grid steps when n >= 2."""
    cap = max(1, min(cap, n, _MAX_BATCH_BLOCK))
    if n >= 2:
        cap = min(cap, (n + 1) // 2)   # >= 2 parallel steps (v7x 2 TCs, pipelining)
    for cand in range(cap, 0, -1):
        if n % cand == 0:
            return cand
    return 1


# --------------------------------------------------------------------------
# Static resize-weight construction (host-side glue; mirrors torch's
# separable antialiased bicubic path, a = -0.5, align_corners=False)
# --------------------------------------------------------------------------
def _aa_bicubic_weights(in_size: int, out_size: int) -> np.ndarray:
    """(out_size, in_size) row-stochastic antialiased bicubic weights."""
    A = -0.5

    def cubic(t):
        t = np.abs(t)
        return np.where(
            t <= 1.0,
            ((A + 2.0) * t - (A + 3.0)) * t * t + 1.0,
            np.where(t < 2.0, (((t - 5.0) * t + 8.0) * t - 4.0) * A, 0.0),
        )

    scale = in_size / out_size
    support = 2.0 * scale if scale >= 1.0 else 2.0
    invscale = 1.0 / scale if scale >= 1.0 else 1.0

    w_mat = np.zeros((out_size, in_size), dtype=np.float64)
    for i in range(out_size):
        center = scale * (i + 0.5)
        xmin = max(int(center - support + 0.5), 0)
        xmax = min(int(center + support + 0.5), in_size)
        idx = np.arange(xmin, xmax, dtype=np.float64)
        w = cubic((idx - center + 0.5) * invscale)
        s = w.sum()
        if s != 0.0:
            w = w / s
        w_mat[i, xmin:xmax] = w
    return w_mat.astype(np.float32)


# --------------------------------------------------------------------------
# Pallas kernels
# --------------------------------------------------------------------------
def _resize_norm_kernel(x_ref, wwt_ref, wh_ref, o_ref, tmp_ref, *, b, c, h):
    # x_ref:   VMEM (B, C*H, W)      channel/row-merged image slabs
    # wwt_ref: VMEM (W, OUT)         width resize weights (transposed)
    # wh_ref:  VMEM (OUT, H)         height resize weights
    # o_ref:   VMEM (B, C, OUT, OUT)
    # tmp_ref: VMEM scratch (B, C*H, OUT) -- explicit staging of the width-pass
    #          intermediate so it never grows the vreg live range as B scales.
    wwt = wwt_ref[...]
    wh = wh_ref[...]
    # Width contraction first: one MXU-filling matmul (M = C*H) per image.
    for bi in range(b):
        tmp_ref[bi] = jnp.dot(
            x_ref[bi], wwt, preferred_element_type=jnp.float32
        ).astype(tmp_ref.dtype)
    # Height contraction + clamp + CLIP normalization (FMA, no divides).
    for bi in range(b):
        for ci in range(c):
            t = tmp_ref[bi, ci * h:(ci + 1) * h, :]                    # (H, OUT)
            y = jnp.dot(wh, t, preferred_element_type=jnp.float32)     # (OUT, OUT)
            y = jnp.clip(y, 0.0, 1.0)                                  # clamp_(0, 1)
            o_ref[bi, ci] = (y * CLIP_INV_STD[ci]
                             + CLIP_BIAS[ci]).astype(o_ref.dtype)


def _norm_only_kernel(x_ref, o_ref, *, b, c):
    # Path taken when H == 224 or W == 224 (no resize, no clamp in PyTorch).
    # x_ref / o_ref: VMEM (B, C, R, L) -- lane-dense (L == 128) view when possible.
    for bi in range(b):
        for ci in range(c):
            o_ref[bi, ci] = (x_ref[bi, ci] * CLIP_INV_STD[ci]
                             + CLIP_BIAS[ci]).astype(o_ref.dtype)


# --------------------------------------------------------------------------
# Wrapper
# --------------------------------------------------------------------------
def clip_preprocess(x: jax.Array) -> jax.Array:
    """x: float32 NCHW image batch in [0, 1]."""
    n, c, h, w = x.shape
    assert c == len(CLIP_MEAN), "Preprocessor expects 3-channel RGB input"
    do_resize = (h != CLIP_SIZE) and (w != CLIP_SIZE)

    vmem_cap = _vmem_capacity_bytes()
    budget = int(vmem_cap * _VMEM_BUDGET_FRACTION)

    if do_resize:
        out_hw = CLIP_SIZE
        cdt = RESIZE_COMPUTE_DTYPE
        isz = jnp.dtype(cdt).itemsize
        wh = jnp.asarray(_aa_bicubic_weights(h, out_hw), dtype=cdt)      # (OUT, H)
        wwt = jnp.asarray(_aa_bicubic_weights(w, out_hw).T, dtype=cdt)   # (W, OUT)
        # Merge (C, H) -> C*H in the wrapper (free contiguous reshape) so the
        # kernel's width matmul has a big, MXU-aligned M dimension.
        x3 = x.reshape(n, c * h, w).astype(cdt)

        # VMEM working set: in/out double-buffered per image, tmp scratch,
        # grid-invariant weights (DMA'd once, but two buffers allocated).
        per_img = (2 * c * h * w * isz               # input block  (x2 buffers)
                   + 2 * c * out_hw * out_hw * 4     # output block (x2 buffers)
                   + c * h * out_hw * isz)           # tmp scratch
        fixed = 2 * (w * out_hw + out_hw * h) * isz + _VMEM_SLACK
        b = _pick_batch_block(n, max(1, (budget - fixed) // per_img))
        vmem_limit = int(min(vmem_cap, max(b * per_img + fixed, 32 << 20)))

        kern = functools.partial(_resize_norm_kernel, b=b, c=c, h=h)
        return pl.pallas_call(
            kern,
            out_shape=jax.ShapeDtypeStruct((n, c, out_hw, out_hw), jnp.float32),
            grid=(n // b,),
            in_specs=[
                pl.BlockSpec((b, c * h, w), lambda i: (i, 0, 0)),   # image slabs
                pl.BlockSpec((w, out_hw), lambda i: (0, 0)),        # Ww^T (fetched once)
                pl.BlockSpec((out_hw, h), lambda i: (0, 0)),        # Wh   (fetched once)
            ],
            out_specs=pl.BlockSpec((b, c, out_hw, out_hw),
                                   lambda i: (i, 0, 0, 0)),
            scratch_shapes=[pltpu.VMEM((b, c * h, out_hw), cdt)],
            compiler_params=pltpu.CompilerParams(
                dimension_semantics=("parallel",),
                vmem_limit_bytes=vmem_limit),
        )(x3, wwt, wh)

    # ---- norm-only path (H == 224 or W == 224): pure FMA, HBM-roofline ----
    flat = h * w
    if flat % 128 == 0:
        # Lane-dense view: last dim exactly 128 -> unmasked full-vreg stores.
        r = flat // 128
        x_n = x.reshape(n, c, r, 128)
        blk_hw = (r, 128)
    else:
        x_n = x
        blk_hw = (h, w)

    per_img = 4 * c * flat * 4   # in + out, double-buffered, f32
    b = _pick_batch_block(n, max(1, (budget - _VMEM_SLACK) // per_img))
    vmem_limit = int(min(vmem_cap, max(b * per_img + _VMEM_SLACK, 32 << 20)))

    kern = functools.partial(_norm_only_kernel, b=b, c=c)
    out = pl.pallas_call(
        kern,
        out_shape=jax.ShapeDtypeStruct((n, c) + blk_hw, jnp.float32),
        grid=(n // b,),
        in_specs=[pl.BlockSpec((b, c) + blk_hw, lambda i: (i, 0, 0, 0))],
        out_specs=pl.BlockSpec((b, c) + blk_hw, lambda i: (i, 0, 0, 0)),
        compiler_params=pltpu.CompilerParams(
            dimension_semantics=("parallel",),
            vmem_limit_bytes=vmem_limit),
    )(x_n)
    return out.reshape(n, c, h, w)


if __name__ == "__main__":
    key = jax.random.PRNGKey(0)
    # Batch of 4 exercises batch-blocking (B=2 images per grid step, 2 parallel
    # steps); 3-channel 256x256 -> antialiased bicubic downsample + clamp +
    # normalize to the fixed 224x224 CLIP size.
    x = jax.random.uniform(key, (4, 3, 256, 256), dtype=jnp.float32)

    out = jax.block_until_ready(clip_preprocess(x))
    assert out.shape == (4, 3, CLIP_SIZE, CLIP_SIZE) and out.dtype == jnp.float32

    # Reference check (same separable weights, applied in f64 on host;
    # height-then-width, mathematically identical to the kernel's ordering).
    wh_np = _aa_bicubic_weights(256, CLIP_SIZE).astype(np.float64)       # (224, 256)
    wwt_np = _aa_bicubic_weights(256, CLIP_SIZE).T.astype(np.float64)    # (256, 224)
    x_np = np.asarray(x, dtype=np.float64)
    tmp = np.einsum('oh,nchw->ncow', wh_np, x_np)
    y = np.clip(np.einsum('ncow,wj->ncoj', tmp, wwt_np), 0.0, 1.0)
    ref = (y - np.asarray(CLIP_MEAN)[None, :, None, None]) \
        / np.asarray(CLIP_STD)[None, :, None, None]
    tol = 5e-4 if RESIZE_COMPUTE_DTYPE == jnp.float32 else 1e-2
    np.testing.assert_allclose(np.asarray(out), ref, atol=tol, rtol=tol)

    # Range sanity: values must lie inside ((0 - mean)/std, (1 - mean)/std).
    lo = (0.0 - np.asarray(CLIP_MEAN)) / np.asarray(CLIP_STD)
    hi = (1.0 - np.asarray(CLIP_MEAN)) / np.asarray(CLIP_STD)
    o = np.asarray(out)
    assert np.all(o >= lo[None, :, None, None] - 1e-3)
    assert np.all(o <= hi[None, :, None, None] + 1e-3)

    # Norm-only path (one spatial dim already 224 -> no resize, no clamp).
    x224 = jax.random.uniform(jax.random.PRNGKey(1), (2, 3, 224, 224),
                              dtype=jnp.float32)
    out224 = jax.block_until_ready(clip_preprocess(x224))
    ref224 = (np.asarray(x224)
              - np.asarray(CLIP_MEAN, np.float32)[None, :, None, None]) \
        / np.asarray(CLIP_STD, np.float32)[None, :, None, None]
    np.testing.assert_allclose(np.asarray(out224), ref224, atol=1e-5, rtol=1e-5)

    print("KERNEL_OK")
</pallas_src>

<mosaic_0001>
module attributes {stable_mosaic.version = 11 : i64} {
  func.func @_resize_norm_kernel(%arg0: i32, %arg1: memref<2x768x256xf32, #tpu.memory_space<vmem>>, %arg2: memref<256x224xf32, #tpu.memory_space<vmem>>, %arg3: memref<224x256xf32, #tpu.memory_space<vmem>>, %arg4: memref<2x3x224x224xf32, #tpu.memory_space<vmem>>, %arg5: memref<2x768x224xf32, #tpu.memory_space<vmem>>) attributes {dimension_semantics = [#tpu.dimension_semantics<parallel>], iteration_bounds = array<i64: 2>, scalar_prefetch = 0 : i64, scratch_operands = 1 : i64, tpu.core_type = #tpu.core_type<tc>, window_params = [{transform_indices = @transform_0, window_bounds = array<i64: 2, 768, 256>}, {pipeline_mode = #tpu.pipeline_mode<synchronous>, transform_indices = @transform_1, window_bounds = array<i64: 256, 224>}, {pipeline_mode = #tpu.pipeline_mode<synchronous>, transform_indices = @transform_2, window_bounds = array<i64: 224, 256>}, {transform_indices = @transform_3, window_bounds = array<i64: 2, 3, 224, 224>}]} {
    %c0 = arith.constant 0 : index
    %c0_0 = arith.constant 0 : index
    %0 = vector.load %arg2[%c0, %c0_0] : memref<256x224xf32, #tpu.memory_space<vmem>>, vector<256x224xf32>
    %c0_1 = arith.constant 0 : index
    %c0_2 = arith.constant 0 : index
    %1 = vector.load %arg3[%c0_1, %c0_2] : memref<224x256xf32, #tpu.memory_space<vmem>>, vector<224x256xf32>
    %c0_3 = arith.constant 0 : index
    %c0_4 = arith.constant 0 : index
    %c0_5 = arith.constant 0 : index
    %2 = vector.load %arg1[%c0_3, %c0_4, %c0_5] : memref<2x768x256xf32, #tpu.memory_space<vmem>>, vector<1x768x256xf32>
    %3 = vector.shape_cast %2 : vector<1x768x256xf32> to vector<768x256xf32>
    %cst = arith.constant dense<0.000000e+00> : vector<768x224xf32>
    %4 = tpu.matmul %3, %0, %cst {dimension_numbers = #tpu.dot_dimension_numbers<[1], [0], [0], [1], [0, 0, 1, 1], [], []>} : vector<768x256xf32>, vector<256x224xf32>, vector<768x224xf32> -> vector<768x224xf32>
    %c0_6 = arith.constant 0 : index
    %c0_7 = arith.constant 0 : index
    %c0_8 = arith.constant 0 : index
    %5 = vector.load %arg5[%c0_6, %c0_7, %c0_8] : memref<2x768x224xf32, #tpu.memory_space<vmem>>, vector<1x768x224xf32>
    %6 = vector.shape_cast %5 : vector<1x768x224xf32> to vector<768x224xf32>
    %7 = vector.shape_cast %4 : vector<768x224xf32> to vector<1x768x224xf32>
    tpu.vector_store %arg5[%c0_6, %c0_7, %c0_8], %7 {strides = array<i32>} : memref<2x768x224xf32, #tpu.memory_space<vmem>>, vector<1x768x224xf32>,
    %c1 = arith.constant 1 : index
    %c0_9 = arith.constant 0 : index
    %c0_10 = arith.constant 0 : index
    %8 = vector.load %arg1[%c1, %c0_9, %c0_10] : memref<2x768x256xf32, #tpu.memory_space<vmem>>, vector<1x768x256xf32>
    %9 = vector.shape_cast %8 : vector<1x768x256xf32> to vector<768x256xf32>
    %cst_11 = arith.constant dense<0.000000e+00> : vector<768x224xf32>
    %10 = tpu.matmul %9, %0, %cst_11 {dimension_numbers = #tpu.dot_dimension_numbers<[1], [0], [0], [1], [0, 0, 1, 1], [], []>} : vector<768x256xf32>, vector<256x224xf32>, vector<768x224xf32> -> vector<768x224xf32>
    %c1_12 = arith.constant 1 : index
    %c0_13 = arith.constant 0 : index
    %c0_14 = arith.constant 0 : index
    %11 = vector.load %arg5[%c1_12, %c0_13, %c0_14] : memref<2x768x224xf32, #tpu.memory_space<vmem>>, vector<1x768x224xf32>
    %12 = vector.shape_cast %11 : vector<1x768x224xf32> to vector<768x224xf32>
    %13 = vector.shape_cast %10 : vector<768x224xf32> to vector<1x768x224xf32>
    tpu.vector_store %arg5[%c1_12, %c0_13, %c0_14], %13 {strides = array<i32>} : memref<2x768x224xf32, #tpu.memory_space<vmem>>, vector<1x768x224xf32>,
    %c0_15 = arith.constant 0 : index
    %c0_16 = arith.constant 0 : index
    %c0_17 = arith.constant 0 : index
    %14 = vector.load %arg5[%c0_15, %c0_16, %c0_17] : memref<2x768x224xf32, #tpu.memory_space<vmem>>, vector<1x256x224xf32>
    %15 = vector.shape_cast %14 : vector<1x256x224xf32> to vector<256x224xf32>
    %cst_18 = arith.constant dense<0.000000e+00> : vector<224x224xf32>
    %16 = tpu.matmul %1, %15, %cst_18 {dimension_numbers = #tpu.dot_dimension_numbers<[1], [0], [0], [1], [0, 0, 1, 1], [], []>} : vector<224x256xf32>, vector<256x224xf32>, vector<224x224xf32> -> vector<224x224xf32>
    %cst_19 = arith.constant 0.000000e+00 : f32
    %cst_20 = arith.constant 1.000000e+00 : f32
    %17 = vector.broadcast %cst_19 : f32 to vector<224x224xf32>
    %18 = arith.maximumf %17, %16 : vector<224x224xf32>
    %19 = vector.broadcast %cst_20 : f32 to vector<224x224xf32>
    %20 = arith.minimumf %19, %18 : vector<224x224xf32>
    %cst_21 = arith.constant 3.72259879 : f32
    %21 = vector.broadcast %cst_21 : f32 to vector<224x224xf32>
    %22 = arith.mulf %20, %21 : vector<224x224xf32>
    %cst_22 = arith.constant -1.79226255 : f32
    %23 = vector.broadcast %cst_22 : f32 to vector<224x224xf32>
    %24 = arith.addf %22, %23 : vector<224x224xf32>
    %c0_23 = arith.constant 0 : index
    %c0_24 = arith.constant 0 : index
    %c0_25 = arith.constant 0 : index
    %c0_26 = arith.constant 0 : index
    %25 = vector.load %arg4[%c0_23, %c0_24, %c0_25, %c0_26] : memref<2x3x224x224xf32, #tpu.memory_space<vmem>>, vector<1x1x224x224xf32>
    %26 = vector.shape_cast %25 : vector<1x1x224x224xf32> to vector<224x224xf32>
    %27 = vector.shape_cast %24 : vector<224x224xf32> to vector<1x1x224x224xf32>
    tpu.vector_store %arg4[%c0_23, %c0_24, %c0_25, %c0_26], %27 {strides = array<i32>} : memref<2x3x224x224xf32, #tpu.memory_space<vmem>>, vector<1x1x224x224xf32>,
    %c0_27 = arith.constant 0 : index
    %c256 = arith.constant 256 : index
    %c0_28 = arith.constant 0 : index
    %28 = vector.load %arg5[%c0_27, %c256, %c0_28] : memref<2x768x224xf32, #tpu.memory_space<vmem>>, vector<1x256x224xf32>
    %29 = vector.shape_cast %28 : vector<1x256x224xf32> to vector<256x224xf32>
    %cst_29 = arith.constant dense<0.000000e+00> : vector<224x224xf32>
    %30 = tpu.matmul %1, %29, %cst_29 {dimension_numbers = #tpu.dot_dimension_numbers<[1], [0], [0], [1], [0, 0, 1, 1], [], []>} : vector<224x256xf32>, vector<256x224xf32>, vector<224x224xf32> -> vector<224x224xf32>
    %cst_30 = arith.constant 0.000000e+00 : f32
    %cst_31 = arith.constant 1.000000e+00 : f32
    %31 = vector.broadcast %cst_30 : f32 to vector<224x224xf32>
    %32 = arith.maximumf %31, %30 : vector<224x224xf32>
    %33 = vector.broadcast %cst_31 : f32 to vector<224x224xf32>
    %34 = arith.minimumf %33, %32 : vector<224x224xf32>
    %cst_32 = arith.constant 3.82698107 : f32
    %35 = vector.broadcast %cst_32 : f32 to vector<224x224xf32>
    %36 = arith.mulf %34, %35 : vector<224x224xf32>
    %cst_33 = arith.constant -1.75209713 : f32
    %37 = vector.broadcast %cst_33 : f32 to vector<224x224xf32>
    %38 = arith.addf %36, %37 : vector<224x224xf32>
    %c0_34 = arith.constant 0 : index
    %c1_35 = arith.constant 1 : index
    %c0_36 = arith.constant 0 : index
    %c0_37 = arith.constant 0 : index
    %39 = vector.load %arg4[%c0_34, %c1_35, %c0_36, %c0_37] : memref<2x3x224x224xf32, #tpu.memory_space<vmem>>, vector<1x1x224x224xf32>
    %40 = vector.shape_cast %39 : vector<1x1x224x224xf32> to vector<224x224xf32>
    %41 = vector.shape_cast %38 : vector<224x224xf32> to vector<1x1x224x224xf32>
    tpu.vector_store %arg4[%c0_34, %c1_35, %c0_36, %c0_37], %41 {strides = array<i32>} : memref<2x3x224x224xf32, #tpu.memory_space<vmem>>, vector<1x1x224x224xf32>,
    %c0_38 = arith.constant 0 : index
    %c512 = arith.constant 512 : index
    %c0_39 = arith.constant 0 : index
    %42 = vector.load %arg5[%c0_38, %c512, %c0_39] : memref<2x768x224xf32, #tpu.memory_space<vmem>>, vector<1x256x224xf32>
    %43 = vector.shape_cast %42 : vector<1x256x224xf32> to vector<256x224xf32>
    %cst_40 = arith.constant dense<0.000000e+00> : vector<224x224xf32>
    %44 = tpu.matmul %1, %43, %cst_40 {dimension_numbers = #tpu.dot_dimension_numbers<[1], [0], [0], [1], [0, 0, 1, 1], [], []>} : vector<224x256xf32>, vector<256x224xf32>, vector<224x224xf32> -> vector<224x224xf32>
    %cst_41 = arith.constant 0.000000e+00 : f32
    %cst_42 = arith.constant 1.000000e+00 : f32
    %45 = vector.broadcast %cst_41 : f32 to vector<224x224xf32>
    %46 = arith.maximumf %45, %44 : vector<224x224xf32>
    %47 = vector.broadcast %cst_42 : f32 to vector<224x224xf32>
    %48 = arith.minimumf %47, %46 : vector<224x224xf32>
    %cst_43 = arith.constant 3.62611675 : f32
    %49 = vector.broadcast %cst_43 : f32 to vector<224x224xf32>
    %50 = arith.mulf %48, %49 : vector<224x224xf32>
    %cst_44 = arith.constant -1.48021972 : f32
    %51 = vector.broadcast %cst_44 : f32 to vector<224x224xf32>
    %52 = arith.addf %50, %51 : vector<224x224xf32>
    %c0_45 = arith.constant 0 : index
    %c2 = arith.constant 2 : index
    %c0_46 = arith.constant 0 : index
    %c0_47 = arith.constant 0 : index
    %53 = vector.load %arg4[%c0_45, %c2, %c0_46, %c0_47] : memref<2x3x224x224xf32, #tpu.memory_space<vmem>>, vector<1x1x224x224xf32>
    %54 = vector.shape_cast %53 : vector<1x1x224x224xf32> to vector<224x224xf32>
    %55 = vector.shape_cast %52 : vector<224x224xf32> to vector<1x1x224x224xf32>
    tpu.vector_store %arg4[%c0_45, %c2, %c0_46, %c0_47], %55 {strides = array<i32>} : memref<2x3x224x224xf32, #tpu.memory_space<vmem>>, vector<1x1x224x224xf32>,
    %c1_48 = arith.constant 1 : index
    %c0_49 = arith.constant 0 : index
    %c0_50 = arith.constant 0 : index
    %56 = vector.load %arg5[%c1_48, %c0_49, %c0_50] : memref<2x768x224xf32, #tpu.memory_space<vmem>>, vector<1x256x224xf32>
    %57 = vector.shape_cast %56 : vector<1x256x224xf32> to vector<256x224xf32>
    %cst_51 = arith.constant dense<0.000000e+00> : vector<224x224xf32>
    %58 = tpu.matmul %1, %57, %cst_51 {dimension_numbers = #tpu.dot_dimension_numbers<[1], [0], [0], [1], [0, 0, 1, 1], [], []>} : vector<224x256xf32>, vector<256x224xf32>, vector<224x224xf32> -> vector<224x224xf32>
    %cst_52 = arith.constant 0.000000e+00 : f32
    %cst_53 = arith.constant 1.000000e+00 : f32
    %59 = vector.broadcast %cst_52 : f32 to vector<224x224xf32>
    %60 = arith.maximumf %59, %58 : vector<224x224xf32>
    %61 = vector.broadcast %cst_53 : f32 to vector<224x224xf32>
    %62 = arith.minimumf %61, %60 : vector<224x224xf32>
    %cst_54 = arith.constant 3.72259879 : f32
    %63 = vector.broadcast %cst_54 : f32 to vector<224x224xf32>
    %64 = arith.mulf %62, %63 : vector<224x224xf32>
    %cst_55 = arith.constant -1.79226255 : f32
    %65 = vector.broadcast %cst_55 : f32 to vector<224x224xf32>
    %66 = arith.addf %64, %65 : vector<224x224xf32>
    %c1_56 = arith.constant 1 : index
    %c0_57 = arith.constant 0 : index
    %c0_58 = arith.constant 0 : index
    %c0_59 = arith.constant 0 : index
    %67 = vector.load %arg4[%c1_56, %c0_57, %c0_58, %c0_59] : memref<2x3x224x224xf32, #tpu.memory_space<vmem>>, vector<1x1x224x224xf32>
    %68 = vector.shape_cast %67 : vector<1x1x224x224xf32> to vector<224x224xf32>
    %69 = vector.shape_cast %66 : vector<224x224xf32> to vector<1x1x224x224xf32>
    tpu.vector_store %arg4[%c1_56, %c0_57, %c0_58, %c0_59], %69 {strides = array<i32>} : memref<2x3x224x224xf32, #tpu.memory_space<vmem>>, vector<1x1x224x224xf32>,
    %c1_60 = arith.constant 1 : index
    %c256_61 = arith.constant 256 : index
    %c0_62 = arith.constant 0 : index
    %70 = vector.load %arg5[%c1_60, %c256_61, %c0_62] : memref<2x768x224xf32, #tpu.memory_space<vmem>>, vector<1x256x224xf32>
    %71 = vector.shape_cast %70 : vector<1x256x224xf32> to vector<256x224xf32>
    %cst_63 = arith.constant dense<0.000000e+00> : vector<224x224xf32>
    %72 = tpu.matmul %1, %71, %cst_63 {dimension_numbers = #tpu.dot_dimension_numbers<[1], [0], [0], [1], [0, 0, 1, 1], [], []>} : vector<224x256xf32>, vector<256x224xf32>, vector<224x224xf32> -> vector<224x224xf32>
    %cst_64 = arith.constant 0.000000e+00 : f32
    %cst_65 = arith.constant 1.000000e+00 : f32
    %73 = vector.broadcast %cst_64 : f32 to vector<224x224xf32>
    %74 = arith.maximumf %73, %72 : vector<224x224xf32>
    %75 = vector.broadcast %cst_65 : f32 to vector<224x224xf32>
    %76 = arith.minimumf %75, %74 : vector<224x224xf32>
    %cst_66 = arith.constant 3.82698107 : f32
    %77 = vector.broadcast %cst_66 : f32 to vector<224x224xf32>
    %78 = arith.mulf %76, %77 : vector<224x224xf32>
    %cst_67 = arith.constant -1.75209713 : f32
    %79 = vector.broadcast %cst_67 : f32 to vector<224x224xf32>
    %80 = arith.addf %78, %79 : vector<224x224xf32>
    %c1_68 = arith.constant 1 : index
    %c1_69 = arith.constant 1 : index
    %c0_70 = arith.constant 0 : index
    %c0_71 = arith.constant 0 : index
    %81 = vector.load %arg4[%c1_68, %c1_69, %c0_70, %c0_71] : memref<2x3x224x224xf32, #tpu.memory_space<vmem>>, vector<1x1x224x224xf32>
    %82 = vector.shape_cast %81 : vector<1x1x224x224xf32> to vector<224x224xf32>
    %83 = vector.shape_cast %80 : vector<224x224xf32> to vector<1x1x224x224xf32>
    tpu.vector_store %arg4[%c1_68, %c1_69, %c0_70, %c0_71], %83 {strides = array<i32>} : memref<2x3x224x224xf32, #tpu.memory_space<vmem>>, vector<1x1x224x224xf32>,
    %c1_72 = arith.constant 1 : index
    %c512_73 = arith.constant 512 : index
    %c0_74 = arith.constant 0 : index
    %84 = vector.load %arg5[%c1_72, %c512_73, %c0_74] : memref<2x768x224xf32, #tpu.memory_space<vmem>>, vector<1x256x224xf32>
    %85 = vector.shape_cast %84 : vector<1x256x224xf32> to vector<256x224xf32>
    %cst_75 = arith.constant dense<0.000000e+00> : vector<224x224xf32>
    %86 = tpu.matmul %1, %85, %cst_75 {dimension_numbers = #tpu.dot_dimension_numbers<[1], [0], [0], [1], [0, 0, 1, 1], [], []>} : vector<224x256xf32>, vector<256x224xf32>, vector<224x224xf32> -> vector<224x224xf32>
    %cst_76 = arith.constant 0.000000e+00 : f32
    %cst_77 = arith.constant 1.000000e+00 : f32
    %87 = vector.broadcast %cst_76 : f32 to vector<224x224xf32>
    %88 = arith.maximumf %87, %86 : vector<224x224xf32>
    %89 = vector.broadcast %cst_77 : f32 to vector<224x224xf32>
    %90 = arith.minimumf %89, %88 : vector<224x224xf32>
    %cst_78 = arith.constant 3.62611675 : f32
    %91 = vector.broadcast %cst_78 : f32 to vector<224x224xf32>
    %92 = arith.mulf %90, %91 : vector<224x224xf32>
    %cst_79 = arith.constant -1.48021972 : f32
    %93 = vector.broadcast %cst_79 : f32 to vector<224x224xf32>
    %94 = arith.addf %92, %93 : vector<224x224xf32>
    %c1_80 = arith.constant 1 : index
    %c2_81 = arith.constant 2 : index
    %c0_82 = arith.constant 0 : index
    %c0_83 = arith.constant 0 : index
    %95 = vector.load %arg4[%c1_80, %c2_81, %c0_82, %c0_83] : memref<2x3x224x224xf32, #tpu.memory_space<vmem>>, vector<1x1x224x224xf32>
    %96 = vector.shape_cast %95 : vector<1x1x224x224xf32> to vector<224x224xf32>
    %97 = vector.shape_cast %94 : vector<224x224xf32> to vector<1x1x224x224xf32>
    tpu.vector_store %arg4[%c1_80, %c2_81, %c0_82, %c0_83], %97 {strides = array<i32>} : memref<2x3x224x224xf32, #tpu.memory_space<vmem>>, vector<1x1x224x224xf32>,
    return
  }
  func.func @transform_0(%arg0: i32) -> (i32, i32, i32) {
    %c0_i32 = arith.constant 0 : i32
    %c0_i32_0 = arith.constant 0 : i32
    %c0_i32_1 = arith.constant 0 : i32
    return %arg0, %c0_i32, %c0_i32_0 : i32, i32, i32
  }
  func.func @transform_1(%arg0: i32) -> (i32, i32) {
    %c0_i32 = arith.constant 0 : i32
    %c0_i32_0 = arith.constant 0 : i32
    %c0_i32_1 = arith.constant 0 : i32
    return %c0_i32, %c0_i32_0 : i32, i32
  }
  func.func @transform_2(%arg0: i32) -> (i32, i32) {
    %c0_i32 = arith.constant 0 : i32
    %c0_i32_0 = arith.constant 0 : i32
    %c0_i32_1 = arith.constant 0 : i32
    return %c0_i32, %c0_i32_0 : i32, i32
  }
  func.func @transform_3(%arg0: i32) -> (i32, i32, i32, i32) {
    %c0_i32 = arith.constant 0 : i32
    %c0_i32_0 = arith.constant 0 : i32
    %c0_i32_1 = arith.constant 0 : i32
    %c0_i32_2 = arith.constant 0 : i32
    return %arg0, %c0_i32, %c0_i32_0, %c0_i32_1 : i32, i32, i32, i32
  }
}

</mosaic_0001>

<llo_original>
// kernel: tpu_custom_call.1
$region0: #{tpu_custom_call.1}
  #allocation0 [shape = 'u32[]', space=smem, size = 0x4, offset = 0x4, fixed_abs, tag = 'smem constant byte address 0x4 - core index']
  #allocation1 [shape = 'u32[72,128]{1,0:T(1,128)}', space=vmem, size = 0x9000, scoped, tag = 'internal scratch']
  #allocation2 [shape = 'f32[2,768,224]{2,1,0:T(8,128)}', space=vmem, size = 0x180000, scoped, tag = 'scratch operand']
  %s0 = inlined_call_operand.hbm [shape: f32[4,768,256], index: 0, kind: input, shape index: {}]
  %s1 = inlined_call_operand.vmem [shape: f32[256,224], index: 1, kind: input, shape index: {}]
  %s2 = inlined_call_operand.hbm [shape: f32[224,256], index: 2, kind: input, shape index: {}]
  %s3 = inlined_call_operand.hbm [shape: f32[4,3,224,224], index: 3, kind: output, shape index: {}]
  %s4 = sld [smem:[#allocation0]]
  $region53: #{tpu_custom_call.1} parent=0
    _
  %s6 = ssub.s32 1, %s4
  %s7 = scalar_select 0, %s6, %s4
  $region1: #{tpu_custom_call.1} parent=0
    #allocation3 [shape = 'u8[3145728]{0}', space=vmem, size = 0x300000, scoped, tag = 'input window, operand 0']
    #allocation4 [shape = 's32[2]{0}', space=sflag, size = 0x8, scoped, tag = 'scoped memory for tpu_custom_call.1']
    #allocation5 [shape = 's32[2]{0}', space=sflag, size = 0x8, scoped, tag = 'scoped memory for tpu_custom_call.1']
    #allocation6 [shape = 'u8[229376]{0}', space=vmem, size = 0x38000, scoped, tag = 'input window, operand 2, single buffered']
    #allocation7 [shape = 's32[1]{0}', space=sflag, size = 0x4, scoped, tag = 'scoped memory for tpu_custom_call.1']
    #allocation8 [shape = 'u8[2752512]{0}', space=vmem, size = 0x2a0000, scoped, tag = 'output window, operand 0']
    %8 = vsyncpa [#allocation4], 0
    %s9 = scalar_lea.sflag [#allocation4], 1
    %10 = vsyncpa %s9, 0
    %11 = vsyncpa [#allocation7], 0
    %12 = vsyncpa [#allocation5], 0
    %s13 = scalar_lea.sflag [#allocation5], 1
    %14 = vsyncpa %s13, 0
    loop: start=0, step=1, limit=4
    $region2: #{tpu_custom_call.1} parent=1 // loop_pre_header
      _
    $region3: #{tpu_custom_call.1} parent=1 // loop_header
      %s16 = sphi 0, %s20
      %p17 = scmp.ge.s32.totalorder %s16, 4
      %s26 = sphi 0, %s28
      %s29 = sphi 0, %s26
      %s30 = sphi 0, %s29
      %s46 = sphi 0, %s30
      %s50 = sphi 0, %s50
      %s52 = sphi 0, %s50
      %s53 = sphi 0, %s52
      %s67 = sphi 0, %s53
      %s71 = sphi 0, %s71
      %s73 = sphi 0, %s71
      %s74 = sphi 0, %s73
      %s88 = sphi 0, %s74
      %s94 = sphi 0, %s96
      %s97 = sphi 0, %s94
      %s98 = sphi 0, %s97
      %s114 = sphi 0, %s98
    $region4: #{tpu_custom_call.1} parent=1 // loop_header_branch
      %19 = sbr.rel (%p17) target = $region8
    $region5: #{tpu_custom_call.1} parent=1 // loop_body
      %s21 = ssub.s32 %s16, 1
      %s22 = ssub.s32 %s16, 2
      %s23 = sadd.s32 %s16, 1
      %s24 = ssub.s32 %s16, %s23
      %p25 = scmp.eq.s32.totalorder %s24, 0
      %s27 = sadd.s32 %s26, 1
      %s28 = scalar_select %p25, %s26, %s27
      %p31 = pneg %p25
      %p32 = scmp.eq.s32.totalorder %s16, 1
      %p33 = por %p31, %p32
      %p34 = scmp.ne.s32.totalorder %s26, %s29
      %p35 = scmp.eq.s32.totalorder %s16, 0
      %p36 = por %p34, %p35
      %p37 = scmp.ne.s32.totalorder %s26, %s29
      %p38 = scmp.eq.s32.totalorder %s21, 1
      %p39 = por %p37, %p38
      %p40 = scmp.ne.s32.totalorder %s29, %s30
      %p41 = scmp.eq.s32.totalorder %s21, 0
      %p42 = por %p40, %p41
      %p43 = scmp.ne.s32.totalorder %s29, %s30
      %p44 = scmp.eq.s32.totalorder %s22, 1
      %p45 = por %p43, %p44
      %p47 = scmp.ne.s32.totalorder %s30, %s46
      %p48 = scmp.eq.s32.totalorder %s22, 0
      %p49 = por %p47, %p48
      %s51 = sadd.s32 %s50, 1
      %p54 = scmp.eq.s32.totalorder %s16, 1
      %p55 = scmp.ne.s32.totalorder %s50, %s52
      %p56 = scmp.eq.s32.totalorder %s16, 0
      %p57 = por %p55, %p56
      %p58 = scmp.ne.s32.totalorder %s50, %s52
      %p59 = scmp.eq.s32.totalorder %s21, 1
      %p60 = por %p58, %p59
      %p61 = scmp.ne.s32.totalorder %s52, %s53
      %p62 = scmp.eq.s32.totalorder %s21, 0
      %p63 = por %p61, %p62
      %p64 = scmp.ne.s32.totalorder %s52, %s53
      %p65 = scmp.eq.s32.totalorder %s22, 1
      %p66 = por %p64, %p65
      %p68 = scmp.ne.s32.totalorder %s53, %s67
      %p69 = scmp.eq.s32.totalorder %s22, 0
      %p70 = por %p68, %p69
      %s72 = sadd.s32 %s71, 1
      %p75 = scmp.eq.s32.totalorder %s16, 1
      %p76 = scmp.ne.s32.totalorder %s71, %s73
      %p77 = scmp.eq.s32.totalorder %s16, 0
      %p78 = por %p76, %p77
      %p79 = scmp.ne.s32.totalorder %s71, %s73
      %p80 = scmp.eq.s32.totalorder %s21, 1
      %p81 = por %p79, %p80
      %p82 = scmp.ne.s32.totalorder %s73, %s74
      %p83 = scmp.eq.s32.totalorder %s21, 0
      %p84 = por %p82, %p83
      %p85 = scmp.ne.s32.totalorder %s73, %s74
      %p86 = scmp.eq.s32.totalorder %s22, 1
      %p87 = por %p85, %p86
      %p89 = scmp.ne.s32.totalorder %s74, %s88
      %p90 = scmp.eq.s32.totalorder %s22, 0
      %p91 = por %p89, %p90
      %s92 = ssub.s32 %s16, %s23
      %p93 = scmp.eq.s32.totalorder %s92, 0
      %s95 = sadd.s32 %s94, 1
      %s96 = scalar_select %p93, %s94, %s95
      %p99 = pneg %p93
      %p100 = scmp.eq.s32.totalorder %s16, 1
      %p101 = por %p99, %p100
      %p102 = scmp.ne.s32.totalorder %s94, %s97
      %p103 = scmp.eq.s32.totalorder %s16, 0
      %p104 = por %p102, %p103
      %p105 = scmp.ne.s32.totalorder %s94, %s97
      %p106 = scmp.eq.s32.totalorder %s21, 1
      %p107 = por %p105, %p106
      %p108 = scmp.ne.s32.totalorder %s97, %s98
      %p109 = scmp.eq.s32.totalorder %s21, 0
      %p110 = por %p108, %p109
      %p111 = scmp.ne.s32.totalorder %s97, %s98
      %p112 = scmp.eq.s32.totalorder %s22, 1
      %p113 = por %p111, %p112
      %p115 = scmp.ne.s32.totalorder %s98, %s114
      %p116 = scmp.eq.s32.totalorder %s22, 0
      %p117 = por %p115, %p116
      %p118 = scmp.le.s32.totalorder 1, %s16
      %p119 = scmp.lt.s32.totalorder %s16, 3
      %p120 = pnand %p118, %p119
      %p121 = pneg %p120
      // Predicated region
      $region9: #{tpu_custom_call.1} parent=5 // pred_check
        _
      $region10: #{tpu_custom_call.1} parent=5 // pred_check_branch
        %123 = sbr.rel (%p120) target = $region12
      $region11: #{tpu_custom_call.1} parent=5 // pred_region
        %s124 = ssub.s32 %s16, 1
        // Predicated region
        $region13: #{tpu_custom_call.1} parent=11 // pred_check
          %p125 = pneg %p63
        $region14: #{tpu_custom_call.1} parent=11 // pred_check_branch
          %127 = sbr.rel (%p125) target = $region16
        $region15: #{tpu_custom_call.1} parent=11 // pred_region
          _
        $region16: #{tpu_custom_call.1} parent=11 // pred_fallthru
          _
        // Predicated region
        $region17: #{tpu_custom_call.1} parent=11 // pred_check
          %p128 = pneg %p84
        $region18: #{tpu_custom_call.1} parent=11 // pred_check_branch
          %130 = sbr.rel (%p128) target = $region20
        $region19: #{tpu_custom_call.1} parent=11 // pred_region
          %132 = vsyncadd [#allocation7], 0
          %s133 = sshll.u32 %s2, 4
          %s134 = int_to_ptr.hbm [resolvable:$true] %s133
          %s135 = sshll.u32 [#allocation6], 4
          %s136 = int_to_ptr.vmem [resolvable:$true] %s135
          %141 = dma.hbm_to_vmem [thread:$0]  %s134, 7168, %s136, [#allocation7], 256, 256, 16
        $region20: #{tpu_custom_call.1} parent=11 // pred_fallthru
          _
      $region12: #{tpu_custom_call.1} parent=5 // pred_fallthru
        _
      %p142 = scmp.lt.s32.totalorder %s16, 2
      // Predicated region
      $region21: #{tpu_custom_call.1} parent=5 // pred_check
        %p143 = pneg %p142
      $region22: #{tpu_custom_call.1} parent=5 // pred_check_branch
        %145 = sbr.rel (%p143) target = $region24
      $region23: #{tpu_custom_call.1} parent=5 // pred_region
        // Predicated region
        $region25: #{tpu_custom_call.1} parent=23 // pred_check
          %p146 = pneg %p36
        $region26: #{tpu_custom_call.1} parent=23 // pred_check_branch
          %148 = sbr.rel (%p146) target = $region28
        $region27: #{tpu_custom_call.1} parent=23 // pred_region
          %s149 = sand.u32 %s26, 1
          %s150 = scalar_lea.sflag [#allocation4], %s149
          %s151 = sand.u32 %s26, 1
          %s152 = smul.addr %s151, 3072
          %s153 = scalar_lea.vmem [#allocation3], %s152
          %s154 = smul.u32 2, %s16
          %156 = vsyncadd %s150, 0
          %s157 = smul.addr %s154, 192
          %s158 = smul.addr %s157, 8
          %s159 = scalar_lea.hbm %s0, %s158
          %s160 = sshll.u32 %s159, 4
          %s161 = int_to_ptr.hbm [resolvable:$true] %s160
          %s162 = sshll.u32 %s153, 4
          %s163 = int_to_ptr.vmem [resolvable:$true] %s162
          %168 = dma.hbm_to_vmem [thread:$0]  %s161, 49152, %s163, %s150, 256, 256, 16
        $region28: #{tpu_custom_call.1} parent=23 // pred_fallthru
          _
      $region24: #{tpu_custom_call.1} parent=5 // pred_fallthru
        _
      %p169 = scmp.le.s32.totalorder 1, %s16
      %p170 = scmp.lt.s32.totalorder %s16, 3
      %p171 = pnand %p169, %p170
      %p172 = pneg %p171
      // Predicated region
      $region29: #{tpu_custom_call.1} parent=5 // pred_check
        _
      $region30: #{tpu_custom_call.1} parent=5 // pred_check_branch
        %174 = sbr.rel (%p171) target = $region32
      $region31: #{tpu_custom_call.1} parent=5 // pred_region
        %s175 = ssub.s32 %s16, 1
        %s176 = sand.u32 %s29, 1
        %s177 = scalar_lea.sflag [#allocation4], %s176
        %s178 = sand.u32 %s29, 1
        %s179 = smul.addr %s178, 3072
        %s180 = scalar_lea.vmem [#allocation3], %s179
        // Predicated region
        $region33: #{tpu_custom_call.1} parent=31 // pred_check
          %p181 = pneg %p42
        $region34: #{tpu_custom_call.1} parent=31 // pred_check_branch
          %183 = sbr.rel (%p181) target = $region36
        $region35: #{tpu_custom_call.1} parent=31 // pred_region
          %185 = dma.done %s177, 49152
        $region36: #{tpu_custom_call.1} parent=31 // pred_fallthru
          _
        // Predicated region
        $region37: #{tpu_custom_call.1} parent=31 // pred_check
          %p186 = pneg %p84
        $region38: #{tpu_custom_call.1} parent=31 // pred_check_branch
          %188 = sbr.rel (%p186) target = $region40
        $region39: #{tpu_custom_call.1} parent=31 // pred_region
          %190 = dma.done [#allocation7], 7168
        $region40: #{tpu_custom_call.1} parent=31 // pred_fallthru
          _
        %s191 = sand.u32 %s29, 1
        %s192 = scalar_lea.sflag [#allocation4], %s191
        %s193 = sand.u32 %s29, 1
        %s194 = smul.addr %s193, 3072
        %s195 = scalar_lea.vmem [#allocation3], %s194
        %p196 = pneg %p42
        %p197 = pneg %p39
        %p198 = pneg %p63
        %p199 = pneg %p60
        %p200 = pneg %p84
        %p201 = pneg %p81
        %p202 = pneg %p110
        %p203 = pneg %p107
        %s204 = sand.u32 %s97, 1
        %s205 = scalar_lea.sflag [#allocation5], %s204
        %s206 = sand.u32 %s97, 1
        %s207 = smul.addr %s206, 2688
        %s208 = scalar_lea.vmem [#allocation8], %s207
        %s209 = smul.u32 2, %s21
        %s210 = smul.u32 2, %s21
        %v211 = vld [vmem:[%s1] sm:$0xff]
        %v212 = vld [vmem:[%s1 + $0x8] sm:$0xff]
        %v213 = vld [vmem:[%s1 + $0x10] sm:$0xff]
        %v214 = vld [vmem:[%s1 + $0x18] sm:$0xff]
        %v215 = vld [vmem:[%s1 + $0x20] sm:$0xff]
        %v216 = vld [vmem:[%s1 + $0x28] sm:$0xff]
        %v217 = vld [vmem:[%s1 + $0x30] sm:$0xff]
        %v218 = vld [vmem:[%s1 + $0x38] sm:$0xff]
        %v219 = vld [vmem:[%s1 + $0x40] sm:$0xff]
        %v220 = vld [vmem:[%s1 + $0x48] sm:$0xff]
        %v221 = vld [vmem:[%s1 + $0x50] sm:$0xff]
        %v222 = vld [vmem:[%s1 + $0x58] sm:$0xff]
        %v223 = vld [vmem:[%s1 + $0x60] sm:$0xff]
        %v224 = vld [vmem:[%s1 + $0x68] sm:$0xff]
        %v225 = vld [vmem:[%s1 + $0x70] sm:$0xff]
        %v226 = vld [vmem:[%s1 + $0x78] sm:$0xff]
        %v227 = vld [vmem:[%s1 + $0x80] sm:$0xff]
        %v228 = vld [vmem:[%s1 + $0x88] sm:$0xff]
        %v229 = vld [vmem:[%s1 + $0x90] sm:$0xff]
        %v230 = vld [vmem:[%s1 + $0x98] sm:$0xff]
        %v231 = vld [vmem:[%s1 + $0xa0] sm:$0xff]
        %v232 = vld [vmem:[%s1 + $0xa8] sm:$0xff]
        %v233 = vld [vmem:[%s1 + $0xb0] sm:$0xff]
        %v234 = vld [vmem:[%s1 + $0xb8] sm:$0xff]
        %v235 = vld [vmem:[%s1 + $0xc0] sm:$0xff]
        %v236 = vld [vmem:[%s1 + $0xc8] sm:$0xff]
        %v237 = vld [vmem:[%s1 + $0xd0] sm:$0xff]
        %v238 = vld [vmem:[%s1 + $0xd8] sm:$0xff]
        %v239 = vld [vmem:[%s1 + $0xe0] sm:$0xff]
        %v240 = vld [vmem:[%s1 + $0xe8] sm:$0xff]
        %v241 = vld [vmem:[%s1 + $0xf0] sm:$0xff]
        %v242 = vld [vmem:[%s1 + $0xf8] sm:$0xff]
        %v243 = vld [vmem:[%s1 + $0x100] sm:$0xff]
        %v244 = vld [vmem:[%s1 + $0x108] sm:$0xff]
        %v245 = vld [vmem:[%s1 + $0x110] sm:$0xff]
        %v246 = vld [vmem:[%s1 + $0x118] sm:$0xff]
        %v247 = vld [vmem:[%s1 + $0x120] sm:$0xff]
        %v248 = vld [vmem:[%s1 + $0x128] sm:$0xff]
        %v249 = vld [vmem:[%s1 + $0x130] sm:$0xff]
        %v250 = vld [vmem:[%s1 + $0x138] sm:$0xff]
        %v251 = vld [vmem:[%s1 + $0x140] sm:$0xff]
        %v252 = vld [vmem:[%s1 + $0x148] sm:$0xff]
        %v253 = vld [vmem:[%s1 + $0x150] sm:$0xff]
        %v254 = vld [vmem:[%s1 + $0x158] sm:$0xff]
        %v255 = vld [vmem:[%s1 + $0x160] sm:$0xff]
        %v256 = vld [vmem:[%s1 + $0x168] sm:$0xff]
        %v257 = vld [vmem:[%s1 + $0x170] sm:$0xff]
        %v258 = vld [vmem:[%s1 + $0x178] sm:$0xff]
        %v259 = vld [vmem:[%s1 + $0x180] sm:$0xff]
        %v260 = vld [vmem:[%s1 + $0x188] sm:$0xff]
        %v261 = vld [vmem:[%s1 + $0x190] sm:$0xff]
        %v262 = vld [vmem:[%s1 + $0x198] sm:$0xff]
        %v263 = vld [vmem:[%s1 + $0x1a0] sm:$0xff]
        %v264 = vld [vmem:[%s1 + $0x1a8] sm:$0xff]
        %v265 = vld [vmem:[%s1 + $0x1b0] sm:$0xff]
        %v266 = vld [vmem:[%s1 + $0x1b8] sm:$0xff]
        %v267 = vld [vmem:[%s1 + $0x1c0] sm:$0xff]
        %v268 = vld [vmem:[%s1 + $0x1c8] sm:$0xff]
        %v269 = vld [vmem:[%s1 + $0x1d0] sm:$0xff]
        %v270 = vld [vmem:[%s1 + $0x1d8] sm:$0xff]
        %v271 = vld [vmem:[%s1 + $0x1e0] sm:$0xff]
        %v272 = vld [vmem:[%s1 + $0x1e8] sm:$0xff]
        %v273 = vld [vmem:[%s1 + $0x1f0] sm:$0xff]
        %v274 = vld [vmem:[%s1 + $0x1f8] sm:$0xff]
        %v275 = vld [vmem:[#allocation6] sm:$0xff]
        %v276 = vld [vmem:[#allocation6 + $0x8] sm:$0xff]
        %v277 = vld [vmem:[#allocation6 + $0x10] sm:$0xff]
        %v278 = vld [vmem:[#allocation6 + $0x18] sm:$0xff]
        %v279 = vld [vmem:[#allocation6 + $0x20] sm:$0xff]
        %v280 = vld [vmem:[#allocation6 + $0x28] sm:$0xff]
        %v281 = vld [vmem:[#allocation6 + $0x30] sm:$0xff]
        %v282 = vld [vmem:[#allocation6 + $0x38] sm:$0xff]
        %v283 = vld [vmem:[#allocation6 + $0x40] sm:$0xff]
        %v284 = vld [vmem:[#allocation6 + $0x48] sm:$0xff]
        %v285 = vld [vmem:[#allocation6 + $0x50] sm:$0xff]
        %v286 = vld [vmem:[#allocation6 + $0x58] sm:$0xff]
        %v287 = vld [vmem:[#allocation6 + $0x60] sm:$0xff]
        %v288 = vld [vmem:[#allocation6 + $0x68] sm:$0xff]
        %v289 = vld [vmem:[#allocation6 + $0x70] sm:$0xff]
        %v290 = vld [vmem:[#allocation6 + $0x78] sm:$0xff]
        %v291 = vld [vmem:[#allocation6 + $0x80] sm:$0xff]
        %v292 = vld [vmem:[#allocation6 + $0x88] sm:$0xff]
        %v293 = vld [vmem:[#allocation6 + $0x90] sm:$0xff]
        %v294 = vld [vmem:[#allocation6 + $0x98] sm:$0xff]
        %v295 = vld [vmem:[#allocation6 + $0xa0] sm:$0xff]
        %v296 = vld [vmem:[#allocation6 + $0xa8] sm:$0xff]
        %v297 = vld [vmem:[#allocation6 + $0xb0] sm:$0xff]
        %v298 = vld [vmem:[#allocation6 + $0xb8] sm:$0xff]
        %v299 = vld [vmem:[#allocation6 + $0xc0] sm:$0xff]
        %v300 = vld [vmem:[#allocation6 + $0xc8] sm:$0xff]
        %v301 = vld [vmem:[#allocation6 + $0xd0] sm:$0xff]
        %v302 = vld [vmem:[#allocation6 + $0xd8] sm:$0xff]
        %v303 = vld [vmem:[#allocation6 + $0xe0] sm:$0xff]
        %v304 = vld [vmem:[#allocation6 + $0xe8] sm:$0xff]
        %v305 = vld [vmem:[#allocation6 + $0xf0] sm:$0xff]
        %v306 = vld [vmem:[#allocation6 + $0xf8] sm:$0xff]
        %v307 = vld [vmem:[#allocation6 + $0x100] sm:$0xff]
        %v308 = vld [vmem:[#allocation6 + $0x108] sm:$0xff]
        %v309 = vld [vmem:[#allocation6 + $0x110] sm:$0xff]
        %v310 = vld [vmem:[#allocation6 + $0x118] sm:$0xff]
        %v311 = vld [vmem:[#allocation6 + $0x120] sm:$0xff]
        %v312 = vld [vmem:[#allocation6 + $0x128] sm:$0xff]
        %v313 = vld [vmem:[#allocation6 + $0x130] sm:$0xff]
        %v314 = vld [vmem:[#allocation6 + $0x138] sm:$0xff]
        %v315 = vld [vmem:[#allocation6 + $0x140] sm:$0xff]
        %v316 = vld [vmem:[#allocation6 + $0x148] sm:$0xff]
        %v317 = vld [vmem:[#allocation6 + $0x150] sm:$0xff]
        %v318 = vld [vmem:[#allocation6 + $0x158] sm:$0xff]
        %v319 = vld [vmem:[#allocation6 + $0x160] sm:$0xff]
        %v320 = vld [vmem:[#allocation6 + $0x168] sm:$0xff]
        %v321 = vld [vmem:[#allocation6 + $0x170] sm:$0xff]
        %v322 = vld [vmem:[#allocation6 + $0x178] sm:$0xff]
        %v323 = vld [vmem:[#allocation6 + $0x180] sm:$0xff]
        %v324 = vld [vmem:[#allocation6 + $0x188] sm:$0xff]
        %v325 = vld [vmem:[#allocation6 + $0x190] sm:$0xff]
        %v326 = vld [vmem:[#allocation6 + $0x198] sm:$0xff]
        %v327 = vld [vmem:[#allocation6 + $0x1a0] sm:$0xff]
        %v328 = vld [vmem:[#allocation6 + $0x1a8] sm:$0xff]
        %v329 = vld [vmem:[#allocation6 + $0x1b0] sm:$0xff]
        %v330 = vld [vmem:[#allocation6 + $0x1b8] sm:$0xff]
        %v331 = vld [vmem:[%s180] sm:$0xff]
        %v332 = vld [vmem:[%s180 + $0x8] sm:$0xff]
        %v333 = vld [vmem:[%s180 + $0x10] sm:$0xff]
        %v334 = vld [vmem:[%s180 + $0x18] sm:$0xff]
        %v335 = vld [vmem:[%s180 + $0x20] sm:$0xff]
        %v336 = vld [vmem:[%s180 + $0x28] sm:$0xff]
        %v337 = vld [vmem:[%s180 + $0x30] sm:$0xff]
        %v338 = vld [vmem:[%s180 + $0x38] sm:$0xff]
        %v339 = vld [vmem:[%s180 + $0x40] sm:$0xff]
        %v340 = vld [vmem:[%s180 + $0x48] sm:$0xff]
        %v341 = vld [vmem:[%s180 + $0x50] sm:$0xff]
        %v342 = vld [vmem:[%s180 + $0x58] sm:$0xff]
        %v343 = vld [vmem:[%s180 + $0x60] sm:$0xff]
        %v344 = vld [vmem:[%s180 + $0x68] sm:$0xff]
        %v345 = vld [vmem:[%s180 + $0x70] sm:$0xff]
        %v346 = vld [vmem:[%s180 + $0x78] sm:$0xff]
        %v347 = vld [vmem:[%s180 + $0x80] sm:$0xff]
        %v348 = vld [vmem:[%s180 + $0x88] sm:$0xff]
        %v349 = vld [vmem:[%s180 + $0x90] sm:$0xff]
        %v350 = vld [vmem:[%s180 + $0x98] sm:$0xff]
        %v351 = vld [vmem:[%s180 + $0xa0] sm:$0xff]
        %v352 = vld [vmem:[%s180 + $0xa8] sm:$0xff]
        %v353 = vld [vmem:[%s180 + $0xb0] sm:$0xff]
        %v354 = vld [vmem:[%s180 + $0xb8] sm:$0xff]
        %v355 = vld [vmem:[%s180 + $0xc0] sm:$0xff]
        %v356 = vld [vmem:[%s180 + $0xc8] sm:$0xff]
        %v357 = vld [vmem:[%s180 + $0xd0] sm:$0xff]
        %v358 = vld [vmem:[%s180 + $0xd8] sm:$0xff]
        %v359 = vld [vmem:[%s180 + $0xe0] sm:$0xff]
        %v360 = vld [vmem:[%s180 + $0xe8] sm:$0xff]
        %v361 = vld [vmem:[%s180 + $0xf0] sm:$0xff]
        %v362 = vld [vmem:[%s180 + $0xf8] sm:$0xff]
        %v363 = vld [vmem:[%s180 + $0x100] sm:$0xff]
        %v364 = vld [vmem:[%s180 + $0x108] sm:$0xff]
        %v365 = vld [vmem:[%s180 + $0x110] sm:$0xff]
        %v366 = vld [vmem:[%s180 + $0x118] sm:$0xff]
        %v367 = vld [vmem:[%s180 + $0x120] sm:$0xff]
        %v368 = vld [vmem:[%s180 + $0x128] sm:$0xff]
        %v369 = vld [vmem:[%s180 + $0x130] sm:$0xff]
        %v370 = vld [vmem:[%s180 + $0x138] sm:$0xff]
        %v371 = vld [vmem:[%s180 + $0x140] sm:$0xff]
        %v372 = vld [vmem:[%s180 + $0x148] sm:$0xff]
        %v373 = vld [vmem:[%s180 + $0x150] sm:$0xff]
        %v374 = vld [vmem:[%s180 + $0x158] sm:$0xff]
        %v375 = vld [vmem:[%s180 + $0x160] sm:$0xff]
        %v376 = vld [vmem:[%s180 + $0x168] sm:$0xff]
        %v377 = vld [vmem:[%s180 + $0x170] sm:$0xff]
        %v378 = vld [vmem:[%s180 + $0x178] sm:$0xff]
        %v379 = vld [vmem:[%s180 + $0x180] sm:$0xff]
        %v380 = vld [vmem:[%s180 + $0x188] sm:$0xff]
        %v381 = vld [vmem:[%s180 + $0x190] sm:$0xff]
        %v382 = vld [vmem:[%s180 + $0x198] sm:$0xff]
        %v383 = vld [vmem:[%s180 + $0x1a0] sm:$0xff]
        %v384 = vld [vmem:[%s180 + $0x1a8] sm:$0xff]
        %v385 = vld [vmem:[%s180 + $0x1b0] sm:$0xff]
        %v386 = vld [vmem:[%s180 + $0x1b8] sm:$0xff]
        %v387 = vld [vmem:[%s180 + $0x1c0] sm:$0xff]
        %v388 = vld [vmem:[%s180 + $0x1c8] sm:$0xff]
        %v389 = vld [vmem:[%s180 + $0x1d0] sm:$0xff]
        %v390 = vld [vmem:[%s180 + $0x1d8] sm:$0xff]
        %v391 = vld [vmem:[%s180 + $0x1e0] sm:$0xff]
        %v392 = vld [vmem:[%s180 + $0x1e8] sm:$0xff]
        %v393 = vld [vmem:[%s180 + $0x1f0] sm:$0xff]
        %v394 = vld [vmem:[%s180 + $0x1f8] sm:$0xff]
        %v395 = vld [vmem:[%s180 + $0x200] sm:$0xff]
        %v396 = vld [vmem:[%s180 + $0x208] sm:$0xff]
        %v397 = vld [vmem:[%s180 + $0x210] sm:$0xff]
        %v398 = vld [vmem:[%s180 + $0x218] sm:$0xff]
        %v399 = vld [vmem:[%s180 + $0x220] sm:$0xff]
        %v400 = vld [vmem:[%s180 + $0x228] sm:$0xff]
        %v401 = vld [vmem:[%s180 + $0x230] sm:$0xff]
        %v402 = vld [vmem:[%s180 + $0x238] sm:$0xff]
        %v403 = vld [vmem:[%s180 + $0x240] sm:$0xff]
        %v404 = vld [vmem:[%s180 + $0x248] sm:$0xff]
        %v405 = vld [vmem:[%s180 + $0x250] sm:$0xff]
        %v406 = vld [vmem:[%s180 + $0x258] sm:$0xff]
        %v407 = vld [vmem:[%s180 + $0x260] sm:$0xff]
        %v408 = vld [vmem:[%s180 + $0x268] sm:$0xff]
        %v409 = vld [vmem:[%s180 + $0x270] sm:$0xff]
        %v410 = vld [vmem:[%s180 + $0x278] sm:$0xff]
        %v411 = vld [vmem:[%s180 + $0x280] sm:$0xff]
        %v412 = vld [vmem:[%s180 + $0x288] sm:$0xff]
        %v413 = vld [vmem:[%s180 + $0x290] sm:$0xff]
        %v414 = vld [vmem:[%s180 + $0x298] sm:$0xff]
        %v415 = vld [vmem:[%s180 + $0x2a0] sm:$0xff]
        %v416 = vld [vmem:[%s180 + $0x2a8] sm:$0xff]
        %v417 = vld [vmem:[%s180 + $0x2b0] sm:$0xff]
        %v418 = vld [vmem:[%s180 + $0x2b8] sm:$0xff]
        %v419 = vld [vmem:[%s180 + $0x2c0] sm:$0xff]
        %v420 = vld [vmem:[%s180 + $0x2c8] sm:$0xff]
        %v421 = vld [vmem:[%s180 + $0x2d0] sm:$0xff]
        %v422 = vld [vmem:[%s180 + $0x2d8] sm:$0xff]
        %v423 = vld [vmem:[%s180 + $0x2e0] sm:$0xff]
        %v424 = vld [vmem:[%s180 + $0x2e8] sm:$0xff]
        %v425 = vld [vmem:[%s180 + $0x2f0] sm:$0xff]
        %v426 = vld [vmem:[%s180 + $0x2f8] sm:$0xff]
        %v427 = vld [vmem:[%s180 + $0x300] sm:$0xff]
        %v428 = vld [vmem:[%s180 + $0x308] sm:$0xff]
        %v429 = vld [vmem:[%s180 + $0x310] sm:$0xff]
        %v430 = vld [vmem:[%s180 + $0x318] sm:$0xff]
        %v431 = vld [vmem:[%s180 + $0x320] sm:$0xff]
        %v432 = vld [vmem:[%s180 + $0x328] sm:$0xff]
        %v433 = vld [vmem:[%s180 + $0x330] sm:$0xff]
        %v434 = vld [vmem:[%s180 + $0x338] sm:$0xff]
        %v435 = vld [vmem:[%s180 + $0x340] sm:$0xff]
        %v436 = vld [vmem:[%s180 + $0x348] sm:$0xff]
        %v437 = vld [vmem:[%s180 + $0x350] sm:$0xff]
        %v438 = vld [vmem:[%s180 + $0x358] sm:$0xff]
        %v439 = vld [vmem:[%s180 + $0x360] sm:$0xff]
        %v440 = vld [vmem:[%s180 + $0x368] sm:$0xff]
        %v441 = vld [vmem:[%s180 + $0x370] sm:$0xff]
        %v442 = vld [vmem:[%s180 + $0x378] sm:$0xff]
        %v443 = vld [vmem:[%s180 + $0x380] sm:$0xff]
        %v444 = vld [vmem:[%s180 + $0x388] sm:$0xff]
        %v445 = vld [vmem:[%s180 + $0x390] sm:$0xff]
        %v446 = vld [vmem:[%s180 + $0x398] sm:$0xff]
        %v447 = vld [vmem:[%s180 + $0x3a0] sm:$0xff]
        %v448 = vld [vmem:[%s180 + $0x3a8] sm:$0xff]
        %v449 = vld [vmem:[%s180 + $0x3b0] sm:$0xff]
        %v450 = vld [vmem:[%s180 + $0x3b8] sm:$0xff]
        %v451 = vld [vmem:[%s180 + $0x3c0] sm:$0xff]
        %v452 = vld [vmem:[%s180 + $0x3c8] sm:$0xff]
        %v453 = vld [vmem:[%s180 + $0x3d0] sm:$0xff]
        %v454 = vld [vmem:[%s180 + $0x3d8] sm:$0xff]
        %v455 = vld [vmem:[%s180 + $0x3e0] sm:$0xff]
        %v456 = vld [vmem:[%s180 + $0x3e8] sm:$0xff]
        %v457 = vld [vmem:[%s180 + $0x3f0] sm:$0xff]
        %v458 = vld [vmem:[%s180 + $0x3f8] sm:$0xff]
        %v459 = vld [vmem:[%s180 + $0x400] sm:$0xff]
        %v460 = vld [vmem:[%s180 + $0x408] sm:$0xff]
        %v461 = vld [vmem:[%s180 + $0x410] sm:$0xff]
        %v462 = vld [vmem:[%s180 + $0x418] sm:$0xff]
        %v463 = vld [vmem:[%s180 + $0x420] sm:$0xff]
        %v464 = vld [vmem:[%s180 + $0x428] sm:$0xff]
        %v465 = vld [vmem:[%s180 + $0x430] sm:$0xff]
        %v466 = vld [vmem:[%s180 + $0x438] sm:$0xff]
        %v467 = vld [vmem:[%s180 + $0x440] sm:$0xff]
        %v468 = vld [vmem:[%s180 + $0x448] sm:$0xff]
        %v469 = vld [vmem:[%s180 + $0x450] sm:$0xff]
        %v470 = vld [vmem:[%s180 + $0x458] sm:$0xff]
        %v471 = vld [vmem:[%s180 + $0x460] sm:$0xff]
        %v472 = vld [vmem:[%s180 + $0x468] sm:$0xff]
        %v473 = vld [vmem:[%s180 + $0x470] sm:$0xff]
        %v474 = vld [vmem:[%s180 + $0x478] sm:$0xff]
        %v475 = vld [vmem:[%s180 + $0x480] sm:$0xff]
        %v476 = vld [vmem:[%s180 + $0x488] sm:$0xff]
        %v477 = vld [vmem:[%s180 + $0x490] sm:$0xff]
        %v478 = vld [vmem:[%s180 + $0x498] sm:$0xff]
        %v479 = vld [vmem:[%s180 + $0x4a0] sm:$0xff]
        %v480 = vld [vmem:[%s180 + $0x4a8] sm:$0xff]
        %v481 = vld [vmem:[%s180 + $0x4b0] sm:$0xff]
        %v482 = vld [vmem:[%s180 + $0x4b8] sm:$0xff]
        %v483 = vld [vmem:[%s180 + $0x4c0] sm:$0xff]
        %v484 = vld [vmem:[%s180 + $0x4c8] sm:$0xff]
        %v485 = vld [vmem:[%s180 + $0x4d0] sm:$0xff]
        %v486 = vld [vmem:[%s180 + $0x4d8] sm:$0xff]
        %v487 = vld [vmem:[%s180 + $0x4e0] sm:$0xff]
        %v488 = vld [vmem:[%s180 + $0x4e8] sm:$0xff]
        %v489 = vld [vmem:[%s180 + $0x4f0] sm:$0xff]
        %v490 = vld [vmem:[%s180 + $0x4f8] sm:$0xff]
        %v491 = vld [vmem:[%s180 + $0x500] sm:$0xff]
        %v492 = vld [vmem:[%s180 + $0x508] sm:$0xff]
        %v493 = vld [vmem:[%s180 + $0x510] sm:$0xff]
        %v494 = vld [vmem:[%s180 + $0x518] sm:$0xff]
        %v495 = vld [vmem:[%s180 + $0x520] sm:$0xff]
        %v496 = vld [vmem:[%s180 + $0x528] sm:$0xff]
        %v497 = vld [vmem:[%s180 + $0x530] sm:$0xff]
        %v498 = vld [vmem:[%s180 + $0x538] sm:$0xff]
        %v499 = vld [vmem:[%s180 + $0x540] sm:$0xff]
        %v500 = vld [vmem:[%s180 + $0x548] sm:$0xff]
        %v501 = vld [vmem:[%s180 + $0x550] sm:$0xff]
        %v502 = vld [vmem:[%s180 + $0x558] sm:$0xff]
        %v503 = vld [vmem:[%s180 + $0x560] sm:$0xff]
        %v504 = vld [vmem:[%s180 + $0x568] sm:$0xff]
        %v505 = vld [vmem:[%s180 + $0x570] sm:$0xff]
        %v506 = vld [vmem:[%s180 + $0x578] sm:$0xff]
        %v507 = vld [vmem:[%s180 + $0x580] sm:$0xff]
        %v508 = vld [vmem:[%s180 + $0x588] sm:$0xff]
        %v509 = vld [vmem:[%s180 + $0x590] sm:$0xff]
        %v510 = vld [vmem:[%s180 + $0x598] sm:$0xff]
        %v511 = vld [vmem:[%s180 + $0x5a0] sm:$0xff]
        %v512 = vld [vmem:[%s180 + $0x5a8] sm:$0xff]
        %v513 = vld [vmem:[%s180 + $0x5b0] sm:$0xff]
        %v514 = vld [vmem:[%s180 + $0x5b8] sm:$0xff]
        %v515 = vld [vmem:[%s180 + $0x5c0] sm:$0xff]
        %v516 = vld [vmem:[%s180 + $0x5c8] sm:$0xff]
        %v517 = vld [vmem:[%s180 + $0x5d0] sm:$0xff]
        %v518 = vld [vmem:[%s180 + $0x5d8] sm:$0xff]
        %v519 = vld [vmem:[%s180 + $0x5e0] sm:$0xff]
        %v520 = vld [vmem:[%s180 + $0x5e8] sm:$0xff]
        %v521 = vld [vmem:[%s180 + $0x5f0] sm:$0xff]
        %v522 = vld [vmem:[%s180 + $0x5f8] sm:$0xff]
        %523 = vmatpush.msra.mxu0 %v241
        %524 = vmatpush.msra.mxu0 %v239
        %525 = vmatpush.msra.mxu0 %v237
        %526 = vmatpush.msra.mxu0 %v235
        %527 = vmatpush.msra.mxu0 %v233
        %528 = vmatpush.msra.mxu0 %v231
        %529 = vmatpush.msra.mxu0 %v229
        %530 = vmatpush.msra.mxu0 %v227
        %531 = vmatpush.msra.mxu0 %v225
        %532 = vmatpush.msra.mxu0 %v223
        %533 = vmatpush.msra.mxu0 %v221
        %534 = vmatpush.msra.mxu0 %v219
        %535 = vmatpush.msra.mxu0 %v217
        %536 = vmatpush.msra.mxu0 %v215
        %537 = vmatpush.msra.mxu0 %v213
        %538 = vmatpush.msra.mxu0 %v211
        %539 = vmatmul.f32.gmra.mxu0 %v331
        %v540 = vpop.f32.mrf.mxu0
        %v541 = vadd.f32 0.0, %v540
        %542 = vmatmul.f32.gmra.mxu0 %v333
        %v543 = vpop.f32.mrf.mxu0
        %v544 = vadd.f32 0.0, %v543
        %545 = vmatmul.f32.gmra.mxu0 %v335
        %v546 = vpop.f32.mrf.mxu0
        %v547 = vadd.f32 0.0, %v546
        %548 = vmatmul.f32.gmra.mxu0 %v337
        %v549 = vpop.f32.mrf.mxu0
        %v550 = vadd.f32 0.0, %v549
        %551 = vmatmul.f32.gmra.mxu0 %v339
        %v552 = vpop.f32.mrf.mxu0
        %v553 = vadd.f32 0.0, %v552
        %554 = vmatmul.f32.gmra.mxu0 %v341
        %v555 = vpop.f32.mrf.mxu0
        %v556 = vadd.f32 0.0, %v555
        %557 = vmatmul.f32.gmra.mxu0 %v343
        %v558 = vpop.f32.mrf.mxu0
        %v559 = vadd.f32 0.0, %v558
        %560 = vmatmul.f32.gmra.mxu0 %v345
        %v561 = vpop.f32.mrf.mxu0
        %v562 = vadd.f32 0.0, %v561
        %563 = vmatmul.f32.gmra.mxu0 %v347
        %v564 = vpop.f32.mrf.mxu0
        %v565 = vadd.f32 0.0, %v564
        %566 = vmatmul.f32.gmra.mxu0 %v349
        %v567 = vpop.f32.mrf.mxu0
        %v568 = vadd.f32 0.0, %v567
        %569 = vmatmul.f32.gmra.mxu0 %v351
        %v570 = vpop.f32.mrf.mxu0
        %v571 = vadd.f32 0.0, %v570
        %572 = vmatmul.f32.gmra.mxu0 %v353
        %v573 = vpop.f32.mrf.mxu0
        %v574 = vadd.f32 0.0, %v573
        %575 = vmatmul.f32.gmra.mxu0 %v355
        %v576 = vpop.f32.mrf.mxu0
        %v577 = vadd.f32 0.0, %v576
        %578 = vmatmul.f32.gmra.mxu0 %v357
        %v579 = vpop.f32.mrf.mxu0
        %v580 = vadd.f32 0.0, %v579
        %581 = vmatmul.f32.gmra.mxu0 %v359
        %v582 = vpop.f32.mrf.mxu0
        %v583 = vadd.f32 0.0, %v582
        %584 = vmatmul.f32.gmra.mxu0 %v361
        %v585 = vpop.f32.mrf.mxu0
        %v586 = vadd.f32 0.0, %v585
        %587 = vmatmul.f32.gmra.mxu0 %v363
        %v588 = vpop.f32.mrf.mxu0
        %v589 = vadd.f32 0.0, %v588
        %590 = vmatmul.f32.gmra.mxu0 %v365
        %v591 = vpop.f32.mrf.mxu0
        %v592 = vadd.f32 0.0, %v591
        %593 = vmatmul.f32.gmra.mxu0 %v367
        %v594 = vpop.f32.mrf.mxu0
        %v595 = vadd.f32 0.0, %v594
        %596 = vmatmul.f32.gmra.mxu0 %v369
        %v597 = vpop.f32.mrf.mxu0
        %v598 = vadd.f32 0.0, %v597
        %599 = vmatmul.f32.gmra.mxu0 %v371
        %v600 = vpop.f32.mrf.mxu0
        %v601 = vadd.f32 0.0, %v600
        %602 = vmatmul.f32.gmra.mxu0 %v373
        %v603 = vpop.f32.mrf.mxu0
        %v604 = vadd.f32 0.0, %v603
        %605 = vmatmul.f32.gmra.mxu0 %v375
        %v606 = vpop.f32.mrf.mxu0
        %v607 = vadd.f32 0.0, %v606
        %608 = vmatmul.f32.gmra.mxu0 %v377
        %v609 = vpop.f32.mrf.mxu0
        %v610 = vadd.f32 0.0, %v609
        %611 = vmatmul.f32.gmra.mxu0 %v379
        %v612 = vpop.f32.mrf.mxu0
        %v613 = vadd.f32 0.0, %v612
        %614 = vmatmul.f32.gmra.mxu0 %v381
        %v615 = vpop.f32.mrf.mxu0
        %v616 = vadd.f32 0.0, %v615
        %617 = vmatmul.f32.gmra.mxu0 %v383
        %v618 = vpop.f32.mrf.mxu0
        %v619 = vadd.f32 0.0, %v618
        %620 = vmatmul.f32.gmra.mxu0 %v385
        %v621 = vpop.f32.mrf.mxu0
        %v622 = vadd.f32 0.0, %v621
        %623 = vmatmul.f32.gmra.mxu0 %v387
        %v624 = vpop.f32.mrf.mxu0
        %v625 = vadd.f32 0.0, %v624
        %626 = vmatmul.f32.gmra.mxu0 %v389
        %v627 = vpop.f32.mrf.mxu0
        %v628 = vadd.f32 0.0, %v627
        %629 = vmatmul.f32.gmra.mxu0 %v391
        %v630 = vpop.f32.mrf.mxu0
        %v631 = vadd.f32 0.0, %v630
        %632 = vmatmul.f32.gmra.mxu0 %v393
        %v633 = vpop.f32.mrf.mxu0
        %v634 = vadd.f32 0.0, %v633
        %635 = vmatmul.f32.gmra.mxu0 %v395
        %v636 = vpop.f32.mrf.mxu0
        %v637 = vadd.f32 0.0, %v636
        %638 = vmatmul.f32.gmra.mxu0 %v397
        %v639 = vpop.f32.mrf.mxu0
        %v640 = vadd.f32 0.0, %v639
        %641 = vmatmul.f32.gmra.mxu0 %v399
        %v642 = vpop.f32.mrf.mxu0
        %v643 = vadd.f32 0.0, %v642
        %644 = vmatmul.f32.gmra.mxu0 %v401
        %v645 = vpop.f32.mrf.mxu0
        %v646 = vadd.f32 0.0, %v645
        %647 = vmatmul.f32.gmra.mxu0 %v403
        %v648 = vpop.f32.mrf.mxu0
        %v649 = vadd.f32 0.0, %v648
        %650 = vmatmul.f32.gmra.mxu0 %v405
        %v651 = vpop.f32.mrf.mxu0
        %v652 = vadd.f32 0.0, %v651
        %653 = vmatmul.f32.gmra.mxu0 %v407
        %v654 = vpop.f32.mrf.mxu0
        %v655 = vadd.f32 0.0, %v654
        %656 = vmatmul.f32.gmra.mxu0 %v409
        %v657 = vpop.f32.mrf.mxu0
        %v658 = vadd.f32 0.0, %v657
        %659 = vmatmul.f32.gmra.mxu0 %v411
        %v660 = vpop.f32.mrf.mxu0
        %v661 = vadd.f32 0.0, %v660
        %662 = vmatmul.f32.gmra.mxu0 %v413
        %v663 = vpop.f32.mrf.mxu0
        %v664 = vadd.f32 0.0, %v663
        %665 = vmatmul.f32.gmra.mxu0 %v415
        %v666 = vpop.f32.mrf.mxu0
        %v667 = vadd.f32 0.0, %v666
        %668 = vmatmul.f32.gmra.mxu0 %v417
        %v669 = vpop.f32.mrf.mxu0
        %v670 = vadd.f32 0.0, %v669
        %671 = vmatmul.f32.gmra.mxu0 %v419
        %v672 = vpop.f32.mrf.mxu0
        %v673 = vadd.f32 0.0, %v672
        %674 = vmatmul.f32.gmra.mxu0 %v421
        %v675 = vpop.f32.mrf.mxu0
        %v676 = vadd.f32 0.0, %v675
        %677 = vmatmul.f32.gmra.mxu0 %v423
        %v678 = vpop.f32.mrf.mxu0
        %v679 = vadd.f32 0.0, %v678
        %680 = vmatmul.f32.gmra.mxu0 %v425
        %v681 = vpop.f32.mrf.mxu0
        %v682 = vadd.f32 0.0, %v681
        %683 = vmatmul.f32.gmra.mxu0 %v427
        %v684 = vpop.f32.mrf.mxu0
        %v685 = vadd.f32 0.0, %v684
        %686 = vmatmul.f32.gmra.mxu0 %v429
        %v687 = vpop.f32.mrf.mxu0
        %v688 = vadd.f32 0.0, %v687
        %689 = vmatmul.f32.gmra.mxu0 %v431
        %v690 = vpop.f32.mrf.mxu0
        %v691 = vadd.f32 0.0, %v690
        %692 = vmatmul.f32.gmra.mxu0 %v433
        %v693 = vpop.f32.mrf.mxu0
        %v694 = vadd.f32 0.0, %v693
        %695 = vmatmul.f32.gmra.mxu0 %v435
        %v696 = vpop.f32.mrf.mxu0
        %v697 = vadd.f32 0.0, %v696
        %698 = vmatmul.f32.gmra.mxu0 %v437
        %v699 = vpop.f32.mrf.mxu0
        %v700 = vadd.f32 0.0, %v699
        %701 = vmatmul.f32.gmra.mxu0 %v439
        %v702 = vpop.f32.mrf.mxu0
        %v703 = vadd.f32 0.0, %v702
        %704 = vmatmul.f32.gmra.mxu0 %v441
        %v705 = vpop.f32.mrf.mxu0
        %v706 = vadd.f32 0.0, %v705
        %707 = vmatmul.f32.gmra.mxu0 %v443
        %v708 = vpop.f32.mrf.mxu0
        %v709 = vadd.f32 0.0, %v708
        %710 = vmatmul.f32.gmra.mxu0 %v445
        %v711 = vpop.f32.mrf.mxu0
        %v712 = vadd.f32 0.0, %v711
        %713 = vmatmul.f32.gmra.mxu0 %v447
        %v714 = vpop.f32.mrf.mxu0
        %v715 = vadd.f32 0.0, %v714
        %716 = vmatmul.f32.gmra.mxu0 %v449
        %v717 = vpop.f32.mrf.mxu0
        %v718 = vadd.f32 0.0, %v717
        %719 = vmatmul.f32.gmra.mxu0 %v451
        %v720 = vpop.f32.mrf.mxu0
        %v721 = vadd.f32 0.0, %v720
        %722 = vmatmul.f32.gmra.mxu0 %v453
        %v723 = vpop.f32.mrf.mxu0
        %v724 = vadd.f32 0.0, %v723
        %725 = vmatmul.f32.gmra.mxu0 %v455
        %v726 = vpop.f32.mrf.mxu0
        %v727 = vadd.f32 0.0, %v726
        %728 = vmatmul.f32.gmra.mxu0 %v457
        %v729 = vpop.f32.mrf.mxu0
        %v730 = vadd.f32 0.0, %v729
        %731 = vmatmul.f32.gmra.mxu0 %v459
        %v732 = vpop.f32.mrf.mxu0
        %v733 = vadd.f32 0.0, %v732
        %734 = vmatmul.f32.gmra.mxu0 %v461
        %v735 = vpop.f32.mrf.mxu0
        %v736 = vadd.f32 0.0, %v735
        %737 = vmatmul.f32.gmra.mxu0 %v463
        %v738 = vpop.f32.mrf.mxu0
        %v739 = vadd.f32 0.0, %v738
        %740 = vmatmul.f32.gmra.mxu0 %v465
        %v741 = vpop.f32.mrf.mxu0
        %v742 = vadd.f32 0.0, %v741
        %743 = vmatmul.f32.gmra.mxu0 %v467
        %v744 = vpop.f32.mrf.mxu0
        %v745 = vadd.f32 0.0, %v744
        %746 = vmatmul.f32.gmra.mxu0 %v469
        %v747 = vpop.f32.mrf.mxu0
        %v748 = vadd.f32 0.0, %v747
        %749 = vmatmul.f32.gmra.mxu0 %v471
        %v750 = vpop.f32.mrf.mxu0
        %v751 = vadd.f32 0.0, %v750
        %752 = vmatmul.f32.gmra.mxu0 %v473
        %v753 = vpop.f32.mrf.mxu0
        %v754 = vadd.f32 0.0, %v753
        %755 = vmatmul.f32.gmra.mxu0 %v475
        %v756 = vpop.f32.mrf.mxu0
        %v757 = vadd.f32 0.0, %v756
        %758 = vmatmul.f32.gmra.mxu0 %v477
        %v759 = vpop.f32.mrf.mxu0
        %v760 = vadd.f32 0.0, %v759
        %761 = vmatmul.f32.gmra.mxu0 %v479
        %v762 = vpop.f32.mrf.mxu0
        %v763 = vadd.f32 0.0, %v762
        %764 = vmatmul.f32.gmra.mxu0 %v481
        %v765 = vpop.f32.mrf.mxu0
        %v766 = vadd.f32 0.0, %v765
        %767 = vmatmul.f32.gmra.mxu0 %v483
        %v768 = vpop.f32.mrf.mxu0
        %v769 = vadd.f32 0.0, %v768
        %770 = vmatmul.f32.gmra.mxu0 %v485
        %v771 = vpop.f32.mrf.mxu0
        %v772 = vadd.f32 0.0, %v771
        %773 = vmatmul.f32.gmra.mxu0 %v487
        %v774 = vpop.f32.mrf.mxu0
        %v775 = vadd.f32 0.0, %v774
        %776 = vmatmul.f32.gmra.mxu0 %v489
        %v777 = vpop.f32.mrf.mxu0
        %v778 = vadd.f32 0.0, %v777
        %779 = vmatmul.f32.gmra.mxu0 %v491
        %v780 = vpop.f32.mrf.mxu0
        %v781 = vadd.f32 0.0, %v780
        %782 = vmatmul.f32.gmra.mxu0 %v493
        %v783 = vpop.f32.mrf.mxu0
        %v784 = vadd.f32 0.0, %v783
        %785 = vmatmul.f32.gmra.mxu0 %v495
        %v786 = vpop.f32.mrf.mxu0
        %v787 = vadd.f32 0.0, %v786
        %788 = vmatmul.f32.gmra.mxu0 %v497
        %v789 = vpop.f32.mrf.mxu0
        %v790 = vadd.f32 0.0, %v789
        %791 = vmatmul.f32.gmra.mxu0 %v499
        %v792 = vpop.f32.mrf.mxu0
        %v793 = vadd.f32 0.0, %v792
        %794 = vmatmul.f32.gmra.mxu0 %v501
        %v795 = vpop.f32.mrf.mxu0
        %v796 = vadd.f32 0.0, %v795
        %797 = vmatmul.f32.gmra.mxu0 %v503
        %v798 = vpop.f32.mrf.mxu0
        %v799 = vadd.f32 0.0, %v798
        %800 = vmatmul.f32.gmra.mxu0 %v505
        %v801 = vpop.f32.mrf.mxu0
        %v802 = vadd.f32 0.0, %v801
        %803 = vmatmul.f32.gmra.mxu0 %v507
        %v804 = vpop.f32.mrf.mxu0
        %v805 = vadd.f32 0.0, %v804
        %806 = vmatmul.f32.gmra.mxu0 %v509
        %v807 = vpop.f32.mrf.mxu0
        %v808 = vadd.f32 0.0, %v807
        %809 = vmatmul.f32.gmra.mxu0 %v511
        %v810 = vpop.f32.mrf.mxu0
        %v811 = vadd.f32 0.0, %v810
        %812 = vmatmul.f32.gmra.mxu0 %v513
        %v813 = vpop.f32.mrf.mxu0
        %v814 = vadd.f32 0.0, %v813
        %815 = vmatmul.f32.gmra.mxu0 %v515
        %v816 = vpop.f32.mrf.mxu0
        %v817 = vadd.f32 0.0, %v816
        %818 = vmatmul.f32.gmra.mxu0 %v517
        %v819 = vpop.f32.mrf.mxu0
        %v820 = vadd.f32 0.0, %v819
        %821 = vmatmul.f32.gmra.mxu0 %v519
        %v822 = vpop.f32.mrf.mxu0
        %v823 = vadd.f32 0.0, %v822
        %824 = vmatmul.f32.gmra.mxu0 %v521
        %v825 = vpop.f32.mrf.mxu0
        %v826 = vadd.f32 0.0, %v825
        %827 = vdwg.mxu0
        %828 = vmatpush.msra.mxu0 %v273
        %829 = vmatpush.msra.mxu0 %v271
        %830 = vmatpush.msra.mxu0 %v269
        %831 = vmatpush.msra.mxu0 %v267
        %832 = vmatpush.msra.mxu0 %v265
        %833 = vmatpush.msra.mxu0 %v263
        %834 = vmatpush.msra.mxu0 %v261
        %835 = vmatpush.msra.mxu0 %v259
        %836 = vmatpush.msra.mxu0 %v257
        %837 = vmatpush.msra.mxu0 %v255
        %838 = vmatpush.msra.mxu0 %v253
        %839 = vmatpush.msra.mxu0 %v251
        %840 = vmatpush.msra.mxu0 %v249
        %841 = vmatpush.msra.mxu0 %v247
        %842 = vmatpush.msra.mxu0 %v245
        %843 = vmatpush.msra.mxu0 %v243
        %844 = vmatmul.f32.gmra.mxu0 %v332
        %v845 = vpop.f32.mrf.mxu0
        %v846 = vadd.f32 %v541, %v845
        %847 = vmatmul.f32.gmra.mxu0 %v334
        %v848 = vpop.f32.mrf.mxu0
        %v849 = vadd.f32 %v544, %v848
        %850 = vmatmul.f32.gmra.mxu0 %v336
        %v851 = vpop.f32.mrf.mxu0
        %v852 = vadd.f32 %v547, %v851
        %853 = vmatmul.f32.gmra.mxu0 %v338
        %v854 = vpop.f32.mrf.mxu0
        %v855 = vadd.f32 %v550, %v854
        %856 = vmatmul.f32.gmra.mxu0 %v340
        %v857 = vpop.f32.mrf.mxu0
        %v858 = vadd.f32 %v553, %v857
        %859 = vmatmul.f32.gmra.mxu0 %v342
        %v860 = vpop.f32.mrf.mxu0
        %v861 = vadd.f32 %v556, %v860
        %862 = vmatmul.f32.gmra.mxu0 %v344
        %v863 = vpop.f32.mrf.mxu0
        %v864 = vadd.f32 %v559, %v863
        %865 = vmatmul.f32.gmra.mxu0 %v346
        %v866 = vpop.f32.mrf.mxu0
        %v867 = vadd.f32 %v562, %v866
        %868 = vmatmul.f32.gmra.mxu0 %v348
        %v869 = vpop.f32.mrf.mxu0
        %v870 = vadd.f32 %v565, %v869
        %871 = vmatmul.f32.gmra.mxu0 %v350
        %v872 = vpop.f32.mrf.mxu0
        %v873 = vadd.f32 %v568, %v872
        %874 = vmatmul.f32.gmra.mxu0 %v352
        %v875 = vpop.f32.mrf.mxu0
        %v876 = vadd.f32 %v571, %v875
        %877 = vmatmul.f32.gmra.mxu0 %v354
        %v878 = vpop.f32.mrf.mxu0
        %v879 = vadd.f32 %v574, %v878
        %880 = vmatmul.f32.gmra.mxu0 %v356
        %v881 = vpop.f32.mrf.mxu0
        %v882 = vadd.f32 %v577, %v881
        %883 = vmatmul.f32.gmra.mxu0 %v358
        %v884 = vpop.f32.mrf.mxu0
        %v885 = vadd.f32 %v580, %v884
        %886 = vmatmul.f32.gmra.mxu0 %v360
        %v887 = vpop.f32.mrf.mxu0
        %v888 = vadd.f32 %v583, %v887
        %889 = vmatmul.f32.gmra.mxu0 %v362
        %v890 = vpop.f32.mrf.mxu0
        %v891 = vadd.f32 %v586, %v890
        %892 = vmatmul.f32.gmra.mxu0 %v364
        %v893 = vpop.f32.mrf.mxu0
        %v894 = vadd.f32 %v589, %v893
        %895 = vmatmul.f32.gmra.mxu0 %v366
        %v896 = vpop.f32.mrf.mxu0
        %v897 = vadd.f32 %v592, %v896
        %898 = vmatmul.f32.gmra.mxu0 %v368
        %v899 = vpop.f32.mrf.mxu0
        %v900 = vadd.f32 %v595, %v899
        %901 = vmatmul.f32.gmra.mxu0 %v370
        %v902 = vpop.f32.mrf.mxu0
        %v903 = vadd.f32 %v598, %v902
        %904 = vmatmul.f32.gmra.mxu0 %v372
        %v905 = vpop.f32.mrf.mxu0
        %v906 = vadd.f32 %v601, %v905
        %907 = vmatmul.f32.gmra.mxu0 %v374
        %v908 = vpop.f32.mrf.mxu0
        %v909 = vadd.f32 %v604, %v908
        %910 = vmatmul.f32.gmra.mxu0 %v376
        %v911 = vpop.f32.mrf.mxu0
        %v912 = vadd.f32 %v607, %v911
        %913 = vmatmul.f32.gmra.mxu0 %v378
        %v914 = vpop.f32.mrf.mxu0
        %v915 = vadd.f32 %v610, %v914
        %916 = vmatmul.f32.gmra.mxu0 %v380
        %v917 = vpop.f32.mrf.mxu0
        %v918 = vadd.f32 %v613, %v917
        %919 = vmatmul.f32.gmra.mxu0 %v382
        %v920 = vpop.f32.mrf.mxu0
        %v921 = vadd.f32 %v616, %v920
        %922 = vmatmul.f32.gmra.mxu0 %v384
        %v923 = vpop.f32.mrf.mxu0
        %v924 = vadd.f32 %v619, %v923
        %925 = vmatmul.f32.gmra.mxu0 %v386
        %v926 = vpop.f32.mrf.mxu0
        %v927 = vadd.f32 %v622, %v926
        %928 = vmatmul.f32.gmra.mxu0 %v388
        %v929 = vpop.f32.mrf.mxu0
        %v930 = vadd.f32 %v625, %v929
        %931 = vmatmul.f32.gmra.mxu0 %v390
        %v932 = vpop.f32.mrf.mxu0
        %v933 = vadd.f32 %v628, %v932
        %934 = vmatmul.f32.gmra.mxu0 %v392
        %v935 = vpop.f32.mrf.mxu0
        %v936 = vadd.f32 %v631, %v935
        %937 = vmatmul.f32.gmra.mxu0 %v394
        %v938 = vpop.f32.mrf.mxu0
        %v939 = vadd.f32 %v634, %v938
        %940 = vmatmul.f32.gmra.mxu0 %v396
        %v941 = vpop.f32.mrf.mxu0
        %v942 = vadd.f32 %v637, %v941
        %943 = vmatmul.f32.gmra.mxu0 %v398
        %v944 = vpop.f32.mrf.mxu0
        %v945 = vadd.f32 %v640, %v944
        %946 = vmatmul.f32.gmra.mxu0 %v400
        %v947 = vpop.f32.mrf.mxu0
        %v948 = vadd.f32 %v643, %v947
        %949 = vmatmul.f32.gmra.mxu0 %v402
        %v950 = vpop.f32.mrf.mxu0
        %v951 = vadd.f32 %v646, %v950
        %952 = vmatmul.f32.gmra.mxu0 %v404
        %v953 = vpop.f32.mrf.mxu0
        %v954 = vadd.f32 %v649, %v953
        %955 = vmatmul.f32.gmra.mxu0 %v406
        %v956 = vpop.f32.mrf.mxu0
        %v957 = vadd.f32 %v652, %v956
        %958 = vmatmul.f32.gmra.mxu0 %v408
        %v959 = vpop.f32.mrf.mxu0
        %v960 = vadd.f32 %v655, %v959
        %961 = vmatmul.f32.gmra.mxu0 %v410
        %v962 = vpop.f32.mrf.mxu0
        %v963 = vadd.f32 %v658, %v962
        %964 = vmatmul.f32.gmra.mxu0 %v412
        %v965 = vpop.f32.mrf.mxu0
        %v966 = vadd.f32 %v661, %v965
        %967 = vmatmul.f32.gmra.mxu0 %v414
        %v968 = vpop.f32.mrf.mxu0
        %v969 = vadd.f32 %v664, %v968
        %970 = vmatmul.f32.gmra.mxu0 %v416
        %v971 = vpop.f32.mrf.mxu0
        %v972 = vadd.f32 %v667, %v971
        %973 = vmatmul.f32.gmra.mxu0 %v418
        %v974 = vpop.f32.mrf.mxu0
        %v975 = vadd.f32 %v670, %v974
        %976 = vmatmul.f32.gmra.mxu0 %v420
        %v977 = vpop.f32.mrf.mxu0
        %v978 = vadd.f32 %v673, %v977
        %979 = vmatmul.f32.gmra.mxu0 %v422
        %v980 = vpop.f32.mrf.mxu0
        %v981 = vadd.f32 %v676, %v980
        %982 = vmatmul.f32.gmra.mxu0 %v424
        %v983 = vpop.f32.mrf.mxu0
        %v984 = vadd.f32 %v679, %v983
        %985 = vmatmul.f32.gmra.mxu0 %v426
        %v986 = vpop.f32.mrf.mxu0
        %v987 = vadd.f32 %v682, %v986
        %988 = vmatmul.f32.gmra.mxu0 %v428
        %v989 = vpop.f32.mrf.mxu0
        %v990 = vadd.f32 %v685, %v989
        %991 = vmatmul.f32.gmra.mxu0 %v430
        %v992 = vpop.f32.mrf.mxu0
        %v993 = vadd.f32 %v688, %v992
        %994 = vmatmul.f32.gmra.mxu0 %v432
        %v995 = vpop.f32.mrf.mxu0
        %v996 = vadd.f32 %v691, %v995
        %997 = vmatmul.f32.gmra.mxu0 %v434
        %v998 = vpop.f32.mrf.mxu0
        %v999 = vadd.f32 %v694, %v998
        %1000 = vmatmul.f32.gmra.mxu0 %v436
        %v1001 = vpop.f32.mrf.mxu0
        %v1002 = vadd.f32 %v697, %v1001
        %1003 = vmatmul.f32.gmra.mxu0 %v438
        %v1004 = vpop.f32.mrf.mxu0
        %v1005 = vadd.f32 %v700, %v1004
        %1006 = vmatmul.f32.gmra.mxu0 %v440
        %v1007 = vpop.f32.mrf.mxu0
        %v1008 = vadd.f32 %v703, %v1007
        %1009 = vmatmul.f32.gmra.mxu0 %v442
        %v1010 = vpop.f32.mrf.mxu0
        %v1011 = vadd.f32 %v706, %v1010
        %1012 = vmatmul.f32.gmra.mxu0 %v444
        %v1013 = vpop.f32.mrf.mxu0
        %v1014 = vadd.f32 %v709, %v1013
        %1015 = vmatmul.f32.gmra.mxu0 %v446
        %v1016 = vpop.f32.mrf.mxu0
        %v1017 = vadd.f32 %v712, %v1016
        %1018 = vmatmul.f32.gmra.mxu0 %v448
        %v1019 = vpop.f32.mrf.mxu0
        %v1020 = vadd.f32 %v715, %v1019
        %1021 = vmatmul.f32.gmra.mxu0 %v450
        %v1022 = vpop.f32.mrf.mxu0
        %v1023 = vadd.f32 %v718, %v1022
        %1024 = vmatmul.f32.gmra.mxu0 %v452
        %v1025 = vpop.f32.mrf.mxu0
        %v1026 = vadd.f32 %v721, %v1025
        %1027 = vmatmul.f32.gmra.mxu0 %v454
        %v1028 = vpop.f32.mrf.mxu0
        %v1029 = vadd.f32 %v724, %v1028
        %1030 = vmatmul.f32.gmra.mxu0 %v456
        %v1031 = vpop.f32.mrf.mxu0
        %v1032 = vadd.f32 %v727, %v1031
        %1033 = vmatmul.f32.gmra.mxu0 %v458
        %v1034 = vpop.f32.mrf.mxu0
        %v1035 = vadd.f32 %v730, %v1034
        %1036 = vmatmul.f32.gmra.mxu0 %v460
        %v1037 = vpop.f32.mrf.mxu0
        %v1038 = vadd.f32 %v733, %v1037
        %1039 = vmatmul.f32.gmra.mxu0 %v462
        %v1040 = vpop.f32.mrf.mxu0
        %v1041 = vadd.f32 %v736, %v1040
        %1042 = vmatmul.f32.gmra.mxu0 %v464
        %v1043 = vpop.f32.mrf.mxu0
        %v1044 = vadd.f32 %v739, %v1043
        %1045 = vmatmul.f32.gmra.mxu0 %v466
        %v1046 = vpop.f32.mrf.mxu0
        %v1047 = vadd.f32 %v742, %v1046
        %1048 = vmatmul.f32.gmra.mxu0 %v468
        %v1049 = vpop.f32.mrf.mxu0
        %v1050 = vadd.f32 %v745, %v1049
        %1051 = vmatmul.f32.gmra.mxu0 %v470
        %v1052 = vpop.f32.mrf.mxu0
        %v1053 = vadd.f32 %v748, %v1052
        %1054 = vmatmul.f32.gmra.mxu0 %v472
        %v1055 = vpop.f32.mrf.mxu0
        %v1056 = vadd.f32 %v751, %v1055
        %1057 = vmatmul.f32.gmra.mxu0 %v474
        %v1058 = vpop.f32.mrf.mxu0
        %v1059 = vadd.f32 %v754, %v1058
        %1060 = vmatmul.f32.gmra.mxu0 %v476
        %v1061 = vpop.f32.mrf.mxu0
        %v1062 = vadd.f32 %v757, %v1061
        %1063 = vmatmul.f32.gmra.mxu0 %v478
        %v1064 = vpop.f32.mrf.mxu0
        %v1065 = vadd.f32 %v760, %v1064
        %1066 = vmatmul.f32.gmra.mxu0 %v480
        %v1067 = vpop.f32.mrf.mxu0
        %v1068 = vadd.f32 %v763, %v1067
        %1069 = vmatmul.f32.gmra.mxu0 %v482
        %v1070 = vpop.f32.mrf.mxu0
        %v1071 = vadd.f32 %v766, %v1070
        %1072 = vmatmul.f32.gmra.mxu0 %v484
        %v1073 = vpop.f32.mrf.mxu0
        %v1074 = vadd.f32 %v769, %v1073
        %1075 = vmatmul.f32.gmra.mxu0 %v486
        %v1076 = vpop.f32.mrf.mxu0
        %v1077 = vadd.f32 %v772, %v1076
        %1078 = vmatmul.f32.gmra.mxu0 %v488
        %v1079 = vpop.f32.mrf.mxu0
        %v1080 = vadd.f32 %v775, %v1079
        %1081 = vmatmul.f32.gmra.mxu0 %v490
        %v1082 = vpop.f32.mrf.mxu0
        %v1083 = vadd.f32 %v778, %v1082
        %1084 = vmatmul.f32.gmra.mxu0 %v492
        %v1085 = vpop.f32.mrf.mxu0
        %v1086 = vadd.f32 %v781, %v1085
        %1087 = vmatmul.f32.gmra.mxu0 %v494
        %v1088 = vpop.f32.mrf.mxu0
        %v1089 = vadd.f32 %v784, %v1088
        %1090 = vmatmul.f32.gmra.mxu0 %v496
        %v1091 = vpop.f32.mrf.mxu0
        %v1092 = vadd.f32 %v787, %v1091
        %1093 = vmatmul.f32.gmra.mxu0 %v498
        %v1094 = vpop.f32.mrf.mxu0
        %v1095 = vadd.f32 %v790, %v1094
        %1096 = vmatmul.f32.gmra.mxu0 %v500
        %v1097 = vpop.f32.mrf.mxu0
        %v1098 = vadd.f32 %v793, %v1097
        %1099 = vmatmul.f32.gmra.mxu0 %v502
        %v1100 = vpop.f32.mrf.mxu0
        %v1101 = vadd.f32 %v796, %v1100
        %1102 = vmatmul.f32.gmra.mxu0 %v504
        %v1103 = vpop.f32.mrf.mxu0
        %v1104 = vadd.f32 %v799, %v1103
        %1105 = vmatmul.f32.gmra.mxu0 %v506
        %v1106 = vpop.f32.mrf.mxu0
        %v1107 = vadd.f32 %v802, %v1106
        %1108 = vmatmul.f32.gmra.mxu0 %v508
        %v1109 = vpop.f32.mrf.mxu0
        %v1110 = vadd.f32 %v805, %v1109
        %1111 = vmatmul.f32.gmra.mxu0 %v510
        %v1112 = vpop.f32.mrf.mxu0
        %v1113 = vadd.f32 %v808, %v1112
        %1114 = vmatmul.f32.gmra.mxu0 %v512
        %v1115 = vpop.f32.mrf.mxu0
        %v1116 = vadd.f32 %v811, %v1115
        %1117 = vmatmul.f32.gmra.mxu0 %v514
        %v1118 = vpop.f32.mrf.mxu0
        %v1119 = vadd.f32 %v814, %v1118
        %1120 = vmatmul.f32.gmra.mxu0 %v516
        %v1121 = vpop.f32.mrf.mxu0
        %v1122 = vadd.f32 %v817, %v1121
        %1123 = vmatmul.f32.gmra.mxu0 %v518
        %v1124 = vpop.f32.mrf.mxu0
        %v1125 = vadd.f32 %v820, %v1124
        %1126 = vmatmul.f32.gmra.mxu0 %v520
        %v1127 = vpop.f32.mrf.mxu0
        %v1128 = vadd.f32 %v823, %v1127
        %1129 = vmatmul.f32.gmra.mxu0 %v522
        %v1130 = vpop.f32.mrf.mxu0
        %v1131 = vadd.f32 %v826, %v1130
        %1132 = vdwg.mxu0
        %1133 = vmatpush.msra.mxu0 %v242
        %1134 = vmatpush.msra.mxu0 %v240
        %1135 = vmatpush.msra.mxu0 %v238
        %1136 = vmatpush.msra.mxu0 %v236
        %1137 = vmatpush.msra.mxu0 %v234
        %1138 = vmatpush.msra.mxu0 %v232
        %1139 = vmatpush.msra.mxu0 %v230
        %1140 = vmatpush.msra.mxu0 %v228
        %1141 = vmatpush.msra.mxu0 %v226
        %1142 = vmatpush.msra.mxu0 %v224
        %1143 = vmatpush.msra.mxu0 %v222
        %1144 = vmatpush.msra.mxu0 %v220
        %1145 = vmatpush.msra.mxu0 %v218
        %1146 = vmatpush.msra.mxu0 %v216
        %1147 = vmatpush.msra.mxu0 %v214
        %1148 = vmatpush.msra.mxu0 %v212
        %1149 = vmatmul.f32.gmra.mxu0 %v331
        %v1150 = vpop.f32.mrf.mxu0
        %v1151 = vadd.f32 0.0, %v1150
        %1152 = vmatmul.f32.gmra.mxu0 %v333
        %v1153 = vpop.f32.mrf.mxu0
        %v1154 = vadd.f32 0.0, %v1153
        %1155 = vmatmul.f32.gmra.mxu0 %v335
        %v1156 = vpop.f32.mrf.mxu0
        %v1157 = vadd.f32 0.0, %v1156
        %1158 = vmatmul.f32.gmra.mxu0 %v337
        %v1159 = vpop.f32.mrf.mxu0
        %v1160 = vadd.f32 0.0, %v1159
        %1161 = vmatmul.f32.gmra.mxu0 %v339
        %v1162 = vpop.f32.mrf.mxu0
        %v1163 = vadd.f32 0.0, %v1162
        %1164 = vmatmul.f32.gmra.mxu0 %v341
        %v1165 = vpop.f32.mrf.mxu0
        %v1166 = vadd.f32 0.0, %v1165
        %1167 = vmatmul.f32.gmra.mxu0 %v343
        %v1168 = vpop.f32.mrf.mxu0
        %v1169 = vadd.f32 0.0, %v1168
        %1170 = vmatmul.f32.gmra.mxu0 %v345
        %v1171 = vpop.f32.mrf.mxu0
        %v1172 = vadd.f32 0.0, %v1171
        %1173 = vmatmul.f32.gmra.mxu0 %v347
        %v1174 = vpop.f32.mrf.mxu0
        %v1175 = vadd.f32 0.0, %v1174
        %1176 = vmatmul.f32.gmra.mxu0 %v349
        %v1177 = vpop.f32.mrf.mxu0
        %v1178 = vadd.f32 0.0, %v1177
        %1179 = vmatmul.f32.gmra.mxu0 %v351
        %v1180 = vpop.f32.mrf.mxu0
        %v1181 = vadd.f32 0.0, %v1180
        %1182 = vmatmul.f32.gmra.mxu0 %v353
        %v1183 = vpop.f32.mrf.mxu0
        %v1184 = vadd.f32 0.0, %v1183
        %1185 = vmatmul.f32.gmra.mxu0 %v355
        %v1186 = vpop.f32.mrf.mxu0
        %v1187 = vadd.f32 0.0, %v1186
        %1188 = vmatmul.f32.gmra.mxu0 %v357
        %v1189 = vpop.f32.mrf.mxu0
        %v1190 = vadd.f32 0.0, %v1189
        %1191 = vmatmul.f32.gmra.mxu0 %v359
        %v1192 = vpop.f32.mrf.mxu0
        %v1193 = vadd.f32 0.0, %v1192
        %1194 = vmatmul.f32.gmra.mxu0 %v361
        %v1195 = vpop.f32.mrf.mxu0
        %v1196 = vadd.f32 0.0, %v1195
        %1197 = vmatmul.f32.gmra.mxu0 %v363
        %v1198 = vpop.f32.mrf.mxu0
        %v1199 = vadd.f32 0.0, %v1198
        %1200 = vmatmul.f32.gmra.mxu0 %v365
        %v1201 = vpop.f32.mrf.mxu0
        %v1202 = vadd.f32 0.0, %v1201
        %1203 = vmatmul.f32.gmra.mxu0 %v367
        %v1204 = vpop.f32.mrf.mxu0
        %v1205 = vadd.f32 0.0, %v1204
        %1206 = vmatmul.f32.gmra.mxu0 %v369
        %v1207 = vpop.f32.mrf.mxu0
        %v1208 = vadd.f32 0.0, %v1207
        %1209 = vmatmul.f32.gmra.mxu0 %v371
        %v1210 = vpop.f32.mrf.mxu0
        %v1211 = vadd.f32 0.0, %v1210
        %1212 = vmatmul.f32.gmra.mxu0 %v373
        %v1213 = vpop.f32.mrf.mxu0
        %v1214 = vadd.f32 0.0, %v1213
        %1215 = vmatmul.f32.gmra.mxu0 %v375
        %v1216 = vpop.f32.mrf.mxu0
        %v1217 = vadd.f32 0.0, %v1216
        %1218 = vmatmul.f32.gmra.mxu0 %v377
        %v1219 = vpop.f32.mrf.mxu0
        %v1220 = vadd.f32 0.0, %v1219
        %1221 = vmatmul.f32.gmra.mxu0 %v379
        %v1222 = vpop.f32.mrf.mxu0
        %v1223 = vadd.f32 0.0, %v1222
        %1224 = vmatmul.f32.gmra.mxu0 %v381
        %v1225 = vpop.f32.mrf.mxu0
        %v1226 = vadd.f32 0.0, %v1225
        %1227 = vmatmul.f32.gmra.mxu0 %v383
        %v1228 = vpop.f32.mrf.mxu0
        %v1229 = vadd.f32 0.0, %v1228
        %1230 = vmatmul.f32.gmra.mxu0 %v385
        %v1231 = vpop.f32.mrf.mxu0
        %v1232 = vadd.f32 0.0, %v1231
        %1233 = vmatmul.f32.gmra.mxu0 %v387
        %v1234 = vpop.f32.mrf.mxu0
        %v1235 = vadd.f32 0.0, %v1234
        %1236 = vmatmul.f32.gmra.mxu0 %v389
        %v1237 = vpop.f32.mrf.mxu0
        %v1238 = vadd.f32 0.0, %v1237
        %1239 = vmatmul.f32.gmra.mxu0 %v391
        %v1240 = vpop.f32.mrf.mxu0
        %v1241 = vadd.f32 0.0, %v1240
        %1242 = vmatmul.f32.gmra.mxu0 %v393
        %v1243 = vpop.f32.mrf.mxu0
        %v1244 = vadd.f32 0.0, %v1243
        %1245 = vmatmul.f32.gmra.mxu0 %v395
        %v1246 = vpop.f32.mrf.mxu0
        %v1247 = vadd.f32 0.0, %v1246
        %1248 = vmatmul.f32.gmra.mxu0 %v397
        %v1249 = vpop.f32.mrf.mxu0
        %v1250 = vadd.f32 0.0, %v1249
        %1251 = vmatmul.f32.gmra.mxu0 %v399
        %v1252 = vpop.f32.mrf.mxu0
        %v1253 = vadd.f32 0.0, %v1252
        %1254 = vmatmul.f32.gmra.mxu0 %v401
        %v1255 = vpop.f32.mrf.mxu0
        %v1256 = vadd.f32 0.0, %v1255
        %1257 = vmatmul.f32.gmra.mxu0 %v403
        %v1258 = vpop.f32.mrf.mxu0
        %v1259 = vadd.f32 0.0, %v1258
        %1260 = vmatmul.f32.gmra.mxu0 %v405
        %v1261 = vpop.f32.mrf.mxu0
        %v1262 = vadd.f32 0.0, %v1261
        %1263 = vmatmul.f32.gmra.mxu0 %v407
        %v1264 = vpop.f32.mrf.mxu0
        %v1265 = vadd.f32 0.0, %v1264
        %1266 = vmatmul.f32.gmra.mxu0 %v409
        %v1267 = vpop.f32.mrf.mxu0
        %v1268 = vadd.f32 0.0, %v1267
        %1269 = vmatmul.f32.gmra.mxu0 %v411
        %v1270 = vpop.f32.mrf.mxu0
        %v1271 = vadd.f32 0.0, %v1270
        %1272 = vmatmul.f32.gmra.mxu0 %v413
        %v1273 = vpop.f32.mrf.mxu0
        %v1274 = vadd.f32 0.0, %v1273
        %1275 = vmatmul.f32.gmra.mxu0 %v415
        %v1276 = vpop.f32.mrf.mxu0
        %v1277 = vadd.f32 0.0, %v1276
        %1278 = vmatmul.f32.gmra.mxu0 %v417
        %v1279 = vpop.f32.mrf.mxu0
        %v1280 = vadd.f32 0.0, %v1279
        %1281 = vmatmul.f32.gmra.mxu0 %v419
        %v1282 = vpop.f32.mrf.mxu0
        %v1283 = vadd.f32 0.0, %v1282
        %1284 = vmatmul.f32.gmra.mxu0 %v421
        %v1285 = vpop.f32.mrf.mxu0
        %v1286 = vadd.f32 0.0, %v1285
        %1287 = vmatmul.f32.gmra.mxu0 %v423
        %v1288 = vpop.f32.mrf.mxu0
        %v1289 = vadd.f32 0.0, %v1288
        %1290 = vmatmul.f32.gmra.mxu0 %v425
        %v1291 = vpop.f32.mrf.mxu0
        %v1292 = vadd.f32 0.0, %v1291
        %1293 = vmatmul.f32.gmra.mxu0 %v427
        %v1294 = vpop.f32.mrf.mxu0
        %v1295 = vadd.f32 0.0, %v1294
        %1296 = vmatmul.f32.gmra.mxu0 %v429
        %v1297 = vpop.f32.mrf.mxu0
        %v1298 = vadd.f32 0.0, %v1297
        %1299 = vmatmul.f32.gmra.mxu0 %v431
        %v1300 = vpop.f32.mrf.mxu0
        %v1301 = vadd.f32 0.0, %v1300
        %1302 = vmatmul.f32.gmra.mxu0 %v433
        %v1303 = vpop.f32.mrf.mxu0
        %v1304 = vadd.f32 0.0, %v1303
        %1305 = vmatmul.f32.gmra.mxu0 %v435
        %v1306 = vpop.f32.mrf.mxu0
        %v1307 = vadd.f32 0.0, %v1306
        %1308 = vmatmul.f32.gmra.mxu0 %v437
        %v1309 = vpop.f32.mrf.mxu0
        %v1310 = vadd.f32 0.0, %v1309
        %1311 = vmatmul.f32.gmra.mxu0 %v439
        %v1312 = vpop.f32.mrf.mxu0
        %v1313 = vadd.f32 0.0, %v1312
        %1314 = vmatmul.f32.gmra.mxu0 %v441
        %v1315 = vpop.f32.mrf.mxu0
        %v1316 = vadd.f32 0.0, %v1315
        %1317 = vmatmul.f32.gmra.mxu0 %v443
        %v1318 = vpop.f32.mrf.mxu0
        %v1319 = vadd.f32 0.0, %v1318
        %1320 = vmatmul.f32.gmra.mxu0 %v445
        %v1321 = vpop.f32.mrf.mxu0
        %v1322 = vadd.f32 0.0, %v1321
        %1323 = vmatmul.f32.gmra.mxu0 %v447
        %v1324 = vpop.f32.mrf.mxu0
        %v1325 = vadd.f32 0.0, %v1324
        %1326 = vmatmul.f32.gmra.mxu0 %v449
        %v1327 = vpop.f32.mrf.mxu0
        %v1328 = vadd.f32 0.0, %v1327
        %1329 = vmatmul.f32.gmra.mxu0 %v451
        %v1330 = vpop.f32.mrf.mxu0
        %v1331 = vadd.f32 0.0, %v1330
        %1332 = vmatmul.f32.gmra.mxu0 %v453
        %v1333 = vpop.f32.mrf.mxu0
        %v1334 = vadd.f32 0.0, %v1333
        %1335 = vmatmul.f32.gmra.mxu0 %v455
        %v1336 = vpop.f32.mrf.mxu0
        %v1337 = vadd.f32 0.0, %v1336
        %1338 = vmatmul.f32.gmra.mxu0 %v457
        %v1339 = vpop.f32.mrf.mxu0
        %v1340 = vadd.f32 0.0, %v1339
        %1341 = vmatmul.f32.gmra.mxu0 %v459
        %v1342 = vpop.f32.mrf.mxu0
        %v1343 = vadd.f32 0.0, %v1342
        %1344 = vmatmul.f32.gmra.mxu0 %v461
        %v1345 = vpop.f32.mrf.mxu0
        %v1346 = vadd.f32 0.0, %v1345
        %1347 = vmatmul.f32.gmra.mxu0 %v463
        %v1348 = vpop.f32.mrf.mxu0
        %v1349 = vadd.f32 0.0, %v1348
        %1350 = vmatmul.f32.gmra.mxu0 %v465
        %v1351 = vpop.f32.mrf.mxu0
        %v1352 = vadd.f32 0.0, %v1351
        %1353 = vmatmul.f32.gmra.mxu0 %v467
        %v1354 = vpop.f32.mrf.mxu0
        %v1355 = vadd.f32 0.0, %v1354
        %1356 = vmatmul.f32.gmra.mxu0 %v469
        %v1357 = vpop.f32.mrf.mxu0
        %v1358 = vadd.f32 0.0, %v1357
        %1359 = vmatmul.f32.gmra.mxu0 %v471
        %v1360 = vpop.f32.mrf.mxu0
        %v1361 = vadd.f32 0.0, %v1360
        %1362 = vmatmul.f32.gmra.mxu0 %v473
        %v1363 = vpop.f32.mrf.mxu0
        %v1364 = vadd.f32 0.0, %v1363
        %1365 = vmatmul.f32.gmra.mxu0 %v475
        %v1366 = vpop.f32.mrf.mxu0
        %v1367 = vadd.f32 0.0, %v1366
        %1368 = vmatmul.f32.gmra.mxu0 %v477
        %v1369 = vpop.f32.mrf.mxu0
        %v1370 = vadd.f32 0.0, %v1369
        %1371 = vmatmul.f32.gmra.mxu0 %v479
        %v1372 = vpop.f32.mrf.mxu0
        %v1373 = vadd.f32 0.0, %v1372
        %1374 = vmatmul.f32.gmra.mxu0 %v481
        %v1375 = vpop.f32.mrf.mxu0
        %v1376 = vadd.f32 0.0, %v1375
        %1377 = vmatmul.f32.gmra.mxu0 %v483
        %v1378 = vpop.f32.mrf.mxu0
        %v1379 = vadd.f32 0.0, %v1378
        %1380 = vmatmul.f32.gmra.mxu0 %v485
        %v1381 = vpop.f32.mrf.mxu0
        %v1382 = vadd.f32 0.0, %v1381
        %1383 = vmatmul.f32.gmra.mxu0 %v487
        %v1384 = vpop.f32.mrf.mxu0
        %v1385 = vadd.f32 0.0, %v1384
        %1386 = vmatmul.f32.gmra.mxu0 %v489
        %v1387 = vpop.f32.mrf.mxu0
        %v1388 = vadd.f32 0.0, %v1387
        %1389 = vmatmul.f32.gmra.mxu0 %v491
        %v1390 = vpop.f32.mrf.mxu0
        %v1391 = vadd.f32 0.0, %v1390
        %1392 = vmatmul.f32.gmra.mxu0 %v493
        %v1393 = vpop.f32.mrf.mxu0
        %v1394 = vadd.f32 0.0, %v1393
        %1395 = vmatmul.f32.gmra.mxu0 %v495
        %v1396 = vpop.f32.mrf.mxu0
        %v1397 = vadd.f32 0.0, %v1396
        %1398 = vmatmul.f32.gmra.mxu0 %v497
        %v1399 = vpop.f32.mrf.mxu0
        %v1400 = vadd.f32 0.0, %v1399
        %1401 = vmatmul.f32.gmra.mxu0 %v499
        %v1402 = vpop.f32.mrf.mxu0
        %v1403 = vadd.f32 0.0, %v1402
        %1404 = vmatmul.f32.gmra.mxu0 %v501
        %v1405 = vpop.f32.mrf.mxu0
        %v1406 = vadd.f32 0.0, %v1405
        %1407 = vmatmul.f32.gmra.mxu0 %v503
        %v1408 = vpop.f32.mrf.mxu0
        %v1409 = vadd.f32 0.0, %v1408
        %1410 = vmatmul.f32.gmra.mxu0 %v505
        %v1411 = vpop.f32.mrf.mxu0
        %v1412 = vadd.f32 0.0, %v1411
        %1413 = vmatmul.f32.gmra.mxu0 %v507
        %v1414 = vpop.f32.mrf.mxu0
        %v1415 = vadd.f32 0.0, %v1414
        %1416 = vmatmul.f32.gmra.mxu0 %v509
        %v1417 = vpop.f32.mrf.mxu0
        %v1418 = vadd.f32 0.0, %v1417
        %1419 = vmatmul.f32.gmra.mxu0 %v511
        %v1420 = vpop.f32.mrf.mxu0
        %v1421 = vadd.f32 0.0, %v1420
        %1422 = vmatmul.f32.gmra.mxu0 %v513
        %v1423 = vpop.f32.mrf.mxu0
        %v1424 = vadd.f32 0.0, %v1423
        %1425 = vmatmul.f32.gmra.mxu0 %v515
        %v1426 = vpop.f32.mrf.mxu0
        %v1427 = vadd.f32 0.0, %v1426
        %1428 = vmatmul.f32.gmra.mxu0 %v517
        %v1429 = vpop.f32.mrf.mxu0
        %v1430 = vadd.f32 0.0, %v1429
        %1431 = vmatmul.f32.gmra.mxu0 %v519
        %v1432 = vpop.f32.mrf.mxu0
        %v1433 = vadd.f32 0.0, %v1432
        %1434 = vmatmul.f32.gmra.mxu0 %v521
        %v1435 = vpop.f32.mrf.mxu0
        %v1436 = vadd.f32 0.0, %v1435
        %1437 = vdwg.mxu0
        %1438 = vmatpush.msra.mxu0 %v274
        %1439 = vmatpush.msra.mxu0 %v272
        %1440 = vmatpush.msra.mxu0 %v270
        %1441 = vmatpush.msra.mxu0 %v268
        %1442 = vmatpush.msra.mxu0 %v266
        %1443 = vmatpush.msra.mxu0 %v264
        %1444 = vmatpush.msra.mxu0 %v262
        %1445 = vmatpush.msra.mxu0 %v260
        %1446 = vmatpush.msra.mxu0 %v258
        %1447 = vmatpush.msra.mxu0 %v256
        %1448 = vmatpush.msra.mxu0 %v254
        %1449 = vmatpush.msra.mxu0 %v252
        %1450 = vmatpush.msra.mxu0 %v250
        %1451 = vmatpush.msra.mxu0 %v248
        %1452 = vmatpush.msra.mxu0 %v246
        %1453 = vmatpush.msra.mxu0 %v244
        %1454 = vmatmul.f32.gmra.mxu0 %v332
        %v1455 = vpop.f32.mrf.mxu0
        %v1456 = vadd.f32 %v1151, %v1455
        %1457 = vmatmul.f32.gmra.mxu0 %v334
        %v1458 = vpop.f32.mrf.mxu0
        %v1459 = vadd.f32 %v1154, %v1458
        %1460 = vmatmul.f32.gmra.mxu0 %v336
        %v1461 = vpop.f32.mrf.mxu0
        %v1462 = vadd.f32 %v1157, %v1461
        %1463 = vmatmul.f32.gmra.mxu0 %v338
        %v1464 = vpop.f32.mrf.mxu0
        %v1465 = vadd.f32 %v1160, %v1464
        %1466 = vmatmul.f32.gmra.mxu0 %v340
        %v1467 = vpop.f32.mrf.mxu0
        %v1468 = vadd.f32 %v1163, %v1467
        %1469 = vmatmul.f32.gmra.mxu0 %v342
        %v1470 = vpop.f32.mrf.mxu0
        %v1471 = vadd.f32 %v1166, %v1470
        %1472 = vmatmul.f32.gmra.mxu0 %v344
        %v1473 = vpop.f32.mrf.mxu0
        %v1474 = vadd.f32 %v1169, %v1473
        %1475 = vmatmul.f32.gmra.mxu0 %v346
        %v1476 = vpop.f32.mrf.mxu0
        %v1477 = vadd.f32 %v1172, %v1476
        %1478 = vmatmul.f32.gmra.mxu0 %v348
        %v1479 = vpop.f32.mrf.mxu0
        %v1480 = vadd.f32 %v1175, %v1479
        %1481 = vmatmul.f32.gmra.mxu0 %v350
        %v1482 = vpop.f32.mrf.mxu0
        %v1483 = vadd.f32 %v1178, %v1482
        %1484 = vmatmul.f32.gmra.mxu0 %v352
        %v1485 = vpop.f32.mrf.mxu0
        %v1486 = vadd.f32 %v1181, %v1485
        %1487 = vmatmul.f32.gmra.mxu0 %v354
        %v1488 = vpop.f32.mrf.mxu0
        %v1489 = vadd.f32 %v1184, %v1488
        %1490 = vmatmul.f32.gmra.mxu0 %v356
        %v1491 = vpop.f32.mrf.mxu0
        %v1492 = vadd.f32 %v1187, %v1491
        %1493 = vmatmul.f32.gmra.mxu0 %v358
        %v1494 = vpop.f32.mrf.mxu0
        %v1495 = vadd.f32 %v1190, %v1494
        %1496 = vmatmul.f32.gmra.mxu0 %v360
        %v1497 = vpop.f32.mrf.mxu0
        %v1498 = vadd.f32 %v1193, %v1497
        %1499 = vmatmul.f32.gmra.mxu0 %v362
        %v1500 = vpop.f32.mrf.mxu0
        %v1501 = vadd.f32 %v1196, %v1500
        %1502 = vmatmul.f32.gmra.mxu0 %v364
        %v1503 = vpop.f32.mrf.mxu0
        %v1504 = vadd.f32 %v1199, %v1503
        %1505 = vmatmul.f32.gmra.mxu0 %v366
        %v1506 = vpop.f32.mrf.mxu0
        %v1507 = vadd.f32 %v1202, %v1506
        %1508 = vmatmul.f32.gmra.mxu0 %v368
        %v1509 = vpop.f32.mrf.mxu0
        %v1510 = vadd.f32 %v1205, %v1509
        %1511 = vmatmul.f32.gmra.mxu0 %v370
        %v1512 = vpop.f32.mrf.mxu0
        %v1513 = vadd.f32 %v1208, %v1512
        %1514 = vmatmul.f32.gmra.mxu0 %v372
        %v1515 = vpop.f32.mrf.mxu0
        %v1516 = vadd.f32 %v1211, %v1515
        %1517 = vmatmul.f32.gmra.mxu0 %v374
        %v1518 = vpop.f32.mrf.mxu0
        %v1519 = vadd.f32 %v1214, %v1518
        %1520 = vmatmul.f32.gmra.mxu0 %v376
        %v1521 = vpop.f32.mrf.mxu0
        %v1522 = vadd.f32 %v1217, %v1521
        %1523 = vmatmul.f32.gmra.mxu0 %v378
        %v1524 = vpop.f32.mrf.mxu0
        %v1525 = vadd.f32 %v1220, %v1524
        %1526 = vmatmul.f32.gmra.mxu0 %v380
        %v1527 = vpop.f32.mrf.mxu0
        %v1528 = vadd.f32 %v1223, %v1527
        %1529 = vmatmul.f32.gmra.mxu0 %v382
        %v1530 = vpop.f32.mrf.mxu0
        %v1531 = vadd.f32 %v1226, %v1530
        %1532 = vmatmul.f32.gmra.mxu0 %v384
        %v1533 = vpop.f32.mrf.mxu0
        %v1534 = vadd.f32 %v1229, %v1533
        %1535 = vmatmul.f32.gmra.mxu0 %v386
        %v1536 = vpop.f32.mrf.mxu0
        %v1537 = vadd.f32 %v1232, %v1536
        %1538 = vmatmul.f32.gmra.mxu0 %v388
        %v1539 = vpop.f32.mrf.mxu0
        %v1540 = vadd.f32 %v1235, %v1539
        %1541 = vmatmul.f32.gmra.mxu0 %v390
        %v1542 = vpop.f32.mrf.mxu0
        %v1543 = vadd.f32 %v1238, %v1542
        %1544 = vmatmul.f32.gmra.mxu0 %v392
        %v1545 = vpop.f32.mrf.mxu0
        %v1546 = vadd.f32 %v1241, %v1545
        %1547 = vmatmul.f32.gmra.mxu0 %v394
        %v1548 = vpop.f32.mrf.mxu0
        %v1549 = vadd.f32 %v1244, %v1548
        %1550 = vmatmul.f32.gmra.mxu0 %v396
        %v1551 = vpop.f32.mrf.mxu0
        %v1552 = vadd.f32 %v1247, %v1551
        %1553 = vmatmul.f32.gmra.mxu0 %v398
        %v1554 = vpop.f32.mrf.mxu0
        %v1555 = vadd.f32 %v1250, %v1554
        %1556 = vmatmul.f32.gmra.mxu0 %v400
        %v1557 = vpop.f32.mrf.mxu0
        %v1558 = vadd.f32 %v1253, %v1557
        %1559 = vmatmul.f32.gmra.mxu0 %v402
        %v1560 = vpop.f32.mrf.mxu0
        %v1561 = vadd.f32 %v1256, %v1560
        %1562 = vmatmul.f32.gmra.mxu0 %v404
        %v1563 = vpop.f32.mrf.mxu0
        %v1564 = vadd.f32 %v1259, %v1563
        %1565 = vmatmul.f32.gmra.mxu0 %v406
        %v1566 = vpop.f32.mrf.mxu0
        %v1567 = vadd.f32 %v1262, %v1566
        %1568 = vmatmul.f32.gmra.mxu0 %v408
        %v1569 = vpop.f32.mrf.mxu0
        %v1570 = vadd.f32 %v1265, %v1569
        %1571 = vmatmul.f32.gmra.mxu0 %v410
        %v1572 = vpop.f32.mrf.mxu0
        %v1573 = vadd.f32 %v1268, %v1572
        %1574 = vmatmul.f32.gmra.mxu0 %v412
        %v1575 = vpop.f32.mrf.mxu0
        %v1576 = vadd.f32 %v1271, %v1575
        %1577 = vmatmul.f32.gmra.mxu0 %v414
        %v1578 = vpop.f32.mrf.mxu0
        %v1579 = vadd.f32 %v1274, %v1578
        %1580 = vmatmul.f32.gmra.mxu0 %v416
        %v1581 = vpop.f32.mrf.mxu0
        %v1582 = vadd.f32 %v1277, %v1581
        %1583 = vmatmul.f32.gmra.mxu0 %v418
        %v1584 = vpop.f32.mrf.mxu0
        %v1585 = vadd.f32 %v1280, %v1584
        %1586 = vmatmul.f32.gmra.mxu0 %v420
        %v1587 = vpop.f32.mrf.mxu0
        %v1588 = vadd.f32 %v1283, %v1587
        %1589 = vmatmul.f32.gmra.mxu0 %v422
        %v1590 = vpop.f32.mrf.mxu0
        %v1591 = vadd.f32 %v1286, %v1590
        %1592 = vmatmul.f32.gmra.mxu0 %v424
        %v1593 = vpop.f32.mrf.mxu0
        %v1594 = vadd.f32 %v1289, %v1593
        %1595 = vmatmul.f32.gmra.mxu0 %v426
        %v1596 = vpop.f32.mrf.mxu0
        %v1597 = vadd.f32 %v1292, %v1596
        %1598 = vmatmul.f32.gmra.mxu0 %v428
        %v1599 = vpop.f32.mrf.mxu0
        %v1600 = vadd.f32 %v1295, %v1599
        %1601 = vmatmul.f32.gmra.mxu0 %v430
        %v1602 = vpop.f32.mrf.mxu0
        %v1603 = vadd.f32 %v1298, %v1602
        %1604 = vmatmul.f32.gmra.mxu0 %v432
        %v1605 = vpop.f32.mrf.mxu0
        %v1606 = vadd.f32 %v1301, %v1605
        %1607 = vmatmul.f32.gmra.mxu0 %v434
        %v1608 = vpop.f32.mrf.mxu0
        %v1609 = vadd.f32 %v1304, %v1608
        %1610 = vmatmul.f32.gmra.mxu0 %v436
        %v1611 = vpop.f32.mrf.mxu0
        %v1612 = vadd.f32 %v1307, %v1611
        %1613 = vmatmul.f32.gmra.mxu0 %v438
        %v1614 = vpop.f32.mrf.mxu0
        %v1615 = vadd.f32 %v1310, %v1614
        %1616 = vmatmul.f32.gmra.mxu0 %v440
        %v1617 = vpop.f32.mrf.mxu0
        %v1618 = vadd.f32 %v1313, %v1617
        %1619 = vmatmul.f32.gmra.mxu0 %v442
        %v1620 = vpop.f32.mrf.mxu0
        %v1621 = vadd.f32 %v1316, %v1620
        %1622 = vmatmul.f32.gmra.mxu0 %v444
        %v1623 = vpop.f32.mrf.mxu0
        %v1624 = vadd.f32 %v1319, %v1623
        %1625 = vmatmul.f32.gmra.mxu0 %v446
        %v1626 = vpop.f32.mrf.mxu0
        %v1627 = vadd.f32 %v1322, %v1626
        %1628 = vmatmul.f32.gmra.mxu0 %v448
        %v1629 = vpop.f32.mrf.mxu0
        %v1630 = vadd.f32 %v1325, %v1629
        %1631 = vmatmul.f32.gmra.mxu0 %v450
        %v1632 = vpop.f32.mrf.mxu0
        %v1633 = vadd.f32 %v1328, %v1632
        %1634 = vmatmul.f32.gmra.mxu0 %v452
        %v1635 = vpop.f32.mrf.mxu0
        %v1636 = vadd.f32 %v1331, %v1635
        %1637 = vmatmul.f32.gmra.mxu0 %v454
        %v1638 = vpop.f32.mrf.mxu0
        %v1639 = vadd.f32 %v1334, %v1638
        %1640 = vmatmul.f32.gmra.mxu0 %v456
        %v1641 = vpop.f32.mrf.mxu0
        %v1642 = vadd.f32 %v1337, %v1641
        %1643 = vmatmul.f32.gmra.mxu0 %v458
        %v1644 = vpop.f32.mrf.mxu0
        %v1645 = vadd.f32 %v1340, %v1644
        %1646 = vmatmul.f32.gmra.mxu0 %v460
        %v1647 = vpop.f32.mrf.mxu0
        %v1648 = vadd.f32 %v1343, %v1647
        %1649 = vmatmul.f32.gmra.mxu0 %v462
        %v1650 = vpop.f32.mrf.mxu0
        %v1651 = vadd.f32 %v1346, %v1650
        %1652 = vmatmul.f32.gmra.mxu0 %v464
        %v1653 = vpop.f32.mrf.mxu0
        %v1654 = vadd.f32 %v1349, %v1653
        %1655 = vmatmul.f32.gmra.mxu0 %v466
        %v1656 = vpop.f32.mrf.mxu0
        %v1657 = vadd.f32 %v1352, %v1656
        %1658 = vmatmul.f32.gmra.mxu0 %v468
        %v1659 = vpop.f32.mrf.mxu0
        %v1660 = vadd.f32 %v1355, %v1659
        %1661 = vmatmul.f32.gmra.mxu0 %v470
        %v1662 = vpop.f32.mrf.mxu0
        %v1663 = vadd.f32 %v1358, %v1662
        %1664 = vmatmul.f32.gmra.mxu0 %v472
        %v1665 = vpop.f32.mrf.mxu0
        %v1666 = vadd.f32 %v1361, %v1665
        %1667 = vmatmul.f32.gmra.mxu0 %v474
        %v1668 = vpop.f32.mrf.mxu0
        %v1669 = vadd.f32 %v1364, %v1668
        %1670 = vmatmul.f32.gmra.mxu0 %v476
        %v1671 = vpop.f32.mrf.mxu0
        %v1672 = vadd.f32 %v1367, %v1671
        %1673 = vmatmul.f32.gmra.mxu0 %v478
        %v1674 = vpop.f32.mrf.mxu0
        %v1675 = vadd.f32 %v1370, %v1674
        %1676 = vmatmul.f32.gmra.mxu0 %v480
        %v1677 = vpop.f32.mrf.mxu0
        %v1678 = vadd.f32 %v1373, %v1677
        %1679 = vmatmul.f32.gmra.mxu0 %v482
        %v1680 = vpop.f32.mrf.mxu0
        %v1681 = vadd.f32 %v1376, %v1680
        %1682 = vmatmul.f32.gmra.mxu0 %v484
        %v1683 = vpop.f32.mrf.mxu0
        %v1684 = vadd.f32 %v1379, %v1683
        %1685 = vmatmul.f32.gmra.mxu0 %v486
        %v1686 = vpop.f32.mrf.mxu0
        %v1687 = vadd.f32 %v1382, %v1686
        %1688 = vmatmul.f32.gmra.mxu0 %v488
        %v1689 = vpop.f32.mrf.mxu0
        %v1690 = vadd.f32 %v1385, %v1689
        %1691 = vmatmul.f32.gmra.mxu0 %v490
        %v1692 = vpop.f32.mrf.mxu0
        %v1693 = vadd.f32 %v1388, %v1692
        %1694 = vmatmul.f32.gmra.mxu0 %v492
        %v1695 = vpop.f32.mrf.mxu0
        %v1696 = vadd.f32 %v1391, %v1695
        %1697 = vmatmul.f32.gmra.mxu0 %v494
        %v1698 = vpop.f32.mrf.mxu0
        %v1699 = vadd.f32 %v1394, %v1698
        %1700 = vmatmul.f32.gmra.mxu0 %v496
        %v1701 = vpop.f32.mrf.mxu0
        %v1702 = vadd.f32 %v1397, %v1701
        %1703 = vmatmul.f32.gmra.mxu0 %v498
        %v1704 = vpop.f32.mrf.mxu0
        %v1705 = vadd.f32 %v1400, %v1704
        %1706 = vmatmul.f32.gmra.mxu0 %v500
        %v1707 = vpop.f32.mrf.mxu0
        %v1708 = vadd.f32 %v1403, %v1707
        %1709 = vmatmul.f32.gmra.mxu0 %v502
        %v1710 = vpop.f32.mrf.mxu0
        %v1711 = vadd.f32 %v1406, %v1710
        %1712 = vmatmul.f32.gmra.mxu0 %v504
        %v1713 = vpop.f32.mrf.mxu0
        %v1714 = vadd.f32 %v1409, %v1713
        %1715 = vmatmul.f32.gmra.mxu0 %v506
        %v1716 = vpop.f32.mrf.mxu0
        %v1717 = vadd.f32 %v1412, %v1716
        %1718 = vmatmul.f32.gmra.mxu0 %v508
        %v1719 = vpop.f32.mrf.mxu0
        %v1720 = vadd.f32 %v1415, %v1719
        %1721 = vmatmul.f32.gmra.mxu0 %v510
        %v1722 = vpop.f32.mrf.mxu0
        %v1723 = vadd.f32 %v1418, %v1722
        %1724 = vmatmul.f32.gmra.mxu0 %v512
        %v1725 = vpop.f32.mrf.mxu0
        %v1726 = vadd.f32 %v1421, %v1725
        %1727 = vmatmul.f32.gmra.mxu0 %v514
        %v1728 = vpop.f32.mrf.mxu0
        %v1729 = vadd.f32 %v1424, %v1728
        %1730 = vmatmul.f32.gmra.mxu0 %v516
        %v1731 = vpop.f32.mrf.mxu0
        %v1732 = vadd.f32 %v1427, %v1731
        %1733 = vmatmul.f32.gmra.mxu0 %v518
        %v1734 = vpop.f32.mrf.mxu0
        %v1735 = vadd.f32 %v1430, %v1734
        %1736 = vmatmul.f32.gmra.mxu0 %v520
        %v1737 = vpop.f32.mrf.mxu0
        %v1738 = vadd.f32 %v1433, %v1737
        %1739 = vmatmul.f32.gmra.mxu0 %v522
        %v1740 = vpop.f32.mrf.mxu0
        %v1741 = vadd.f32 %v1436, %v1740
        %1742 = vdwg.mxu0
        %1743 = vst [vmem:[#allocation2] sm:$0xff] %v846
        %vm1744 = vcmask 785408
        %1745 = vst.msk [vmem:[#allocation2 + $0x8] sm:$0xff] %vm1744, %v1456
        %1746 = vst [vmem:[#allocation2 + $0x10] sm:$0xff] %v849
        %1747 = vst.msk [vmem:[#allocation2 + $0x18] sm:$0xff] %vm1744, %v1459
        %1748 = vst [vmem:[#allocation2 + $0x20] sm:$0xff] %v852
        %1749 = vst.msk [vmem:[#allocation2 + $0x28] sm:$0xff] %vm1744, %v1462
        %1750 = vst [vmem:[#allocation2 + $0x30] sm:$0xff] %v855
        %1751 = vst.msk [vmem:[#allocation2 + $0x38] sm:$0xff] %vm1744, %v1465
        %1752 = vst [vmem:[#allocation2 + $0x40] sm:$0xff] %v858
        %1753 = vst.msk [vmem:[#allocation2 + $0x48] sm:$0xff] %vm1744, %v1468
        %1754 = vst [vmem:[#allocation2 + $0x50] sm:$0xff] %v861
        %1755 = vst.msk [vmem:[#allocation2 + $0x58] sm:$0xff] %vm1744, %v1471
        %1756 = vst [vmem:[#allocation2 + $0x60] sm:$0xff] %v864
        %1757 = vst.msk [vmem:[#allocation2 + $0x68] sm:$0xff] %vm1744, %v1474
        %1758 = vst [vmem:[#allocation2 + $0x70] sm:$0xff] %v867
        %1759 = vst.msk [vmem:[#allocation2 + $0x78] sm:$0xff] %vm1744, %v1477
        %1760 = vst [vmem:[#allocation2 + $0x80] sm:$0xff] %v870
        %1761 = vst.msk [vmem:[#allocation2 + $0x88] sm:$0xff] %vm1744, %v1480
        %1762 = vst [vmem:[#allocation2 + $0x90] sm:$0xff] %v873
        %1763 = vst.msk [vmem:[#allocation2 + $0x98] sm:$0xff] %vm1744, %v1483
        %1764 = vst [vmem:[#allocation2 + $0xa0] sm:$0xff] %v876
        %1765 = vst.msk [vmem:[#allocation2 + $0xa8] sm:$0xff] %vm1744, %v1486
        %1766 = vst [vmem:[#allocation2 + $0xb0] sm:$0xff] %v879
        %1767 = vst.msk [vmem:[#allocation2 + $0xb8] sm:$0xff] %vm1744, %v1489
        %1768 = vst [vmem:[#allocation2 + $0xc0] sm:$0xff] %v882
        %1769 = vst.msk [vmem:[#allocation2 + $0xc8] sm:$0xff] %vm1744, %v1492
        %1770 = vst [vmem:[#allocation2 + $0xd0] sm:$0xff] %v885
        %1771 = vst.msk [vmem:[#allocation2 + $0xd8] sm:$0xff] %vm1744, %v1495
        %1772 = vst [vmem:[#allocation2 + $0xe0] sm:$0xff] %v888
        %1773 = vst.msk [vmem:[#allocation2 + $0xe8] sm:$0xff] %vm1744, %v1498
        %1774 = vst [vmem:[#allocation2 + $0xf0] sm:$0xff] %v891
        %1775 = vst.msk [vmem:[#allocation2 + $0xf8] sm:$0xff] %vm1744, %v1501
        %1776 = vst [vmem:[#allocation2 + $0x100] sm:$0xff] %v894
        %1777 = vst.msk [vmem:[#allocation2 + $0x108] sm:$0xff] %vm1744, %v1504
        %1778 = vst [vmem:[#allocation2 + $0x110] sm:$0xff] %v897
        %1779 = vst.msk [vmem:[#allocation2 + $0x118] sm:$0xff] %vm1744, %v1507
        %1780 = vst [vmem:[#allocation2 + $0x120] sm:$0xff] %v900
        %1781 = vst.msk [vmem:[#allocation2 + $0x128] sm:$0xff] %vm1744, %v1510
        %1782 = vst [vmem:[#allocation2 + $0x130] sm:$0xff] %v903
        %1783 = vst.msk [vmem:[#allocation2 + $0x138] sm:$0xff] %vm1744, %v1513
        %1784 = vst [vmem:[#allocation2 + $0x140] sm:$0xff] %v906
        %1785 = vst.msk [vmem:[#allocation2 + $0x148] sm:$0xff] %vm1744, %v1516
        %1786 = vst [vmem:[#allocation2 + $0x150] sm:$0xff] %v909
        %1787 = vst.msk [vmem:[#allocation2 + $0x158] sm:$0xff] %vm1744, %v1519
        %1788 = vst [vmem:[#allocation2 + $0x160] sm:$0xff] %v912
        %1789 = vst.msk [vmem:[#allocation2 + $0x168] sm:$0xff] %vm1744, %v1522
        %1790 = vst [vmem:[#allocation2 + $0x170] sm:$0xff] %v915
        %1791 = vst.msk [vmem:[#allocation2 + $0x178] sm:$0xff] %vm1744, %v1525
        %1792 = vst [vmem:[#allocation2 + $0x180] sm:$0xff] %v918
        %1793 = vst.msk [vmem:[#allocation2 + $0x188] sm:$0xff] %vm1744, %v1528
        %1794 = vst [vmem:[#allocation2 + $0x190] sm:$0xff] %v921
        %1795 = vst.msk [vmem:[#allocation2 + $0x198] sm:$0xff] %vm1744, %v1531
        %1796 = vst [vmem:[#allocation2 + $0x1a0] sm:$0xff] %v924
        %1797 = vst.msk [vmem:[#allocation2 + $0x1a8] sm:$0xff] %vm1744, %v1534
        %1798 = vst [vmem:[#allocation2 + $0x1b0] sm:$0xff] %v927
        %1799 = vst.msk [vmem:[#allocation2 + $0x1b8] sm:$0xff] %vm1744, %v1537
        %1800 = vst [vmem:[#allocation2 + $0x1c0] sm:$0xff] %v930
        %1801 = vst.msk [vmem:[#allocation2 + $0x1c8] sm:$0xff] %vm1744, %v1540
        %1802 = vst [vmem:[#allocation2 + $0x1d0] sm:$0xff] %v933
        %1803 = vst.msk [vmem:[#allocation2 + $0x1d8] sm:$0xff] %vm1744, %v1543
        %1804 = vst [vmem:[#allocation2 + $0x1e0] sm:$0xff] %v936
        %1805 = vst.msk [vmem:[#allocation2 + $0x1e8] sm:$0xff] %vm1744, %v1546
        %1806 = vst [vmem:[#allocation2 + $0x1f0] sm:$0xff] %v939
        %1807 = vst.msk [vmem:[#allocation2 + $0x1f8] sm:$0xff] %vm1744, %v1549
        %1808 = vst [vmem:[#allocation2 + $0x200] sm:$0xff] %v942
        %1809 = vst.msk [vmem:[#allocation2 + $0x208] sm:$0xff] %vm1744, %v1552
        %1810 = vst [vmem:[#allocation2 + $0x210] sm:$0xff] %v945
        %1811 = vst.msk [vmem:[#allocation2 + $0x218] sm:$0xff] %vm1744, %v1555
        %1812 = vst [vmem:[#allocation2 + $0x220] sm:$0xff] %v948
        %1813 = vst.msk [vmem:[#allocation2 + $0x228] sm:$0xff] %vm1744, %v1558
        %1814 = vst [vmem:[#allocation2 + $0x230] sm:$0xff] %v951
        %1815 = vst.msk [vmem:[#allocation2 + $0x238] sm:$0xff] %vm1744, %v1561
        %1816 = vst [vmem:[#allocation2 + $0x240] sm:$0xff] %v954
        %1817 = vst.msk [vmem:[#allocation2 + $0x248] sm:$0xff] %vm1744, %v1564
        %1818 = vst [vmem:[#allocation2 + $0x250] sm:$0xff] %v957
        %1819 = vst.msk [vmem:[#allocation2 + $0x258] sm:$0xff] %vm1744, %v1567
        %1820 = vst [vmem:[#allocation2 + $0x260] sm:$0xff] %v960
        %1821 = vst.msk [vmem:[#allocation2 + $0x268] sm:$0xff] %vm1744, %v1570
        %1822 = vst [vmem:[#allocation2 + $0x270] sm:$0xff] %v963
        %1823 = vst.msk [vmem:[#allocation2 + $0x278] sm:$0xff] %vm1744, %v1573
        %1824 = vst [vmem:[#allocation2 + $0x280] sm:$0xff] %v966
        %1825 = vst.msk [vmem:[#allocation2 + $0x288] sm:$0xff] %vm1744, %v1576
        %1826 = vst [vmem:[#allocation2 + $0x290] sm:$0xff] %v969
        %1827 = vst.msk [vmem:[#allocation2 + $0x298] sm:$0xff] %vm1744, %v1579
        %1828 = vst [vmem:[#allocation2 + $0x2a0] sm:$0xff] %v972
        %1829 = vst.msk [vmem:[#allocation2 + $0x2a8] sm:$0xff] %vm1744, %v1582
        %1830 = vst [vmem:[#allocation2 + $0x2b0] sm:$0xff] %v975
        %1831 = vst.msk [vmem:[#allocation2 + $0x2b8] sm:$0xff] %vm1744, %v1585
        %1832 = vst [vmem:[#allocation2 + $0x2c0] sm:$0xff] %v978
        %1833 = vst.msk [vmem:[#allocation2 + $0x2c8] sm:$0xff] %vm1744, %v1588
        %1834 = vst [vmem:[#allocation2 + $0x2d0] sm:$0xff] %v981
        %1835 = vst.msk [vmem:[#allocation2 + $0x2d8] sm:$0xff] %vm1744, %v1591
        %1836 = vst [vmem:[#allocation2 + $0x2e0] sm:$0xff] %v984
        %1837 = vst.msk [vmem:[#allocation2 + $0x2e8] sm:$0xff] %vm1744, %v1594
        %1838 = vst [vmem:[#allocation2 + $0x2f0] sm:$0xff] %v987
        %1839 = vst.msk [vmem:[#allocation2 + $0x2f8] sm:$0xff] %vm1744, %v1597
        %1840 = vst [vmem:[#allocation2 + $0x300] sm:$0xff] %v990
        %1841 = vst.msk [vmem:[#allocation2 + $0x308] sm:$0xff] %vm1744, %v1600
        %1842 = vst [vmem:[#allocation2 + $0x310] sm:$0xff] %v993
        %1843 = vst.msk [vmem:[#allocation2 + $0x318] sm:$0xff] %vm1744, %v1603
        %1844 = vst [vmem:[#allocation2 + $0x320] sm:$0xff] %v996
        %1845 = vst.msk [vmem:[#allocation2 + $0x328] sm:$0xff] %vm1744, %v1606
        %1846 = vst [vmem:[#allocation2 + $0x330] sm:$0xff] %v999
        %1847 = vst.msk [vmem:[#allocation2 + $0x338] sm:$0xff] %vm1744, %v1609
        %1848 = vst [vmem:[#allocation2 + $0x340] sm:$0xff] %v1002
        %1849 = vst.msk [vmem:[#allocation2 + $0x348] sm:$0xff] %vm1744, %v1612
        %1850 = vst [vmem:[#allocation2 + $0x350] sm:$0xff] %v1005
        %1851 = vst.msk [vmem:[#allocation2 + $0x358] sm:$0xff] %vm1744, %v1615
        %1852 = vst [vmem:[#allocation2 + $0x360] sm:$0xff] %v1008
        %1853 = vst.msk [vmem:[#allocation2 + $0x368] sm:$0xff] %vm1744, %v1618
        %1854 = vst [vmem:[#allocation2 + $0x370] sm:$0xff] %v1011
        %1855 = vst.msk [vmem:[#allocation2 + $0x378] sm:$0xff] %vm1744, %v1621
        %1856 = vst [vmem:[#allocation2 + $0x380] sm:$0xff] %v1014
        %1857 = vst.msk [vmem:[#allocation2 + $0x388] sm:$0xff] %vm1744, %v1624
        %1858 = vst [vmem:[#allocation2 + $0x390] sm:$0xff] %v1017
        %1859 = vst.msk [vmem:[#allocation2 + $0x398] sm:$0xff] %vm1744, %v1627
        %1860 = vst [vmem:[#allocation2 + $0x3a0] sm:$0xff] %v1020
        %1861 = vst.msk [vmem:[#allocation2 + $0x3a8] sm:$0xff] %vm1744, %v1630
        %1862 = vst [vmem:[#allocation2 + $0x3b0] sm:$0xff] %v1023
        %1863 = vst.msk [vmem:[#allocation2 + $0x3b8] sm:$0xff] %vm1744, %v1633
        %1864 = vst [vmem:[#allocation2 + $0x3c0] sm:$0xff] %v1026
        %1865 = vst.msk [vmem:[#allocation2 + $0x3c8] sm:$0xff] %vm1744, %v1636
        %1866 = vst [vmem:[#allocation2 + $0x3d0] sm:$0xff] %v1029
        %1867 = vst.msk [vmem:[#allocation2 + $0x3d8] sm:$0xff] %vm1744, %v1639
        %1868 = vst [vmem:[#allocation2 + $0x3e0] sm:$0xff] %v1032
        %1869 = vst.msk [vmem:[#allocation2 + $0x3e8] sm:$0xff] %vm1744, %v1642
        %1870 = vst [vmem:[#allocation2 + $0x3f0] sm:$0xff] %v1035
        %1871 = vst.msk [vmem:[#allocation2 + $0x3f8] sm:$0xff] %vm1744, %v1645
        %1872 = vst [vmem:[#allocation2 + $0x400] sm:$0xff] %v1038
        %1873 = vst.msk [vmem:[#allocation2 + $0x408] sm:$0xff] %vm1744, %v1648
        %1874 = vst [vmem:[#allocation2 + $0x410] sm:$0xff] %v1041
        %1875 = vst.msk [vmem:[#allocation2 + $0x418] sm:$0xff] %vm1744, %v1651
        %1876 = vst [vmem:[#allocation2 + $0x420] sm:$0xff] %v1044
        %1877 = vst.msk [vmem:[#allocation2 + $0x428] sm:$0xff] %vm1744, %v1654
        %1878 = vst [vmem:[#allocation2 + $0x430] sm:$0xff] %v1047
        %1879 = vst.msk [vmem:[#allocation2 + $0x438] sm:$0xff] %vm1744, %v1657
        %1880 = vst [vmem:[#allocation2 + $0x440] sm:$0xff] %v1050
        %1881 = vst.msk [vmem:[#allocation2 + $0x448] sm:$0xff] %vm1744, %v1660
        %1882 = vst [vmem:[#allocation2 + $0x450] sm:$0xff] %v1053
        %1883 = vst.msk [vmem:[#allocation2 + $0x458] sm:$0xff] %vm1744, %v1663
        %1884 = vst [vmem:[#allocation2 + $0x460] sm:$0xff] %v1056
        %1885 = vst.msk [vmem:[#allocation2 + $0x468] sm:$0xff] %vm1744, %v1666
        %1886 = vst [vmem:[#allocation2 + $0x470] sm:$0xff] %v1059
        %1887 = vst.msk [vmem:[#allocation2 + $0x478] sm:$0xff] %vm1744, %v1669
        %1888 = vst [vmem:[#allocation2 + $0x480] sm:$0xff] %v1062
        %1889 = vst.msk [vmem:[#allocation2 + $0x488] sm:$0xff] %vm1744, %v1672
        %1890 = vst [vmem:[#allocation2 + $0x490] sm:$0xff] %v1065
        %1891 = vst.msk [vmem:[#allocation2 + $0x498] sm:$0xff] %vm1744, %v1675
        %1892 = vst [vmem:[#allocation2 + $0x4a0] sm:$0xff] %v1068
        %1893 = vst.msk [vmem:[#allocation2 + $0x4a8] sm:$0xff] %vm1744, %v1678
        %1894 = vst [vmem:[#allocation2 + $0x4b0] sm:$0xff] %v1071
        %1895 = vst.msk [vmem:[#allocation2 + $0x4b8] sm:$0xff] %vm1744, %v1681
        %1896 = vst [vmem:[#allocation2 + $0x4c0] sm:$0xff] %v1074
        %1897 = vst.msk [vmem:[#allocation2 + $0x4c8] sm:$0xff] %vm1744, %v1684
        %1898 = vst [vmem:[#allocation2 + $0x4d0] sm:$0xff] %v1077
        %1899 = vst.msk [vmem:[#allocation2 + $0x4d8] sm:$0xff] %vm1744, %v1687
        %1900 = vst [vmem:[#allocation2 + $0x4e0] sm:$0xff] %v1080
        %1901 = vst.msk [vmem:[#allocation2 + $0x4e8] sm:$0xff] %vm1744, %v1690
        %1902 = vst [vmem:[#allocation2 + $0x4f0] sm:$0xff] %v1083
        %1903 = vst.msk [vmem:[#allocation2 + $0x4f8] sm:$0xff] %vm1744, %v1693
        %1904 = vst [vmem:[#allocation2 + $0x500] sm:$0xff] %v1086
        %1905 = vst.msk [vmem:[#allocation2 + $0x508] sm:$0xff] %vm1744, %v1696
        %1906 = vst [vmem:[#allocation2 + $0x510] sm:$0xff] %v1089
        %1907 = vst.msk [vmem:[#allocation2 + $0x518] sm:$0xff] %vm1744, %v1699
        %1908 = vst [vmem:[#allocation2 + $0x520] sm:$0xff] %v1092
        %1909 = vst.msk [vmem:[#allocation2 + $0x528] sm:$0xff] %vm1744, %v1702
        %1910 = vst [vmem:[#allocation2 + $0x530] sm:$0xff] %v1095
        %1911 = vst.msk [vmem:[#allocation2 + $0x538] sm:$0xff] %vm1744, %v1705
        %1912 = vst [vmem:[#allocation2 + $0x540] sm:$0xff] %v1098
        %1913 = vst.msk [vmem:[#allocation2 + $0x548] sm:$0xff] %vm1744, %v1708
        %1914 = vst [vmem:[#allocation2 + $0x550] sm:$0xff] %v1101
        %1915 = vst.msk [vmem:[#allocation2 + $0x558] sm:$0xff] %vm1744, %v1711
        %1916 = vst [vmem:[#allocation2 + $0x560] sm:$0xff] %v1104
        %1917 = vst.msk [vmem:[#allocation2 + $0x568] sm:$0xff] %vm1744, %v1714
        %1918 = vst [vmem:[#allocation2 + $0x570] sm:$0xff] %v1107
        %1919 = vst.msk [vmem:[#allocation2 + $0x578] sm:$0xff] %vm1744, %v1717
        %1920 = vst [vmem:[#allocation2 + $0x580] sm:$0xff] %v1110
        %1921 = vst.msk [vmem:[#allocation2 + $0x588] sm:$0xff] %vm1744, %v1720
        %1922 = vst [vmem:[#allocation2 + $0x590] sm:$0xff] %v1113
        %1923 = vst.msk [vmem:[#allocation2 + $0x598] sm:$0xff] %vm1744, %v1723
        %1924 = vst [vmem:[#allocation2 + $0x5a0] sm:$0xff] %v1116
        %1925 = vst.msk [vmem:[#allocation2 + $0x5a8] sm:$0xff] %vm1744, %v1726
        %1926 = vst [vmem:[#allocation2 + $0x5b0] sm:$0xff] %v1119
        %1927 = vst.msk [vmem:[#allocation2 + $0x5b8] sm:$0xff] %vm1744, %v1729
        %1928 = vst [vmem:[#allocation2 + $0x5c0] sm:$0xff] %v1122
        %1929 = vst.msk [vmem:[#allocation2 + $0x5c8] sm:$0xff] %vm1744, %v1732
        %1930 = vst [vmem:[#allocation2 + $0x5d0] sm:$0xff] %v1125
        %1931 = vst.msk [vmem:[#allocation2 + $0x5d8] sm:$0xff] %vm1744, %v1735
        %1932 = vst [vmem:[#allocation2 + $0x5e0] sm:$0xff] %v1128
        %1933 = vst.msk [vmem:[#allocation2 + $0x5e8] sm:$0xff] %vm1744, %v1738
        %1934 = vst [vmem:[#allocation2 + $0x5f0] sm:$0xff] %v1131
        %1935 = vst.msk [vmem:[#allocation2 + $0x5f8] sm:$0xff] %vm1744, %v1741
        %s1936 = scalar_lea.vmem %s180, 1536 [#allocation3]
        %v1937 = vld [vmem:[%s1936] sm:$0xff]
        %v1938 = vld [vmem:[%s1936 + $0x8] sm:$0xff]
        %v1939 = vld [vmem:[%s1936 + $0x10] sm:$0xff]
        %v1940 = vld [vmem:[%s1936 + $0x18] sm:$0xff]
        %v1941 = vld [vmem:[%s1936 + $0x20] sm:$0xff]
        %v1942 = vld [vmem:[%s1936 + $0x28] sm:$0xff]
        %v1943 = vld [vmem:[%s1936 + $0x30] sm:$0xff]
        %v1944 = vld [vmem:[%s1936 + $0x38] sm:$0xff]
        %v1945 = vld [vmem:[%s1936 + $0x40] sm:$0xff]
        %v1946 = vld [vmem:[%s1936 + $0x48] sm:$0xff]
        %v1947 = vld [vmem:[%s1936 + $0x50] sm:$0xff]
        %v1948 = vld [vmem:[%s1936 + $0x58] sm:$0xff]
        %v1949 = vld [vmem:[%s1936 + $0x60] sm:$0xff]
        %v1950 = vld [vmem:[%s1936 + $0x68] sm:$0xff]
        %v1951 = vld [vmem:[%s1936 + $0x70] sm:$0xff]
        %v1952 = vld [vmem:[%s1936 + $0x78] sm:$0xff]
        %v1953 = vld [vmem:[%s1936 + $0x80] sm:$0xff]
        %v1954 = vld [vmem:[%s1936 + $0x88] sm:$0xff]
        %v1955 = vld [vmem:[%s1936 + $0x90] sm:$0xff]
        %v1956 = vld [vmem:[%s1936 + $0x98] sm:$0xff]
        %v1957 = vld [vmem:[%s1936 + $0xa0] sm:$0xff]
        %v1958 = vld [vmem:[%s1936 + $0xa8] sm:$0xff]
        %v1959 = vld [vmem:[%s1936 + $0xb0] sm:$0xff]
        %v1960 = vld [vmem:[%s1936 + $0xb8] sm:$0xff]
        %v1961 = vld [vmem:[%s1936 + $0xc0] sm:$0xff]
        %v1962 = vld [vmem:[%s1936 + $0xc8] sm:$0xff]
        %v1963 = vld [vmem:[%s1936 + $0xd0] sm:$0xff]
        %v1964 = vld [vmem:[%s1936 + $0xd8] sm:$0xff]
        %v1965 = vld [vmem:[%s1936 + $0xe0] sm:$0xff]
        %v1966 = vld [vmem:[%s1936 + $0xe8] sm:$0xff]
        %v1967 = vld [vmem:[%s1936 + $0xf0] sm:$0xff]
        %v1968 = vld [vmem:[%s1936 + $0xf8] sm:$0xff]
        %v1969 = vld [vmem:[%s1936 + $0x100] sm:$0xff]
        %v1970 = vld [vmem:[%s1936 + $0x108] sm:$0xff]
        %v1971 = vld [vmem:[%s1936 + $0x110] sm:$0xff]
        %v1972 = vld [vmem:[%s1936 + $0x118] sm:$0xff]
        %v1973 = vld [vmem:[%s1936 + $0x120] sm:$0xff]
        %v1974 = vld [vmem:[%s1936 + $0x128] sm:$0xff]
        %v1975 = vld [vmem:[%s1936 + $0x130] sm:$0xff]
        %v1976 = vld [vmem:[%s1936 + $0x138] sm:$0xff]
        %v1977 = vld [vmem:[%s1936 + $0x140] sm:$0xff]
        %v1978 = vld [vmem:[%s1936 + $0x148] sm:$0xff]
        %v1979 = vld [vmem:[%s1936 + $0x150] sm:$0xff]
        %v1980 = vld [vmem:[%s1936 + $0x158] sm:$0xff]
        %v1981 = vld [vmem:[%s1936 + $0x160] sm:$0xff]
        %v1982 = vld [vmem:[%s1936 + $0x168] sm:$0xff]
        %v1983 = vld [vmem:[%s1936 + $0x170] sm:$0xff]
        %v1984 = vld [vmem:[%s1936 + $0x178] sm:$0xff]
        %v1985 = vld [vmem:[%s1936 + $0x180] sm:$0xff]
        %v1986 = vld [vmem:[%s1936 + $0x188] sm:$0xff]
        %v1987 = vld [vmem:[%s1936 + $0x190] sm:$0xff]
        %v1988 = vld [vmem:[%s1936 + $0x198] sm:$0xff]
        %v1989 = vld [vmem:[%s1936 + $0x1a0] sm:$0xff]
        %v1990 = vld [vmem:[%s1936 + $0x1a8] sm:$0xff]
        %v1991 = vld [vmem:[%s1936 + $0x1b0] sm:$0xff]
        %v1992 = vld [vmem:[%s1936 + $0x1b8] sm:$0xff]
        %v1993 = vld [vmem:[%s1936 + $0x1c0] sm:$0xff]
        %v1994 = vld [vmem:[%s1936 + $0x1c8] sm:$0xff]
        %v1995 = vld [vmem:[%s1936 + $0x1d0] sm:$0xff]
        %v1996 = vld [vmem:[%s1936 + $0x1d8] sm:$0xff]
        %v1997 = vld [vmem:[%s1936 + $0x1e0] sm:$0xff]
        %v1998 = vld [vmem:[%s1936 + $0x1e8] sm:$0xff]
        %v1999 = vld [vmem:[%s1936 + $0x1f0] sm:$0xff]
        %v2000 = vld [vmem:[%s1936 + $0x1f8] sm:$0xff]
        %v2001 = vld [vmem:[%s1936 + $0x200] sm:$0xff]
        %v2002 = vld [vmem:[%s1936 + $0x208] sm:$0xff]
        %v2003 = vld [vmem:[%s1936 + $0x210] sm:$0xff]
        %v2004 = vld [vmem:[%s1936 + $0x218] sm:$0xff]
        %v2005 = vld [vmem:[%s1936 + $0x220] sm:$0xff]
        %v2006 = vld [vmem:[%s1936 + $0x228] sm:$0xff]
        %v2007 = vld [vmem:[%s1936 + $0x230] sm:$0xff]
        %v2008 = vld [vmem:[%s1936 + $0x238] sm:$0xff]
        %v2009 = vld [vmem:[%s1936 + $0x240] sm:$0xff]
        %v2010 = vld [vmem:[%s1936 + $0x248] sm:$0xff]
        %v2011 = vld [vmem:[%s1936 + $0x250] sm:$0xff]
        %v2012 = vld [vmem:[%s1936 + $0x258] sm:$0xff]
        %v2013 = vld [vmem:[%s1936 + $0x260] sm:$0xff]
        %v2014 = vld [vmem:[%s1936 + $0x268] sm:$0xff]
        %v2015 = vld [vmem:[%s1936 + $0x270] sm:$0xff]
        %v2016 = vld [vmem:[%s1936 + $0x278] sm:$0xff]
        %v2017 = vld [vmem:[%s1936 + $0x280] sm:$0xff]
        %v2018 = vld [vmem:[%s1936 + $0x288] sm:$0xff]
        %v2019 = vld [vmem:[%s1936 + $0x290] sm:$0xff]
        %v2020 = vld [vmem:[%s1936 + $0x298] sm:$0xff]
        %v2021 = vld [vmem:[%s1936 + $0x2a0] sm:$0xff]
        %v2022 = vld [vmem:[%s1936 + $0x2a8] sm:$0xff]
        %v2023 = vld [vmem:[%s1936 + $0x2b0] sm:$0xff]
        %v2024 = vld [vmem:[%s1936 + $0x2b8] sm:$0xff]
        %v2025 = vld [vmem:[%s1936 + $0x2c0] sm:$0xff]
        %v2026 = vld [vmem:[%s1936 + $0x2c8] sm:$0xff]
        %v2027 = vld [vmem:[%s1936 + $0x2d0] sm:$0xff]
        %v2028 = vld [vmem:[%s1936 + $0x2d8] sm:$0xff]
        %v2029 = vld [vmem:[%s1936 + $0x2e0] sm:$0xff]
        %v2030 = vld [vmem:[%s1936 + $0x2e8] sm:$0xff]
        %v2031 = vld [vmem:[%s1936 + $0x2f0] sm:$0xff]
        %v2032 = vld [vmem:[%s1936 + $0x2f8] sm:$0xff]
        %v2033 = vld [vmem:[%s1936 + $0x300] sm:$0xff]
        %v2034 = vld [vmem:[%s1936 + $0x308] sm:$0xff]
        %v2035 = vld [vmem:[%s1936 + $0x310] sm:$0xff]
        %v2036 = vld [vmem:[%s1936 + $0x318] sm:$0xff]
        %v2037 = vld [vmem:[%s1936 + $0x320] sm:$0xff]
        %v2038 = vld [vmem:[%s1936 + $0x328] sm:$0xff]
        %v2039 = vld [vmem:[%s1936 + $0x330] sm:$0xff]
        %v2040 = vld [vmem:[%s1936 + $0x338] sm:$0xff]
        %v2041 = vld [vmem:[%s1936 + $0x340] sm:$0xff]
        %v2042 = vld [vmem:[%s1936 + $0x348] sm:$0xff]
        %v2043 = vld [vmem:[%s1936 + $0x350] sm:$0xff]
        %v2044 = vld [vmem:[%s1936 + $0x358] sm:$0xff]
        %v2045 = vld [vmem:[%s1936 + $0x360] sm:$0xff]
        %v2046 = vld [vmem:[%s1936 + $0x368] sm:$0xff]
        %v2047 = vld [vmem:[%s1936 + $0x370] sm:$0xff]
        %v2048 = vld [vmem:[%s1936 + $0x378] sm:$0xff]
        %v2049 = vld [vmem:[%s1936 + $0x380] sm:$0xff]
        %v2050 = vld [vmem:[%s1936 + $0x388] sm:$0xff]
        %v2051 = vld [vmem:[%s1936 + $0x390] sm:$0xff]
        %v2052 = vld [vmem:[%s1936 + $0x398] sm:$0xff]
        %v2053 = vld [vmem:[%s1936 + $0x3a0] sm:$0xff]
        %v2054 = vld [vmem:[%s1936 + $0x3a8] sm:$0xff]
        %v2055 = vld [vmem:[%s1936 + $0x3b0] sm:$0xff]
        %v2056 = vld [vmem:[%s1936 + $0x3b8] sm:$0xff]
        %v2057 = vld [vmem:[%s1936 + $0x3c0] sm:$0xff]
        %v2058 = vld [vmem:[%s1936 + $0x3c8] sm:$0xff]
        %v2059 = vld [vmem:[%s1936 + $0x3d0] sm:$0xff]
        %v2060 = vld [vmem:[%s1936 + $0x3d8] sm:$0xff]
        %v2061 = vld [vmem:[%s1936 + $0x3e0] sm:$0xff]
        %v2062 = vld [vmem:[%s1936 + $0x3e8] sm:$0xff]
        %v2063 = vld [vmem:[%s1936 + $0x3f0] sm:$0xff]
        %v2064 = vld [vmem:[%s1936 + $0x3f8] sm:$0xff]
        %v2065 = vld [vmem:[%s1936 + $0x400] sm:$0xff]
        %v2066 = vld [vmem:[%s1936 + $0x408] sm:$0xff]
        %v2067 = vld [vmem:[%s1936 + $0x410] sm:$0xff]
        %v2068 = vld [vmem:[%s1936 + $0x418] sm:$0xff]
        %v2069 = vld [vmem:[%s1936 + $0x420] sm:$0xff]
        %v2070 = vld [vmem:[%s1936 + $0x428] sm:$0xff]
        %v2071 = vld [vmem:[%s1936 + $0x430] sm:$0xff]
        %v2072 = vld [vmem:[%s1936 + $0x438] sm:$0xff]
        %v2073 = vld [vmem:[%s1936 + $0x440] sm:$0xff]
        %v2074 = vld [vmem:[%s1936 + $0x448] sm:$0xff]
        %v2075 = vld [vmem:[%s1936 + $0x450] sm:$0xff]
        %v2076 = vld [vmem:[%s1936 + $0x458] sm:$0xff]
        %v2077 = vld [vmem:[%s1936 + $0x460] sm:$0xff]
        %v2078 = vld [vmem:[%s1936 + $0x468] sm:$0xff]
        %v2079 = vld [vmem:[%s1936 + $0x470] sm:$0xff]
        %v2080 = vld [vmem:[%s1936 + $0x478] sm:$0xff]
        %v2081 = vld [vmem:[%s1936 + $0x480] sm:$0xff]
        %v2082 = vld [vmem:[%s1936 + $0x488] sm:$0xff]
        %v2083 = vld [vmem:[%s1936 + $0x490] sm:$0xff]
        %v2084 = vld [vmem:[%s1936 + $0x498] sm:$0xff]
        %v2085 = vld [vmem:[%s1936 + $0x4a0] sm:$0xff]
        %v2086 = vld [vmem:[%s1936 + $0x4a8] sm:$0xff]
        %v2087 = vld [vmem:[%s1936 + $0x4b0] sm:$0xff]
        %v2088 = vld [vmem:[%s1936 + $0x4b8] sm:$0xff]
        %v2089 = vld [vmem:[%s1936 + $0x4c0] sm:$0xff]
        %v2090 = vld [vmem:[%s1936 + $0x4c8] sm:$0xff]
        %v2091 = vld [vmem:[%s1936 + $0x4d0] sm:$0xff]
        %v2092 = vld [vmem:[%s1936 + $0x4d8] sm:$0xff]
        %v2093 = vld [vmem:[%s1936 + $0x4e0] sm:$0xff]
        %v2094 = vld [vmem:[%s1936 + $0x4e8] sm:$0xff]
        %v2095 = vld [vmem:[%s1936 + $0x4f0] sm:$0xff]
        %v2096 = vld [vmem:[%s1936 + $0x4f8] sm:$0xff]
        %v2097 = vld [vmem:[%s1936 + $0x500] sm:$0xff]
        %v2098 = vld [vmem:[%s1936 + $0x508] sm:$0xff]
        %v2099 = vld [vmem:[%s1936 + $0x510] sm:$0xff]
        %v2100 = vld [vmem:[%s1936 + $0x518] sm:$0xff]
        %v2101 = vld [vmem:[%s1936 + $0x520] sm:$0xff]
        %v2102 = vld [vmem:[%s1936 + $0x528] sm:$0xff]
        %v2103 = vld [vmem:[%s1936 + $0x530] sm:$0xff]
        %v2104 = vld [vmem:[%s1936 + $0x538] sm:$0xff]
        %v2105 = vld [vmem:[%s1936 + $0x540] sm:$0xff]
        %v2106 = vld [vmem:[%s1936 + $0x548] sm:$0xff]
        %v2107 = vld [vmem:[%s1936 + $0x550] sm:$0xff]
        %v2108 = vld [vmem:[%s1936 + $0x558] sm:$0xff]
        %v2109 = vld [vmem:[%s1936 + $0x560] sm:$0xff]
        %v2110 = vld [vmem:[%s1936 + $0x568] sm:$0xff]
        %v2111 = vld [vmem:[%s1936 + $0x570] sm:$0xff]
        %v2112 = vld [vmem:[%s1936 + $0x578] sm:$0xff]
        %v2113 = vld [vmem:[%s1936 + $0x580] sm:$0xff]
        %v2114 = vld [vmem:[%s1936 + $0x588] sm:$0xff]
        %v2115 = vld [vmem:[%s1936 + $0x590] sm:$0xff]
        %v2116 = vld [vmem:[%s1936 + $0x598] sm:$0xff]
        %v2117 = vld [vmem:[%s1936 + $0x5a0] sm:$0xff]
        %v2118 = vld [vmem:[%s1936 + $0x5a8] sm:$0xff]
        %v2119 = vld [vmem:[%s1936 + $0x5b0] sm:$0xff]
        %v2120 = vld [vmem:[%s1936 + $0x5b8] sm:$0xff]
        %v2121 = vld [vmem:[%s1936 + $0x5c0] sm:$0xff]
        %v2122 = vld [vmem:[%s1936 + $0x5c8] sm:$0xff]
        %v2123 = vld [vmem:[%s1936 + $0x5d0] sm:$0xff]
        %v2124 = vld [vmem:[%s1936 + $0x5d8] sm:$0xff]
        %v2125 = vld [vmem:[%s1936 + $0x5e0] sm:$0xff]
        %v2126 = vld [vmem:[%s1936 + $0x5e8] sm:$0xff]
        %v2127 = vld [vmem:[%s1936 + $0x5f0] sm:$0xff]
        %v2128 = vld [vmem:[%s1936 + $0x5f8] sm:$0xff]
        %2129 = vmatpush.msra.mxu0 %v241
        %2130 = vmatpush.msra.mxu0 %v239
        %2131 = vmatpush.msra.mxu0 %v237
        %2132 = vmatpush.msra.mxu0 %v235
        %2133 = vmatpush.msra.mxu0 %v233
        %2134 = vmatpush.msra.mxu0 %v231
        %2135 = vmatpush.msra.mxu0 %v229
        %2136 = vmatpush.msra.mxu0 %v227
        %2137 = vmatpush.msra.mxu0 %v225
        %2138 = vmatpush.msra.mxu0 %v223
        %2139 = vmatpush.msra.mxu0 %v221
        %2140 = vmatpush.msra.mxu0 %v219
        %2141 = vmatpush.msra.mxu0 %v217
        %2142 = vmatpush.msra.mxu0 %v215
        %2143 = vmatpush.msra.mxu0 %v213
        %2144 = vmatpush.msra.mxu0 %v211
        %2145 = vmatmul.f32.gmra.mxu0 %v1937
        %v2146 = vpop.f32.mrf.mxu0
        %v2147 = vadd.f32 0.0, %v2146
        %2148 = vmatmul.f32.gmra.mxu0 %v1939
        %v2149 = vpop.f32.mrf.mxu0
        %v2150 = vadd.f32 0.0, %v2149
        %2151 = vmatmul.f32.gmra.mxu0 %v1941
        %v2152 = vpop.f32.mrf.mxu0
        %v2153 = vadd.f32 0.0, %v2152
        %2154 = vmatmul.f32.gmra.mxu0 %v1943
        %v2155 = vpop.f32.mrf.mxu0
        %v2156 = vadd.f32 0.0, %v2155
        %2157 = vmatmul.f32.gmra.mxu0 %v1945
        %v2158 = vpop.f32.mrf.mxu0
        %v2159 = vadd.f32 0.0, %v2158
        %2160 = vmatmul.f32.gmra.mxu0 %v1947
        %v2161 = vpop.f32.mrf.mxu0
        %v2162 = vadd.f32 0.0, %v2161
        %2163 = vmatmul.f32.gmra.mxu0 %v1949
        %v2164 = vpop.f32.mrf.mxu0
        %v2165 = vadd.f32 0.0, %v2164
        %2166 = vmatmul.f32.gmra.mxu0 %v1951
        %v2167 = vpop.f32.mrf.mxu0
        %v2168 = vadd.f32 0.0, %v2167
        %2169 = vmatmul.f32.gmra.mxu0 %v1953
        %v2170 = vpop.f32.mrf.mxu0
        %v2171 = vadd.f32 0.0, %v2170
        %2172 = vmatmul.f32.gmra.mxu0 %v1955
        %v2173 = vpop.f32.mrf.mxu0
        %v2174 = vadd.f32 0.0, %v2173
        %2175 = vmatmul.f32.gmra.mxu0 %v1957
        %v2176 = vpop.f32.mrf.mxu0
        %v2177 = vadd.f32 0.0, %v2176
        %2178 = vmatmul.f32.gmra.mxu0 %v1959
        %v2179 = vpop.f32.mrf.mxu0
        %v2180 = vadd.f32 0.0, %v2179
        %2181 = vmatmul.f32.gmra.mxu0 %v1961
        %v2182 = vpop.f32.mrf.mxu0
        %v2183 = vadd.f32 0.0, %v2182
        %2184 = vmatmul.f32.gmra.mxu0 %v1963
        %v2185 = vpop.f32.mrf.mxu0
        %v2186 = vadd.f32 0.0, %v2185
        %2187 = vmatmul.f32.gmra.mxu0 %v1965
        %v2188 = vpop.f32.mrf.mxu0
        %v2189 = vadd.f32 0.0, %v2188
        %2190 = vmatmul.f32.gmra.mxu0 %v1967
        %v2191 = vpop.f32.mrf.mxu0
        %v2192 = vadd.f32 0.0, %v2191
        %2193 = vmatmul.f32.gmra.mxu0 %v1969
        %v2194 = vpop.f32.mrf.mxu0
        %v2195 = vadd.f32 0.0, %v2194
        %2196 = vmatmul.f32.gmra.mxu0 %v1971
        %v2197 = vpop.f32.mrf.mxu0
        %v2198 = vadd.f32 0.0, %v2197
        %2199 = vmatmul.f32.gmra.mxu0 %v1973
        %v2200 = vpop.f32.mrf.mxu0
        %v2201 = vadd.f32 0.0, %v2200
        %2202 = vmatmul.f32.gmra.mxu0 %v1975
        %v2203 = vpop.f32.mrf.mxu0
        %v2204 = vadd.f32 0.0, %v2203
        %2205 = vmatmul.f32.gmra.mxu0 %v1977
        %v2206 = vpop.f32.mrf.mxu0
        %v2207 = vadd.f32 0.0, %v2206
        %2208 = vmatmul.f32.gmra.mxu0 %v1979
        %v2209 = vpop.f32.mrf.mxu0
        %v2210 = vadd.f32 0.0, %v2209
        %2211 = vmatmul.f32.gmra.mxu0 %v1981
        %v2212 = vpop.f32.mrf.mxu0
        %v2213 = vadd.f32 0.0, %v2212
        %2214 = vmatmul.f32.gmra.mxu0 %v1983
        %v2215 = vpop.f32.mrf.mxu0
        %v2216 = vadd.f32 0.0, %v2215
        %2217 = vmatmul.f32.gmra.mxu0 %v1985
        %v2218 = vpop.f32.mrf.mxu0
        %v2219 = vadd.f32 0.0, %v2218
        %2220 = vmatmul.f32.gmra.mxu0 %v1987
        %v2221 = vpop.f32.mrf.mxu0
        %v2222 = vadd.f32 0.0, %v2221
        %2223 = vmatmul.f32.gmra.mxu0 %v1989
        %v2224 = vpop.f32.mrf.mxu0
        %v2225 = vadd.f32 0.0, %v2224
        %2226 = vmatmul.f32.gmra.mxu0 %v1991
        %v2227 = vpop.f32.mrf.mxu0
        %v2228 = vadd.f32 0.0, %v2227
        %2229 = vmatmul.f32.gmra.mxu0 %v1993
        %v2230 = vpop.f32.mrf.mxu0
        %v2231 = vadd.f32 0.0, %v2230
        %2232 = vmatmul.f32.gmra.mxu0 %v1995
        %v2233 = vpop.f32.mrf.mxu0
        %v2234 = vadd.f32 0.0, %v2233
        %2235 = vmatmul.f32.gmra.mxu0 %v1997
        %v2236 = vpop.f32.mrf.mxu0
        %v2237 = vadd.f32 0.0, %v2236
        %2238 = vmatmul.f32.gmra.mxu0 %v1999
        %v2239 = vpop.f32.mrf.mxu0
        %v2240 = vadd.f32 0.0, %v2239
        %2241 = vmatmul.f32.gmra.mxu0 %v2001
        %v2242 = vpop.f32.mrf.mxu0
        %v2243 = vadd.f32 0.0, %v2242
        %2244 = vmatmul.f32.gmra.mxu0 %v2003
        %v2245 = vpop.f32.mrf.mxu0
        %v2246 = vadd.f32 0.0, %v2245
        %2247 = vmatmul.f32.gmra.mxu0 %v2005
        %v2248 = vpop.f32.mrf.mxu0
        %v2249 = vadd.f32 0.0, %v2248
        %2250 = vmatmul.f32.gmra.mxu0 %v2007
        %v2251 = vpop.f32.mrf.mxu0
        %v2252 = vadd.f32 0.0, %v2251
        %2253 = vmatmul.f32.gmra.mxu0 %v2009
        %v2254 = vpop.f32.mrf.mxu0
        %v2255 = vadd.f32 0.0, %v2254
        %2256 = vmatmul.f32.gmra.mxu0 %v2011
        %v2257 = vpop.f32.mrf.mxu0
        %v2258 = vadd.f32 0.0, %v2257
        %2259 = vmatmul.f32.gmra.mxu0 %v2013
        %v2260 = vpop.f32.mrf.mxu0
        %v2261 = vadd.f32 0.0, %v2260
        %2262 = vmatmul.f32.gmra.mxu0 %v2015
        %v2263 = vpop.f32.mrf.mxu0
        %v2264 = vadd.f32 0.0, %v2263
        %2265 = vmatmul.f32.gmra.mxu0 %v2017
        %v2266 = vpop.f32.mrf.mxu0
        %v2267 = vadd.f32 0.0, %v2266
        %2268 = vmatmul.f32.gmra.mxu0 %v2019
        %v2269 = vpop.f32.mrf.mxu0
        %v2270 = vadd.f32 0.0, %v2269
        %2271 = vmatmul.f32.gmra.mxu0 %v2021
        %v2272 = vpop.f32.mrf.mxu0
        %v2273 = vadd.f32 0.0, %v2272
        %2274 = vmatmul.f32.gmra.mxu0 %v2023
        %v2275 = vpop.f32.mrf.mxu0
        %v2276 = vadd.f32 0.0, %v2275
        %2277 = vmatmul.f32.gmra.mxu0 %v2025
        %v2278 = vpop.f32.mrf.mxu0
        %v2279 = vadd.f32 0.0, %v2278
        %2280 = vmatmul.f32.gmra.mxu0 %v2027
        %v2281 = vpop.f32.mrf.mxu0
        %v2282 = vadd.f32 0.0, %v2281
        %2283 = vmatmul.f32.gmra.mxu0 %v2029
        %v2284 = vpop.f32.mrf.mxu0
        %v2285 = vadd.f32 0.0, %v2284
        %2286 = vmatmul.f32.gmra.mxu0 %v2031
        %v2287 = vpop.f32.mrf.mxu0
        %v2288 = vadd.f32 0.0, %v2287
        %2289 = vmatmul.f32.gmra.mxu0 %v2033
        %v2290 = vpop.f32.mrf.mxu0
        %v2291 = vadd.f32 0.0, %v2290
        %2292 = vmatmul.f32.gmra.mxu0 %v2035
        %v2293 = vpop.f32.mrf.mxu0
        %v2294 = vadd.f32 0.0, %v2293
        %2295 = vmatmul.f32.gmra.mxu0 %v2037
        %v2296 = vpop.f32.mrf.mxu0
        %v2297 = vadd.f32 0.0, %v2296
        %2298 = vmatmul.f32.gmra.mxu0 %v2039
        %v2299 = vpop.f32.mrf.mxu0
        %v2300 = vadd.f32 0.0, %v2299
        %2301 = vmatmul.f32.gmra.mxu0 %v2041
        %v2302 = vpop.f32.mrf.mxu0
        %v2303 = vadd.f32 0.0, %v2302
        %2304 = vmatmul.f32.gmra.mxu0 %v2043
        %v2305 = vpop.f32.mrf.mxu0
        %v2306 = vadd.f32 0.0, %v2305
        %2307 = vmatmul.f32.gmra.mxu0 %v2045
        %v2308 = vpop.f32.mrf.mxu0
        %v2309 = vadd.f32 0.0, %v2308
        %2310 = vmatmul.f32.gmra.mxu0 %v2047
        %v2311 = vpop.f32.mrf.mxu0
        %v2312 = vadd.f32 0.0, %v2311
        %2313 = vmatmul.f32.gmra.mxu0 %v2049
        %v2314 = vpop.f32.mrf.mxu0
        %v2315 = vadd.f32 0.0, %v2314
        %2316 = vmatmul.f32.gmra.mxu0 %v2051
        %v2317 = vpop.f32.mrf.mxu0
        %v2318 = vadd.f32 0.0, %v2317
        %2319 = vmatmul.f32.gmra.mxu0 %v2053
        %v2320 = vpop.f32.mrf.mxu0
        %v2321 = vadd.f32 0.0, %v2320
        %2322 = vmatmul.f32.gmra.mxu0 %v2055
        %v2323 = vpop.f32.mrf.mxu0
        %v2324 = vadd.f32 0.0, %v2323
        %2325 = vmatmul.f32.gmra.mxu0 %v2057
        %v2326 = vpop.f32.mrf.mxu0
        %v2327 = vadd.f32 0.0, %v2326
        %2328 = vmatmul.f32.gmra.mxu0 %v2059
        %v2329 = vpop.f32.mrf.mxu0
        %v2330 = vadd.f32 0.0, %v2329
        %2331 = vmatmul.f32.gmra.mxu0 %v2061
        %v2332 = vpop.f32.mrf.mxu0
        %v2333 = vadd.f32 0.0, %v2332
        %2334 = vmatmul.f32.gmra.mxu0 %v2063
        %v2335 = vpop.f32.mrf.mxu0
        %v2336 = vadd.f32 0.0, %v2335
        %2337 = vmatmul.f32.gmra.mxu0 %v2065
        %v2338 = vpop.f32.mrf.mxu0
        %v2339 = vadd.f32 0.0, %v2338
        %2340 = vmatmul.f32.gmra.mxu0 %v2067
        %v2341 = vpop.f32.mrf.mxu0
        %v2342 = vadd.f32 0.0, %v2341
        %2343 = vmatmul.f32.gmra.mxu0 %v2069
        %v2344 = vpop.f32.mrf.mxu0
        %v2345 = vadd.f32 0.0, %v2344
        %2346 = vmatmul.f32.gmra.mxu0 %v2071
        %v2347 = vpop.f32.mrf.mxu0
        %v2348 = vadd.f32 0.0, %v2347
        %2349 = vmatmul.f32.gmra.mxu0 %v2073
        %v2350 = vpop.f32.mrf.mxu0
        %v2351 = vadd.f32 0.0, %v2350
        %2352 = vmatmul.f32.gmra.mxu0 %v2075
        %v2353 = vpop.f32.mrf.mxu0
        %v2354 = vadd.f32 0.0, %v2353
        %2355 = vmatmul.f32.gmra.mxu0 %v2077
        %v2356 = vpop.f32.mrf.mxu0
        %v2357 = vadd.f32 0.0, %v2356
        %2358 = vmatmul.f32.gmra.mxu0 %v2079
        %v2359 = vpop.f32.mrf.mxu0
        %v2360 = vadd.f32 0.0, %v2359
        %2361 = vmatmul.f32.gmra.mxu0 %v2081
        %v2362 = vpop.f32.mrf.mxu0
        %v2363 = vadd.f32 0.0, %v2362
        %2364 = vmatmul.f32.gmra.mxu0 %v2083
        %v2365 = vpop.f32.mrf.mxu0
        %v2366 = vadd.f32 0.0, %v2365
        %2367 = vmatmul.f32.gmra.mxu0 %v2085
        %v2368 = vpop.f32.mrf.mxu0
        %v2369 = vadd.f32 0.0, %v2368
        %2370 = vmatmul.f32.gmra.mxu0 %v2087
        %v2371 = vpop.f32.mrf.mxu0
        %v2372 = vadd.f32 0.0, %v2371
        %2373 = vmatmul.f32.gmra.mxu0 %v2089
        %v2374 = vpop.f32.mrf.mxu0
        %v2375 = vadd.f32 0.0, %v2374
        %2376 = vmatmul.f32.gmra.mxu0 %v2091
        %v2377 = vpop.f32.mrf.mxu0
        %v2378 = vadd.f32 0.0, %v2377
        %2379 = vmatmul.f32.gmra.mxu0 %v2093
        %v2380 = vpop.f32.mrf.mxu0
        %v2381 = vadd.f32 0.0, %v2380
        %2382 = vmatmul.f32.gmra.mxu0 %v2095
        %v2383 = vpop.f32.mrf.mxu0
        %v2384 = vadd.f32 0.0, %v2383
        %2385 = vmatmul.f32.gmra.mxu0 %v2097
        %v2386 = vpop.f32.mrf.mxu0
        %v2387 = vadd.f32 0.0, %v2386
        %2388 = vmatmul.f32.gmra.mxu0 %v2099
        %v2389 = vpop.f32.mrf.mxu0
        %v2390 = vadd.f32 0.0, %v2389
        %2391 = vmatmul.f32.gmra.mxu0 %v2101
        %v2392 = vpop.f32.mrf.mxu0
        %v2393 = vadd.f32 0.0, %v2392
        %2394 = vmatmul.f32.gmra.mxu0 %v2103
        %v2395 = vpop.f32.mrf.mxu0
        %v2396 = vadd.f32 0.0, %v2395
        %2397 = vmatmul.f32.gmra.mxu0 %v2105
        %v2398 = vpop.f32.mrf.mxu0
        %v2399 = vadd.f32 0.0, %v2398
        %2400 = vmatmul.f32.gmra.mxu0 %v2107
        %v2401 = vpop.f32.mrf.mxu0
        %v2402 = vadd.f32 0.0, %v2401
        %2403 = vmatmul.f32.gmra.mxu0 %v2109
        %v2404 = vpop.f32.mrf.mxu0
        %v2405 = vadd.f32 0.0, %v2404
        %2406 = vmatmul.f32.gmra.mxu0 %v2111
        %v2407 = vpop.f32.mrf.mxu0
        %v2408 = vadd.f32 0.0, %v2407
        %2409 = vmatmul.f32.gmra.mxu0 %v2113
        %v2410 = vpop.f32.mrf.mxu0
        %v2411 = vadd.f32 0.0, %v2410
        %2412 = vmatmul.f32.gmra.mxu0 %v2115
        %v2413 = vpop.f32.mrf.mxu0
        %v2414 = vadd.f32 0.0, %v2413
        %2415 = vmatmul.f32.gmra.mxu0 %v2117
        %v2416 = vpop.f32.mrf.mxu0
        %v2417 = vadd.f32 0.0, %v2416
        %2418 = vmatmul.f32.gmra.mxu0 %v2119
        %v2419 = vpop.f32.mrf.mxu0
        %v2420 = vadd.f32 0.0, %v2419
        %2421 = vmatmul.f32.gmra.mxu0 %v2121
        %v2422 = vpop.f32.mrf.mxu0
        %v2423 = vadd.f32 0.0, %v2422
        %2424 = vmatmul.f32.gmra.mxu0 %v2123
        %v2425 = vpop.f32.mrf.mxu0
        %v2426 = vadd.f32 0.0, %v2425
        %2427 = vmatmul.f32.gmra.mxu0 %v2125
        %v2428 = vpop.f32.mrf.mxu0
        %v2429 = vadd.f32 0.0, %v2428
        %2430 = vmatmul.f32.gmra.mxu0 %v2127
        %v2431 = vpop.f32.mrf.mxu0
        %v2432 = vadd.f32 0.0, %v2431
        %2433 = vdwg.mxu0
        %2434 = vmatpush.msra.mxu0 %v273
        %2435 = vmatpush.msra.mxu0 %v271
        %2436 = vmatpush.msra.mxu0 %v269
        %2437 = vmatpush.msra.mxu0 %v267
        %2438 = vmatpush.msra.mxu0 %v265
        %2439 = vmatpush.msra.mxu0 %v263
        %2440 = vmatpush.msra.mxu0 %v261
        %2441 = vmatpush.msra.mxu0 %v259
        %2442 = vmatpush.msra.mxu0 %v257
        %2443 = vmatpush.msra.mxu0 %v255
        %2444 = vmatpush.msra.mxu0 %v253
        %2445 = vmatpush.msra.mxu0 %v251
        %2446 = vmatpush.msra.mxu0 %v249
        %2447 = vmatpush.msra.mxu0 %v247
        %2448 = vmatpush.msra.mxu0 %v245
        %2449 = vmatpush.msra.mxu0 %v243
        %2450 = vmatmul.f32.gmra.mxu0 %v1938
        %v2451 = vpop.f32.mrf.mxu0
        %v2452 = vadd.f32 %v2147, %v2451
        %2453 = vmatmul.f32.gmra.mxu0 %v1940
        %v2454 = vpop.f32.mrf.mxu0
        %v2455 = vadd.f32 %v2150, %v2454
        %2456 = vmatmul.f32.gmra.mxu0 %v1942
        %v2457 = vpop.f32.mrf.mxu0
        %v2458 = vadd.f32 %v2153, %v2457
        %2459 = vmatmul.f32.gmra.mxu0 %v1944
        %v2460 = vpop.f32.mrf.mxu0
        %v2461 = vadd.f32 %v2156, %v2460
        %2462 = vmatmul.f32.gmra.mxu0 %v1946
        %v2463 = vpop.f32.mrf.mxu0
        %v2464 = vadd.f32 %v2159, %v2463
        %2465 = vmatmul.f32.gmra.mxu0 %v1948
        %v2466 = vpop.f32.mrf.mxu0
        %v2467 = vadd.f32 %v2162, %v2466
        %2468 = vmatmul.f32.gmra.mxu0 %v1950
        %v2469 = vpop.f32.mrf.mxu0
        %v2470 = vadd.f32 %v2165, %v2469
        %2471 = vmatmul.f32.gmra.mxu0 %v1952
        %v2472 = vpop.f32.mrf.mxu0
        %v2473 = vadd.f32 %v2168, %v2472
        %2474 = vmatmul.f32.gmra.mxu0 %v1954
        %v2475 = vpop.f32.mrf.mxu0
        %v2476 = vadd.f32 %v2171, %v2475
        %2477 = vmatmul.f32.gmra.mxu0 %v1956
        %v2478 = vpop.f32.mrf.mxu0
        %v2479 = vadd.f32 %v2174, %v2478
        %2480 = vmatmul.f32.gmra.mxu0 %v1958
        %v2481 = vpop.f32.mrf.mxu0
        %v2482 = vadd.f32 %v2177, %v2481
        %2483 = vmatmul.f32.gmra.mxu0 %v1960
        %v2484 = vpop.f32.mrf.mxu0
        %v2485 = vadd.f32 %v2180, %v2484
        %2486 = vmatmul.f32.gmra.mxu0 %v1962
        %v2487 = vpop.f32.mrf.mxu0
        %v2488 = vadd.f32 %v2183, %v2487
        %2489 = vmatmul.f32.gmra.mxu0 %v1964
        %v2490 = vpop.f32.mrf.mxu0
        %v2491 = vadd.f32 %v2186, %v2490
        %2492 = vmatmul.f32.gmra.mxu0 %v1966
        %v2493 = vpop.f32.mrf.mxu0
        %v2494 = vadd.f32 %v2189, %v2493
        %2495 = vmatmul.f32.gmra.mxu0 %v1968
        %v2496 = vpop.f32.mrf.mxu0
        %v2497 = vadd.f32 %v2192, %v2496
        %2498 = vmatmul.f32.gmra.mxu0 %v1970
        %v2499 = vpop.f32.mrf.mxu0
        %v2500 = vadd.f32 %v2195, %v2499
        %2501 = vmatmul.f32.gmra.mxu0 %v1972
        %v2502 = vpop.f32.mrf.mxu0
        %v2503 = vadd.f32 %v2198, %v2502
        %2504 = vmatmul.f32.gmra.mxu0 %v1974
        %v2505 = vpop.f32.mrf.mxu0
        %v2506 = vadd.f32 %v2201, %v2505
        %2507 = vmatmul.f32.gmra.mxu0 %v1976
        %v2508 = vpop.f32.mrf.mxu0
        %v2509 = vadd.f32 %v2204, %v2508
        %2510 = vmatmul.f32.gmra.mxu0 %v1978
        %v2511 = vpop.f32.mrf.mxu0
        %v2512 = vadd.f32 %v2207, %v2511
        %2513 = vmatmul.f32.gmra.mxu0 %v1980
        %v2514 = vpop.f32.mrf.mxu0
        %v2515 = vadd.f32 %v2210, %v2514
        %2516 = vmatmul.f32.gmra.mxu0 %v1982
        %v2517 = vpop.f32.mrf.mxu0
        %v2518 = vadd.f32 %v2213, %v2517
        %2519 = vmatmul.f32.gmra.mxu0 %v1984
        %v2520 = vpop.f32.mrf.mxu0
        %v2521 = vadd.f32 %v2216, %v2520
        %2522 = vmatmul.f32.gmra.mxu0 %v1986
        %v2523 = vpop.f32.mrf.mxu0
        %v2524 = vadd.f32 %v2219, %v2523
        %2525 = vmatmul.f32.gmra.mxu0 %v1988
        %v2526 = vpop.f32.mrf.mxu0
        %v2527 = vadd.f32 %v2222, %v2526
        %2528 = vmatmul.f32.gmra.mxu0 %v1990
        %v2529 = vpop.f32.mrf.mxu0
        %v2530 = vadd.f32 %v2225, %v2529
        %2531 = vmatmul.f32.gmra.mxu0 %v1992
        %v2532 = vpop.f32.mrf.mxu0
        %v2533 = vadd.f32 %v2228, %v2532
        %2534 = vmatmul.f32.gmra.mxu0 %v1994
        %v2535 = vpop.f32.mrf.mxu0
        %v2536 = vadd.f32 %v2231, %v2535
        %2537 = vmatmul.f32.gmra.mxu0 %v1996
        %v2538 = vpop.f32.mrf.mxu0
        %v2539 = vadd.f32 %v2234, %v2538
        %2540 = vmatmul.f32.gmra.mxu0 %v1998
        %v2541 = vpop.f32.mrf.mxu0
        %v2542 = vadd.f32 %v2237, %v2541
        %2543 = vmatmul.f32.gmra.mxu0 %v2000
        %v2544 = vpop.f32.mrf.mxu0
        %v2545 = vadd.f32 %v2240, %v2544
        %2546 = vmatmul.f32.gmra.mxu0 %v2002
        %v2547 = vpop.f32.mrf.mxu0
        %v2548 = vadd.f32 %v2243, %v2547
        %2549 = vmatmul.f32.gmra.mxu0 %v2004
        %v2550 = vpop.f32.mrf.mxu0
        %v2551 = vadd.f32 %v2246, %v2550
        %2552 = vmatmul.f32.gmra.mxu0 %v2006
        %v2553 = vpop.f32.mrf.mxu0
        %v2554 = vadd.f32 %v2249, %v2553
        %2555 = vmatmul.f32.gmra.mxu0 %v2008
        %v2556 = vpop.f32.mrf.mxu0
        %v2557 = vadd.f32 %v2252, %v2556
        %2558 = vmatmul.f32.gmra.mxu0 %v2010
        %v2559 = vpop.f32.mrf.mxu0
        %v2560 = vadd.f32 %v2255, %v2559
        %2561 = vmatmul.f32.gmra.mxu0 %v2012
        %v2562 = vpop.f32.mrf.mxu0
        %v2563 = vadd.f32 %v2258, %v2562
        %2564 = vmatmul.f32.gmra.mxu0 %v2014
        %v2565 = vpop.f32.mrf.mxu0
        %v2566 = vadd.f32 %v2261, %v2565
        %2567 = vmatmul.f32.gmra.mxu0 %v2016
        %v2568 = vpop.f32.mrf.mxu0
        %v2569 = vadd.f32 %v2264, %v2568
        %2570 = vmatmul.f32.gmra.mxu0 %v2018
        %v2571 = vpop.f32.mrf.mxu0
        %v2572 = vadd.f32 %v2267, %v2571
        %2573 = vmatmul.f32.gmra.mxu0 %v2020
        %v2574 = vpop.f32.mrf.mxu0
        %v2575 = vadd.f32 %v2270, %v2574
        %2576 = vmatmul.f32.gmra.mxu0 %v2022
        %v2577 = vpop.f32.mrf.mxu0
        %v2578 = vadd.f32 %v2273, %v2577
        %2579 = vmatmul.f32.gmra.mxu0 %v2024
        %v2580 = vpop.f32.mrf.mxu0
        %v2581 = vadd.f32 %v2276, %v2580
        %2582 = vmatmul.f32.gmra.mxu0 %v2026
        %v2583 = vpop.f32.mrf.mxu0
        %v2584 = vadd.f32 %v2279, %v2583
        %2585 = vmatmul.f32.gmra.mxu0 %v2028
        %v2586 = vpop.f32.mrf.mxu0
        %v2587 = vadd.f32 %v2282, %v2586
        %2588 = vmatmul.f32.gmra.mxu0 %v2030
        %v2589 = vpop.f32.mrf.mxu0
        %v2590 = vadd.f32 %v2285, %v2589
        %2591 = vmatmul.f32.gmra.mxu0 %v2032
        %v2592 = vpop.f32.mrf.mxu0
        %v2593 = vadd.f32 %v2288, %v2592
        %2594 = vmatmul.f32.gmra.mxu0 %v2034
        %v2595 = vpop.f32.mrf.mxu0
        %v2596 = vadd.f32 %v2291, %v2595
        %2597 = vmatmul.f32.gmra.mxu0 %v2036
        %v2598 = vpop.f32.mrf.mxu0
        %v2599 = vadd.f32 %v2294, %v2598
        %2600 = vmatmul.f32.gmra.mxu0 %v2038
        %v2601 = vpop.f32.mrf.mxu0
        %v2602 = vadd.f32 %v2297, %v2601
        %2603 = vmatmul.f32.gmra.mxu0 %v2040
        %v2604 = vpop.f32.mrf.mxu0
        %v2605 = vadd.f32 %v2300, %v2604
        %2606 = vmatmul.f32.gmra.mxu0 %v2042
        %v2607 = vpop.f32.mrf.mxu0
        %v2608 = vadd.f32 %v2303, %v2607
        %2609 = vmatmul.f32.gmra.mxu0 %v2044
        %v2610 = vpop.f32.mrf.mxu0
        %v2611 = vadd.f32 %v2306, %v2610
        %2612 = vmatmul.f32.gmra.mxu0 %v2046
        %v2613 = vpop.f32.mrf.mxu0
        %v2614 = vadd.f32 %v2309, %v2613
        %2615 = vmatmul.f32.gmra.mxu0 %v2048
        %v2616 = vpop.f32.mrf.mxu0
        %v2617 = vadd.f32 %v2312, %v2616
        %2618 = vmatmul.f32.gmra.mxu0 %v2050
        %v2619 = vpop.f32.mrf.mxu0
        %v2620 = vadd.f32 %v2315, %v2619
        %2621 = vmatmul.f32.gmra.mxu0 %v2052
        %v2622 = vpop.f32.mrf.mxu0
        %v2623 = vadd.f32 %v2318, %v2622
        %2624 = vmatmul.f32.gmra.mxu0 %v2054
        %v2625 = vpop.f32.mrf.mxu0
        %v2626 = vadd.f32 %v2321, %v2625
        %2627 = vmatmul.f32.gmra.mxu0 %v2056
        %v2628 = vpop.f32.mrf.mxu0
        %v2629 = vadd.f32 %v2324, %v2628
        %2630 = vmatmul.f32.gmra.mxu0 %v2058
        %v2631 = vpop.f32.mrf.mxu0
        %v2632 = vadd.f32 %v2327, %v2631
        %2633 = vmatmul.f32.gmra.mxu0 %v2060
        %v2634 = vpop.f32.mrf.mxu0
        %v2635 = vadd.f32 %v2330, %v2634
        %2636 = vmatmul.f32.gmra.mxu0 %v2062
        %v2637 = vpop.f32.mrf.mxu0
        %v2638 = vadd.f32 %v2333, %v2637
        %2639 = vmatmul.f32.gmra.mxu0 %v2064
        %v2640 = vpop.f32.mrf.mxu0
        %v2641 = vadd.f32 %v2336, %v2640
        %2642 = vmatmul.f32.gmra.mxu0 %v2066
        %v2643 = vpop.f32.mrf.mxu0
        %v2644 = vadd.f32 %v2339, %v2643
        %2645 = vmatmul.f32.gmra.mxu0 %v2068
        %v2646 = vpop.f32.mrf.mxu0
        %v2647 = vadd.f32 %v2342, %v2646
        %2648 = vmatmul.f32.gmra.mxu0 %v2070
        %v2649 = vpop.f32.mrf.mxu0
        %v2650 = vadd.f32 %v2345, %v2649
        %2651 = vmatmul.f32.gmra.mxu0 %v2072
        %v2652 = vpop.f32.mrf.mxu0
        %v2653 = vadd.f32 %v2348, %v2652
        %2654 = vmatmul.f32.gmra.mxu0 %v2074
        %v2655 = vpop.f32.mrf.mxu0
        %v2656 = vadd.f32 %v2351, %v2655
        %2657 = vmatmul.f32.gmra.mxu0 %v2076
        %v2658 = vpop.f32.mrf.mxu0
        %v2659 = vadd.f32 %v2354, %v2658
        %2660 = vmatmul.f32.gmra.mxu0 %v2078
        %v2661 = vpop.f32.mrf.mxu0
        %v2662 = vadd.f32 %v2357, %v2661
        %2663 = vmatmul.f32.gmra.mxu0 %v2080
        %v2664 = vpop.f32.mrf.mxu0
        %v2665 = vadd.f32 %v2360, %v2664
        %2666 = vmatmul.f32.gmra.mxu0 %v2082
        %v2667 = vpop.f32.mrf.mxu0
        %v2668 = vadd.f32 %v2363, %v2667
        %2669 = vmatmul.f32.gmra.mxu0 %v2084
        %v2670 = vpop.f32.mrf.mxu0
        %v2671 = vadd.f32 %v2366, %v2670
        %2672 = vmatmul.f32.gmra.mxu0 %v2086
        %v2673 = vpop.f32.mrf.mxu0
        %v2674 = vadd.f32 %v2369, %v2673
        %2675 = vmatmul.f32.gmra.mxu0 %v2088
        %v2676 = vpop.f32.mrf.mxu0
        %v2677 = vadd.f32 %v2372, %v2676
        %2678 = vmatmul.f32.gmra.mxu0 %v2090
        %v2679 = vpop.f32.mrf.mxu0
        %v2680 = vadd.f32 %v2375, %v2679
        %2681 = vmatmul.f32.gmra.mxu0 %v2092
        %v2682 = vpop.f32.mrf.mxu0
        %v2683 = vadd.f32 %v2378, %v2682
        %2684 = vmatmul.f32.gmra.mxu0 %v2094
        %v2685 = vpop.f32.mrf.mxu0
        %v2686 = vadd.f32 %v2381, %v2685
        %2687 = vmatmul.f32.gmra.mxu0 %v2096
        %v2688 = vpop.f32.mrf.mxu0
        %v2689 = vadd.f32 %v2384, %v2688
        %2690 = vmatmul.f32.gmra.mxu0 %v2098
        %v2691 = vpop.f32.mrf.mxu0
        %v2692 = vadd.f32 %v2387, %v2691
        %2693 = vmatmul.f32.gmra.mxu0 %v2100
        %v2694 = vpop.f32.mrf.mxu0
        %v2695 = vadd.f32 %v2390, %v2694
        %2696 = vmatmul.f32.gmra.mxu0 %v2102
        %v2697 = vpop.f32.mrf.mxu0
        %v2698 = vadd.f32 %v2393, %v2697
        %2699 = vmatmul.f32.gmra.mxu0 %v2104
        %v2700 = vpop.f32.mrf.mxu0
        %v2701 = vadd.f32 %v2396, %v2700
        %2702 = vmatmul.f32.gmra.mxu0 %v2106
        %v2703 = vpop.f32.mrf.mxu0
        %v2704 = vadd.f32 %v2399, %v2703
        %2705 = vmatmul.f32.gmra.mxu0 %v2108
        %v2706 = vpop.f32.mrf.mxu0
        %v2707 = vadd.f32 %v2402, %v2706
        %2708 = vmatmul.f32.gmra.mxu0 %v2110
        %v2709 = vpop.f32.mrf.mxu0
        %v2710 = vadd.f32 %v2405, %v2709
        %2711 = vmatmul.f32.gmra.mxu0 %v2112
        %v2712 = vpop.f32.mrf.mxu0
        %v2713 = vadd.f32 %v2408, %v2712
        %2714 = vmatmul.f32.gmra.mxu0 %v2114
        %v2715 = vpop.f32.mrf.mxu0
        %v2716 = vadd.f32 %v2411, %v2715
        %2717 = vmatmul.f32.gmra.mxu0 %v2116
        %v2718 = vpop.f32.mrf.mxu0
        %v2719 = vadd.f32 %v2414, %v2718
        %2720 = vmatmul.f32.gmra.mxu0 %v2118
        %v2721 = vpop.f32.mrf.mxu0
        %v2722 = vadd.f32 %v2417, %v2721
        %2723 = vmatmul.f32.gmra.mxu0 %v2120
        %v2724 = vpop.f32.mrf.mxu0
        %v2725 = vadd.f32 %v2420, %v2724
        %2726 = vmatmul.f32.gmra.mxu0 %v2122
        %v2727 = vpop.f32.mrf.mxu0
        %v2728 = vadd.f32 %v2423, %v2727
        %2729 = vmatmul.f32.gmra.mxu0 %v2124
        %v2730 = vpop.f32.mrf.mxu0
        %v2731 = vadd.f32 %v2426, %v2730
        %2732 = vmatmul.f32.gmra.mxu0 %v2126
        %v2733 = vpop.f32.mrf.mxu0
        %v2734 = vadd.f32 %v2429, %v2733
        %2735 = vmatmul.f32.gmra.mxu0 %v2128
        %v2736 = vpop.f32.mrf.mxu0
        %v2737 = vadd.f32 %v2432, %v2736
        %2738 = vdwg.mxu0
        %2739 = vmatpush.msra.mxu0 %v242
        %2740 = vmatpush.msra.mxu0 %v240
        %2741 = vmatpush.msra.mxu0 %v238
        %2742 = vmatpush.msra.mxu0 %v236
        %2743 = vmatpush.msra.mxu0 %v234
        %2744 = vmatpush.msra.mxu0 %v232
        %2745 = vmatpush.msra.mxu0 %v230
        %2746 = vmatpush.msra.mxu0 %v228
        %2747 = vmatpush.msra.mxu0 %v226
        %2748 = vmatpush.msra.mxu0 %v224
        %2749 = vmatpush.msra.mxu0 %v222
        %2750 = vmatpush.msra.mxu0 %v220
        %2751 = vmatpush.msra.mxu0 %v218
        %2752 = vmatpush.msra.mxu0 %v216
        %2753 = vmatpush.msra.mxu0 %v214
        %2754 = vmatpush.msra.mxu0 %v212
        %2755 = vmatmul.f32.gmra.mxu0 %v1937
        %v2756 = vpop.f32.mrf.mxu0
        %v2757 = vadd.f32 0.0, %v2756
        %2758 = vmatmul.f32.gmra.mxu0 %v1939
        %v2759 = vpop.f32.mrf.mxu0
        %v2760 = vadd.f32 0.0, %v2759
        %2761 = vmatmul.f32.gmra.mxu0 %v1941
        %v2762 = vpop.f32.mrf.mxu0
        %v2763 = vadd.f32 0.0, %v2762
        %2764 = vmatmul.f32.gmra.mxu0 %v1943
        %v2765 = vpop.f32.mrf.mxu0
        %v2766 = vadd.f32 0.0, %v2765
        %2767 = vmatmul.f32.gmra.mxu0 %v1945
        %v2768 = vpop.f32.mrf.mxu0
        %v2769 = vadd.f32 0.0, %v2768
        %2770 = vmatmul.f32.gmra.mxu0 %v1947
        %v2771 = vpop.f32.mrf.mxu0
        %v2772 = vadd.f32 0.0, %v2771
        %2773 = vmatmul.f32.gmra.mxu0 %v1949
        %v2774 = vpop.f32.mrf.mxu0
        %v2775 = vadd.f32 0.0, %v2774
        %2776 = vmatmul.f32.gmra.mxu0 %v1951
        %v2777 = vpop.f32.mrf.mxu0
        %v2778 = vadd.f32 0.0, %v2777
        %2779 = vmatmul.f32.gmra.mxu0 %v1953
        %v2780 = vpop.f32.mrf.mxu0
        %v2781 = vadd.f32 0.0, %v2780
        %2782 = vmatmul.f32.gmra.mxu0 %v1955
        %v2783 = vpop.f32.mrf.mxu0
        %v2784 = vadd.f32 0.0, %v2783
        %2785 = vmatmul.f32.gmra.mxu0 %v1957
        %v2786 = vpop.f32.mrf.mxu0
        %v2787 = vadd.f32 0.0, %v2786
        %2788 = vmatmul.f32.gmra.mxu0 %v1959
        %v2789 = vpop.f32.mrf.mxu0
        %v2790 = vadd.f32 0.0, %v2789
        %2791 = vmatmul.f32.gmra.mxu0 %v1961
        %v2792 = vpop.f32.mrf.mxu0
        %v2793 = vadd.f32 0.0, %v2792
        %2794 = vmatmul.f32.gmra.mxu0 %v1963
        %v2795 = vpop.f32.mrf.mxu0
        %v2796 = vadd.f32 0.0, %v2795
        %2797 = vmatmul.f32.gmra.mxu0 %v1965
        %v2798 = vpop.f32.mrf.mxu0
        %v2799 = vadd.f32 0.0, %v2798
        %2800 = vmatmul.f32.gmra.mxu0 %v1967
        %v2801 = vpop.f32.mrf.mxu0
        %v2802 = vadd.f32 0.0, %v2801
        %2803 = vmatmul.f32.gmra.mxu0 %v1969
        %v2804 = vpop.f32.mrf.mxu0
        %v2805 = vadd.f32 0.0, %v2804
        %2806 = vmatmul.f32.gmra.mxu0 %v1971
        %v2807 = vpop.f32.mrf.mxu0
        %v2808 = vadd.f32 0.0, %v2807
        %2809 = vmatmul.f32.gmra.mxu0 %v1973
        %v2810 = vpop.f32.mrf.mxu0
        %v2811 = vadd.f32 0.0, %v2810
        %2812 = vmatmul.f32.gmra.mxu0 %v1975
        %v2813 = vpop.f32.mrf.mxu0
        %v2814 = vadd.f32 0.0, %v2813
        %2815 = vmatmul.f32.gmra.mxu0 %v1977
        %v2816 = vpop.f32.mrf.mxu0
        %v2817 = vadd.f32 0.0, %v2816
        %2818 = vmatmul.f32.gmra.mxu0 %v1979
        %v2819 = vpop.f32.mrf.mxu0
        %v2820 = vadd.f32 0.0, %v2819
        %2821 = vmatmul.f32.gmra.mxu0 %v1981
        %v2822 = vpop.f32.mrf.mxu0
        %v2823 = vadd.f32 0.0, %v2822
        %2824 = vmatmul.f32.gmra.mxu0 %v1983
        %v2825 = vpop.f32.mrf.mxu0
        %v2826 = vadd.f32 0.0, %v2825
        %2827 = vmatmul.f32.gmra.mxu0 %v1985
        %v2828 = vpop.f32.mrf.mxu0
        %v2829 = vadd.f32 0.0, %v2828
        %2830 = vmatmul.f32.gmra.mxu0 %v1987
        %v2831 = vpop.f32.mrf.mxu0
        %v2832 = vadd.f32 0.0, %v2831
        %2833 = vmatmul.f32.gmra.mxu0 %v1989
        %v2834 = vpop.f32.mrf.mxu0
        %v2835 = vadd.f32 0.0, %v2834
        %2836 = vmatmul.f32.gmra.mxu0 %v1991
        %v2837 = vpop.f32.mrf.mxu0
        %v2838 = vadd.f32 0.0, %v2837
        %2839 = vmatmul.f32.gmra.mxu0 %v1993
        %v2840 = vpop.f32.mrf.mxu0
        %v2841 = vadd.f32 0.0, %v2840
        %2842 = vmatmul.f32.gmra.mxu0 %v1995
        %v2843 = vpop.f32.mrf.mxu0
        %v2844 = vadd.f32 0.0, %v2843
        %2845 = vmatmul.f32.gmra.mxu0 %v1997
        %v2846 = vpop.f32.mrf.mxu0
        %v2847 = vadd.f32 0.0, %v2846
        %2848 = vmatmul.f32.gmra.mxu0 %v1999
        %v2849 = vpop.f32.mrf.mxu0
        %v2850 = vadd.f32 0.0, %v2849
        %2851 = vmatmul.f32.gmra.mxu0 %v2001
        %v2852 = vpop.f32.mrf.mxu0
        %v2853 = vadd.f32 0.0, %v2852
        %2854 = vmatmul.f32.gmra.mxu0 %v2003
        %v2855 = vpop.f32.mrf.mxu0
        %v2856 = vadd.f32 0.0, %v2855
        %2857 = vmatmul.f32.gmra.mxu0 %v2005
        %v2858 = vpop.f32.mrf.mxu0
        %v2859 = vadd.f32 0.0, %v2858
        %2860 = vmatmul.f32.gmra.mxu0 %v2007
        %v2861 = vpop.f32.mrf.mxu0
        %v2862 = vadd.f32 0.0, %v2861
        %2863 = vmatmul.f32.gmra.mxu0 %v2009
        %v2864 = vpop.f32.mrf.mxu0
        %v2865 = vadd.f32 0.0, %v2864
        %2866 = vmatmul.f32.gmra.mxu0 %v2011
        %v2867 = vpop.f32.mrf.mxu0
        %v2868 = vadd.f32 0.0, %v2867
        %2869 = vmatmul.f32.gmra.mxu0 %v2013
        %v2870 = vpop.f32.mrf.mxu0
        %v2871 = vadd.f32 0.0, %v2870
        %2872 = vmatmul.f32.gmra.mxu0 %v2015
        %v2873 = vpop.f32.mrf.mxu0
        %v2874 = vadd.f32 0.0, %v2873
        %2875 = vmatmul.f32.gmra.mxu0 %v2017
        %v2876 = vpop.f32.mrf.mxu0
        %v2877 = vadd.f32 0.0, %v2876
        %2878 = vmatmul.f32.gmra.mxu0 %v2019
        %v2879 = vpop.f32.mrf.mxu0
        %v2880 = vadd.f32 0.0, %v2879
        %2881 = vmatmul.f32.gmra.mxu0 %v2021
        %v2882 = vpop.f32.mrf.mxu0
        %v2883 = vadd.f32 0.0, %v2882
        %2884 = vmatmul.f32.gmra.mxu0 %v2023
        %v2885 = vpop.f32.mrf.mxu0
        %v2886 = vadd.f32 0.0, %v2885
        %2887 = vmatmul.f32.gmra.mxu0 %v2025
        %v2888 = vpop.f32.mrf.mxu0
        %v2889 = vadd.f32 0.0, %v2888
        %2890 = vmatmul.f32.gmra.mxu0 %v2027
        %v2891 = vpop.f32.mrf.mxu0
        %v2892 = vadd.f32 0.0, %v2891
        %2893 = vmatmul.f32.gmra.mxu0 %v2029
        %v2894 = vpop.f32.mrf.mxu0
        %v2895 = vadd.f32 0.0, %v2894
        %2896 = vmatmul.f32.gmra.mxu0 %v2031
        %v2897 = vpop.f32.mrf.mxu0
        %v2898 = vadd.f32 0.0, %v2897
        %2899 = vmatmul.f32.gmra.mxu0 %v2033
        %v2900 = vpop.f32.mrf.mxu0
        %v2901 = vadd.f32 0.0, %v2900
        %2902 = vmatmul.f32.gmra.mxu0 %v2035
        %v2903 = vpop.f32.mrf.mxu0
        %v2904 = vadd.f32 0.0, %v2903
        %2905 = vmatmul.f32.gmra.mxu0 %v2037
        %v2906 = vpop.f32.mrf.mxu0
        %v2907 = vadd.f32 0.0, %v2906
        %2908 = vmatmul.f32.gmra.mxu0 %v2039
        %v2909 = vpop.f32.mrf.mxu0
        %v2910 = vadd.f32 0.0, %v2909
        %2911 = vmatmul.f32.gmra.mxu0 %v2041
        %v2912 = vpop.f32.mrf.mxu0
        %v2913 = vadd.f32 0.0, %v2912
        %2914 = vmatmul.f32.gmra.mxu0 %v2043
        %v2915 = vpop.f32.mrf.mxu0
        %v2916 = vadd.f32 0.0, %v2915
        %2917 = vmatmul.f32.gmra.mxu0 %v2045
        %v2918 = vpop.f32.mrf.mxu0
        %v2919 = vadd.f32 0.0, %v2918
        %2920 = vmatmul.f32.gmra.mxu0 %v2047
        %v2921 = vpop.f32.mrf.mxu0
        %v2922 = vadd.f32 0.0, %v2921
        %2923 = vmatmul.f32.gmra.mxu0 %v2049
        %v2924 = vpop.f32.mrf.mxu0
        %v2925 = vadd.f32 0.0, %v2924
        %2926 = vmatmul.f32.gmra.mxu0 %v2051
        %v2927 = vpop.f32.mrf.mxu0
        %v2928 = vadd.f32 0.0, %v2927
        %2929 = vmatmul.f32.gmra.mxu0 %v2053
        %v2930 = vpop.f32.mrf.mxu0
        %v2931 = vadd.f32 0.0, %v2930
        %2932 = vmatmul.f32.gmra.mxu0 %v2055
        %v2933 = vpop.f32.mrf.mxu0
        %v2934 = vadd.f32 0.0, %v2933
        %2935 = vmatmul.f32.gmra.mxu0 %v2057
        %v2936 = vpop.f32.mrf.mxu0
        %v2937 = vadd.f32 0.0, %v2936
        %2938 = vmatmul.f32.gmra.mxu0 %v2059
        %v2939 = vpop.f32.mrf.mxu0
        %v2940 = vadd.f32 0.0, %v2939
        %2941 = vmatmul.f32.gmra.mxu0 %v2061
        %v2942 = vpop.f32.mrf.mxu0
        %v2943 = vadd.f32 0.0, %v2942
        %2944 = vmatmul.f32.gmra.mxu0 %v2063
        %v2945 = vpop.f32.mrf.mxu0
        %v2946 = vadd.f32 0.0, %v2945
        %2947 = vmatmul.f32.gmra.mxu0 %v2065
        %v2948 = vpop.f32.mrf.mxu0
        %v2949 = vadd.f32 0.0, %v2948
        %2950 = vmatmul.f32.gmra.mxu0 %v2067
        %v2951 = vpop.f32.mrf.mxu0
        %v2952 = vadd.f32 0.0, %v2951
        %2953 = vmatmul.f32.gmra.mxu0 %v2069
        %v2954 = vpop.f32.mrf.mxu0
        %v2955 = vadd.f32 0.0, %v2954
        %2956 = vmatmul.f32.gmra.mxu0 %v2071
        %v2957 = vpop.f32.mrf.mxu0
        %v2958 = vadd.f32 0.0, %v2957
        %2959 = vmatmul.f32.gmra.mxu0 %v2073
        %v2960 = vpop.f32.mrf.mxu0
        %v2961 = vadd.f32 0.0, %v2960
        %2962 = vmatmul.f32.gmra.mxu0 %v2075
        %v2963 = vpop.f32.mrf.mxu0
        %v2964 = vadd.f32 0.0, %v2963
        %2965 = vmatmul.f32.gmra.mxu0 %v2077
        %v2966 = vpop.f32.mrf.mxu0
        %v2967 = vadd.f32 0.0, %v2966
        %2968 = vmatmul.f32.gmra.mxu0 %v2079
        %v2969 = vpop.f32.mrf.mxu0
        %v2970 = vadd.f32 0.0, %v2969
        %2971 = vmatmul.f32.gmra.mxu0 %v2081
        %v2972 = vpop.f32.mrf.mxu0
        %v2973 = vadd.f32 0.0, %v2972
        %2974 = vmatmul.f32.gmra.mxu0 %v2083
        %v2975 = vpop.f32.mrf.mxu0
        %v2976 = vadd.f32 0.0, %v2975
        %2977 = vmatmul.f32.gmra.mxu0 %v2085
        %v2978 = vpop.f32.mrf.mxu0
        %v2979 = vadd.f32 0.0, %v2978
        %2980 = vmatmul.f32.gmra.mxu0 %v2087
        %v2981 = vpop.f32.mrf.mxu0
        %v2982 = vadd.f32 0.0, %v2981
        %2983 = vmatmul.f32.gmra.mxu0 %v2089
        %v2984 = vpop.f32.mrf.mxu0
        %v2985 = vadd.f32 0.0, %v2984
        %2986 = vmatmul.f32.gmra.mxu0 %v2091
        %v2987 = vpop.f32.mrf.mxu0
        %v2988 = vadd.f32 0.0, %v2987
        %2989 = vmatmul.f32.gmra.mxu0 %v2093
        %v2990 = vpop.f32.mrf.mxu0
        %v2991 = vadd.f32 0.0, %v2990
        %2992 = vmatmul.f32.gmra.mxu0 %v2095
        %v2993 = vpop.f32.mrf.mxu0
        %v2994 = vadd.f32 0.0, %v2993
        %2995 = vmatmul.f32.gmra.mxu0 %v2097
        %v2996 = vpop.f32.mrf.mxu0
        %v2997 = vadd.f32 0.0, %v2996
        %2998 = vmatmul.f32.gmra.mxu0 %v2099
        %v2999 = vpop.f32.mrf.mxu0
        %v3000 = vadd.f32 0.0, %v2999
        %3001 = vmatmul.f32.gmra.mxu0 %v2101
        %v3002 = vpop.f32.mrf.mxu0
        %v3003 = vadd.f32 0.0, %v3002
        %3004 = vmatmul.f32.gmra.mxu0 %v2103
        %v3005 = vpop.f32.mrf.mxu0
        %v3006 = vadd.f32 0.0, %v3005
        %3007 = vmatmul.f32.gmra.mxu0 %v2105
        %v3008 = vpop.f32.mrf.mxu0
        %v3009 = vadd.f32 0.0, %v3008
        %3010 = vmatmul.f32.gmra.mxu0 %v2107
        %v3011 = vpop.f32.mrf.mxu0
        %v3012 = vadd.f32 0.0, %v3011
        %3013 = vmatmul.f32.gmra.mxu0 %v2109
        %v3014 = vpop.f32.mrf.mxu0
        %v3015 = vadd.f32 0.0, %v3014
        %3016 = vmatmul.f32.gmra.mxu0 %v2111
        %v3017 = vpop.f32.mrf.mxu0
        %v3018 = vadd.f32 0.0, %v3017
        %3019 = vmatmul.f32.gmra.mxu0 %v2113
        %v3020 = vpop.f32.mrf.mxu0
        %v3021 = vadd.f32 0.0, %v3020
        %3022 = vmatmul.f32.gmra.mxu0 %v2115
        %v3023 = vpop.f32.mrf.mxu0
        %v3024 = vadd.f32 0.0, %v3023
        %3025 = vmatmul.f32.gmra.mxu0 %v2117
        %v3026 = vpop.f32.mrf.mxu0
        %v3027 = vadd.f32 0.0, %v3026
        %3028 = vmatmul.f32.gmra.mxu0 %v2119
        %v3029 = vpop.f32.mrf.mxu0
        %v3030 = vadd.f32 0.0, %v3029
        %3031 = vmatmul.f32.gmra.mxu0 %v2121
        %v3032 = vpop.f32.mrf.mxu0
        %v3033 = vadd.f32 0.0, %v3032
        %3034 = vmatmul.f32.gmra.mxu0 %v2123
        %v3035 = vpop.f32.mrf.mxu0
        %v3036 = vadd.f32 0.0, %v3035
        %3037 = vmatmul.f32.gmra.mxu0 %v2125
        %v3038 = vpop.f32.mrf.mxu0
        %v3039 = vadd.f32 0.0, %v3038
        %3040 = vmatmul.f32.gmra.mxu0 %v2127
        %v3041 = vpop.f32.mrf.mxu0
        %v3042 = vadd.f32 0.0, %v3041
        %3043 = vdwg.mxu0
        %3044 = vmatpush.msra.mxu0 %v274
        %3045 = vmatpush.msra.mxu0 %v272
        %3046 = vmatpush.msra.mxu0 %v270
        %3047 = vmatpush.msra.mxu0 %v268
        %3048 = vmatpush.msra.mxu0 %v266
        %3049 = vmatpush.msra.mxu0 %v264
        %3050 = vmatpush.msra.mxu0 %v262
        %3051 = vmatpush.msra.mxu0 %v260
        %3052 = vmatpush.msra.mxu0 %v258
        %3053 = vmatpush.msra.mxu0 %v256
        %3054 = vmatpush.msra.mxu0 %v254
        %3055 = vmatpush.msra.mxu0 %v252
        %3056 = vmatpush.msra.mxu0 %v250
        %3057 = vmatpush.msra.mxu0 %v248
        %3058 = vmatpush.msra.mxu0 %v246
        %3059 = vmatpush.msra.mxu0 %v244
        %3060 = vmatmul.f32.gmra.mxu0 %v1938
        %v3061 = vpop.f32.mrf.mxu0
        %v3062 = vadd.f32 %v2757, %v3061
        %3063 = vmatmul.f32.gmra.mxu0 %v1940
        %v3064 = vpop.f32.mrf.mxu0
        %v3065 = vadd.f32 %v2760, %v3064
        %3066 = vmatmul.f32.gmra.mxu0 %v1942
        %v3067 = vpop.f32.mrf.mxu0
        %v3068 = vadd.f32 %v2763, %v3067
        %3069 = vmatmul.f32.gmra.mxu0 %v1944
        %v3070 = vpop.f32.mrf.mxu0
        %v3071 = vadd.f32 %v2766, %v3070
        %3072 = vmatmul.f32.gmra.mxu0 %v1946
        %v3073 = vpop.f32.mrf.mxu0
        %v3074 = vadd.f32 %v2769, %v3073
        %3075 = vmatmul.f32.gmra.mxu0 %v1948
        %v3076 = vpop.f32.mrf.mxu0
        %v3077 = vadd.f32 %v2772, %v3076
        %3078 = vmatmul.f32.gmra.mxu0 %v1950
        %v3079 = vpop.f32.mrf.mxu0
        %v3080 = vadd.f32 %v2775, %v3079
        %3081 = vmatmul.f32.gmra.mxu0 %v1952
        %v3082 = vpop.f32.mrf.mxu0
        %v3083 = vadd.f32 %v2778, %v3082
        %3084 = vmatmul.f32.gmra.mxu0 %v1954
        %v3085 = vpop.f32.mrf.mxu0
        %v3086 = vadd.f32 %v2781, %v3085
        %3087 = vmatmul.f32.gmra.mxu0 %v1956
        %v3088 = vpop.f32.mrf.mxu0
        %v3089 = vadd.f32 %v2784, %v3088
        %3090 = vmatmul.f32.gmra.mxu0 %v1958
        %v3091 = vpop.f32.mrf.mxu0
        %v3092 = vadd.f32 %v2787, %v3091
        %3093 = vmatmul.f32.gmra.mxu0 %v1960
        %v3094 = vpop.f32.mrf.mxu0
        %v3095 = vadd.f32 %v2790, %v3094
        %3096 = vmatmul.f32.gmra.mxu0 %v1962
        %v3097 = vpop.f32.mrf.mxu0
        %v3098 = vadd.f32 %v2793, %v3097
        %3099 = vmatmul.f32.gmra.mxu0 %v1964
        %v3100 = vpop.f32.mrf.mxu0
        %v3101 = vadd.f32 %v2796, %v3100
        %3102 = vmatmul.f32.gmra.mxu0 %v1966
        %v3103 = vpop.f32.mrf.mxu0
        %v3104 = vadd.f32 %v2799, %v3103
        %3105 = vmatmul.f32.gmra.mxu0 %v1968
        %v3106 = vpop.f32.mrf.mxu0
        %v3107 = vadd.f32 %v2802, %v3106
        %3108 = vmatmul.f32.gmra.mxu0 %v1970
        %v3109 = vpop.f32.mrf.mxu0
        %v3110 = vadd.f32 %v2805, %v3109
        %3111 = vmatmul.f32.gmra.mxu0 %v1972
        %v3112 = vpop.f32.mrf.mxu0
        %v3113 = vadd.f32 %v2808, %v3112
        %3114 = vmatmul.f32.gmra.mxu0 %v1974
        %v3115 = vpop.f32.mrf.mxu0
        %v3116 = vadd.f32 %v2811, %v3115
        %3117 = vmatmul.f32.gmra.mxu0 %v1976
        %v3118 = vpop.f32.mrf.mxu0
        %v3119 = vadd.f32 %v2814, %v3118
        %3120 = vmatmul.f32.gmra.mxu0 %v1978
        %v3121 = vpop.f32.mrf.mxu0
        %v3122 = vadd.f32 %v2817, %v3121
        %3123 = vmatmul.f32.gmra.mxu0 %v1980
        %v3124 = vpop.f32.mrf.mxu0
        %v3125 = vadd.f32 %v2820, %v3124
        %3126 = vmatmul.f32.gmra.mxu0 %v1982
        %v3127 = vpop.f32.mrf.mxu0
        %v3128 = vadd.f32 %v2823, %v3127
        %3129 = vmatmul.f32.gmra.mxu0 %v1984
        %v3130 = vpop.f32.mrf.mxu0
        %v3131 = vadd.f32 %v2826, %v3130
        %3132 = vmatmul.f32.gmra.mxu0 %v1986
        %v3133 = vpop.f32.mrf.mxu0
        %v3134 = vadd.f32 %v2829, %v3133
        %3135 = vmatmul.f32.gmra.mxu0 %v1988
        %v3136 = vpop.f32.mrf.mxu0
        %v3137 = vadd.f32 %v2832, %v3136
        %3138 = vmatmul.f32.gmra.mxu0 %v1990
        %v3139 = vpop.f32.mrf.mxu0
        %v3140 = vadd.f32 %v2835, %v3139
        %3141 = vmatmul.f32.gmra.mxu0 %v1992
        %v3142 = vpop.f32.mrf.mxu0
        %v3143 = vadd.f32 %v2838, %v3142
        %3144 = vmatmul.f32.gmra.mxu0 %v1994
        %v3145 = vpop.f32.mrf.mxu0
        %v3146 = vadd.f32 %v2841, %v3145
        %3147 = vmatmul.f32.gmra.mxu0 %v1996
        %v3148 = vpop.f32.mrf.mxu0
        %v3149 = vadd.f32 %v2844, %v3148
        %3150 = vmatmul.f32.gmra.mxu0 %v1998
        %v3151 = vpop.f32.mrf.mxu0
        %v3152 = vadd.f32 %v2847, %v3151
        %3153 = vmatmul.f32.gmra.mxu0 %v2000
        %v3154 = vpop.f32.mrf.mxu0
        %v3155 = vadd.f32 %v2850, %v3154
        %3156 = vmatmul.f32.gmra.mxu0 %v2002
        %v3157 = vpop.f32.mrf.mxu0
        %v3158 = vadd.f32 %v2853, %v3157
        %3159 = vmatmul.f32.gmra.mxu0 %v2004
        %v3160 = vpop.f32.mrf.mxu0
        %v3161 = vadd.f32 %v2856, %v3160
        %3162 = vmatmul.f32.gmra.mxu0 %v2006
        %v3163 = vpop.f32.mrf.mxu0
        %v3164 = vadd.f32 %v2859, %v3163
        %3165 = vmatmul.f32.gmra.mxu0 %v2008
        %v3166 = vpop.f32.mrf.mxu0
        %v3167 = vadd.f32 %v2862, %v3166
        %3168 = vmatmul.f32.gmra.mxu0 %v2010
        %v3169 = vpop.f32.mrf.mxu0
        %v3170 = vadd.f32 %v2865, %v3169
        %3171 = vmatmul.f32.gmra.mxu0 %v2012
        %v3172 = vpop.f32.mrf.mxu0
        %v3173 = vadd.f32 %v2868, %v3172
        %3174 = vmatmul.f32.gmra.mxu0 %v2014
        %v3175 = vpop.f32.mrf.mxu0
        %v3176 = vadd.f32 %v2871, %v3175
        %3177 = vmatmul.f32.gmra.mxu0 %v2016
        %v3178 = vpop.f32.mrf.mxu0
        %v3179 = vadd.f32 %v2874, %v3178
        %3180 = vmatmul.f32.gmra.mxu0 %v2018
        %v3181 = vpop.f32.mrf.mxu0
        %v3182 = vadd.f32 %v2877, %v3181
        %3183 = vmatmul.f32.gmra.mxu0 %v2020
        %v3184 = vpop.f32.mrf.mxu0
        %v3185 = vadd.f32 %v2880, %v3184
        %3186 = vmatmul.f32.gmra.mxu0 %v2022
        %v3187 = vpop.f32.mrf.mxu0
        %v3188 = vadd.f32 %v2883, %v3187
        %3189 = vmatmul.f32.gmra.mxu0 %v2024
        %v3190 = vpop.f32.mrf.mxu0
        %v3191 = vadd.f32 %v2886, %v3190
        %3192 = vmatmul.f32.gmra.mxu0 %v2026
        %v3193 = vpop.f32.mrf.mxu0
        %v3194 = vadd.f32 %v2889, %v3193
        %3195 = vmatmul.f32.gmra.mxu0 %v2028
        %v3196 = vpop.f32.mrf.mxu0
        %v3197 = vadd.f32 %v2892, %v3196
        %3198 = vmatmul.f32.gmra.mxu0 %v2030
        %v3199 = vpop.f32.mrf.mxu0
        %v3200 = vadd.f32 %v2895, %v3199
        %3201 = vmatmul.f32.gmra.mxu0 %v2032
        %v3202 = vpop.f32.mrf.mxu0
        %v3203 = vadd.f32 %v2898, %v3202
        %3204 = vmatmul.f32.gmra.mxu0 %v2034
        %v3205 = vpop.f32.mrf.mxu0
        %v3206 = vadd.f32 %v2901, %v3205
        %3207 = vmatmul.f32.gmra.mxu0 %v2036
        %v3208 = vpop.f32.mrf.mxu0
        %v3209 = vadd.f32 %v2904, %v3208
        %3210 = vmatmul.f32.gmra.mxu0 %v2038
        %v3211 = vpop.f32.mrf.mxu0
        %v3212 = vadd.f32 %v2907, %v3211
        %3213 = vmatmul.f32.gmra.mxu0 %v2040
        %v3214 = vpop.f32.mrf.mxu0
        %v3215 = vadd.f32 %v2910, %v3214
        %3216 = vmatmul.f32.gmra.mxu0 %v2042
        %v3217 = vpop.f32.mrf.mxu0
        %v3218 = vadd.f32 %v2913, %v3217
        %3219 = vmatmul.f32.gmra.mxu0 %v2044
        %v3220 = vpop.f32.mrf.mxu0
        %v3221 = vadd.f32 %v2916, %v3220
        %3222 = vmatmul.f32.gmra.mxu0 %v2046
        %v3223 = vpop.f32.mrf.mxu0
        %v3224 = vadd.f32 %v2919, %v3223
        %3225 = vmatmul.f32.gmra.mxu0 %v2048
        %v3226 = vpop.f32.mrf.mxu0
        %v3227 = vadd.f32 %v2922, %v3226
        %3228 = vmatmul.f32.gmra.mxu0 %v2050
        %v3229 = vpop.f32.mrf.mxu0
        %v3230 = vadd.f32 %v2925, %v3229
        %3231 = vmatmul.f32.gmra.mxu0 %v2052
        %v3232 = vpop.f32.mrf.mxu0
        %v3233 = vadd.f32 %v2928, %v3232
        %3234 = vmatmul.f32.gmra.mxu0 %v2054
        %v3235 = vpop.f32.mrf.mxu0
        %v3236 = vadd.f32 %v2931, %v3235
        %3237 = vmatmul.f32.gmra.mxu0 %v2056
        %v3238 = vpop.f32.mrf.mxu0
        %v3239 = vadd.f32 %v2934, %v3238
        %3240 = vmatmul.f32.gmra.mxu0 %v2058
        %v3241 = vpop.f32.mrf.mxu0
        %v3242 = vadd.f32 %v2937, %v3241
        %3243 = vmatmul.f32.gmra.mxu0 %v2060
        %v3244 = vpop.f32.mrf.mxu0
        %v3245 = vadd.f32 %v2940, %v3244
        %3246 = vmatmul.f32.gmra.mxu0 %v2062
        %v3247 = vpop.f32.mrf.mxu0
        %v3248 = vadd.f32 %v2943, %v3247
        %3249 = vmatmul.f32.gmra.mxu0 %v2064
        %v3250 = vpop.f32.mrf.mxu0
        %v3251 = vadd.f32 %v2946, %v3250
        %3252 = vmatmul.f32.gmra.mxu0 %v2066
        %v3253 = vpop.f32.mrf.mxu0
        %v3254 = vadd.f32 %v2949, %v3253
        %3255 = vmatmul.f32.gmra.mxu0 %v2068
        %v3256 = vpop.f32.mrf.mxu0
        %v3257 = vadd.f32 %v2952, %v3256
        %3258 = vmatmul.f32.gmra.mxu0 %v2070
        %v3259 = vpop.f32.mrf.mxu0
        %v3260 = vadd.f32 %v2955, %v3259
        %3261 = vmatmul.f32.gmra.mxu0 %v2072
        %v3262 = vpop.f32.mrf.mxu0
        %v3263 = vadd.f32 %v2958, %v3262
        %3264 = vmatmul.f32.gmra.mxu0 %v2074
        %v3265 = vpop.f32.mrf.mxu0
        %v3266 = vadd.f32 %v2961, %v3265
        %3267 = vmatmul.f32.gmra.mxu0 %v2076
        %v3268 = vpop.f32.mrf.mxu0
        %v3269 = vadd.f32 %v2964, %v3268
        %3270 = vmatmul.f32.gmra.mxu0 %v2078
        %v3271 = vpop.f32.mrf.mxu0
        %v3272 = vadd.f32 %v2967, %v3271
        %3273 = vmatmul.f32.gmra.mxu0 %v2080
        %v3274 = vpop.f32.mrf.mxu0
        %v3275 = vadd.f32 %v2970, %v3274
        %3276 = vmatmul.f32.gmra.mxu0 %v2082
        %v3277 = vpop.f32.mrf.mxu0
        %v3278 = vadd.f32 %v2973, %v3277
        %3279 = vmatmul.f32.gmra.mxu0 %v2084
        %v3280 = vpop.f32.mrf.mxu0
        %v3281 = vadd.f32 %v2976, %v3280
        %3282 = vmatmul.f32.gmra.mxu0 %v2086
        %v3283 = vpop.f32.mrf.mxu0
        %v3284 = vadd.f32 %v2979, %v3283
        %3285 = vmatmul.f32.gmra.mxu0 %v2088
        %v3286 = vpop.f32.mrf.mxu0
        %v3287 = vadd.f32 %v2982, %v3286
        %3288 = vmatmul.f32.gmra.mxu0 %v2090
        %v3289 = vpop.f32.mrf.mxu0
        %v3290 = vadd.f32 %v2985, %v3289
        %3291 = vmatmul.f32.gmra.mxu0 %v2092
        %v3292 = vpop.f32.mrf.mxu0
        %v3293 = vadd.f32 %v2988, %v3292
        %3294 = vmatmul.f32.gmra.mxu0 %v2094
        %v3295 = vpop.f32.mrf.mxu0
        %v3296 = vadd.f32 %v2991, %v3295
        %3297 = vmatmul.f32.gmra.mxu0 %v2096
        %v3298 = vpop.f32.mrf.mxu0
        %v3299 = vadd.f32 %v2994, %v3298
        %3300 = vmatmul.f32.gmra.mxu0 %v2098
        %v3301 = vpop.f32.mrf.mxu0
        %v3302 = vadd.f32 %v2997, %v3301
        %3303 = vmatmul.f32.gmra.mxu0 %v2100
        %v3304 = vpop.f32.mrf.mxu0
        %v3305 = vadd.f32 %v3000, %v3304
        %3306 = vmatmul.f32.gmra.mxu0 %v2102
        %v3307 = vpop.f32.mrf.mxu0
        %v3308 = vadd.f32 %v3003, %v3307
        %3309 = vmatmul.f32.gmra.mxu0 %v2104
        %v3310 = vpop.f32.mrf.mxu0
        %v3311 = vadd.f32 %v3006, %v3310
        %3312 = vmatmul.f32.gmra.mxu0 %v2106
        %v3313 = vpop.f32.mrf.mxu0
        %v3314 = vadd.f32 %v3009, %v3313
        %3315 = vmatmul.f32.gmra.mxu0 %v2108
        %v3316 = vpop.f32.mrf.mxu0
        %v3317 = vadd.f32 %v3012, %v3316
        %3318 = vmatmul.f32.gmra.mxu0 %v2110
        %v3319 = vpop.f32.mrf.mxu0
        %v3320 = vadd.f32 %v3015, %v3319
        %3321 = vmatmul.f32.gmra.mxu0 %v2112
        %v3322 = vpop.f32.mrf.mxu0
        %v3323 = vadd.f32 %v3018, %v3322
        %3324 = vmatmul.f32.gmra.mxu0 %v2114
        %v3325 = vpop.f32.mrf.mxu0
        %v3326 = vadd.f32 %v3021, %v3325
        %3327 = vmatmul.f32.gmra.mxu0 %v2116
        %v3328 = vpop.f32.mrf.mxu0
        %v3329 = vadd.f32 %v3024, %v3328
        %3330 = vmatmul.f32.gmra.mxu0 %v2118
        %v3331 = vpop.f32.mrf.mxu0
        %v3332 = vadd.f32 %v3027, %v3331
        %3333 = vmatmul.f32.gmra.mxu0 %v2120
        %v3334 = vpop.f32.mrf.mxu0
        %v3335 = vadd.f32 %v3030, %v3334
        %3336 = vmatmul.f32.gmra.mxu0 %v2122
        %v3337 = vpop.f32.mrf.mxu0
        %v3338 = vadd.f32 %v3033, %v3337
        %3339 = vmatmul.f32.gmra.mxu0 %v2124
        %v3340 = vpop.f32.mrf.mxu0
        %v3341 = vadd.f32 %v3036, %v3340
        %3342 = vmatmul.f32.gmra.mxu0 %v2126
        %v3343 = vpop.f32.mrf.mxu0
        %v3344 = vadd.f32 %v3039, %v3343
        %3345 = vmatmul.f32.gmra.mxu0 %v2128
        %v3346 = vpop.f32.mrf.mxu0
        %v3347 = vadd.f32 %v3042, %v3346
        %3348 = vdwg.mxu0
        %s3349 = scalar_lea.vmem [#allocation2], 1536
        %3350 = vst [vmem:[%s3349] sm:$0xff] %v2452
        %3351 = vst.msk [vmem:[%s3349 + $0x8] sm:$0xff] %vm1744, %v3062
        %3352 = vst [vmem:[%s3349 + $0x10] sm:$0xff] %v2455
        %3353 = vst.msk [vmem:[%s3349 + $0x18] sm:$0xff] %vm1744, %v3065
        %3354 = vst [vmem:[%s3349 + $0x20] sm:$0xff] %v2458
        %3355 = vst.msk [vmem:[%s3349 + $0x28] sm:$0xff] %vm1744, %v3068
        %3356 = vst [vmem:[%s3349 + $0x30] sm:$0xff] %v2461
        %3357 = vst.msk [vmem:[%s3349 + $0x38] sm:$0xff] %vm1744, %v3071
        %3358 = vst [vmem:[%s3349 + $0x40] sm:$0xff] %v2464
        %3359 = vst.msk [vmem:[%s3349 + $0x48] sm:$0xff] %vm1744, %v3074
        %3360 = vst [vmem:[%s3349 + $0x50] sm:$0xff] %v2467
        %3361 = vst.msk [vmem:[%s3349 + $0x58] sm:$0xff] %vm1744, %v3077
        %3362 = vst [vmem:[%s3349 + $0x60] sm:$0xff] %v2470
        %3363 = vst.msk [vmem:[%s3349 + $0x68] sm:$0xff] %vm1744, %v3080
        %3364 = vst [vmem:[%s3349 + $0x70] sm:$0xff] %v2473
        %3365 = vst.msk [vmem:[%s3349 + $0x78] sm:$0xff] %vm1744, %v3083
        %3366 = vst [vmem:[%s3349 + $0x80] sm:$0xff] %v2476
        %3367 = vst.msk [vmem:[%s3349 + $0x88] sm:$0xff] %vm1744, %v3086
        %3368 = vst [vmem:[%s3349 + $0x90] sm:$0xff] %v2479
        %3369 = vst.msk [vmem:[%s3349 + $0x98] sm:$0xff] %vm1744, %v3089
        %3370 = vst [vmem:[%s3349 + $0xa0] sm:$0xff] %v2482
        %3371 = vst.msk [vmem:[%s3349 + $0xa8] sm:$0xff] %vm1744, %v3092
        %3372 = vst [vmem:[%s3349 + $0xb0] sm:$0xff] %v2485
        %3373 = vst.msk [vmem:[%s3349 + $0xb8] sm:$0xff] %vm1744, %v3095
        %3374 = vst [vmem:[%s3349 + $0xc0] sm:$0xff] %v2488
        %3375 = vst.msk [vmem:[%s3349 + $0xc8] sm:$0xff] %vm1744, %v3098
        %3376 = vst [vmem:[%s3349 + $0xd0] sm:$0xff] %v2491
        %3377 = vst.msk [vmem:[%s3349 + $0xd8] sm:$0xff] %vm1744, %v3101
        %3378 = vst [vmem:[%s3349 + $0xe0] sm:$0xff] %v2494
        %3379 = vst.msk [vmem:[%s3349 + $0xe8] sm:$0xff] %vm1744, %v3104
        %3380 = vst [vmem:[%s3349 + $0xf0] sm:$0xff] %v2497
        %3381 = vst.msk [vmem:[%s3349 + $0xf8] sm:$0xff] %vm1744, %v3107
        %3382 = vst [vmem:[%s3349 + $0x100] sm:$0xff] %v2500
        %3383 = vst.msk [vmem:[%s3349 + $0x108] sm:$0xff] %vm1744, %v3110
        %3384 = vst [vmem:[%s3349 + $0x110] sm:$0xff] %v2503
        %3385 = vst.msk [vmem:[%s3349 + $0x118] sm:$0xff] %vm1744, %v3113
        %3386 = vst [vmem:[%s3349 + $0x120] sm:$0xff] %v2506
        %3387 = vst.msk [vmem:[%s3349 + $0x128] sm:$0xff] %vm1744, %v3116
        %3388 = vst [vmem:[%s3349 + $0x130] sm:$0xff] %v2509
        %3389 = vst.msk [vmem:[%s3349 + $0x138] sm:$0xff] %vm1744, %v3119
        %3390 = vst [vmem:[%s3349 + $0x140] sm:$0xff] %v2512
        %3391 = vst.msk [vmem:[%s3349 + $0x148] sm:$0xff] %vm1744, %v3122
        %3392 = vst [vmem:[%s3349 + $0x150] sm:$0xff] %v2515
        %3393 = vst.msk [vmem:[%s3349 + $0x158] sm:$0xff] %vm1744, %v3125
        %3394 = vst [vmem:[%s3349 + $0x160] sm:$0xff] %v2518
        %3395 = vst.msk [vmem:[%s3349 + $0x168] sm:$0xff] %vm1744, %v3128
        %3396 = vst [vmem:[%s3349 + $0x170] sm:$0xff] %v2521
        %3397 = vst.msk [vmem:[%s3349 + $0x178] sm:$0xff] %vm1744, %v3131
        %3398 = vst [vmem:[%s3349 + $0x180] sm:$0xff] %v2524
        %3399 = vst.msk [vmem:[%s3349 + $0x188] sm:$0xff] %vm1744, %v3134
        %3400 = vst [vmem:[%s3349 + $0x190] sm:$0xff] %v2527
        %3401 = vst.msk [vmem:[%s3349 + $0x198] sm:$0xff] %vm1744, %v3137
        %3402 = vst [vmem:[%s3349 + $0x1a0] sm:$0xff] %v2530
        %3403 = vst.msk [vmem:[%s3349 + $0x1a8] sm:$0xff] %vm1744, %v3140
        %3404 = vst [vmem:[%s3349 + $0x1b0] sm:$0xff] %v2533
        %3405 = vst.msk [vmem:[%s3349 + $0x1b8] sm:$0xff] %vm1744, %v3143
        %3406 = vst [vmem:[%s3349 + $0x1c0] sm:$0xff] %v2536
        %3407 = vst.msk [vmem:[%s3349 + $0x1c8] sm:$0xff] %vm1744, %v3146
        %3408 = vst [vmem:[%s3349 + $0x1d0] sm:$0xff] %v2539
        %3409 = vst.msk [vmem:[%s3349 + $0x1d8] sm:$0xff] %vm1744, %v3149
        %3410 = vst [vmem:[%s3349 + $0x1e0] sm:$0xff] %v2542
        %3411 = vst.msk [vmem:[%s3349 + $0x1e8] sm:$0xff] %vm1744, %v3152
        %3412 = vst [vmem:[%s3349 + $0x1f0] sm:$0xff] %v2545
        %3413 = vst.msk [vmem:[%s3349 + $0x1f8] sm:$0xff] %vm1744, %v3155
        %3414 = vst [vmem:[%s3349 + $0x200] sm:$0xff] %v2548
        %3415 = vst.msk [vmem:[%s3349 + $0x208] sm:$0xff] %vm1744, %v3158
        %3416 = vst [vmem:[%s3349 + $0x210] sm:$0xff] %v2551
        %3417 = vst.msk [vmem:[%s3349 + $0x218] sm:$0xff] %vm1744, %v3161
        %3418 = vst [vmem:[%s3349 + $0x220] sm:$0xff] %v2554
        %3419 = vst.msk [vmem:[%s3349 + $0x228] sm:$0xff] %vm1744, %v3164
        %3420 = vst [vmem:[%s3349 + $0x230] sm:$0xff] %v2557
        %3421 = vst.msk [vmem:[%s3349 + $0x238] sm:$0xff] %vm1744, %v3167
        %3422 = vst [vmem:[%s3349 + $0x240] sm:$0xff] %v2560
        %3423 = vst.msk [vmem:[%s3349 + $0x248] sm:$0xff] %vm1744, %v3170
        %3424 = vst [vmem:[%s3349 + $0x250] sm:$0xff] %v2563
        %3425 = vst.msk [vmem:[%s3349 + $0x258] sm:$0xff] %vm1744, %v3173
        %3426 = vst [vmem:[%s3349 + $0x260] sm:$0xff] %v2566
        %3427 = vst.msk [vmem:[%s3349 + $0x268] sm:$0xff] %vm1744, %v3176
        %3428 = vst [vmem:[%s3349 + $0x270] sm:$0xff] %v2569
        %3429 = vst.msk [vmem:[%s3349 + $0x278] sm:$0xff] %vm1744, %v3179
        %3430 = vst [vmem:[%s3349 + $0x280] sm:$0xff] %v2572
        %3431 = vst.msk [vmem:[%s3349 + $0x288] sm:$0xff] %vm1744, %v3182
        %3432 = vst [vmem:[%s3349 + $0x290] sm:$0xff] %v2575
        %3433 = vst.msk [vmem:[%s3349 + $0x298] sm:$0xff] %vm1744, %v3185
        %3434 = vst [vmem:[%s3349 + $0x2a0] sm:$0xff] %v2578
        %3435 = vst.msk [vmem:[%s3349 + $0x2a8] sm:$0xff] %vm1744, %v3188
        %3436 = vst [vmem:[%s3349 + $0x2b0] sm:$0xff] %v2581
        %3437 = vst.msk [vmem:[%s3349 + $0x2b8] sm:$0xff] %vm1744, %v3191
        %3438 = vst [vmem:[%s3349 + $0x2c0] sm:$0xff] %v2584
        %3439 = vst.msk [vmem:[%s3349 + $0x2c8] sm:$0xff] %vm1744, %v3194
        %3440 = vst [vmem:[%s3349 + $0x2d0] sm:$0xff] %v2587
        %3441 = vst.msk [vmem:[%s3349 + $0x2d8] sm:$0xff] %vm1744, %v3197
        %3442 = vst [vmem:[%s3349 + $0x2e0] sm:$0xff] %v2590
        %3443 = vst.msk [vmem:[%s3349 + $0x2e8] sm:$0xff] %vm1744, %v3200
        %3444 = vst [vmem:[%s3349 + $0x2f0] sm:$0xff] %v2593
        %3445 = vst.msk [vmem:[%s3349 + $0x2f8] sm:$0xff] %vm1744, %v3203
        %3446 = vst [vmem:[%s3349 + $0x300] sm:$0xff] %v2596
        %3447 = vst.msk [vmem:[%s3349 + $0x308] sm:$0xff] %vm1744, %v3206
        %3448 = vst [vmem:[%s3349 + $0x310] sm:$0xff] %v2599
        %3449 = vst.msk [vmem:[%s3349 + $0x318] sm:$0xff] %vm1744, %v3209
        %3450 = vst [vmem:[%s3349 + $0x320] sm:$0xff] %v2602
        %3451 = vst.msk [vmem:[%s3349 + $0x328] sm:$0xff] %vm1744, %v3212
        %3452 = vst [vmem:[%s3349 + $0x330] sm:$0xff] %v2605
        %3453 = vst.msk [vmem:[%s3349 + $0x338] sm:$0xff] %vm1744, %v3215
        %3454 = vst [vmem:[%s3349 + $0x340] sm:$0xff] %v2608
        %3455 = vst.msk [vmem:[%s3349 + $0x348] sm:$0xff] %vm1744, %v3218
        %3456 = vst [vmem:[%s3349 + $0x350] sm:$0xff] %v2611
        %3457 = vst.msk [vmem:[%s3349 + $0x358] sm:$0xff] %vm1744, %v3221
        %3458 = vst [vmem:[%s3349 + $0x360] sm:$0xff] %v2614
        %3459 = vst.msk [vmem:[%s3349 + $0x368] sm:$0xff] %vm1744, %v3224
        %3460 = vst [vmem:[%s3349 + $0x370] sm:$0xff] %v2617
        %3461 = vst.msk [vmem:[%s3349 + $0x378] sm:$0xff] %vm1744, %v3227
        %3462 = vst [vmem:[%s3349 + $0x380] sm:$0xff] %v2620
        %3463 = vst.msk [vmem:[%s3349 + $0x388] sm:$0xff] %vm1744, %v3230
        %3464 = vst [vmem:[%s3349 + $0x390] sm:$0xff] %v2623
        %3465 = vst.msk [vmem:[%s3349 + $0x398] sm:$0xff] %vm1744, %v3233
        %3466 = vst [vmem:[%s3349 + $0x3a0] sm:$0xff] %v2626
        %3467 = vst.msk [vmem:[%s3349 + $0x3a8] sm:$0xff] %vm1744, %v3236
        %3468 = vst [vmem:[%s3349 + $0x3b0] sm:$0xff] %v2629
        %3469 = vst.msk [vmem:[%s3349 + $0x3b8] sm:$0xff] %vm1744, %v3239
        %3470 = vst [vmem:[%s3349 + $0x3c0] sm:$0xff] %v2632
        %3471 = vst.msk [vmem:[%s3349 + $0x3c8] sm:$0xff] %vm1744, %v3242
        %3472 = vst [vmem:[%s3349 + $0x3d0] sm:$0xff] %v2635
        %3473 = vst.msk [vmem:[%s3349 + $0x3d8] sm:$0xff] %vm1744, %v3245
        %3474 = vst [vmem:[%s3349 + $0x3e0] sm:$0xff] %v2638
        %3475 = vst.msk [vmem:[%s3349 + $0x3e8] sm:$0xff] %vm1744, %v3248
        %3476 = vst [vmem:[%s3349 + $0x3f0] sm:$0xff] %v2641
        %3477 = vst.msk [vmem:[%s3349 + $0x3f8] sm:$0xff] %vm1744, %v3251
        %3478 = vst [vmem:[%s3349 + $0x400] sm:$0xff] %v2644
        %3479 = vst.msk [vmem:[%s3349 + $0x408] sm:$0xff] %vm1744, %v3254
        %3480 = vst [vmem:[%s3349 + $0x410] sm:$0xff] %v2647
        %3481 = vst.msk [vmem:[%s3349 + $0x418] sm:$0xff] %vm1744, %v3257
        %3482 = vst [vmem:[%s3349 + $0x420] sm:$0xff] %v2650
        %3483 = vst.msk [vmem:[%s3349 + $0x428] sm:$0xff] %vm1744, %v3260
        %3484 = vst [vmem:[%s3349 + $0x430] sm:$0xff] %v2653
        %3485 = vst.msk [vmem:[%s3349 + $0x438] sm:$0xff] %vm1744, %v3263
        %3486 = vst [vmem:[%s3349 + $0x440] sm:$0xff] %v2656
        %3487 = vst.msk [vmem:[%s3349 + $0x448] sm:$0xff] %vm1744, %v3266
        %3488 = vst [vmem:[%s3349 + $0x450] sm:$0xff] %v2659
        %3489 = vst.msk [vmem:[%s3349 + $0x458] sm:$0xff] %vm1744, %v3269
        %3490 = vst [vmem:[%s3349 + $0x460] sm:$0xff] %v2662
        %3491 = vst.msk [vmem:[%s3349 + $0x468] sm:$0xff] %vm1744, %v3272
        %3492 = vst [vmem:[%s3349 + $0x470] sm:$0xff] %v2665
        %3493 = vst.msk [vmem:[%s3349 + $0x478] sm:$0xff] %vm1744, %v3275
        %3494 = vst [vmem:[%s3349 + $0x480] sm:$0xff] %v2668
        %3495 = vst.msk [vmem:[%s3349 + $0x488] sm:$0xff] %vm1744, %v3278
        %3496 = vst [vmem:[%s3349 + $0x490] sm:$0xff] %v2671
        %3497 = vst.msk [vmem:[%s3349 + $0x498] sm:$0xff] %vm1744, %v3281
        %3498 = vst [vmem:[%s3349 + $0x4a0] sm:$0xff] %v2674
        %3499 = vst.msk [vmem:[%s3349 + $0x4a8] sm:$0xff] %vm1744, %v3284
        %3500 = vst [vmem:[%s3349 + $0x4b0] sm:$0xff] %v2677
        %3501 = vst.msk [vmem:[%s3349 + $0x4b8] sm:$0xff] %vm1744, %v3287
        %3502 = vst [vmem:[%s3349 + $0x4c0] sm:$0xff] %v2680
        %3503 = vst.msk [vmem:[%s3349 + $0x4c8] sm:$0xff] %vm1744, %v3290
        %3504 = vst [vmem:[%s3349 + $0x4d0] sm:$0xff] %v2683
        %3505 = vst.msk [vmem:[%s3349 + $0x4d8] sm:$0xff] %vm1744, %v3293
        %3506 = vst [vmem:[%s3349 + $0x4e0] sm:$0xff] %v2686
        %3507 = vst.msk [vmem:[%s3349 + $0x4e8] sm:$0xff] %vm1744, %v3296
        %3508 = vst [vmem:[%s3349 + $0x4f0] sm:$0xff] %v2689
        %3509 = vst.msk [vmem:[%s3349 + $0x4f8] sm:$0xff] %vm1744, %v3299
        %3510 = vst [vmem:[%s3349 + $0x500] sm:$0xff] %v2692
        %3511 = vst.msk [vmem:[%s3349 + $0x508] sm:$0xff] %vm1744, %v3302
        %3512 = vst [vmem:[%s3349 + $0x510] sm:$0xff] %v2695
        %3513 = vst.msk [vmem:[%s3349 + $0x518] sm:$0xff] %vm1744, %v3305
        %3514 = vst [vmem:[%s3349 + $0x520] sm:$0xff] %v2698
        %3515 = vst.msk [vmem:[%s3349 + $0x528] sm:$0xff] %vm1744, %v3308
        %3516 = vst [vmem:[%s3349 + $0x530] sm:$0xff] %v2701
        %3517 = vst.msk [vmem:[%s3349 + $0x538] sm:$0xff] %vm1744, %v3311
        %3518 = vst [vmem:[%s3349 + $0x540] sm:$0xff] %v2704
        %3519 = vst.msk [vmem:[%s3349 + $0x548] sm:$0xff] %vm1744, %v3314
        %3520 = vst [vmem:[%s3349 + $0x550] sm:$0xff] %v2707
        %3521 = vst.msk [vmem:[%s3349 + $0x558] sm:$0xff] %vm1744, %v3317
        %3522 = vst [vmem:[%s3349 + $0x560] sm:$0xff] %v2710
        %3523 = vst.msk [vmem:[%s3349 + $0x568] sm:$0xff] %vm1744, %v3320
        %3524 = vst [vmem:[%s3349 + $0x570] sm:$0xff] %v2713
        %3525 = vst.msk [vmem:[%s3349 + $0x578] sm:$0xff] %vm1744, %v3323
        %3526 = vst [vmem:[%s3349 + $0x580] sm:$0xff] %v2716
        %3527 = vst.msk [vmem:[%s3349 + $0x588] sm:$0xff] %vm1744, %v3326
        %3528 = vst [vmem:[%s3349 + $0x590] sm:$0xff] %v2719
        %3529 = vst.msk [vmem:[%s3349 + $0x598] sm:$0xff] %vm1744, %v3329
        %3530 = vst [vmem:[%s3349 + $0x5a0] sm:$0xff] %v2722
        %3531 = vst.msk [vmem:[%s3349 + $0x5a8] sm:$0xff] %vm1744, %v3332
        %3532 = vst [vmem:[%s3349 + $0x5b0] sm:$0xff] %v2725
        %3533 = vst.msk [vmem:[%s3349 + $0x5b8] sm:$0xff] %vm1744, %v3335
        %3534 = vst [vmem:[%s3349 + $0x5c0] sm:$0xff] %v2728
        %3535 = vst.msk [vmem:[%s3349 + $0x5c8] sm:$0xff] %vm1744, %v3338
        %3536 = vst [vmem:[%s3349 + $0x5d0] sm:$0xff] %v2731
        %3537 = vst.msk [vmem:[%s3349 + $0x5d8] sm:$0xff] %vm1744, %v3341
        %3538 = vst [vmem:[%s3349 + $0x5e0] sm:$0xff] %v2734
        %3539 = vst.msk [vmem:[%s3349 + $0x5e8] sm:$0xff] %vm1744, %v3344
        %3540 = vst [vmem:[%s3349 + $0x5f0] sm:$0xff] %v2737
        %3541 = vst.msk [vmem:[%s3349 + $0x5f8] sm:$0xff] %vm1744, %v3347
        %v3542 = vld [vmem:[#allocation2] sm:$0xff]
        %v3543 = vld [vmem:[#allocation2 + $0x8] sm:$0xff]
        %v3544 = vld [vmem:[#allocation2 + $0x10] sm:$0xff]
        %v3545 = vld [vmem:[#allocation2 + $0x18] sm:$0xff]
        %v3546 = vld [vmem:[#allocation2 + $0x20] sm:$0xff]
        %v3547 = vld [vmem:[#allocation2 + $0x28] sm:$0xff]
        %v3548 = vld [vmem:[#allocation2 + $0x30] sm:$0xff]
        %v3549 = vld [vmem:[#allocation2 + $0x38] sm:$0xff]
        %v3550 = vld [vmem:[#allocation2 + $0x40] sm:$0xff]
        %v3551 = vld [vmem:[#allocation2 + $0x48] sm:$0xff]
        %v3552 = vld [vmem:[#allocation2 + $0x50] sm:$0xff]
        %v3553 = vld [vmem:[#allocation2 + $0x58] sm:$0xff]
        %v3554 = vld [vmem:[#allocation2 + $0x60] sm:$0xff]
        %v3555 = vld [vmem:[#allocation2 + $0x68] sm:$0xff]
        %v3556 = vld [vmem:[#allocation2 + $0x70] sm:$0xff]
        %v3557 = vld [vmem:[#allocation2 + $0x78] sm:$0xff]
        %v3558 = vld [vmem:[#allocation2 + $0x80] sm:$0xff]
        %v3559 = vld [vmem:[#allocation2 + $0x88] sm:$0xff]
        %v3560 = vld [vmem:[#allocation2 + $0x90] sm:$0xff]
        %v3561 = vld [vmem:[#allocation2 + $0x98] sm:$0xff]
        %v3562 = vld [vmem:[#allocation2 + $0xa0] sm:$0xff]
        %v3563 = vld [vmem:[#allocation2 + $0xa8] sm:$0xff]
        %v3564 = vld [vmem:[#allocation2 + $0xb0] sm:$0xff]
        %v3565 = vld [vmem:[#allocation2 + $0xb8] sm:$0xff]
        %v3566 = vld [vmem:[#allocation2 + $0xc0] sm:$0xff]
        %v3567 = vld [vmem:[#allocation2 + $0xc8] sm:$0xff]
        %v3568 = vld [vmem:[#allocation2 + $0xd0] sm:$0xff]
        %v3569 = vld [vmem:[#allocation2 + $0xd8] sm:$0xff]
        %v3570 = vld [vmem:[#allocation2 + $0xe0] sm:$0xff]
        %v3571 = vld [vmem:[#allocation2 + $0xe8] sm:$0xff]
        %v3572 = vld [vmem:[#allocation2 + $0xf0] sm:$0xff]
        %v3573 = vld [vmem:[#allocation2 + $0xf8] sm:$0xff]
        %v3574 = vld [vmem:[#allocation2 + $0x100] sm:$0xff]
        %v3575 = vld [vmem:[#allocation2 + $0x108] sm:$0xff]
        %v3576 = vld [vmem:[#allocation2 + $0x110] sm:$0xff]
        %v3577 = vld [vmem:[#allocation2 + $0x118] sm:$0xff]
        %v3578 = vld [vmem:[#allocation2 + $0x120] sm:$0xff]
        %v3579 = vld [vmem:[#allocation2 + $0x128] sm:$0xff]
        %v3580 = vld [vmem:[#allocation2 + $0x130] sm:$0xff]
        %v3581 = vld [vmem:[#allocation2 + $0x138] sm:$0xff]
        %v3582 = vld [vmem:[#allocation2 + $0x140] sm:$0xff]
        %v3583 = vld [vmem:[#allocation2 + $0x148] sm:$0xff]
        %v3584 = vld [vmem:[#allocation2 + $0x150] sm:$0xff]
        %v3585 = vld [vmem:[#allocation2 + $0x158] sm:$0xff]
        %v3586 = vld [vmem:[#allocation2 + $0x160] sm:$0xff]
        %v3587 = vld [vmem:[#allocation2 + $0x168] sm:$0xff]
        %v3588 = vld [vmem:[#allocation2 + $0x170] sm:$0xff]
        %v3589 = vld [vmem:[#allocation2 + $0x178] sm:$0xff]
        %v3590 = vld [vmem:[#allocation2 + $0x180] sm:$0xff]
        %v3591 = vld [vmem:[#allocation2 + $0x188] sm:$0xff]
        %v3592 = vld [vmem:[#allocation2 + $0x190] sm:$0xff]
        %v3593 = vld [vmem:[#allocation2 + $0x198] sm:$0xff]
        %v3594 = vld [vmem:[#allocation2 + $0x1a0] sm:$0xff]
        %v3595 = vld [vmem:[#allocation2 + $0x1a8] sm:$0xff]
        %v3596 = vld [vmem:[#allocation2 + $0x1b0] sm:$0xff]
        %v3597 = vld [vmem:[#allocation2 + $0x1b8] sm:$0xff]
        %v3598 = vld [vmem:[#allocation2 + $0x1c0] sm:$0xff]
        %v3599 = vld [vmem:[#allocation2 + $0x1c8] sm:$0xff]
        %v3600 = vld [vmem:[#allocation2 + $0x1d0] sm:$0xff]
        %v3601 = vld [vmem:[#allocation2 + $0x1d8] sm:$0xff]
        %v3602 = vld [vmem:[#allocation2 + $0x1e0] sm:$0xff]
        %v3603 = vld [vmem:[#allocation2 + $0x1e8] sm:$0xff]
        %v3604 = vld [vmem:[#allocation2 + $0x1f0] sm:$0xff]
        %v3605 = vld [vmem:[#allocation2 + $0x1f8] sm:$0xff]
        %3606 = vmatpush.msra.mxu0 %v3572
        %3607 = vmatpush.msra.mxu0 %v3570
        %3608 = vmatpush.msra.mxu0 %v3568
        %3609 = vmatpush.msra.mxu0 %v3566
        %3610 = vmatpush.msra.mxu0 %v3564
        %3611 = vmatpush.msra.mxu0 %v3562
        %3612 = vmatpush.msra.mxu0 %v3560
        %3613 = vmatpush.msra.mxu0 %v3558
        %3614 = vmatpush.msra.mxu0 %v3556
        %3615 = vmatpush.msra.mxu0 %v3554
        %3616 = vmatpush.msra.mxu0 %v3552
        %3617 = vmatpush.msra.mxu0 %v3550
        %3618 = vmatpush.msra.mxu0 %v3548
        %3619 = vmatpush.msra.mxu0 %v3546
        %3620 = vmatpush.msra.mxu0 %v3544
        %3621 = vmatpush.msra.mxu0 %v3542
        %3622 = vmatmul.f32.gmra.mxu0 %v275
        %v3623 = vpop.f32.mrf.mxu0
        %v3624 = vadd.f32 0.0, %v3623
        %3625 = vmatmul.f32.gmra.mxu0 %v277
        %v3626 = vpop.f32.mrf.mxu0
        %v3627 = vadd.f32 0.0, %v3626
        %3628 = vmatmul.f32.gmra.mxu0 %v279
        %v3629 = vpop.f32.mrf.mxu0
        %v3630 = vadd.f32 0.0, %v3629
        %3631 = vmatmul.f32.gmra.mxu0 %v281
        %v3632 = vpop.f32.mrf.mxu0
        %v3633 = vadd.f32 0.0, %v3632
        %3634 = vmatmul.f32.gmra.mxu0 %v283
        %v3635 = vpop.f32.mrf.mxu0
        %v3636 = vadd.f32 0.0, %v3635
        %3637 = vmatmul.f32.gmra.mxu0 %v285
        %v3638 = vpop.f32.mrf.mxu0
        %v3639 = vadd.f32 0.0, %v3638
        %3640 = vmatmul.f32.gmra.mxu0 %v287
        %v3641 = vpop.f32.mrf.mxu0
        %v3642 = vadd.f32 0.0, %v3641
        %3643 = vmatmul.f32.gmra.mxu0 %v289
        %v3644 = vpop.f32.mrf.mxu0
        %v3645 = vadd.f32 0.0, %v3644
        %3646 = vmatmul.f32.gmra.mxu0 %v291
        %v3647 = vpop.f32.mrf.mxu0
        %v3648 = vadd.f32 0.0, %v3647
        %3649 = vmatmul.f32.gmra.mxu0 %v293
        %v3650 = vpop.f32.mrf.mxu0
        %v3651 = vadd.f32 0.0, %v3650
        %3652 = vmatmul.f32.gmra.mxu0 %v295
        %v3653 = vpop.f32.mrf.mxu0
        %v3654 = vadd.f32 0.0, %v3653
        %3655 = vmatmul.f32.gmra.mxu0 %v297
        %v3656 = vpop.f32.mrf.mxu0
        %v3657 = vadd.f32 0.0, %v3656
        %3658 = vmatmul.f32.gmra.mxu0 %v299
        %v3659 = vpop.f32.mrf.mxu0
        %v3660 = vadd.f32 0.0, %v3659
        %3661 = vmatmul.f32.gmra.mxu0 %v301
        %v3662 = vpop.f32.mrf.mxu0
        %v3663 = vadd.f32 0.0, %v3662
        %3664 = vmatmul.f32.gmra.mxu0 %v303
        %v3665 = vpop.f32.mrf.mxu0
        %v3666 = vadd.f32 0.0, %v3665
        %3667 = vmatmul.f32.gmra.mxu0 %v305
        %v3668 = vpop.f32.mrf.mxu0
        %v3669 = vadd.f32 0.0, %v3668
        %3670 = vmatmul.f32.gmra.mxu0 %v307
        %v3671 = vpop.f32.mrf.mxu0
        %v3672 = vadd.f32 0.0, %v3671
        %3673 = vmatmul.f32.gmra.mxu0 %v309
        %v3674 = vpop.f32.mrf.mxu0
        %v3675 = vadd.f32 0.0, %v3674
        %3676 = vmatmul.f32.gmra.mxu0 %v311
        %v3677 = vpop.f32.mrf.mxu0
        %v3678 = vadd.f32 0.0, %v3677
        %3679 = vmatmul.f32.gmra.mxu0 %v313
        %v3680 = vpop.f32.mrf.mxu0
        %v3681 = vadd.f32 0.0, %v3680
        %3682 = vmatmul.f32.gmra.mxu0 %v315
        %v3683 = vpop.f32.mrf.mxu0
        %v3684 = vadd.f32 0.0, %v3683
        %3685 = vmatmul.f32.gmra.mxu0 %v317
        %v3686 = vpop.f32.mrf.mxu0
        %v3687 = vadd.f32 0.0, %v3686
        %3688 = vmatmul.f32.gmra.mxu0 %v319
        %v3689 = vpop.f32.mrf.mxu0
        %v3690 = vadd.f32 0.0, %v3689
        %3691 = vmatmul.f32.gmra.mxu0 %v321
        %v3692 = vpop.f32.mrf.mxu0
        %v3693 = vadd.f32 0.0, %v3692
        %3694 = vmatmul.f32.gmra.mxu0 %v323
        %v3695 = vpop.f32.mrf.mxu0
        %v3696 = vadd.f32 0.0, %v3695
        %3697 = vmatmul.f32.gmra.mxu0 %v325
        %v3698 = vpop.f32.mrf.mxu0
        %v3699 = vadd.f32 0.0, %v3698
        %3700 = vmatmul.f32.gmra.mxu0 %v327
        %v3701 = vpop.f32.mrf.mxu0
        %v3702 = vadd.f32 0.0, %v3701
        %3703 = vmatmul.f32.gmra.mxu0 %v329
        %v3704 = vpop.f32.mrf.mxu0
        %v3705 = vadd.f32 0.0, %v3704
        %3706 = vdwg.mxu0
        %3707 = vmatpush.msra.mxu0 %v3604
        %3708 = vmatpush.msra.mxu0 %v3602
        %3709 = vmatpush.msra.mxu0 %v3600
        %3710 = vmatpush.msra.mxu0 %v3598
        %3711 = vmatpush.msra.mxu0 %v3596
        %3712 = vmatpush.msra.mxu0 %v3594
        %3713 = vmatpush.msra.mxu0 %v3592
        %3714 = vmatpush.msra.mxu0 %v3590
        %3715 = vmatpush.msra.mxu0 %v3588
        %3716 = vmatpush.msra.mxu0 %v3586
        %3717 = vmatpush.msra.mxu0 %v3584
        %3718 = vmatpush.msra.mxu0 %v3582
        %3719 = vmatpush.msra.mxu0 %v3580
        %3720 = vmatpush.msra.mxu0 %v3578
        %3721 = vmatpush.msra.mxu0 %v3576
        %3722 = vmatpush.msra.mxu0 %v3574
        %3723 = vmatmul.f32.gmra.mxu0 %v276
        %v3724 = vpop.f32.mrf.mxu0
        %v3725 = vadd.f32 %v3624, %v3724
        %3726 = vmatmul.f32.gmra.mxu0 %v278
        %v3727 = vpop.f32.mrf.mxu0
        %v3728 = vadd.f32 %v3627, %v3727
        %3729 = vmatmul.f32.gmra.mxu0 %v280
        %v3730 = vpop.f32.mrf.mxu0
        %v3731 = vadd.f32 %v3630, %v3730
        %3732 = vmatmul.f32.gmra.mxu0 %v282
        %v3733 = vpop.f32.mrf.mxu0
        %v3734 = vadd.f32 %v3633, %v3733
        %3735 = vmatmul.f32.gmra.mxu0 %v284
        %v3736 = vpop.f32.mrf.mxu0
        %v3737 = vadd.f32 %v3636, %v3736
        %3738 = vmatmul.f32.gmra.mxu0 %v286
        %v3739 = vpop.f32.mrf.mxu0
        %v3740 = vadd.f32 %v3639, %v3739
        %3741 = vmatmul.f32.gmra.mxu0 %v288
        %v3742 = vpop.f32.mrf.mxu0
        %v3743 = vadd.f32 %v3642, %v3742
        %3744 = vmatmul.f32.gmra.mxu0 %v290
        %v3745 = vpop.f32.mrf.mxu0
        %v3746 = vadd.f32 %v3645, %v3745
        %3747 = vmatmul.f32.gmra.mxu0 %v292
        %v3748 = vpop.f32.mrf.mxu0
        %v3749 = vadd.f32 %v3648, %v3748
        %3750 = vmatmul.f32.gmra.mxu0 %v294
        %v3751 = vpop.f32.mrf.mxu0
        %v3752 = vadd.f32 %v3651, %v3751
        %3753 = vmatmul.f32.gmra.mxu0 %v296
        %v3754 = vpop.f32.mrf.mxu0
        %v3755 = vadd.f32 %v3654, %v3754
        %3756 = vmatmul.f32.gmra.mxu0 %v298
        %v3757 = vpop.f32.mrf.mxu0
        %v3758 = vadd.f32 %v3657, %v3757
        %3759 = vmatmul.f32.gmra.mxu0 %v300
        %v3760 = vpop.f32.mrf.mxu0
        %v3761 = vadd.f32 %v3660, %v3760
        %3762 = vmatmul.f32.gmra.mxu0 %v302
        %v3763 = vpop.f32.mrf.mxu0
        %v3764 = vadd.f32 %v3663, %v3763
        %3765 = vmatmul.f32.gmra.mxu0 %v304
        %v3766 = vpop.f32.mrf.mxu0
        %v3767 = vadd.f32 %v3666, %v3766
        %3768 = vmatmul.f32.gmra.mxu0 %v306
        %v3769 = vpop.f32.mrf.mxu0
        %v3770 = vadd.f32 %v3669, %v3769
        %3771 = vmatmul.f32.gmra.mxu0 %v308
        %v3772 = vpop.f32.mrf.mxu0
        %v3773 = vadd.f32 %v3672, %v3772
        %3774 = vmatmul.f32.gmra.mxu0 %v310
        %v3775 = vpop.f32.mrf.mxu0
        %v3776 = vadd.f32 %v3675, %v3775
        %3777 = vmatmul.f32.gmra.mxu0 %v312
        %v3778 = vpop.f32.mrf.mxu0
        %v3779 = vadd.f32 %v3678, %v3778
        %3780 = vmatmul.f32.gmra.mxu0 %v314
        %v3781 = vpop.f32.mrf.mxu0
        %v3782 = vadd.f32 %v3681, %v3781
        %3783 = vmatmul.f32.gmra.mxu0 %v316
        %v3784 = vpop.f32.mrf.mxu0
        %v3785 = vadd.f32 %v3684, %v3784
        %3786 = vmatmul.f32.gmra.mxu0 %v318
        %v3787 = vpop.f32.mrf.mxu0
        %v3788 = vadd.f32 %v3687, %v3787
        %3789 = vmatmul.f32.gmra.mxu0 %v320
        %v3790 = vpop.f32.mrf.mxu0
        %v3791 = vadd.f32 %v3690, %v3790
        %3792 = vmatmul.f32.gmra.mxu0 %v322
        %v3793 = vpop.f32.mrf.mxu0
        %v3794 = vadd.f32 %v3693, %v3793
        %3795 = vmatmul.f32.gmra.mxu0 %v324
        %v3796 = vpop.f32.mrf.mxu0
        %v3797 = vadd.f32 %v3696, %v3796
        %3798 = vmatmul.f32.gmra.mxu0 %v326
        %v3799 = vpop.f32.mrf.mxu0
        %v3800 = vadd.f32 %v3699, %v3799
        %3801 = vmatmul.f32.gmra.mxu0 %v328
        %v3802 = vpop.f32.mrf.mxu0
        %v3803 = vadd.f32 %v3702, %v3802
        %3804 = vmatmul.f32.gmra.mxu0 %v330
        %v3805 = vpop.f32.mrf.mxu0
        %v3806 = vadd.f32 %v3705, %v3805
        %3807 = vdwg.mxu0
        %3808 = vmatpush.msra.mxu0 %v3573
        %3809 = vmatpush.msra.mxu0 %v3571
        %3810 = vmatpush.msra.mxu0 %v3569
        %3811 = vmatpush.msra.mxu0 %v3567
        %3812 = vmatpush.msra.mxu0 %v3565
        %3813 = vmatpush.msra.mxu0 %v3563
        %3814 = vmatpush.msra.mxu0 %v3561
        %3815 = vmatpush.msra.mxu0 %v3559
        %3816 = vmatpush.msra.mxu0 %v3557
        %3817 = vmatpush.msra.mxu0 %v3555
        %3818 = vmatpush.msra.mxu0 %v3553
        %3819 = vmatpush.msra.mxu0 %v3551
        %3820 = vmatpush.msra.mxu0 %v3549
        %3821 = vmatpush.msra.mxu0 %v3547
        %3822 = vmatpush.msra.mxu0 %v3545
        %3823 = vmatpush.msra.mxu0 %v3543
        %3824 = vmatmul.f32.gmra.mxu0 %v275
        %v3825 = vpop.f32.mrf.mxu0
        %v3826 = vadd.f32 0.0, %v3825
        %3827 = vmatmul.f32.gmra.mxu0 %v277
        %v3828 = vpop.f32.mrf.mxu0
        %v3829 = vadd.f32 0.0, %v3828
        %3830 = vmatmul.f32.gmra.mxu0 %v279
        %v3831 = vpop.f32.mrf.mxu0
        %v3832 = vadd.f32 0.0, %v3831
        %3833 = vmatmul.f32.gmra.mxu0 %v281
        %v3834 = vpop.f32.mrf.mxu0
        %v3835 = vadd.f32 0.0, %v3834
        %3836 = vmatmul.f32.gmra.mxu0 %v283
        %v3837 = vpop.f32.mrf.mxu0
        %v3838 = vadd.f32 0.0, %v3837
        %3839 = vmatmul.f32.gmra.mxu0 %v285
        %v3840 = vpop.f32.mrf.mxu0
        %v3841 = vadd.f32 0.0, %v3840
        %3842 = vmatmul.f32.gmra.mxu0 %v287
        %v3843 = vpop.f32.mrf.mxu0
        %v3844 = vadd.f32 0.0, %v3843
        %3845 = vmatmul.f32.gmra.mxu0 %v289
        %v3846 = vpop.f32.mrf.mxu0
        %v3847 = vadd.f32 0.0, %v3846
        %3848 = vmatmul.f32.gmra.mxu0 %v291
        %v3849 = vpop.f32.mrf.mxu0
        %v3850 = vadd.f32 0.0, %v3849
        %3851 = vmatmul.f32.gmra.mxu0 %v293
        %v3852 = vpop.f32.mrf.mxu0
        %v3853 = vadd.f32 0.0, %v3852
        %3854 = vmatmul.f32.gmra.mxu0 %v295
        %v3855 = vpop.f32.mrf.mxu0
        %v3856 = vadd.f32 0.0, %v3855
        %3857 = vmatmul.f32.gmra.mxu0 %v297
        %v3858 = vpop.f32.mrf.mxu0
        %v3859 = vadd.f32 0.0, %v3858
        %3860 = vmatmul.f32.gmra.mxu0 %v299
        %v3861 = vpop.f32.mrf.mxu0
        %v3862 = vadd.f32 0.0, %v3861
        %3863 = vmatmul.f32.gmra.mxu0 %v301
        %v3864 = vpop.f32.mrf.mxu0
        %v3865 = vadd.f32 0.0, %v3864
        %3866 = vmatmul.f32.gmra.mxu0 %v303
        %v3867 = vpop.f32.mrf.mxu0
        %v3868 = vadd.f32 0.0, %v3867
        %3869 = vmatmul.f32.gmra.mxu0 %v305
        %v3870 = vpop.f32.mrf.mxu0
        %v3871 = vadd.f32 0.0, %v3870
        %3872 = vmatmul.f32.gmra.mxu0 %v307
        %v3873 = vpop.f32.mrf.mxu0
        %v3874 = vadd.f32 0.0, %v3873
        %3875 = vmatmul.f32.gmra.mxu0 %v309
        %v3876 = vpop.f32.mrf.mxu0
        %v3877 = vadd.f32 0.0, %v3876
        %3878 = vmatmul.f32.gmra.mxu0 %v311
        %v3879 = vpop.f32.mrf.mxu0
        %v3880 = vadd.f32 0.0, %v3879
        %3881 = vmatmul.f32.gmra.mxu0 %v313
        %v3882 = vpop.f32.mrf.mxu0
        %v3883 = vadd.f32 0.0, %v3882
        %3884 = vmatmul.f32.gmra.mxu0 %v315
        %v3885 = vpop.f32.mrf.mxu0
        %v3886 = vadd.f32 0.0, %v3885
        %3887 = vmatmul.f32.gmra.mxu0 %v317
        %v3888 = vpop.f32.mrf.mxu0
        %v3889 = vadd.f32 0.0, %v3888
        %3890 = vmatmul.f32.gmra.mxu0 %v319
        %v3891 = vpop.f32.mrf.mxu0
        %v3892 = vadd.f32 0.0, %v3891
        %3893 = vmatmul.f32.gmra.mxu0 %v321
        %v3894 = vpop.f32.mrf.mxu0
        %v3895 = vadd.f32 0.0, %v3894
        %3896 = vmatmul.f32.gmra.mxu0 %v323
        %v3897 = vpop.f32.mrf.mxu0
        %v3898 = vadd.f32 0.0, %v3897
        %3899 = vmatmul.f32.gmra.mxu0 %v325
        %v3900 = vpop.f32.mrf.mxu0
        %v3901 = vadd.f32 0.0, %v3900
        %3902 = vmatmul.f32.gmra.mxu0 %v327
        %v3903 = vpop.f32.mrf.mxu0
        %v3904 = vadd.f32 0.0, %v3903
        %3905 = vmatmul.f32.gmra.mxu0 %v329
        %v3906 = vpop.f32.mrf.mxu0
        %v3907 = vadd.f32 0.0, %v3906
        %3908 = vdwg.mxu0
        %3909 = vmatpush.msra.mxu0 %v3605
        %3910 = vmatpush.msra.mxu0 %v3603
        %3911 = vmatpush.msra.mxu0 %v3601
        %3912 = vmatpush.msra.mxu0 %v3599
        %3913 = vmatpush.msra.mxu0 %v3597
        %3914 = vmatpush.msra.mxu0 %v3595
        %3915 = vmatpush.msra.mxu0 %v3593
        %3916 = vmatpush.msra.mxu0 %v3591
        %3917 = vmatpush.msra.mxu0 %v3589
        %3918 = vmatpush.msra.mxu0 %v3587
        %3919 = vmatpush.msra.mxu0 %v3585
        %3920 = vmatpush.msra.mxu0 %v3583
        %3921 = vmatpush.msra.mxu0 %v3581
        %3922 = vmatpush.msra.mxu0 %v3579
        %3923 = vmatpush.msra.mxu0 %v3577
        %3924 = vmatpush.msra.mxu0 %v3575
        %3925 = vmatmul.f32.gmra.mxu0 %v276
        %v3926 = vpop.f32.mrf.mxu0
        %v3927 = vadd.f32 %v3826, %v3926
        %3928 = vmatmul.f32.gmra.mxu0 %v278
        %v3929 = vpop.f32.mrf.mxu0
        %v3930 = vadd.f32 %v3829, %v3929
        %3931 = vmatmul.f32.gmra.mxu0 %v280
        %v3932 = vpop.f32.mrf.mxu0
        %v3933 = vadd.f32 %v3832, %v3932
        %3934 = vmatmul.f32.gmra.mxu0 %v282
        %v3935 = vpop.f32.mrf.mxu0
        %v3936 = vadd.f32 %v3835, %v3935
        %3937 = vmatmul.f32.gmra.mxu0 %v284
        %v3938 = vpop.f32.mrf.mxu0
        %v3939 = vadd.f32 %v3838, %v3938
        %3940 = vmatmul.f32.gmra.mxu0 %v286
        %v3941 = vpop.f32.mrf.mxu0
        %v3942 = vadd.f32 %v3841, %v3941
        %3943 = vmatmul.f32.gmra.mxu0 %v288
        %v3944 = vpop.f32.mrf.mxu0
        %v3945 = vadd.f32 %v3844, %v3944
        %3946 = vmatmul.f32.gmra.mxu0 %v290
        %v3947 = vpop.f32.mrf.mxu0
        %v3948 = vadd.f32 %v3847, %v3947
        %3949 = vmatmul.f32.gmra.mxu0 %v292
        %v3950 = vpop.f32.mrf.mxu0
        %v3951 = vadd.f32 %v3850, %v3950
        %3952 = vmatmul.f32.gmra.mxu0 %v294
        %v3953 = vpop.f32.mrf.mxu0
        %v3954 = vadd.f32 %v3853, %v3953
        %3955 = vmatmul.f32.gmra.mxu0 %v296
        %v3956 = vpop.f32.mrf.mxu0
        %v3957 = vadd.f32 %v3856, %v3956
        %3958 = vmatmul.f32.gmra.mxu0 %v298
        %v3959 = vpop.f32.mrf.mxu0
        %v3960 = vadd.f32 %v3859, %v3959
        %3961 = vmatmul.f32.gmra.mxu0 %v300
        %v3962 = vpop.f32.mrf.mxu0
        %v3963 = vadd.f32 %v3862, %v3962
        %3964 = vmatmul.f32.gmra.mxu0 %v302
        %v3965 = vpop.f32.mrf.mxu0
        %v3966 = vadd.f32 %v3865, %v3965
        %3967 = vmatmul.f32.gmra.mxu0 %v304
        %v3968 = vpop.f32.mrf.mxu0
        %v3969 = vadd.f32 %v3868, %v3968
        %3970 = vmatmul.f32.gmra.mxu0 %v306
        %v3971 = vpop.f32.mrf.mxu0
        %v3972 = vadd.f32 %v3871, %v3971
        %3973 = vmatmul.f32.gmra.mxu0 %v308
        %v3974 = vpop.f32.mrf.mxu0
        %v3975 = vadd.f32 %v3874, %v3974
        %3976 = vmatmul.f32.gmra.mxu0 %v310
        %v3977 = vpop.f32.mrf.mxu0
        %v3978 = vadd.f32 %v3877, %v3977
        %3979 = vmatmul.f32.gmra.mxu0 %v312
        %v3980 = vpop.f32.mrf.mxu0
        %v3981 = vadd.f32 %v3880, %v3980
        %3982 = vmatmul.f32.gmra.mxu0 %v314
        %v3983 = vpop.f32.mrf.mxu0
        %v3984 = vadd.f32 %v3883, %v3983
        %3985 = vmatmul.f32.gmra.mxu0 %v316
        %v3986 = vpop.f32.mrf.mxu0
        %v3987 = vadd.f32 %v3886, %v3986
        %3988 = vmatmul.f32.gmra.mxu0 %v318
        %v3989 = vpop.f32.mrf.mxu0
        %v3990 = vadd.f32 %v3889, %v3989
        %3991 = vmatmul.f32.gmra.mxu0 %v320
        %v3992 = vpop.f32.mrf.mxu0
        %v3993 = vadd.f32 %v3892, %v3992
        %3994 = vmatmul.f32.gmra.mxu0 %v322
        %v3995 = vpop.f32.mrf.mxu0
        %v3996 = vadd.f32 %v3895, %v3995
        %3997 = vmatmul.f32.gmra.mxu0 %v324
        %v3998 = vpop.f32.mrf.mxu0
        %v3999 = vadd.f32 %v3898, %v3998
        %4000 = vmatmul.f32.gmra.mxu0 %v326
        %v4001 = vpop.f32.mrf.mxu0
        %v4002 = vadd.f32 %v3901, %v4001
        %4003 = vmatmul.f32.gmra.mxu0 %v328
        %v4004 = vpop.f32.mrf.mxu0
        %v4005 = vadd.f32 %v3904, %v4004
        %4006 = vmatmul.f32.gmra.mxu0 %v330
        %v4007 = vpop.f32.mrf.mxu0
        %v4008 = vadd.f32 %v3907, %v4007
        %4009 = vdwg.mxu0
        %v4010 = vmax.f32 %v3725, 0.0
        %v4011 = vmax.f32 %v3927, 0.0
        %v4012 = vmax.f32 %v3728, 0.0
        %v4013 = vmax.f32 %v3930, 0.0
        %v4014 = vmax.f32 %v3731, 0.0
        %v4015 = vmax.f32 %v3933, 0.0
        %v4016 = vmax.f32 %v3734, 0.0
        %v4017 = vmax.f32 %v3936, 0.0
        %v4018 = vmax.f32 %v3737, 0.0
        %v4019 = vmax.f32 %v3939, 0.0
        %v4020 = vmax.f32 %v3740, 0.0
        %v4021 = vmax.f32 %v3942, 0.0
        %v4022 = vmax.f32 %v3743, 0.0
        %v4023 = vmax.f32 %v3945, 0.0
        %v4024 = vmax.f32 %v3746, 0.0
        %v4025 = vmax.f32 %v3948, 0.0
        %v4026 = vmax.f32 %v3749, 0.0
        %v4027 = vmax.f32 %v3951, 0.0
        %v4028 = vmax.f32 %v3752, 0.0
        %v4029 = vmax.f32 %v3954, 0.0
        %v4030 = vmax.f32 %v3755, 0.0
        %v4031 = vmax.f32 %v3957, 0.0
        %v4032 = vmax.f32 %v3758, 0.0
        %v4033 = vmax.f32 %v3960, 0.0
        %v4034 = vmax.f32 %v3761, 0.0
        %v4035 = vmax.f32 %v3963, 0.0
        %v4036 = vmax.f32 %v3764, 0.0
        %v4037 = vmax.f32 %v3966, 0.0
        %v4038 = vmax.f32 %v3767, 0.0
        %v4039 = vmax.f32 %v3969, 0.0
        %v4040 = vmax.f32 %v3770, 0.0
        %v4041 = vmax.f32 %v3972, 0.0
        %v4042 = vmax.f32 %v3773, 0.0
        %v4043 = vmax.f32 %v3975, 0.0
        %v4044 = vmax.f32 %v3776, 0.0
        %v4045 = vmax.f32 %v3978, 0.0
        %v4046 = vmax.f32 %v3779, 0.0
        %v4047 = vmax.f32 %v3981, 0.0
        %v4048 = vmax.f32 %v3782, 0.0
        %v4049 = vmax.f32 %v3984, 0.0
        %v4050 = vmax.f32 %v3785, 0.0
        %v4051 = vmax.f32 %v3987, 0.0
        %v4052 = vmax.f32 %v3788, 0.0
        %v4053 = vmax.f32 %v3990, 0.0
        %v4054 = vmax.f32 %v3791, 0.0
        %v4055 = vmax.f32 %v3993, 0.0
        %v4056 = vmax.f32 %v3794, 0.0
        %v4057 = vmax.f32 %v3996, 0.0
        %v4058 = vmax.f32 %v3797, 0.0
        %v4059 = vmax.f32 %v3999, 0.0
        %v4060 = vmax.f32 %v3800, 0.0
        %v4061 = vmax.f32 %v4002, 0.0
        %v4062 = vmax.f32 %v3803, 0.0
        %v4063 = vmax.f32 %v4005, 0.0
        %v4064 = vmax.f32 %v3806, 0.0
        %v4065 = vmax.f32 %v4008, 0.0
        %v4066 = vmin.f32 %v4010, 1.0
        %v4067 = vmin.f32 %v4011, 1.0
        %v4068 = vmin.f32 %v4012, 1.0
        %v4069 = vmin.f32 %v4013, 1.0
        %v4070 = vmin.f32 %v4014, 1.0
        %v4071 = vmin.f32 %v4015, 1.0
        %v4072 = vmin.f32 %v4016, 1.0
        %v4073 = vmin.f32 %v4017, 1.0
        %v4074 = vmin.f32 %v4018, 1.0
        %v4075 = vmin.f32 %v4019, 1.0
        %v4076 = vmin.f32 %v4020, 1.0
        %v4077 = vmin.f32 %v4021, 1.0
        %v4078 = vmin.f32 %v4022, 1.0
        %v4079 = vmin.f32 %v4023, 1.0
        %v4080 = vmin.f32 %v4024, 1.0
        %v4081 = vmin.f32 %v4025, 1.0
        %v4082 = vmin.f32 %v4026, 1.0
        %v4083 = vmin.f32 %v4027, 1.0
        %v4084 = vmin.f32 %v4028, 1.0
        %v4085 = vmin.f32 %v4029, 1.0
        %v4086 = vmin.f32 %v4030, 1.0
        %v4087 = vmin.f32 %v4031, 1.0
        %v4088 = vmin.f32 %v4032, 1.0
        %v4089 = vmin.f32 %v4033, 1.0
        %v4090 = vmin.f32 %v4034, 1.0
        %v4091 = vmin.f32 %v4035, 1.0
        %v4092 = vmin.f32 %v4036, 1.0
        %v4093 = vmin.f32 %v4037, 1.0
        %v4094 = vmin.f32 %v4038, 1.0
        %v4095 = vmin.f32 %v4039, 1.0
        %v4096 = vmin.f32 %v4040, 1.0
        %v4097 = vmin.f32 %v4041, 1.0
        %v4098 = vmin.f32 %v4042, 1.0
        %v4099 = vmin.f32 %v4043, 1.0
        %v4100 = vmin.f32 %v4044, 1.0
        %v4101 = vmin.f32 %v4045, 1.0
        %v4102 = vmin.f32 %v4046, 1.0
        %v4103 = vmin.f32 %v4047, 1.0
        %v4104 = vmin.f32 %v4048, 1.0
        %v4105 = vmin.f32 %v4049, 1.0
        %v4106 = vmin.f32 %v4050, 1.0
        %v4107 = vmin.f32 %v4051, 1.0
        %v4108 = vmin.f32 %v4052, 1.0
        %v4109 = vmin.f32 %v4053, 1.0
        %v4110 = vmin.f32 %v4054, 1.0
        %v4111 = vmin.f32 %v4055, 1.0
        %v4112 = vmin.f32 %v4056, 1.0
        %v4113 = vmin.f32 %v4057, 1.0
        %v4114 = vmin.f32 %v4058, 1.0
        %v4115 = vmin.f32 %v4059, 1.0
        %v4116 = vmin.f32 %v4060, 1.0
        %v4117 = vmin.f32 %v4061, 1.0
        %v4118 = vmin.f32 %v4062, 1.0
        %v4119 = vmin.f32 %v4063, 1.0
        %v4120 = vmin.f32 %v4064, 1.0
        %v4121 = vmin.f32 %v4065, 1.0
        %v4122 = vmul.f32 %v4066, 3.7225988
        %v4123 = vmul.f32 %v4067, 3.7225988
        %v4124 = vmul.f32 %v4068, 3.7225988
        %v4125 = vmul.f32 %v4069, 3.7225988
        %v4126 = vmul.f32 %v4070, 3.7225988
        %v4127 = vmul.f32 %v4071, 3.7225988
        %v4128 = vmul.f32 %v4072, 3.7225988
        %v4129 = vmul.f32 %v4073, 3.7225988
        %v4130 = vmul.f32 %v4074, 3.7225988
        %v4131 = vmul.f32 %v4075, 3.7225988
        %v4132 = vmul.f32 %v4076, 3.7225988
        %v4133 = vmul.f32 %v4077, 3.7225988
        %v4134 = vmul.f32 %v4078, 3.7225988
        %v4135 = vmul.f32 %v4079, 3.7225988
        %v4136 = vmul.f32 %v4080, 3.7225988
        %v4137 = vmul.f32 %v4081, 3.7225988
        %v4138 = vmul.f32 %v4082, 3.7225988
        %v4139 = vmul.f32 %v4083, 3.7225988
        %v4140 = vmul.f32 %v4084, 3.7225988
        %v4141 = vmul.f32 %v4085, 3.7225988
        %v4142 = vmul.f32 %v4086, 3.7225988
        %v4143 = vmul.f32 %v4087, 3.7225988
        %v4144 = vmul.f32 %v4088, 3.7225988
        %v4145 = vmul.f32 %v4089, 3.7225988
        %v4146 = vmul.f32 %v4090, 3.7225988
        %v4147 = vmul.f32 %v4091, 3.7225988
        %v4148 = vmul.f32 %v4092, 3.7225988
        %v4149 = vmul.f32 %v4093, 3.7225988
        %v4150 = vmul.f32 %v4094, 3.7225988
        %v4151 = vmul.f32 %v4095, 3.7225988
        %v4152 = vmul.f32 %v4096, 3.7225988
        %v4153 = vmul.f32 %v4097, 3.7225988
        %v4154 = vmul.f32 %v4098, 3.7225988
        %v4155 = vmul.f32 %v4099, 3.7225988
        %v4156 = vmul.f32 %v4100, 3.7225988
        %v4157 = vmul.f32 %v4101, 3.7225988
        %v4158 = vmul.f32 %v4102, 3.7225988
        %v4159 = vmul.f32 %v4103, 3.7225988
        %v4160 = vmul.f32 %v4104, 3.7225988
        %v4161 = vmul.f32 %v4105, 3.7225988
        %v4162 = vmul.f32 %v4106, 3.7225988
        %v4163 = vmul.f32 %v4107, 3.7225988
        %v4164 = vmul.f32 %v4108, 3.7225988
        %v4165 = vmul.f32 %v4109, 3.7225988
        %v4166 = vmul.f32 %v4110, 3.7225988
        %v4167 = vmul.f32 %v4111, 3.7225988
        %v4168 = vmul.f32 %v4112, 3.7225988
        %v4169 = vmul.f32 %v4113, 3.7225988
        %v4170 = vmul.f32 %v4114, 3.7225988
        %v4171 = vmul.f32 %v4115, 3.7225988
        %v4172 = vmul.f32 %v4116, 3.7225988
        %v4173 = vmul.f32 %v4117, 3.7225988
        %v4174 = vmul.f32 %v4118, 3.7225988
        %v4175 = vmul.f32 %v4119, 3.7225988
        %v4176 = vmul.f32 %v4120, 3.7225988
        %v4177 = vmul.f32 %v4121, 3.7225988
        %v4178 = vadd.f32 %v4122, -1.7922626
        %v4179 = vadd.f32 %v4123, -1.7922626
        %v4180 = vadd.f32 %v4124, -1.7922626
        %v4181 = vadd.f32 %v4125, -1.7922626
        %v4182 = vadd.f32 %v4126, -1.7922626
        %v4183 = vadd.f32 %v4127, -1.7922626
        %v4184 = vadd.f32 %v4128, -1.7922626
        %v4185 = vadd.f32 %v4129, -1.7922626
        %v4186 = vadd.f32 %v4130, -1.7922626
        %v4187 = vadd.f32 %v4131, -1.7922626
        %v4188 = vadd.f32 %v4132, -1.7922626
        %v4189 = vadd.f32 %v4133, -1.7922626
        %v4190 = vadd.f32 %v4134, -1.7922626
        %v4191 = vadd.f32 %v4135, -1.7922626
        %v4192 = vadd.f32 %v4136, -1.7922626
        %v4193 = vadd.f32 %v4137, -1.7922626
        %v4194 = vadd.f32 %v4138, -1.7922626
        %v4195 = vadd.f32 %v4139, -1.7922626
        %v4196 = vadd.f32 %v4140, -1.7922626
        %v4197 = vadd.f32 %v4141, -1.7922626
        %v4198 = vadd.f32 %v4142, -1.7922626
        %v4199 = vadd.f32 %v4143, -1.7922626
        %v4200 = vadd.f32 %v4144, -1.7922626
        %v4201 = vadd.f32 %v4145, -1.7922626
        %v4202 = vadd.f32 %v4146, -1.7922626
        %v4203 = vadd.f32 %v4147, -1.7922626
        %v4204 = vadd.f32 %v4148, -1.7922626
        %v4205 = vadd.f32 %v4149, -1.7922626
        %v4206 = vadd.f32 %v4150, -1.7922626
        %v4207 = vadd.f32 %v4151, -1.7922626
        %v4208 = vadd.f32 %v4152, -1.7922626
        %v4209 = vadd.f32 %v4153, -1.7922626
        %v4210 = vadd.f32 %v4154, -1.7922626
        %v4211 = vadd.f32 %v4155, -1.7922626
        %v4212 = vadd.f32 %v4156, -1.7922626
        %v4213 = vadd.f32 %v4157, -1.7922626
        %v4214 = vadd.f32 %v4158, -1.7922626
        %v4215 = vadd.f32 %v4159, -1.7922626
        %v4216 = vadd.f32 %v4160, -1.7922626
        %v4217 = vadd.f32 %v4161, -1.7922626
        %v4218 = vadd.f32 %v4162, -1.7922626
        %v4219 = vadd.f32 %v4163, -1.7922626
        %v4220 = vadd.f32 %v4164, -1.7922626
        %v4221 = vadd.f32 %v4165, -1.7922626
        %v4222 = vadd.f32 %v4166, -1.7922626
        %v4223 = vadd.f32 %v4167, -1.7922626
        %v4224 = vadd.f32 %v4168, -1.7922626
        %v4225 = vadd.f32 %v4169, -1.7922626
        %v4226 = vadd.f32 %v4170, -1.7922626
        %v4227 = vadd.f32 %v4171, -1.7922626
        %v4228 = vadd.f32 %v4172, -1.7922626
        %v4229 = vadd.f32 %v4173, -1.7922626
        %v4230 = vadd.f32 %v4174, -1.7922626
        %v4231 = vadd.f32 %v4175, -1.7922626
        %v4232 = vadd.f32 %v4176, -1.7922626
        %v4233 = vadd.f32 %v4177, -1.7922626
        %4234 = vst [vmem:[%s208] sm:$0xff] %v4178
        %4235 = vst.msk [vmem:[%s208 + $0x8] sm:$0xff] %vm1744, %v4179
        %4236 = vst [vmem:[%s208 + $0x10] sm:$0xff] %v4180
        %4237 = vst.msk [vmem:[%s208 + $0x18] sm:$0xff] %vm1744, %v4181
        %4238 = vst [vmem:[%s208 + $0x20] sm:$0xff] %v4182
        %4239 = vst.msk [vmem:[%s208 + $0x28] sm:$0xff] %vm1744, %v4183
        %4240 = vst [vmem:[%s208 + $0x30] sm:$0xff] %v4184
        %4241 = vst.msk [vmem:[%s208 + $0x38] sm:$0xff] %vm1744, %v4185
        %4242 = vst [vmem:[%s208 + $0x40] sm:$0xff] %v4186
        %4243 = vst.msk [vmem:[%s208 + $0x48] sm:$0xff] %vm1744, %v4187
        %4244 = vst [vmem:[%s208 + $0x50] sm:$0xff] %v4188
        %4245 = vst.msk [vmem:[%s208 + $0x58] sm:$0xff] %vm1744, %v4189
        %4246 = vst [vmem:[%s208 + $0x60] sm:$0xff] %v4190
        %4247 = vst.msk [vmem:[%s208 + $0x68] sm:$0xff] %vm1744, %v4191
        %4248 = vst [vmem:[%s208 + $0x70] sm:$0xff] %v4192
        %4249 = vst.msk [vmem:[%s208 + $0x78] sm:$0xff] %vm1744, %v4193
        %4250 = vst [vmem:[%s208 + $0x80] sm:$0xff] %v4194
        %4251 = vst.msk [vmem:[%s208 + $0x88] sm:$0xff] %vm1744, %v4195
        %4252 = vst [vmem:[%s208 + $0x90] sm:$0xff] %v4196
        %4253 = vst.msk [vmem:[%s208 + $0x98] sm:$0xff] %vm1744, %v4197
        %4254 = vst [vmem:[%s208 + $0xa0] sm:$0xff] %v4198
        %4255 = vst.msk [vmem:[%s208 + $0xa8] sm:$0xff] %vm1744, %v4199
        %4256 = vst [vmem:[%s208 + $0xb0] sm:$0xff] %v4200
        %4257 = vst.msk [vmem:[%s208 + $0xb8] sm:$0xff] %vm1744, %v4201
        %4258 = vst [vmem:[%s208 + $0xc0] sm:$0xff] %v4202
        %4259 = vst.msk [vmem:[%s208 + $0xc8] sm:$0xff] %vm1744, %v4203
        %4260 = vst [vmem:[%s208 + $0xd0] sm:$0xff] %v4204
        %4261 = vst.msk [vmem:[%s208 + $0xd8] sm:$0xff] %vm1744, %v4205
        %4262 = vst [vmem:[%s208 + $0xe0] sm:$0xff] %v4206
        %4263 = vst.msk [vmem:[%s208 + $0xe8] sm:$0xff] %vm1744, %v4207
        %4264 = vst [vmem:[%s208 + $0xf0] sm:$0xff] %v4208
        %4265 = vst.msk [vmem:[%s208 + $0xf8] sm:$0xff] %vm1744, %v4209
        %4266 = vst [vmem:[%s208 + $0x100] sm:$0xff] %v4210
        %4267 = vst.msk [vmem:[%s208 + $0x108] sm:$0xff] %vm1744, %v4211
        %4268 = vst [vmem:[%s208 + $0x110] sm:$0xff] %v4212
        %4269 = vst.msk [vmem:[%s208 + $0x118] sm:$0xff] %vm1744, %v4213
        %4270 = vst [vmem:[%s208 + $0x120] sm:$0xff] %v4214
        %4271 = vst.msk [vmem:[%s208 + $0x128] sm:$0xff] %vm1744, %v4215
        %4272 = vst [vmem:[%s208 + $0x130] sm:$0xff] %v4216
        %4273 = vst.msk [vmem:[%s208 + $0x138] sm:$0xff] %vm1744, %v4217
        %4274 = vst [vmem:[%s208 + $0x140] sm:$0xff] %v4218
        %4275 = vst.msk [vmem:[%s208 + $0x148] sm:$0xff] %vm1744, %v4219
        %4276 = vst [vmem:[%s208 + $0x150] sm:$0xff] %v4220
        %4277 = vst.msk [vmem:[%s208 + $0x158] sm:$0xff] %vm1744, %v4221
        %4278 = vst [vmem:[%s208 + $0x160] sm:$0xff] %v4222
        %4279 = vst.msk [vmem:[%s208 + $0x168] sm:$0xff] %vm1744, %v4223
        %4280 = vst [vmem:[%s208 + $0x170] sm:$0xff] %v4224
        %4281 = vst.msk [vmem:[%s208 + $0x178] sm:$0xff] %vm1744, %v4225
        %4282 = vst [vmem:[%s208 + $0x180] sm:$0xff] %v4226
        %4283 = vst.msk [vmem:[%s208 + $0x188] sm:$0xff] %vm1744, %v4227
        %4284 = vst [vmem:[%s208 + $0x190] sm:$0xff] %v4228
        %4285 = vst.msk [vmem:[%s208 + $0x198] sm:$0xff] %vm1744, %v4229
        %4286 = vst [vmem:[%s208 + $0x1a0] sm:$0xff] %v4230
        %4287 = vst.msk [vmem:[%s208 + $0x1a8] sm:$0xff] %vm1744, %v4231
        %4288 = vst [vmem:[%s208 + $0x1b0] sm:$0xff] %v4232
        %4289 = vst.msk [vmem:[%s208 + $0x1b8] sm:$0xff] %vm1744, %v4233
        %v4290 = vld [vmem:[#allocation2 + $0x200] sm:$0xff]
        %v4291 = vld [vmem:[#allocation2 + $0x208] sm:$0xff]
        %v4292 = vld [vmem:[#allocation2 + $0x210] sm:$0xff]
        %v4293 = vld [vmem:[#allocation2 + $0x218] sm:$0xff]
        %v4294 = vld [vmem:[#allocation2 + $0x220] sm:$0xff]
        %v4295 = vld [vmem:[#allocation2 + $0x228] sm:$0xff]
        %v4296 = vld [vmem:[#allocation2 + $0x230] sm:$0xff]
        %v4297 = vld [vmem:[#allocation2 + $0x238] sm:$0xff]
        %v4298 = vld [vmem:[#allocation2 + $0x240] sm:$0xff]
        %v4299 = vld [vmem:[#allocation2 + $0x248] sm:$0xff]
        %v4300 = vld [vmem:[#allocation2 + $0x250] sm:$0xff]
        %v4301 = vld [vmem:[#allocation2 + $0x258] sm:$0xff]
        %v4302 = vld [vmem:[#allocation2 + $0x260] sm:$0xff]
        %v4303 = vld [vmem:[#allocation2 + $0x268] sm:$0xff]
        %v4304 = vld [vmem:[#allocation2 + $0x270] sm:$0xff]
        %v4305 = vld [vmem:[#allocation2 + $0x278] sm:$0xff]
        %v4306 = vld [vmem:[#allocation2 + $0x280] sm:$0xff]
        %v4307 = vld [vmem:[#allocation2 + $0x288] sm:$0xff]
        %v4308 = vld [vmem:[#allocation2 + $0x290] sm:$0xff]
        %v4309 = vld [vmem:[#allocation2 + $0x298] sm:$0xff]
        %v4310 = vld [vmem:[#allocation2 + $0x2a0] sm:$0xff]
        %v4311 = vld [vmem:[#allocation2 + $0x2a8] sm:$0xff]
        %v4312 = vld [vmem:[#allocation2 + $0x2b0] sm:$0xff]
        %v4313 = vld [vmem:[#allocation2 + $0x2b8] sm:$0xff]
        %v4314 = vld [vmem:[#allocation2 + $0x2c0] sm:$0xff]
        %v4315 = vld [vmem:[#allocation2 + $0x2c8] sm:$0xff]
        %v4316 = vld [vmem:[#allocation2 + $0x2d0] sm:$0xff]
        %v4317 = vld [vmem:[#allocation2 + $0x2d8] sm:$0xff]
        %v4318 = vld [vmem:[#allocation2 + $0x2e0] sm:$0xff]
        %v4319 = vld [vmem:[#allocation2 + $0x2e8] sm:$0xff]
        %v4320 = vld [vmem:[#allocation2 + $0x2f0] sm:$0xff]
        %v4321 = vld [vmem:[#allocation2 + $0x2f8] sm:$0xff]
        %v4322 = vld [vmem:[#allocation2 + $0x300] sm:$0xff]
        %v4323 = vld [vmem:[#allocation2 + $0x308] sm:$0xff]
        %v4324 = vld [vmem:[#allocation2 + $0x310] sm:$0xff]
        %v4325 = vld [vmem:[#allocation2 + $0x318] sm:$0xff]
        %v4326 = vld [vmem:[#allocation2 + $0x320] sm:$0xff]
        %v4327 = vld [vmem:[#allocation2 + $0x328] sm:$0xff]
        %v4328 = vld [vmem:[#allocation2 + $0x330] sm:$0xff]
        %v4329 = vld [vmem:[#allocation2 + $0x338] sm:$0xff]
        %v4330 = vld [vmem:[#allocation2 + $0x340] sm:$0xff]
        %v4331 = vld [vmem:[#allocation2 + $0x348] sm:$0xff]
        %v4332 = vld [vmem:[#allocation2 + $0x350] sm:$0xff]
        %v4333 = vld [vmem:[#allocation2 + $0x358] sm:$0xff]
        %v4334 = vld [vmem:[#allocation2 + $0x360] sm:$0xff]
        %v4335 = vld [vmem:[#allocation2 + $0x368] sm:$0xff]
        %v4336 = vld [vmem:[#allocation2 + $0x370] sm:$0xff]
        %v4337 = vld [vmem:[#allocation2 + $0x378] sm:$0xff]
        %v4338 = vld [vmem:[#allocation2 + $0x380] sm:$0xff]
        %v4339 = vld [vmem:[#allocation2 + $0x388] sm:$0xff]
        %v4340 = vld [vmem:[#allocation2 + $0x390] sm:$0xff]
        %v4341 = vld [vmem:[#allocation2 + $0x398] sm:$0xff]
        %v4342 = vld [vmem:[#allocation2 + $0x3a0] sm:$0xff]
        %v4343 = vld [vmem:[#allocation2 + $0x3a8] sm:$0xff]
        %v4344 = vld [vmem:[#allocation2 + $0x3b0] sm:$0xff]
        %v4345 = vld [vmem:[#allocation2 + $0x3b8] sm:$0xff]
        %v4346 = vld [vmem:[#allocation2 + $0x3c0] sm:$0xff]
        %v4347 = vld [vmem:[#allocation2 + $0x3c8] sm:$0xff]
        %v4348 = vld [vmem:[#allocation2 + $0x3d0] sm:$0xff]
        %v4349 = vld [vmem:[#allocation2 + $0x3d8] sm:$0xff]
        %v4350 = vld [vmem:[#allocation2 + $0x3e0] sm:$0xff]
        %v4351 = vld [vmem:[#allocation2 + $0x3e8] sm:$0xff]
        %v4352 = vld [vmem:[#allocation2 + $0x3f0] sm:$0xff]
        %v4353 = vld [vmem:[#allocation2 + $0x3f8] sm:$0xff]
        %4354 = vmatpush.msra.mxu0 %v4320
        %4355 = vmatpush.msra.mxu0 %v4318
        %4356 = vmatpush.msra.mxu0 %v4316
        %4357 = vmatpush.msra.mxu0 %v4314
        %4358 = vmatpush.msra.mxu0 %v4312
        %4359 = vmatpush.msra.mxu0 %v4310
        %4360 = vmatpush.msra.mxu0 %v4308
        %4361 = vmatpush.msra.mxu0 %v4306
        %4362 = vmatpush.msra.mxu0 %v4304
        %4363 = vmatpush.msra.mxu0 %v4302
        %4364 = vmatpush.msra.mxu0 %v4300
        %4365 = vmatpush.msra.mxu0 %v4298
        %4366 = vmatpush.msra.mxu0 %v4296
        %4367 = vmatpush.msra.mxu0 %v4294
        %4368 = vmatpush.msra.mxu0 %v4292
        %4369 = vmatpush.msra.mxu0 %v4290
        %4370 = vmatmul.f32.gmra.mxu0 %v275
        %v4371 = vpop.f32.mrf.mxu0
        %v4372 = vadd.f32 0.0, %v4371
        %4373 = vmatmul.f32.gmra.mxu0 %v277
        %v4374 = vpop.f32.mrf.mxu0
        %v4375 = vadd.f32 0.0, %v4374
        %4376 = vmatmul.f32.gmra.mxu0 %v279
        %v4377 = vpop.f32.mrf.mxu0
        %v4378 = vadd.f32 0.0, %v4377
        %4379 = vmatmul.f32.gmra.mxu0 %v281
        %v4380 = vpop.f32.mrf.mxu0
        %v4381 = vadd.f32 0.0, %v4380
        %4382 = vmatmul.f32.gmra.mxu0 %v283
        %v4383 = vpop.f32.mrf.mxu0
        %v4384 = vadd.f32 0.0, %v4383
        %4385 = vmatmul.f32.gmra.mxu0 %v285
        %v4386 = vpop.f32.mrf.mxu0
        %v4387 = vadd.f32 0.0, %v4386
        %4388 = vmatmul.f32.gmra.mxu0 %v287
        %v4389 = vpop.f32.mrf.mxu0
        %v4390 = vadd.f32 0.0, %v4389
        %4391 = vmatmul.f32.gmra.mxu0 %v289
        %v4392 = vpop.f32.mrf.mxu0
        %v4393 = vadd.f32 0.0, %v4392
        %4394 = vmatmul.f32.gmra.mxu0 %v291
        %v4395 = vpop.f32.mrf.mxu0
        %v4396 = vadd.f32 0.0, %v4395
        %4397 = vmatmul.f32.gmra.mxu0 %v293
        %v4398 = vpop.f32.mrf.mxu0
        %v4399 = vadd.f32 0.0, %v4398
        %4400 = vmatmul.f32.gmra.mxu0 %v295
        %v4401 = vpop.f32.mrf.mxu0
        %v4402 = vadd.f32 0.0, %v4401
        %4403 = vmatmul.f32.gmra.mxu0 %v297
        %v4404 = vpop.f32.mrf.mxu0
        %v4405 = vadd.f32 0.0, %v4404
        %4406 = vmatmul.f32.gmra.mxu0 %v299
        %v4407 = vpop.f32.mrf.mxu0
        %v4408 = vadd.f32 0.0, %v4407
        %4409 = vmatmul.f32.gmra.mxu0 %v301
        %v4410 = vpop.f32.mrf.mxu0
        %v4411 = vadd.f32 0.0, %v4410
        %4412 = vmatmul.f32.gmra.mxu0 %v303
        %v4413 = vpop.f32.mrf.mxu0
        %v4414 = vadd.f32 0.0, %v4413
        %4415 = vmatmul.f32.gmra.mxu0 %v305
        %v4416 = vpop.f32.mrf.mxu0
        %v4417 = vadd.f32 0.0, %v4416
        %4418 = vmatmul.f32.gmra.mxu0 %v307
        %v4419 = vpop.f32.mrf.mxu0
        %v4420 = vadd.f32 0.0, %v4419
        %4421 = vmatmul.f32.gmra.mxu0 %v309
        %v4422 = vpop.f32.mrf.mxu0
        %v4423 = vadd.f32 0.0, %v4422
        %4424 = vmatmul.f32.gmra.mxu0 %v311
        %v4425 = vpop.f32.mrf.mxu0
        %v4426 = vadd.f32 0.0, %v4425
        %4427 = vmatmul.f32.gmra.mxu0 %v313
        %v4428 = vpop.f32.mrf.mxu0
        %v4429 = vadd.f32 0.0, %v4428
        %4430 = vmatmul.f32.gmra.mxu0 %v315
        %v4431 = vpop.f32.mrf.mxu0
        %v4432 = vadd.f32 0.0, %v4431
        %4433 = vmatmul.f32.gmra.mxu0 %v317
        %v4434 = vpop.f32.mrf.mxu0
        %v4435 = vadd.f32 0.0, %v4434
        %4436 = vmatmul.f32.gmra.mxu0 %v319
        %v4437 = vpop.f32.mrf.mxu0
        %v4438 = vadd.f32 0.0, %v4437
        %4439 = vmatmul.f32.gmra.mxu0 %v321
        %v4440 = vpop.f32.mrf.mxu0
        %v4441 = vadd.f32 0.0, %v4440
        %4442 = vmatmul.f32.gmra.mxu0 %v323
        %v4443 = vpop.f32.mrf.mxu0
        %v4444 = vadd.f32 0.0, %v4443
        %4445 = vmatmul.f32.gmra.mxu0 %v325
        %v4446 = vpop.f32.mrf.mxu0
        %v4447 = vadd.f32 0.0, %v4446
        %4448 = vmatmul.f32.gmra.mxu0 %v327
        %v4449 = vpop.f32.mrf.mxu0
        %v4450 = vadd.f32 0.0, %v4449
        %4451 = vmatmul.f32.gmra.mxu0 %v329
        %v4452 = vpop.f32.mrf.mxu0
        %v4453 = vadd.f32 0.0, %v4452
        %4454 = vdwg.mxu0
        %4455 = vmatpush.msra.mxu0 %v4352
        %4456 = vmatpush.msra.mxu0 %v4350
        %4457 = vmatpush.msra.mxu0 %v4348
        %4458 = vmatpush.msra.mxu0 %v4346
        %4459 = vmatpush.msra.mxu0 %v4344
        %4460 = vmatpush.msra.mxu0 %v4342
        %4461 = vmatpush.msra.mxu0 %v4340
        %4462 = vmatpush.msra.mxu0 %v4338
        %4463 = vmatpush.msra.mxu0 %v4336
        %4464 = vmatpush.msra.mxu0 %v4334
        %4465 = vmatpush.msra.mxu0 %v4332
        %4466 = vmatpush.msra.mxu0 %v4330
        %4467 = vmatpush.msra.mxu0 %v4328
        %4468 = vmatpush.msra.mxu0 %v4326
        %4469 = vmatpush.msra.mxu0 %v4324
        %4470 = vmatpush.msra.mxu0 %v4322
        %4471 = vmatmul.f32.gmra.mxu0 %v276
        %v4472 = vpop.f32.mrf.mxu0
        %v4473 = vadd.f32 %v4372, %v4472
        %4474 = vmatmul.f32.gmra.mxu0 %v278
        %v4475 = vpop.f32.mrf.mxu0
        %v4476 = vadd.f32 %v4375, %v4475
        %4477 = vmatmul.f32.gmra.mxu0 %v280
        %v4478 = vpop.f32.mrf.mxu0
        %v4479 = vadd.f32 %v4378, %v4478
        %4480 = vmatmul.f32.gmra.mxu0 %v282
        %v4481 = vpop.f32.mrf.mxu0
        %v4482 = vadd.f32 %v4381, %v4481
        %4483 = vmatmul.f32.gmra.mxu0 %v284
        %v4484 = vpop.f32.mrf.mxu0
        %v4485 = vadd.f32 %v4384, %v4484
        %4486 = vmatmul.f32.gmra.mxu0 %v286
        %v4487 = vpop.f32.mrf.mxu0
        %v4488 = vadd.f32 %v4387, %v4487
        %4489 = vmatmul.f32.gmra.mxu0 %v288
        %v4490 = vpop.f32.mrf.mxu0
        %v4491 = vadd.f32 %v4390, %v4490
        %4492 = vmatmul.f32.gmra.mxu0 %v290
        %v4493 = vpop.f32.mrf.mxu0
        %v4494 = vadd.f32 %v4393, %v4493
        %4495 = vmatmul.f32.gmra.mxu0 %v292
        %v4496 = vpop.f32.mrf.mxu0
        %v4497 = vadd.f32 %v4396, %v4496
        %4498 = vmatmul.f32.gmra.mxu0 %v294
        %v4499 = vpop.f32.mrf.mxu0
        %v4500 = vadd.f32 %v4399, %v4499
        %4501 = vmatmul.f32.gmra.mxu0 %v296
        %v4502 = vpop.f32.mrf.mxu0
        %v4503 = vadd.f32 %v4402, %v4502
        %4504 = vmatmul.f32.gmra.mxu0 %v298
        %v4505 = vpop.f32.mrf.mxu0
        %v4506 = vadd.f32 %v4405, %v4505
        %4507 = vmatmul.f32.gmra.mxu0 %v300
        %v4508 = vpop.f32.mrf.mxu0
        %v4509 = vadd.f32 %v4408, %v4508
        %4510 = vmatmul.f32.gmra.mxu0 %v302
        %v4511 = vpop.f32.mrf.mxu0
        %v4512 = vadd.f32 %v4411, %v4511
        %4513 = vmatmul.f32.gmra.mxu0 %v304
        %v4514 = vpop.f32.mrf.mxu0
        %v4515 = vadd.f32 %v4414, %v4514
        %4516 = vmatmul.f32.gmra.mxu0 %v306
        %v4517 = vpop.f32.mrf.mxu0
        %v4518 = vadd.f32 %v4417, %v4517
        %4519 = vmatmul.f32.gmra.mxu0 %v308
        %v4520 = vpop.f32.mrf.mxu0
        %v4521 = vadd.f32 %v4420, %v4520
        %4522 = vmatmul.f32.gmra.mxu0 %v310
        %v4523 = vpop.f32.mrf.mxu0
        %v4524 = vadd.f32 %v4423, %v4523
        %4525 = vmatmul.f32.gmra.mxu0 %v312
        %v4526 = vpop.f32.mrf.mxu0
        %v4527 = vadd.f32 %v4426, %v4526
        %4528 = vmatmul.f32.gmra.mxu0 %v314
        %v4529 = vpop.f32.mrf.mxu0
        %v4530 = vadd.f32 %v4429, %v4529
        %4531 = vmatmul.f32.gmra.mxu0 %v316
        %v4532 = vpop.f32.mrf.mxu0
        %v4533 = vadd.f32 %v4432, %v4532
        %4534 = vmatmul.f32.gmra.mxu0 %v318
        %v4535 = vpop.f32.mrf.mxu0
        %v4536 = vadd.f32 %v4435, %v4535
        %4537 = vmatmul.f32.gmra.mxu0 %v320
        %v4538 = vpop.f32.mrf.mxu0
        %v4539 = vadd.f32 %v4438, %v4538
        %4540 = vmatmul.f32.gmra.mxu0 %v322
        %v4541 = vpop.f32.mrf.mxu0
        %v4542 = vadd.f32 %v4441, %v4541
        %4543 = vmatmul.f32.gmra.mxu0 %v324
        %v4544 = vpop.f32.mrf.mxu0
        %v4545 = vadd.f32 %v4444, %v4544
        %4546 = vmatmul.f32.gmra.mxu0 %v326
        %v4547 = vpop.f32.mrf.mxu0
        %v4548 = vadd.f32 %v4447, %v4547
        %4549 = vmatmul.f32.gmra.mxu0 %v328
        %v4550 = vpop.f32.mrf.mxu0
        %v4551 = vadd.f32 %v4450, %v4550
        %4552 = vmatmul.f32.gmra.mxu0 %v330
        %v4553 = vpop.f32.mrf.mxu0
        %v4554 = vadd.f32 %v4453, %v4553
        %4555 = vdwg.mxu0
        %4556 = vmatpush.msra.mxu0 %v4321
        %4557 = vmatpush.msra.mxu0 %v4319
        %4558 = vmatpush.msra.mxu0 %v4317
        %4559 = vmatpush.msra.mxu0 %v4315
        %4560 = vmatpush.msra.mxu0 %v4313
        %4561 = vmatpush.msra.mxu0 %v4311
        %4562 = vmatpush.msra.mxu0 %v4309
        %4563 = vmatpush.msra.mxu0 %v4307
        %4564 = vmatpush.msra.mxu0 %v4305
        %4565 = vmatpush.msra.mxu0 %v4303
        %4566 = vmatpush.msra.mxu0 %v4301
        %4567 = vmatpush.msra.mxu0 %v4299
        %4568 = vmatpush.msra.mxu0 %v4297
        %4569 = vmatpush.msra.mxu0 %v4295
        %4570 = vmatpush.msra.mxu0 %v4293
        %4571 = vmatpush.msra.mxu0 %v4291
        %4572 = vmatmul.f32.gmra.mxu0 %v275
        %v4573 = vpop.f32.mrf.mxu0
        %v4574 = vadd.f32 0.0, %v4573
        %4575 = vmatmul.f32.gmra.mxu0 %v277
        %v4576 = vpop.f32.mrf.mxu0
        %v4577 = vadd.f32 0.0, %v4576
        %4578 = vmatmul.f32.gmra.mxu0 %v279
        %v4579 = vpop.f32.mrf.mxu0
        %v4580 = vadd.f32 0.0, %v4579
        %4581 = vmatmul.f32.gmra.mxu0 %v281
        %v4582 = vpop.f32.mrf.mxu0
        %v4583 = vadd.f32 0.0, %v4582
        %4584 = vmatmul.f32.gmra.mxu0 %v283
        %v4585 = vpop.f32.mrf.mxu0
        %v4586 = vadd.f32 0.0, %v4585
        %4587 = vmatmul.f32.gmra.mxu0 %v285
        %v4588 = vpop.f32.mrf.mxu0
        %v4589 = vadd.f32 0.0, %v4588
        %4590 = vmatmul.f32.gmra.mxu0 %v287
        %v4591 = vpop.f32.mrf.mxu0
        %v4592 = vadd.f32 0.0, %v4591
        %4593 = vmatmul.f32.gmra.mxu0 %v289
        %v4594 = vpop.f32.mrf.mxu0
        %v4595 = vadd.f32 0.0, %v4594
        %4596 = vmatmul.f32.gmra.mxu0 %v291
        %v4597 = vpop.f32.mrf.mxu0
        %v4598 = vadd.f32 0.0, %v4597
        %4599 = vmatmul.f32.gmra.mxu0 %v293
        %v4600 = vpop.f32.mrf.mxu0
        %v4601 = vadd.f32 0.0, %v4600
        %4602 = vmatmul.f32.gmra.mxu0 %v295
        %v4603 = vpop.f32.mrf.mxu0
        %v4604 = vadd.f32 0.0, %v4603
        %4605 = vmatmul.f32.gmra.mxu0 %v297
        %v4606 = vpop.f32.mrf.mxu0
        %v4607 = vadd.f32 0.0, %v4606
        %4608 = vmatmul.f32.gmra.mxu0 %v299
        %v4609 = vpop.f32.mrf.mxu0
        %v4610 = vadd.f32 0.0, %v4609
        %4611 = vmatmul.f32.gmra.mxu0 %v301
        %v4612 = vpop.f32.mrf.mxu0
        %v4613 = vadd.f32 0.0, %v4612
        %4614 = vmatmul.f32.gmra.mxu0 %v303
        %v4615 = vpop.f32.mrf.mxu0
        %v4616 = vadd.f32 0.0, %v4615
        %4617 = vmatmul.f32.gmra.mxu0 %v305
        %v4618 = vpop.f32.mrf.mxu0
        %v4619 = vadd.f32 0.0, %v4618
        %4620 = vmatmul.f32.gmra.mxu0 %v307
        %v4621 = vpop.f32.mrf.mxu0
        %v4622 = vadd.f32 0.0, %v4621
        %4623 = vmatmul.f32.gmra.mxu0 %v309
        %v4624 = vpop.f32.mrf.mxu0
        %v4625 = vadd.f32 0.0, %v4624
        %4626 = vmatmul.f32.gmra.mxu0 %v311
        %v4627 = vpop.f32.mrf.mxu0
        %v4628 = vadd.f32 0.0, %v4627
        %4629 = vmatmul.f32.gmra.mxu0 %v313
        %v4630 = vpop.f32.mrf.mxu0
        %v4631 = vadd.f32 0.0, %v4630
        %4632 = vmatmul.f32.gmra.mxu0 %v315
        %v4633 = vpop.f32.mrf.mxu0
        %v4634 = vadd.f32 0.0, %v4633
        %4635 = vmatmul.f32.gmra.mxu0 %v317
        %v4636 = vpop.f32.mrf.mxu0
        %v4637 = vadd.f32 0.0, %v4636
        %4638 = vmatmul.f32.gmra.mxu0 %v319
        %v4639 = vpop.f32.mrf.mxu0
        %v4640 = vadd.f32 0.0, %v4639
        %4641 = vmatmul.f32.gmra.mxu0 %v321
        %v4642 = vpop.f32.mrf.mxu0
        %v4643 = vadd.f32 0.0, %v4642
        %4644 = vmatmul.f32.gmra.mxu0 %v323
        %v4645 = vpop.f32.mrf.mxu0
        %v4646 = vadd.f32 0.0, %v4645
        %4647 = vmatmul.f32.gmra.mxu0 %v325
        %v4648 = vpop.f32.mrf.mxu0
        %v4649 = vadd.f32 0.0, %v4648
        %4650 = vmatmul.f32.gmra.mxu0 %v327
        %v4651 = vpop.f32.mrf.mxu0
        %v4652 = vadd.f32 0.0, %v4651
        %4653 = vmatmul.f32.gmra.mxu0 %v329
        %v4654 = vpop.f32.mrf.mxu0
        %v4655 = vadd.f32 0.0, %v4654
        %4656 = vdwg.mxu0
        %4657 = vmatpush.msra.mxu0 %v4353
        %4658 = vmatpush.msra.mxu0 %v4351
        %4659 = vmatpush.msra.mxu0 %v4349
        %4660 = vmatpush.msra.mxu0 %v4347
        %4661 = vmatpush.msra.mxu0 %v4345
        %4662 = vmatpush.msra.mxu0 %v4343
        %4663 = vmatpush.msra.mxu0 %v4341
        %4664 = vmatpush.msra.mxu0 %v4339
        %4665 = vmatpush.msra.mxu0 %v4337
        %4666 = vmatpush.msra.mxu0 %v4335
        %4667 = vmatpush.msra.mxu0 %v4333
        %4668 = vmatpush.msra.mxu0 %v4331
        %4669 = vmatpush.msra.mxu0 %v4329
        %4670 = vmatpush.msra.mxu0 %v4327
        %4671 = vmatpush.msra.mxu0 %v4325
        %4672 = vmatpush.msra.mxu0 %v4323
        %4673 = vmatmul.f32.gmra.mxu0 %v276
        %v4674 = vpop.f32.mrf.mxu0
        %v4675 = vadd.f32 %v4574, %v4674
        %4676 = vmatmul.f32.gmra.mxu0 %v278
        %v4677 = vpop.f32.mrf.mxu0
        %v4678 = vadd.f32 %v4577, %v4677
        %4679 = vmatmul.f32.gmra.mxu0 %v280
        %v4680 = vpop.f32.mrf.mxu0
        %v4681 = vadd.f32 %v4580, %v4680
        %4682 = vmatmul.f32.gmra.mxu0 %v282
        %v4683 = vpop.f32.mrf.mxu0
        %v4684 = vadd.f32 %v4583, %v4683
        %4685 = vmatmul.f32.gmra.mxu0 %v284
        %v4686 = vpop.f32.mrf.mxu0
        %v4687 = vadd.f32 %v4586, %v4686
        %4688 = vmatmul.f32.gmra.mxu0 %v286
        %v4689 = vpop.f32.mrf.mxu0
        %v4690 = vadd.f32 %v4589, %v4689
        %4691 = vmatmul.f32.gmra.mxu0 %v288
        %v4692 = vpop.f32.mrf.mxu0
        %v4693 = vadd.f32 %v4592, %v4692
        %4694 = vmatmul.f32.gmra.mxu0 %v290
        %v4695 = vpop.f32.mrf.mxu0
        %v4696 = vadd.f32 %v4595, %v4695
        %4697 = vmatmul.f32.gmra.mxu0 %v292
        %v4698 = vpop.f32.mrf.mxu0
        %v4699 = vadd.f32 %v4598, %v4698
        %4700 = vmatmul.f32.gmra.mxu0 %v294
        %v4701 = vpop.f32.mrf.mxu0
        %v4702 = vadd.f32 %v4601, %v4701
        %4703 = vmatmul.f32.gmra.mxu0 %v296
        %v4704 = vpop.f32.mrf.mxu0
        %v4705 = vadd.f32 %v4604, %v4704
        %4706 = vmatmul.f32.gmra.mxu0 %v298
        %v4707 = vpop.f32.mrf.mxu0
        %v4708 = vadd.f32 %v4607, %v4707
        %4709 = vmatmul.f32.gmra.mxu0 %v300
        %v4710 = vpop.f32.mrf.mxu0
        %v4711 = vadd.f32 %v4610, %v4710
        %4712 = vmatmul.f32.gmra.mxu0 %v302
        %v4713 = vpop.f32.mrf.mxu0
        %v4714 = vadd.f32 %v4613, %v4713
        %4715 = vmatmul.f32.gmra.mxu0 %v304
        %v4716 = vpop.f32.mrf.mxu0
        %v4717 = vadd.f32 %v4616, %v4716
        %4718 = vmatmul.f32.gmra.mxu0 %v306
        %v4719 = vpop.f32.mrf.mxu0
        %v4720 = vadd.f32 %v4619, %v4719
        %4721 = vmatmul.f32.gmra.mxu0 %v308
        %v4722 = vpop.f32.mrf.mxu0
        %v4723 = vadd.f32 %v4622, %v4722
        %4724 = vmatmul.f32.gmra.mxu0 %v310
        %v4725 = vpop.f32.mrf.mxu0
        %v4726 = vadd.f32 %v4625, %v4725
        %4727 = vmatmul.f32.gmra.mxu0 %v312
        %v4728 = vpop.f32.mrf.mxu0
        %v4729 = vadd.f32 %v4628, %v4728
        %4730 = vmatmul.f32.gmra.mxu0 %v314
        %v4731 = vpop.f32.mrf.mxu0
        %v4732 = vadd.f32 %v4631, %v4731
        %4733 = vmatmul.f32.gmra.mxu0 %v316
        %v4734 = vpop.f32.mrf.mxu0
        %v4735 = vadd.f32 %v4634, %v4734
        %4736 = vmatmul.f32.gmra.mxu0 %v318
        %v4737 = vpop.f32.mrf.mxu0
        %v4738 = vadd.f32 %v4637, %v4737
        %4739 = vmatmul.f32.gmra.mxu0 %v320
        %v4740 = vpop.f32.mrf.mxu0
        %v4741 = vadd.f32 %v4640, %v4740
        %4742 = vmatmul.f32.gmra.mxu0 %v322
        %v4743 = vpop.f32.mrf.mxu0
        %v4744 = vadd.f32 %v4643, %v4743
        %4745 = vmatmul.f32.gmra.mxu0 %v324
        %v4746 = vpop.f32.mrf.mxu0
        %v4747 = vadd.f32 %v4646, %v4746
        %4748 = vmatmul.f32.gmra.mxu0 %v326
        %v4749 = vpop.f32.mrf.mxu0
        %v4750 = vadd.f32 %v4649, %v4749
        %4751 = vmatmul.f32.gmra.mxu0 %v328
        %v4752 = vpop.f32.mrf.mxu0
        %v4753 = vadd.f32 %v4652, %v4752
        %4754 = vmatmul.f32.gmra.mxu0 %v330
        %v4755 = vpop.f32.mrf.mxu0
        %v4756 = vadd.f32 %v4655, %v4755
        %4757 = vdwg.mxu0
        %v4758 = vmax.f32 %v4473, 0.0
        %v4759 = vmax.f32 %v4675, 0.0
        %v4760 = vmax.f32 %v4476, 0.0
        %v4761 = vmax.f32 %v4678, 0.0
        %v4762 = vmax.f32 %v4479, 0.0
        %v4763 = vmax.f32 %v4681, 0.0
        %v4764 = vmax.f32 %v4482, 0.0
        %v4765 = vmax.f32 %v4684, 0.0
        %v4766 = vmax.f32 %v4485, 0.0
        %v4767 = vmax.f32 %v4687, 0.0
        %v4768 = vmax.f32 %v4488, 0.0
        %v4769 = vmax.f32 %v4690, 0.0
        %v4770 = vmax.f32 %v4491, 0.0
        %v4771 = vmax.f32 %v4693, 0.0
        %v4772 = vmax.f32 %v4494, 0.0
        %v4773 = vmax.f32 %v4696, 0.0
        %v4774 = vmax.f32 %v4497, 0.0
        %v4775 = vmax.f32 %v4699, 0.0
        %v4776 = vmax.f32 %v4500, 0.0
        %v4777 = vmax.f32 %v4702, 0.0
        %v4778 = vmax.f32 %v4503, 0.0
        %v4779 = vmax.f32 %v4705, 0.0
        %v4780 = vmax.f32 %v4506, 0.0
        %v4781 = vmax.f32 %v4708, 0.0
        %v4782 = vmax.f32 %v4509, 0.0
        %v4783 = vmax.f32 %v4711, 0.0
        %v4784 = vmax.f32 %v4512, 0.0
        %v4785 = vmax.f32 %v4714, 0.0
        %v4786 = vmax.f32 %v4515, 0.0
        %v4787 = vmax.f32 %v4717, 0.0
        %v4788 = vmax.f32 %v4518, 0.0
        %v4789 = vmax.f32 %v4720, 0.0
        %v4790 = vmax.f32 %v4521, 0.0
        %v4791 = vmax.f32 %v4723, 0.0
        %v4792 = vmax.f32 %v4524, 0.0
        %v4793 = vmax.f32 %v4726, 0.0
        %v4794 = vmax.f32 %v4527, 0.0
        %v4795 = vmax.f32 %v4729, 0.0
        %v4796 = vmax.f32 %v4530, 0.0
        %v4797 = vmax.f32 %v4732, 0.0
        %v4798 = vmax.f32 %v4533, 0.0
        %v4799 = vmax.f32 %v4735, 0.0
        %v4800 = vmax.f32 %v4536, 0.0
        %v4801 = vmax.f32 %v4738, 0.0
        %v4802 = vmax.f32 %v4539, 0.0
        %v4803 = vmax.f32 %v4741, 0.0
        %v4804 = vmax.f32 %v4542, 0.0
        %v4805 = vmax.f32 %v4744, 0.0
        %v4806 = vmax.f32 %v4545, 0.0
        %v4807 = vmax.f32 %v4747, 0.0
        %v4808 = vmax.f32 %v4548, 0.0
        %v4809 = vmax.f32 %v4750, 0.0
        %v4810 = vmax.f32 %v4551, 0.0
        %v4811 = vmax.f32 %v4753, 0.0
        %v4812 = vmax.f32 %v4554, 0.0
        %v4813 = vmax.f32 %v4756, 0.0
        %v4814 = vmin.f32 %v4758, 1.0
        %v4815 = vmin.f32 %v4759, 1.0
        %v4816 = vmin.f32 %v4760, 1.0
        %v4817 = vmin.f32 %v4761, 1.0
        %v4818 = vmin.f32 %v4762, 1.0
        %v4819 = vmin.f32 %v4763, 1.0
        %v4820 = vmin.f32 %v4764, 1.0
        %v4821 = vmin.f32 %v4765, 1.0
        %v4822 = vmin.f32 %v4766, 1.0
        %v4823 = vmin.f32 %v4767, 1.0
        %v4824 = vmin.f32 %v4768, 1.0
        %v4825 = vmin.f32 %v4769, 1.0
        %v4826 = vmin.f32 %v4770, 1.0
        %v4827 = vmin.f32 %v4771, 1.0
        %v4828 = vmin.f32 %v4772, 1.0
        %v4829 = vmin.f32 %v4773, 1.0
        %v4830 = vmin.f32 %v4774, 1.0
        %v4831 = vmin.f32 %v4775, 1.0
        %v4832 = vmin.f32 %v4776, 1.0
        %v4833 = vmin.f32 %v4777, 1.0
        %v4834 = vmin.f32 %v4778, 1.0
        %v4835 = vmin.f32 %v4779, 1.0
        %v4836 = vmin.f32 %v4780, 1.0
        %v4837 = vmin.f32 %v4781, 1.0
        %v4838 = vmin.f32 %v4782, 1.0
        %v4839 = vmin.f32 %v4783, 1.0
        %v4840 = vmin.f32 %v4784, 1.0
        %v4841 = vmin.f32 %v4785, 1.0
        %v4842 = vmin.f32 %v4786, 1.0
        %v4843 = vmin.f32 %v4787, 1.0
        %v4844 = vmin.f32 %v4788, 1.0
        %v4845 = vmin.f32 %v4789, 1.0
        %v4846 = vmin.f32 %v4790, 1.0
        %v4847 = vmin.f32 %v4791, 1.0
        %v4848 = vmin.f32 %v4792, 1.0
        %v4849 = vmin.f32 %v4793, 1.0
        %v4850 = vmin.f32 %v4794, 1.0
        %v4851 = vmin.f32 %v4795, 1.0
        %v4852 = vmin.f32 %v4796, 1.0
        %v4853 = vmin.f32 %v4797, 1.0
        %v4854 = vmin.f32 %v4798, 1.0
        %v4855 = vmin.f32 %v4799, 1.0
        %v4856 = vmin.f32 %v4800, 1.0
        %v4857 = vmin.f32 %v4801, 1.0
        %v4858 = vmin.f32 %v4802, 1.0
        %v4859 = vmin.f32 %v4803, 1.0
        %v4860 = vmin.f32 %v4804, 1.0
        %v4861 = vmin.f32 %v4805, 1.0
        %v4862 = vmin.f32 %v4806, 1.0
        %v4863 = vmin.f32 %v4807, 1.0
        %v4864 = vmin.f32 %v4808, 1.0
        %v4865 = vmin.f32 %v4809, 1.0
        %v4866 = vmin.f32 %v4810, 1.0
        %v4867 = vmin.f32 %v4811, 1.0
        %v4868 = vmin.f32 %v4812, 1.0
        %v4869 = vmin.f32 %v4813, 1.0
        %v4870 = vmul.f32 %v4814, 3.826981
        %v4871 = vmul.f32 %v4815, 3.826981
        %v4872 = vmul.f32 %v4816, 3.826981
        %v4873 = vmul.f32 %v4817, 3.826981
        %v4874 = vmul.f32 %v4818, 3.826981
        %v4875 = vmul.f32 %v4819, 3.826981
        %v4876 = vmul.f32 %v4820, 3.826981
        %v4877 = vmul.f32 %v4821, 3.826981
        %v4878 = vmul.f32 %v4822, 3.826981
        %v4879 = vmul.f32 %v4823, 3.826981
        %v4880 = vmul.f32 %v4824, 3.826981
        %v4881 = vmul.f32 %v4825, 3.826981
        %v4882 = vmul.f32 %v4826, 3.826981
        %v4883 = vmul.f32 %v4827, 3.826981
        %v4884 = vmul.f32 %v4828, 3.826981
        %v4885 = vmul.f32 %v4829, 3.826981
        %v4886 = vmul.f32 %v4830, 3.826981
        %v4887 = vmul.f32 %v4831, 3.826981
        %v4888 = vmul.f32 %v4832, 3.826981
        %v4889 = vmul.f32 %v4833, 3.826981
        %v4890 = vmul.f32 %v4834, 3.826981
        %v4891 = vmul.f32 %v4835, 3.826981
        %v4892 = vmul.f32 %v4836, 3.826981
        %v4893 = vmul.f32 %v4837, 3.826981
        %v4894 = vmul.f32 %v4838, 3.826981
        %v4895 = vmul.f32 %v4839, 3.826981
        %v4896 = vmul.f32 %v4840, 3.826981
        %v4897 = vmul.f32 %v4841, 3.826981
        %v4898 = vmul.f32 %v4842, 3.826981
        %v4899 = vmul.f32 %v4843, 3.826981
        %v4900 = vmul.f32 %v4844, 3.826981
        %v4901 = vmul.f32 %v4845, 3.826981
        %v4902 = vmul.f32 %v4846, 3.826981
        %v4903 = vmul.f32 %v4847, 3.826981
        %v4904 = vmul.f32 %v4848, 3.826981
        %v4905 = vmul.f32 %v4849, 3.826981
        %v4906 = vmul.f32 %v4850, 3.826981
        %v4907 = vmul.f32 %v4851, 3.826981
        %v4908 = vmul.f32 %v4852, 3.826981
        %v4909 = vmul.f32 %v4853, 3.826981
        %v4910 = vmul.f32 %v4854, 3.826981
        %v4911 = vmul.f32 %v4855, 3.826981
        %v4912 = vmul.f32 %v4856, 3.826981
        %v4913 = vmul.f32 %v4857, 3.826981
        %v4914 = vmul.f32 %v4858, 3.826981
        %v4915 = vmul.f32 %v4859, 3.826981
        %v4916 = vmul.f32 %v4860, 3.826981
        %v4917 = vmul.f32 %v4861, 3.826981
        %v4918 = vmul.f32 %v4862, 3.826981
        %v4919 = vmul.f32 %v4863, 3.826981
        %v4920 = vmul.f32 %v4864, 3.826981
        %v4921 = vmul.f32 %v4865, 3.826981
        %v4922 = vmul.f32 %v4866, 3.826981
        %v4923 = vmul.f32 %v4867, 3.826981
        %v4924 = vmul.f32 %v4868, 3.826981
        %v4925 = vmul.f32 %v4869, 3.826981
        %v4926 = vadd.f32 %v4870, -1.7520971
        %v4927 = vadd.f32 %v4871, -1.7520971
        %v4928 = vadd.f32 %v4872, -1.7520971
        %v4929 = vadd.f32 %v4873, -1.7520971
        %v4930 = vadd.f32 %v4874, -1.7520971
        %v4931 = vadd.f32 %v4875, -1.7520971
        %v4932 = vadd.f32 %v4876, -1.7520971
        %v4933 = vadd.f32 %v4877, -1.7520971
        %v4934 = vadd.f32 %v4878, -1.7520971
        %v4935 = vadd.f32 %v4879, -1.7520971
        %v4936 = vadd.f32 %v4880, -1.7520971
        %v4937 = vadd.f32 %v4881, -1.7520971
        %v4938 = vadd.f32 %v4882, -1.7520971
        %v4939 = vadd.f32 %v4883, -1.7520971
        %v4940 = vadd.f32 %v4884, -1.7520971
        %v4941 = vadd.f32 %v4885, -1.7520971
        %v4942 = vadd.f32 %v4886, -1.7520971
        %v4943 = vadd.f32 %v4887, -1.7520971
        %v4944 = vadd.f32 %v4888, -1.7520971
        %v4945 = vadd.f32 %v4889, -1.7520971
        %v4946 = vadd.f32 %v4890, -1.7520971
        %v4947 = vadd.f32 %v4891, -1.7520971
        %v4948 = vadd.f32 %v4892, -1.7520971
        %v4949 = vadd.f32 %v4893, -1.7520971
        %v4950 = vadd.f32 %v4894, -1.7520971
        %v4951 = vadd.f32 %v4895, -1.7520971
        %v4952 = vadd.f32 %v4896, -1.7520971
        %v4953 = vadd.f32 %v4897, -1.7520971
        %v4954 = vadd.f32 %v4898, -1.7520971
        %v4955 = vadd.f32 %v4899, -1.7520971
        %v4956 = vadd.f32 %v4900, -1.7520971
        %v4957 = vadd.f32 %v4901, -1.7520971
        %v4958 = vadd.f32 %v4902, -1.7520971
        %v4959 = vadd.f32 %v4903, -1.7520971
        %v4960 = vadd.f32 %v4904, -1.7520971
        %v4961 = vadd.f32 %v4905, -1.7520971
        %v4962 = vadd.f32 %v4906, -1.7520971
        %v4963 = vadd.f32 %v4907, -1.7520971
        %v4964 = vadd.f32 %v4908, -1.7520971
        %v4965 = vadd.f32 %v4909, -1.7520971
        %v4966 = vadd.f32 %v4910, -1.7520971
        %v4967 = vadd.f32 %v4911, -1.7520971
        %v4968 = vadd.f32 %v4912, -1.7520971
        %v4969 = vadd.f32 %v4913, -1.7520971
        %v4970 = vadd.f32 %v4914, -1.7520971
        %v4971 = vadd.f32 %v4915, -1.7520971
        %v4972 = vadd.f32 %v4916, -1.7520971
        %v4973 = vadd.f32 %v4917, -1.7520971
        %v4974 = vadd.f32 %v4918, -1.7520971
        %v4975 = vadd.f32 %v4919, -1.7520971
        %v4976 = vadd.f32 %v4920, -1.7520971
        %v4977 = vadd.f32 %v4921, -1.7520971
        %v4978 = vadd.f32 %v4922, -1.7520971
        %v4979 = vadd.f32 %v4923, -1.7520971
        %v4980 = vadd.f32 %v4924, -1.7520971
        %v4981 = vadd.f32 %v4925, -1.7520971
        %s4982 = scalar_lea.vmem %s208, 448 [#allocation8]
        %4983 = vst [vmem:[%s4982] sm:$0xff] %v4926
        %4984 = vst.msk [vmem:[%s4982 + $0x8] sm:$0xff] %vm1744, %v4927
        %4985 = vst [vmem:[%s4982 + $0x10] sm:$0xff] %v4928
        %4986 = vst.msk [vmem:[%s4982 + $0x18] sm:$0xff] %vm1744, %v4929
        %4987 = vst [vmem:[%s4982 + $0x20] sm:$0xff] %v4930
        %4988 = vst.msk [vmem:[%s4982 + $0x28] sm:$0xff] %vm1744, %v4931
        %4989 = vst [vmem:[%s4982 + $0x30] sm:$0xff] %v4932
        %4990 = vst.msk [vmem:[%s4982 + $0x38] sm:$0xff] %vm1744, %v4933
        %4991 = vst [vmem:[%s4982 + $0x40] sm:$0xff] %v4934
        %4992 = vst.msk [vmem:[%s4982 + $0x48] sm:$0xff] %vm1744, %v4935
        %4993 = vst [vmem:[%s4982 + $0x50] sm:$0xff] %v4936
        %4994 = vst.msk [vmem:[%s4982 + $0x58] sm:$0xff] %vm1744, %v4937
        %4995 = vst [vmem:[%s4982 + $0x60] sm:$0xff] %v4938
        %4996 = vst.msk [vmem:[%s4982 + $0x68] sm:$0xff] %vm1744, %v4939
        %4997 = vst [vmem:[%s4982 + $0x70] sm:$0xff] %v4940
        %4998 = vst.msk [vmem:[%s4982 + $0x78] sm:$0xff] %vm1744, %v4941
        %4999 = vst [vmem:[%s4982 + $0x80] sm:$0xff] %v4942
        %5000 = vst.msk [vmem:[%s4982 + $0x88] sm:$0xff] %vm1744, %v4943
        %5001 = vst [vmem:[%s4982 + $0x90] sm:$0xff] %v4944
        %5002 = vst.msk [vmem:[%s4982 + $0x98] sm:$0xff] %vm1744, %v4945
        %5003 = vst [vmem:[%s4982 + $0xa0] sm:$0xff] %v4946
        %5004 = vst.msk [vmem:[%s4982 + $0xa8] sm:$0xff] %vm1744, %v4947
        %5005 = vst [vmem:[%s4982 + $0xb0] sm:$0xff] %v4948
        %5006 = vst.msk [vmem:[%s4982 + $0xb8] sm:$0xff] %vm1744, %v4949
        %5007 = vst [vmem:[%s4982 + $0xc0] sm:$0xff] %v4950
        %5008 = vst.msk [vmem:[%s4982 + $0xc8] sm:$0xff] %vm1744, %v4951
        %5009 = vst [vmem:[%s4982 + $0xd0] sm:$0xff] %v4952
        %5010 = vst.msk [vmem:[%s4982 + $0xd8] sm:$0xff] %vm1744, %v4953
        %5011 = vst [vmem:[%s4982 + $0xe0] sm:$0xff] %v4954
        %5012 = vst.msk [vmem:[%s4982 + $0xe8] sm:$0xff] %vm1744, %v4955
        %5013 = vst [vmem:[%s4982 + $0xf0] sm:$0xff] %v4956
        %5014 = vst.msk [vmem:[%s4982 + $0xf8] sm:$0xff] %vm1744, %v4957
        %5015 = vst [vmem:[%s4982 + $0x100] sm:$0xff] %v4958
        %5016 = vst.msk [vmem:[%s4982 + $0x108] sm:$0xff] %vm1744, %v4959
        %5017 = vst [vmem:[%s4982 + $0x110] sm:$0xff] %v4960
        %5018 = vst.msk [vmem:[%s4982 + $0x118] sm:$0xff] %vm1744, %v4961
        %5019 = vst [vmem:[%s4982 + $0x120] sm:$0xff] %v4962
        %5020 = vst.msk [vmem:[%s4982 + $0x128] sm:$0xff] %vm1744, %v4963
        %5021 = vst [vmem:[%s4982 + $0x130] sm:$0xff] %v4964
        %5022 = vst.msk [vmem:[%s4982 + $0x138] sm:$0xff] %vm1744, %v4965
        %5023 = vst [vmem:[%s4982 + $0x140] sm:$0xff] %v4966
        %5024 = vst.msk [vmem:[%s4982 + $0x148] sm:$0xff] %vm1744, %v4967
        %5025 = vst [vmem:[%s4982 + $0x150] sm:$0xff] %v4968
        %5026 = vst.msk [vmem:[%s4982 + $0x158] sm:$0xff] %vm1744, %v4969
        %5027 = vst [vmem:[%s4982 + $0x160] sm:$0xff] %v4970
        %5028 = vst.msk [vmem:[%s4982 + $0x168] sm:$0xff] %vm1744, %v4971
        %5029 = vst [vmem:[%s4982 + $0x170] sm:$0xff] %v4972
        %5030 = vst.msk [vmem:[%s4982 + $0x178] sm:$0xff] %vm1744, %v4973
        %5031 = vst [vmem:[%s4982 + $0x180] sm:$0xff] %v4974
        %5032 = vst.msk [vmem:[%s4982 + $0x188] sm:$0xff] %vm1744, %v4975
        %5033 = vst [vmem:[%s4982 + $0x190] sm:$0xff] %v4976
        %5034 = vst.msk [vmem:[%s4982 + $0x198] sm:$0xff] %vm1744, %v4977
        %5035 = vst [vmem:[%s4982 + $0x1a0] sm:$0xff] %v4978
        %5036 = vst.msk [vmem:[%s4982 + $0x1a8] sm:$0xff] %vm1744, %v4979
        %5037 = vst [vmem:[%s4982 + $0x1b0] sm:$0xff] %v4980
        %5038 = vst.msk [vmem:[%s4982 + $0x1b8] sm:$0xff] %vm1744, %v4981
        %v5039 = vld [vmem:[#allocation2 + $0x400] sm:$0xff]
        %v5040 = vld [vmem:[#allocation2 + $0x408] sm:$0xff]
        %v5041 = vld [vmem:[#allocation2 + $0x410] sm:$0xff]
        %v5042 = vld [vmem:[#allocation2 + $0x418] sm:$0xff]
        %v5043 = vld [vmem:[#allocation2 + $0x420] sm:$0xff]
        %v5044 = vld [vmem:[#allocation2 + $0x428] sm:$0xff]
        %v5045 = vld [vmem:[#allocation2 + $0x430] sm:$0xff]
        %v5046 = vld [vmem:[#allocation2 + $0x438] sm:$0xff]
        %v5047 = vld [vmem:[#allocation2 + $0x440] sm:$0xff]
        %v5048 = vld [vmem:[#allocation2 + $0x448] sm:$0xff]
        %v5049 = vld [vmem:[#allocation2 + $0x450] sm:$0xff]
        %v5050 = vld [vmem:[#allocation2 + $0x458] sm:$0xff]
        %v5051 = vld [vmem:[#allocation2 + $0x460] sm:$0xff]
        %v5052 = vld [vmem:[#allocation2 + $0x468] sm:$0xff]
        %v5053 = vld [vmem:[#allocation2 + $0x470] sm:$0xff]
        %v5054 = vld [vmem:[#allocation2 + $0x478] sm:$0xff]
        %v5055 = vld [vmem:[#allocation2 + $0x480] sm:$0xff]
        %v5056 = vld [vmem:[#allocation2 + $0x488] sm:$0xff]
        %v5057 = vld [vmem:[#allocation2 + $0x490] sm:$0xff]
        %v5058 = vld [vmem:[#allocation2 + $0x498] sm:$0xff]
        %v5059 = vld [vmem:[#allocation2 + $0x4a0] sm:$0xff]
        %v5060 = vld [vmem:[#allocation2 + $0x4a8] sm:$0xff]
        %v5061 = vld [vmem:[#allocation2 + $0x4b0] sm:$0xff]
        %v5062 = vld [vmem:[#allocation2 + $0x4b8] sm:$0xff]
        %v5063 = vld [vmem:[#allocation2 + $0x4c0] sm:$0xff]
        %v5064 = vld [vmem:[#allocation2 + $0x4c8] sm:$0xff]
        %v5065 = vld [vmem:[#allocation2 + $0x4d0] sm:$0xff]
        %v5066 = vld [vmem:[#allocation2 + $0x4d8] sm:$0xff]
        %v5067 = vld [vmem:[#allocation2 + $0x4e0] sm:$0xff]
        %v5068 = vld [vmem:[#allocation2 + $0x4e8] sm:$0xff]
        %v5069 = vld [vmem:[#allocation2 + $0x4f0] sm:$0xff]
        %v5070 = vld [vmem:[#allocation2 + $0x4f8] sm:$0xff]
        %v5071 = vld [vmem:[#allocation2 + $0x500] sm:$0xff]
        %v5072 = vld [vmem:[#allocation2 + $0x508] sm:$0xff]
        %v5073 = vld [vmem:[#allocation2 + $0x510] sm:$0xff]
        %v5074 = vld [vmem:[#allocation2 + $0x518] sm:$0xff]
        %v5075 = vld [vmem:[#allocation2 + $0x520] sm:$0xff]
        %v5076 = vld [vmem:[#allocation2 + $0x528] sm:$0xff]
        %v5077 = vld [vmem:[#allocation2 + $0x530] sm:$0xff]
        %v5078 = vld [vmem:[#allocation2 + $0x538] sm:$0xff]
        %v5079 = vld [vmem:[#allocation2 + $0x540] sm:$0xff]
        %v5080 = vld [vmem:[#allocation2 + $0x548] sm:$0xff]
        %v5081 = vld [vmem:[#allocation2 + $0x550] sm:$0xff]
        %v5082 = vld [vmem:[#allocation2 + $0x558] sm:$0xff]
        %v5083 = vld [vmem:[#allocation2 + $0x560] sm:$0xff]
        %v5084 = vld [vmem:[#allocation2 + $0x568] sm:$0xff]
        %v5085 = vld [vmem:[#allocation2 + $0x570] sm:$0xff]
        %v5086 = vld [vmem:[#allocation2 + $0x578] sm:$0xff]
        %v5087 = vld [vmem:[#allocation2 + $0x580] sm:$0xff]
        %v5088 = vld [vmem:[#allocation2 + $0x588] sm:$0xff]
        %v5089 = vld [vmem:[#allocation2 + $0x590] sm:$0xff]
        %v5090 = vld [vmem:[#allocation2 + $0x598] sm:$0xff]
        %v5091 = vld [vmem:[#allocation2 + $0x5a0] sm:$0xff]
        %v5092 = vld [vmem:[#allocation2 + $0x5a8] sm:$0xff]
        %v5093 = vld [vmem:[#allocation2 + $0x5b0] sm:$0xff]
        %v5094 = vld [vmem:[#allocation2 + $0x5b8] sm:$0xff]
        %v5095 = vld [vmem:[#allocation2 + $0x5c0] sm:$0xff]
        %v5096 = vld [vmem:[#allocation2 + $0x5c8] sm:$0xff]
        %v5097 = vld [vmem:[#allocation2 + $0x5d0] sm:$0xff]
        %v5098 = vld [vmem:[#allocation2 + $0x5d8] sm:$0xff]
        %v5099 = vld [vmem:[#allocation2 + $0x5e0] sm:$0xff]
        %v5100 = vld [vmem:[#allocation2 + $0x5e8] sm:$0xff]
        %v5101 = vld [vmem:[#allocation2 + $0x5f0] sm:$0xff]
        %v5102 = vld [vmem:[#allocation2 + $0x5f8] sm:$0xff]
        %5103 = vmatpush.msra.mxu0 %v5069
        %5104 = vmatpush.msra.mxu0 %v5067
        %5105 = vmatpush.msra.mxu0 %v5065
        %5106 = vmatpush.msra.mxu0 %v5063
        %5107 = vmatpush.msra.mxu0 %v5061
        %5108 = vmatpush.msra.mxu0 %v5059
        %5109 = vmatpush.msra.mxu0 %v5057
        %5110 = vmatpush.msra.mxu0 %v5055
        %5111 = vmatpush.msra.mxu0 %v5053
        %5112 = vmatpush.msra.mxu0 %v5051
        %5113 = vmatpush.msra.mxu0 %v5049
        %5114 = vmatpush.msra.mxu0 %v5047
        %5115 = vmatpush.msra.mxu0 %v5045
        %5116 = vmatpush.msra.mxu0 %v5043
        %5117 = vmatpush.msra.mxu0 %v5041
        %5118 = vmatpush.msra.mxu0 %v5039
        %5119 = vmatmul.f32.gmra.mxu0 %v275
        %v5120 = vpop.f32.mrf.mxu0
        %v5121 = vadd.f32 0.0, %v5120
        %5122 = vmatmul.f32.gmra.mxu0 %v277
        %v5123 = vpop.f32.mrf.mxu0
        %v5124 = vadd.f32 0.0, %v5123
        %5125 = vmatmul.f32.gmra.mxu0 %v279
        %v5126 = vpop.f32.mrf.mxu0
        %v5127 = vadd.f32 0.0, %v5126
        %5128 = vmatmul.f32.gmra.mxu0 %v281
        %v5129 = vpop.f32.mrf.mxu0
        %v5130 = vadd.f32 0.0, %v5129
        %5131 = vmatmul.f32.gmra.mxu0 %v283
        %v5132 = vpop.f32.mrf.mxu0
        %v5133 = vadd.f32 0.0, %v5132
        %5134 = vmatmul.f32.gmra.mxu0 %v285
        %v5135 = vpop.f32.mrf.mxu0
        %v5136 = vadd.f32 0.0, %v5135
        %5137 = vmatmul.f32.gmra.mxu0 %v287
        %v5138 = vpop.f32.mrf.mxu0
        %v5139 = vadd.f32 0.0, %v5138
        %5140 = vmatmul.f32.gmra.mxu0 %v289
        %v5141 = vpop.f32.mrf.mxu0
        %v5142 = vadd.f32 0.0, %v5141
        %5143 = vmatmul.f32.gmra.mxu0 %v291
        %v5144 = vpop.f32.mrf.mxu0
        %v5145 = vadd.f32 0.0, %v5144
        %5146 = vmatmul.f32.gmra.mxu0 %v293
        %v5147 = vpop.f32.mrf.mxu0
        %v5148 = vadd.f32 0.0, %v5147
        %5149 = vmatmul.f32.gmra.mxu0 %v295
        %v5150 = vpop.f32.mrf.mxu0
        %v5151 = vadd.f32 0.0, %v5150
        %5152 = vmatmul.f32.gmra.mxu0 %v297
        %v5153 = vpop.f32.mrf.mxu0
        %v5154 = vadd.f32 0.0, %v5153
        %5155 = vmatmul.f32.gmra.mxu0 %v299
        %v5156 = vpop.f32.mrf.mxu0
        %v5157 = vadd.f32 0.0, %v5156
        %5158 = vmatmul.f32.gmra.mxu0 %v301
        %v5159 = vpop.f32.mrf.mxu0
        %v5160 = vadd.f32 0.0, %v5159
        %5161 = vmatmul.f32.gmra.mxu0 %v303
        %v5162 = vpop.f32.mrf.mxu0
        %v5163 = vadd.f32 0.0, %v5162
        %5164 = vmatmul.f32.gmra.mxu0 %v305
        %v5165 = vpop.f32.mrf.mxu0
        %v5166 = vadd.f32 0.0, %v5165
        %5167 = vmatmul.f32.gmra.mxu0 %v307
        %v5168 = vpop.f32.mrf.mxu0
        %v5169 = vadd.f32 0.0, %v5168
        %5170 = vmatmul.f32.gmra.mxu0 %v309
        %v5171 = vpop.f32.mrf.mxu0
        %v5172 = vadd.f32 0.0, %v5171
        %5173 = vmatmul.f32.gmra.mxu0 %v311
        %v5174 = vpop.f32.mrf.mxu0
        %v5175 = vadd.f32 0.0, %v5174
        %5176 = vmatmul.f32.gmra.mxu0 %v313
        %v5177 = vpop.f32.mrf.mxu0
        %v5178 = vadd.f32 0.0, %v5177
        %5179 = vmatmul.f32.gmra.mxu0 %v315
        %v5180 = vpop.f32.mrf.mxu0
        %v5181 = vadd.f32 0.0, %v5180
        %5182 = vmatmul.f32.gmra.mxu0 %v317
        %v5183 = vpop.f32.mrf.mxu0
        %v5184 = vadd.f32 0.0, %v5183
        %5185 = vmatmul.f32.gmra.mxu0 %v319
        %v5186 = vpop.f32.mrf.mxu0
        %v5187 = vadd.f32 0.0, %v5186
        %5188 = vmatmul.f32.gmra.mxu0 %v321
        %v5189 = vpop.f32.mrf.mxu0
        %v5190 = vadd.f32 0.0, %v5189
        %5191 = vmatmul.f32.gmra.mxu0 %v323
        %v5192 = vpop.f32.mrf.mxu0
        %v5193 = vadd.f32 0.0, %v5192
        %5194 = vmatmul.f32.gmra.mxu0 %v325
        %v5195 = vpop.f32.mrf.mxu0
        %v5196 = vadd.f32 0.0, %v5195
        %5197 = vmatmul.f32.gmra.mxu0 %v327
        %v5198 = vpop.f32.mrf.mxu0
        %v5199 = vadd.f32 0.0, %v5198
        %5200 = vmatmul.f32.gmra.mxu0 %v329
        %v5201 = vpop.f32.mrf.mxu0
        %v5202 = vadd.f32 0.0, %v5201
        %5203 = vdwg.mxu0
        %5204 = vmatpush.msra.mxu0 %v5101
        %5205 = vmatpush.msra.mxu0 %v5099
        %5206 = vmatpush.msra.mxu0 %v5097
        %5207 = vmatpush.msra.mxu0 %v5095
        %5208 = vmatpush.msra.mxu0 %v5093
        %5209 = vmatpush.msra.mxu0 %v5091
        %5210 = vmatpush.msra.mxu0 %v5089
        %5211 = vmatpush.msra.mxu0 %v5087
        %5212 = vmatpush.msra.mxu0 %v5085
        %5213 = vmatpush.msra.mxu0 %v5083
        %5214 = vmatpush.msra.mxu0 %v5081
        %5215 = vmatpush.msra.mxu0 %v5079
        %5216 = vmatpush.msra.mxu0 %v5077
        %5217 = vmatpush.msra.mxu0 %v5075
        %5218 = vmatpush.msra.mxu0 %v5073
        %5219 = vmatpush.msra.mxu0 %v5071
        %5220 = vmatmul.f32.gmra.mxu0 %v276
        %v5221 = vpop.f32.mrf.mxu0
        %v5222 = vadd.f32 %v5121, %v5221
        %5223 = vmatmul.f32.gmra.mxu0 %v278
        %v5224 = vpop.f32.mrf.mxu0
        %v5225 = vadd.f32 %v5124, %v5224
        %5226 = vmatmul.f32.gmra.mxu0 %v280
        %v5227 = vpop.f32.mrf.mxu0
        %v5228 = vadd.f32 %v5127, %v5227
        %5229 = vmatmul.f32.gmra.mxu0 %v282
        %v5230 = vpop.f32.mrf.mxu0
        %v5231 = vadd.f32 %v5130, %v5230
        %5232 = vmatmul.f32.gmra.mxu0 %v284
        %v5233 = vpop.f32.mrf.mxu0
        %v5234 = vadd.f32 %v5133, %v5233
        %5235 = vmatmul.f32.gmra.mxu0 %v286
        %v5236 = vpop.f32.mrf.mxu0
        %v5237 = vadd.f32 %v5136, %v5236
        %5238 = vmatmul.f32.gmra.mxu0 %v288
        %v5239 = vpop.f32.mrf.mxu0
        %v5240 = vadd.f32 %v5139, %v5239
        %5241 = vmatmul.f32.gmra.mxu0 %v290
        %v5242 = vpop.f32.mrf.mxu0
        %v5243 = vadd.f32 %v5142, %v5242
        %5244 = vmatmul.f32.gmra.mxu0 %v292
        %v5245 = vpop.f32.mrf.mxu0
        %v5246 = vadd.f32 %v5145, %v5245
        %5247 = vmatmul.f32.gmra.mxu0 %v294
        %v5248 = vpop.f32.mrf.mxu0
        %v5249 = vadd.f32 %v5148, %v5248
        %5250 = vmatmul.f32.gmra.mxu0 %v296
        %v5251 = vpop.f32.mrf.mxu0
        %v5252 = vadd.f32 %v5151, %v5251
        %5253 = vmatmul.f32.gmra.mxu0 %v298
        %v5254 = vpop.f32.mrf.mxu0
        %v5255 = vadd.f32 %v5154, %v5254
        %5256 = vmatmul.f32.gmra.mxu0 %v300
        %v5257 = vpop.f32.mrf.mxu0
        %v5258 = vadd.f32 %v5157, %v5257
        %5259 = vmatmul.f32.gmra.mxu0 %v302
        %v5260 = vpop.f32.mrf.mxu0
        %v5261 = vadd.f32 %v5160, %v5260
        %5262 = vmatmul.f32.gmra.mxu0 %v304
        %v5263 = vpop.f32.mrf.mxu0
        %v5264 = vadd.f32 %v5163, %v5263
        %5265 = vmatmul.f32.gmra.mxu0 %v306
        %v5266 = vpop.f32.mrf.mxu0
        %v5267 = vadd.f32 %v5166, %v5266
        %5268 = vmatmul.f32.gmra.mxu0 %v308
        %v5269 = vpop.f32.mrf.mxu0
        %v5270 = vadd.f32 %v5169, %v5269
        %5271 = vmatmul.f32.gmra.mxu0 %v310
        %v5272 = vpop.f32.mrf.mxu0
        %v5273 = vadd.f32 %v5172, %v5272
        %5274 = vmatmul.f32.gmra.mxu0 %v312
        %v5275 = vpop.f32.mrf.mxu0
        %v5276 = vadd.f32 %v5175, %v5275
        %5277 = vmatmul.f32.gmra.mxu0 %v314
        %v5278 = vpop.f32.mrf.mxu0
        %v5279 = vadd.f32 %v5178, %v5278
        %5280 = vmatmul.f32.gmra.mxu0 %v316
        %v5281 = vpop.f32.mrf.mxu0
        %v5282 = vadd.f32 %v5181, %v5281
        %5283 = vmatmul.f32.gmra.mxu0 %v318
        %v5284 = vpop.f32.mrf.mxu0
        %v5285 = vadd.f32 %v5184, %v5284
        %5286 = vmatmul.f32.gmra.mxu0 %v320
        %v5287 = vpop.f32.mrf.mxu0
        %v5288 = vadd.f32 %v5187, %v5287
        %5289 = vmatmul.f32.gmra.mxu0 %v322
        %v5290 = vpop.f32.mrf.mxu0
        %v5291 = vadd.f32 %v5190, %v5290
        %5292 = vmatmul.f32.gmra.mxu0 %v324
        %v5293 = vpop.f32.mrf.mxu0
        %v5294 = vadd.f32 %v5193, %v5293
        %5295 = vmatmul.f32.gmra.mxu0 %v326
        %v5296 = vpop.f32.mrf.mxu0
        %v5297 = vadd.f32 %v5196, %v5296
        %5298 = vmatmul.f32.gmra.mxu0 %v328
        %v5299 = vpop.f32.mrf.mxu0
        %v5300 = vadd.f32 %v5199, %v5299
        %5301 = vmatmul.f32.gmra.mxu0 %v330
        %v5302 = vpop.f32.mrf.mxu0
        %v5303 = vadd.f32 %v5202, %v5302
        %5304 = vdwg.mxu0
        %5305 = vmatpush.msra.mxu0 %v5070
        %5306 = vmatpush.msra.mxu0 %v5068
        %5307 = vmatpush.msra.mxu0 %v5066
        %5308 = vmatpush.msra.mxu0 %v5064
        %5309 = vmatpush.msra.mxu0 %v5062
        %5310 = vmatpush.msra.mxu0 %v5060
        %5311 = vmatpush.msra.mxu0 %v5058
        %5312 = vmatpush.msra.mxu0 %v5056
        %5313 = vmatpush.msra.mxu0 %v5054
        %5314 = vmatpush.msra.mxu0 %v5052
        %5315 = vmatpush.msra.mxu0 %v5050
        %5316 = vmatpush.msra.mxu0 %v5048
        %5317 = vmatpush.msra.mxu0 %v5046
        %5318 = vmatpush.msra.mxu0 %v5044
        %5319 = vmatpush.msra.mxu0 %v5042
        %5320 = vmatpush.msra.mxu0 %v5040
        %5321 = vmatmul.f32.gmra.mxu0 %v275
        %v5322 = vpop.f32.mrf.mxu0
        %v5323 = vadd.f32 0.0, %v5322
        %5324 = vmatmul.f32.gmra.mxu0 %v277
        %v5325 = vpop.f32.mrf.mxu0
        %v5326 = vadd.f32 0.0, %v5325
        %5327 = vmatmul.f32.gmra.mxu0 %v279
        %v5328 = vpop.f32.mrf.mxu0
        %v5329 = vadd.f32 0.0, %v5328
        %5330 = vmatmul.f32.gmra.mxu0 %v281
        %v5331 = vpop.f32.mrf.mxu0
        %v5332 = vadd.f32 0.0, %v5331
        %5333 = vmatmul.f32.gmra.mxu0 %v283
        %v5334 = vpop.f32.mrf.mxu0
        %v5335 = vadd.f32 0.0, %v5334
        %5336 = vmatmul.f32.gmra.mxu0 %v285
        %v5337 = vpop.f32.mrf.mxu0
        %v5338 = vadd.f32 0.0, %v5337
        %5339 = vmatmul.f32.gmra.mxu0 %v287
        %v5340 = vpop.f32.mrf.mxu0
        %v5341 = vadd.f32 0.0, %v5340
        %5342 = vmatmul.f32.gmra.mxu0 %v289
        %v5343 = vpop.f32.mrf.mxu0
        %v5344 = vadd.f32 0.0, %v5343
        %5345 = vmatmul.f32.gmra.mxu0 %v291
        %v5346 = vpop.f32.mrf.mxu0
        %v5347 = vadd.f32 0.0, %v5346
        %5348 = vmatmul.f32.gmra.mxu0 %v293
        %v5349 = vpop.f32.mrf.mxu0
        %v5350 = vadd.f32 0.0, %v5349
        %5351 = vmatmul.f32.gmra.mxu0 %v295
        %v5352 = vpop.f32.mrf.mxu0
        %v5353 = vadd.f32 0.0, %v5352
        %5354 = vmatmul.f32.gmra.mxu0 %v297
        %v5355 = vpop.f32.mrf.mxu0
        %v5356 = vadd.f32 0.0, %v5355
        %5357 = vmatmul.f32.gmra.mxu0 %v299
        %v5358 = vpop.f32.mrf.mxu0
        %v5359 = vadd.f32 0.0, %v5358
        %5360 = vmatmul.f32.gmra.mxu0 %v301
        %v5361 = vpop.f32.mrf.mxu0
        %v5362 = vadd.f32 0.0, %v5361
        %5363 = vmatmul.f32.gmra.mxu0 %v303
        %v5364 = vpop.f32.mrf.mxu0
        %v5365 = vadd.f32 0.0, %v5364
        %5366 = vmatmul.f32.gmra.mxu0 %v305
        %v5367 = vpop.f32.mrf.mxu0
        %v5368 = vadd.f32 0.0, %v5367
        %5369 = vmatmul.f32.gmra.mxu0 %v307
        %v5370 = vpop.f32.mrf.mxu0
        %v5371 = vadd.f32 0.0, %v5370
        %5372 = vmatmul.f32.gmra.mxu0 %v309
        %v5373 = vpop.f32.mrf.mxu0
        %v5374 = vadd.f32 0.0, %v5373
        %5375 = vmatmul.f32.gmra.mxu0 %v311
        %v5376 = vpop.f32.mrf.mxu0
        %v5377 = vadd.f32 0.0, %v5376
        %5378 = vmatmul.f32.gmra.mxu0 %v313
        %v5379 = vpop.f32.mrf.mxu0
        %v5380 = vadd.f32 0.0, %v5379
        %5381 = vmatmul.f32.gmra.mxu0 %v315
        %v5382 = vpop.f32.mrf.mxu0
        %v5383 = vadd.f32 0.0, %v5382
        %5384 = vmatmul.f32.gmra.mxu0 %v317
        %v5385 = vpop.f32.mrf.mxu0
        %v5386 = vadd.f32 0.0, %v5385
        %5387 = vmatmul.f32.gmra.mxu0 %v319
        %v5388 = vpop.f32.mrf.mxu0
        %v5389 = vadd.f32 0.0, %v5388
        %5390 = vmatmul.f32.gmra.mxu0 %v321
        %v5391 = vpop.f32.mrf.mxu0
        %v5392 = vadd.f32 0.0, %v5391
        %5393 = vmatmul.f32.gmra.mxu0 %v323
        %v5394 = vpop.f32.mrf.mxu0
        %v5395 = vadd.f32 0.0, %v5394
        %5396 = vmatmul.f32.gmra.mxu0 %v325
        %v5397 = vpop.f32.mrf.mxu0
        %v5398 = vadd.f32 0.0, %v5397
        %5399 = vmatmul.f32.gmra.mxu0 %v327
        %v5400 = vpop.f32.mrf.mxu0
        %v5401 = vadd.f32 0.0, %v5400
        %5402 = vmatmul.f32.gmra.mxu0 %v329
        %v5403 = vpop.f32.mrf.mxu0
        %v5404 = vadd.f32 0.0, %v5403
        %5405 = vdwg.mxu0
        %5406 = vmatpush.msra.mxu0 %v5102
        %5407 = vmatpush.msra.mxu0 %v5100
        %5408 = vmatpush.msra.mxu0 %v5098
        %5409 = vmatpush.msra.mxu0 %v5096
        %5410 = vmatpush.msra.mxu0 %v5094
        %5411 = vmatpush.msra.mxu0 %v5092
        %5412 = vmatpush.msra.mxu0 %v5090
        %5413 = vmatpush.msra.mxu0 %v5088
        %5414 = vmatpush.msra.mxu0 %v5086
        %5415 = vmatpush.msra.mxu0 %v5084
        %5416 = vmatpush.msra.mxu0 %v5082
        %5417 = vmatpush.msra.mxu0 %v5080
        %5418 = vmatpush.msra.mxu0 %v5078
        %5419 = vmatpush.msra.mxu0 %v5076
        %5420 = vmatpush.msra.mxu0 %v5074
        %5421 = vmatpush.msra.mxu0 %v5072
        %5422 = vmatmul.f32.gmra.mxu0 %v276
        %v5423 = vpop.f32.mrf.mxu0
        %v5424 = vadd.f32 %v5323, %v5423
        %5425 = vmatmul.f32.gmra.mxu0 %v278
        %v5426 = vpop.f32.mrf.mxu0
        %v5427 = vadd.f32 %v5326, %v5426
        %5428 = vmatmul.f32.gmra.mxu0 %v280
        %v5429 = vpop.f32.mrf.mxu0
        %v5430 = vadd.f32 %v5329, %v5429
        %5431 = vmatmul.f32.gmra.mxu0 %v282
        %v5432 = vpop.f32.mrf.mxu0
        %v5433 = vadd.f32 %v5332, %v5432
        %5434 = vmatmul.f32.gmra.mxu0 %v284
        %v5435 = vpop.f32.mrf.mxu0
        %v5436 = vadd.f32 %v5335, %v5435
        %5437 = vmatmul.f32.gmra.mxu0 %v286
        %v5438 = vpop.f32.mrf.mxu0
        %v5439 = vadd.f32 %v5338, %v5438
        %5440 = vmatmul.f32.gmra.mxu0 %v288
        %v5441 = vpop.f32.mrf.mxu0
        %v5442 = vadd.f32 %v5341, %v5441
        %5443 = vmatmul.f32.gmra.mxu0 %v290
        %v5444 = vpop.f32.mrf.mxu0
        %v5445 = vadd.f32 %v5344, %v5444
        %5446 = vmatmul.f32.gmra.mxu0 %v292
        %v5447 = vpop.f32.mrf.mxu0
        %v5448 = vadd.f32 %v5347, %v5447
        %5449 = vmatmul.f32.gmra.mxu0 %v294
        %v5450 = vpop.f32.mrf.mxu0
        %v5451 = vadd.f32 %v5350, %v5450
        %5452 = vmatmul.f32.gmra.mxu0 %v296
        %v5453 = vpop.f32.mrf.mxu0
        %v5454 = vadd.f32 %v5353, %v5453
        %5455 = vmatmul.f32.gmra.mxu0 %v298
        %v5456 = vpop.f32.mrf.mxu0
        %v5457 = vadd.f32 %v5356, %v5456
        %5458 = vmatmul.f32.gmra.mxu0 %v300
        %v5459 = vpop.f32.mrf.mxu0
        %v5460 = vadd.f32 %v5359, %v5459
        %5461 = vmatmul.f32.gmra.mxu0 %v302
        %v5462 = vpop.f32.mrf.mxu0
        %v5463 = vadd.f32 %v5362, %v5462
        %5464 = vmatmul.f32.gmra.mxu0 %v304
        %v5465 = vpop.f32.mrf.mxu0
        %v5466 = vadd.f32 %v5365, %v5465
        %5467 = vmatmul.f32.gmra.mxu0 %v306
        %v5468 = vpop.f32.mrf.mxu0
        %v5469 = vadd.f32 %v5368, %v5468
        %5470 = vmatmul.f32.gmra.mxu0 %v308
        %v5471 = vpop.f32.mrf.mxu0
        %v5472 = vadd.f32 %v5371, %v5471
        %5473 = vmatmul.f32.gmra.mxu0 %v310
        %v5474 = vpop.f32.mrf.mxu0
        %v5475 = vadd.f32 %v5374, %v5474
        %5476 = vmatmul.f32.gmra.mxu0 %v312
        %v5477 = vpop.f32.mrf.mxu0
        %v5478 = vadd.f32 %v5377, %v5477
        %5479 = vmatmul.f32.gmra.mxu0 %v314
        %v5480 = vpop.f32.mrf.mxu0
        %v5481 = vadd.f32 %v5380, %v5480
        %5482 = vmatmul.f32.gmra.mxu0 %v316
        %v5483 = vpop.f32.mrf.mxu0
        %v5484 = vadd.f32 %v5383, %v5483
        %5485 = vmatmul.f32.gmra.mxu0 %v318
        %v5486 = vpop.f32.mrf.mxu0
        %v5487 = vadd.f32 %v5386, %v5486
        %5488 = vmatmul.f32.gmra.mxu0 %v320
        %v5489 = vpop.f32.mrf.mxu0
        %v5490 = vadd.f32 %v5389, %v5489
        %5491 = vmatmul.f32.gmra.mxu0 %v322
        %v5492 = vpop.f32.mrf.mxu0
        %v5493 = vadd.f32 %v5392, %v5492
        %5494 = vmatmul.f32.gmra.mxu0 %v324
        %v5495 = vpop.f32.mrf.mxu0
        %v5496 = vadd.f32 %v5395, %v5495
        %5497 = vmatmul.f32.gmra.mxu0 %v326
        %v5498 = vpop.f32.mrf.mxu0
        %v5499 = vadd.f32 %v5398, %v5498
        %5500 = vmatmul.f32.gmra.mxu0 %v328
        %v5501 = vpop.f32.mrf.mxu0
        %v5502 = vadd.f32 %v5401, %v5501
        %5503 = vmatmul.f32.gmra.mxu0 %v330
        %v5504 = vpop.f32.mrf.mxu0
        %v5505 = vadd.f32 %v5404, %v5504
        %5506 = vdwg.mxu0
        %v5507 = vmax.f32 %v5222, 0.0
        %v5508 = vmax.f32 %v5424, 0.0
        %v5509 = vmax.f32 %v5225, 0.0
        %v5510 = vmax.f32 %v5427, 0.0
        %v5511 = vmax.f32 %v5228, 0.0
        %v5512 = vmax.f32 %v5430, 0.0
        %v5513 = vmax.f32 %v5231, 0.0
        %v5514 = vmax.f32 %v5433, 0.0
        %v5515 = vmax.f32 %v5234, 0.0
        %v5516 = vmax.f32 %v5436, 0.0
        %v5517 = vmax.f32 %v5237, 0.0
        %v5518 = vmax.f32 %v5439, 0.0
        %v5519 = vmax.f32 %v5240, 0.0
        %v5520 = vmax.f32 %v5442, 0.0
        %v5521 = vmax.f32 %v5243, 0.0
        %v5522 = vmax.f32 %v5445, 0.0
        %v5523 = vmax.f32 %v5246, 0.0
        %v5524 = vmax.f32 %v5448, 0.0
        %v5525 = vmax.f32 %v5249, 0.0
        %v5526 = vmax.f32 %v5451, 0.0
        %v5527 = vmax.f32 %v5252, 0.0
        %v5528 = vmax.f32 %v5454, 0.0
        %v5529 = vmax.f32 %v5255, 0.0
        %v5530 = vmax.f32 %v5457, 0.0
        %v5531 = vmax.f32 %v5258, 0.0
        %v5532 = vmax.f32 %v5460, 0.0
        %v5533 = vmax.f32 %v5261, 0.0
        %v5534 = vmax.f32 %v5463, 0.0
        %v5535 = vmax.f32 %v5264, 0.0
        %v5536 = vmax.f32 %v5466, 0.0
        %v5537 = vmax.f32 %v5267, 0.0
        %v5538 = vmax.f32 %v5469, 0.0
        %v5539 = vmax.f32 %v5270, 0.0
        %v5540 = vmax.f32 %v5472, 0.0
        %v5541 = vmax.f32 %v5273, 0.0
        %v5542 = vmax.f32 %v5475, 0.0
        %v5543 = vmax.f32 %v5276, 0.0
        %v5544 = vmax.f32 %v5478, 0.0
        %v5545 = vmax.f32 %v5279, 0.0
        %v5546 = vmax.f32 %v5481, 0.0
        %v5547 = vmax.f32 %v5282, 0.0
        %v5548 = vmax.f32 %v5484, 0.0
        %v5549 = vmax.f32 %v5285, 0.0
        %v5550 = vmax.f32 %v5487, 0.0
        %v5551 = vmax.f32 %v5288, 0.0
        %v5552 = vmax.f32 %v5490, 0.0
        %v5553 = vmax.f32 %v5291, 0.0
        %v5554 = vmax.f32 %v5493, 0.0
        %v5555 = vmax.f32 %v5294, 0.0
        %v5556 = vmax.f32 %v5496, 0.0
        %v5557 = vmax.f32 %v5297, 0.0
        %v5558 = vmax.f32 %v5499, 0.0
        %v5559 = vmax.f32 %v5300, 0.0
        %v5560 = vmax.f32 %v5502, 0.0
        %v5561 = vmax.f32 %v5303, 0.0
        %v5562 = vmax.f32 %v5505, 0.0
        %v5563 = vmin.f32 %v5507, 1.0
        %v5564 = vmin.f32 %v5508, 1.0
        %v5565 = vmin.f32 %v5509, 1.0
        %v5566 = vmin.f32 %v5510, 1.0
        %v5567 = vmin.f32 %v5511, 1.0
        %v5568 = vmin.f32 %v5512, 1.0
        %v5569 = vmin.f32 %v5513, 1.0
        %v5570 = vmin.f32 %v5514, 1.0
        %v5571 = vmin.f32 %v5515, 1.0
        %v5572 = vmin.f32 %v5516, 1.0
        %v5573 = vmin.f32 %v5517, 1.0
        %v5574 = vmin.f32 %v5518, 1.0
        %v5575 = vmin.f32 %v5519, 1.0
        %v5576 = vmin.f32 %v5520, 1.0
        %v5577 = vmin.f32 %v5521, 1.0
        %v5578 = vmin.f32 %v5522, 1.0
        %v5579 = vmin.f32 %v5523, 1.0
        %v5580 = vmin.f32 %v5524, 1.0
        %v5581 = vmin.f32 %v5525, 1.0
        %v5582 = vmin.f32 %v5526, 1.0
        %v5583 = vmin.f32 %v5527, 1.0
        %v5584 = vmin.f32 %v5528, 1.0
        %v5585 = vmin.f32 %v5529, 1.0
        %v5586 = vmin.f32 %v5530, 1.0
        %v5587 = vmin.f32 %v5531, 1.0
        %v5588 = vmin.f32 %v5532, 1.0
        %v5589 = vmin.f32 %v5533, 1.0
        %v5590 = vmin.f32 %v5534, 1.0
        %v5591 = vmin.f32 %v5535, 1.0
        %v5592 = vmin.f32 %v5536, 1.0
        %v5593 = vmin.f32 %v5537, 1.0
        %v5594 = vmin.f32 %v5538, 1.0
        %v5595 = vmin.f32 %v5539, 1.0
        %v5596 = vmin.f32 %v5540, 1.0
        %v5597 = vmin.f32 %v5541, 1.0
        %v5598 = vmin.f32 %v5542, 1.0
        %v5599 = vmin.f32 %v5543, 1.0
        %v5600 = vmin.f32 %v5544, 1.0
        %v5601 = vmin.f32 %v5545, 1.0
        %v5602 = vmin.f32 %v5546, 1.0
        %v5603 = vmin.f32 %v5547, 1.0
        %v5604 = vmin.f32 %v5548, 1.0
        %v5605 = vmin.f32 %v5549, 1.0
        %v5606 = vmin.f32 %v5550, 1.0
        %v5607 = vmin.f32 %v5551, 1.0
        %v5608 = vmin.f32 %v5552, 1.0
        %v5609 = vmin.f32 %v5553, 1.0
        %v5610 = vmin.f32 %v5554, 1.0
        %v5611 = vmin.f32 %v5555, 1.0
        %v5612 = vmin.f32 %v5556, 1.0
        %v5613 = vmin.f32 %v5557, 1.0
        %v5614 = vmin.f32 %v5558, 1.0
        %v5615 = vmin.f32 %v5559, 1.0
        %v5616 = vmin.f32 %v5560, 1.0
        %v5617 = vmin.f32 %v5561, 1.0
        %v5618 = vmin.f32 %v5562, 1.0
        %v5619 = vmul.f32 %v5563, 3.6261168
        %v5620 = vmul.f32 %v5564, 3.6261168
        %v5621 = vmul.f32 %v5565, 3.6261168
        %v5622 = vmul.f32 %v5566, 3.6261168
        %v5623 = vmul.f32 %v5567, 3.6261168
        %v5624 = vmul.f32 %v5568, 3.6261168
        %v5625 = vmul.f32 %v5569, 3.6261168
        %v5626 = vmul.f32 %v5570, 3.6261168
        %v5627 = vmul.f32 %v5571, 3.6261168
        %v5628 = vmul.f32 %v5572, 3.6261168
        %v5629 = vmul.f32 %v5573, 3.6261168
        %v5630 = vmul.f32 %v5574, 3.6261168
        %v5631 = vmul.f32 %v5575, 3.6261168
        %v5632 = vmul.f32 %v5576, 3.6261168
        %v5633 = vmul.f32 %v5577, 3.6261168
        %v5634 = vmul.f32 %v5578, 3.6261168
        %v5635 = vmul.f32 %v5579, 3.6261168
        %v5636 = vmul.f32 %v5580, 3.6261168
        %v5637 = vmul.f32 %v5581, 3.6261168
        %v5638 = vmul.f32 %v5582, 3.6261168
        %v5639 = vmul.f32 %v5583, 3.6261168
        %v5640 = vmul.f32 %v5584, 3.6261168
        %v5641 = vmul.f32 %v5585, 3.6261168
        %v5642 = vmul.f32 %v5586, 3.6261168
        %v5643 = vmul.f32 %v5587, 3.6261168
        %v5644 = vmul.f32 %v5588, 3.6261168
        %v5645 = vmul.f32 %v5589, 3.6261168
        %v5646 = vmul.f32 %v5590, 3.6261168
        %v5647 = vmul.f32 %v5591, 3.6261168
        %v5648 = vmul.f32 %v5592, 3.6261168
        %v5649 = vmul.f32 %v5593, 3.6261168
        %v5650 = vmul.f32 %v5594, 3.6261168
        %v5651 = vmul.f32 %v5595, 3.6261168
        %v5652 = vmul.f32 %v5596, 3.6261168
        %v5653 = vmul.f32 %v5597, 3.6261168
        %v5654 = vmul.f32 %v5598, 3.6261168
        %v5655 = vmul.f32 %v5599, 3.6261168
        %v5656 = vmul.f32 %v5600, 3.6261168
        %v5657 = vmul.f32 %v5601, 3.6261168
        %v5658 = vmul.f32 %v5602, 3.6261168
        %v5659 = vmul.f32 %v5603, 3.6261168
        %v5660 = vmul.f32 %v5604, 3.6261168
        %v5661 = vmul.f32 %v5605, 3.6261168
        %v5662 = vmul.f32 %v5606, 3.6261168
        %v5663 = vmul.f32 %v5607, 3.6261168
        %v5664 = vmul.f32 %v5608, 3.6261168
        %v5665 = vmul.f32 %v5609, 3.6261168
        %v5666 = vmul.f32 %v5610, 3.6261168
        %v5667 = vmul.f32 %v5611, 3.6261168
        %v5668 = vmul.f32 %v5612, 3.6261168
        %v5669 = vmul.f32 %v5613, 3.6261168
        %v5670 = vmul.f32 %v5614, 3.6261168
        %v5671 = vmul.f32 %v5615, 3.6261168
        %v5672 = vmul.f32 %v5616, 3.6261168
        %v5673 = vmul.f32 %v5617, 3.6261168
        %v5674 = vmul.f32 %v5618, 3.6261168
        %v5675 = vadd.f32 %v5619, -1.4802197
        %v5676 = vadd.f32 %v5620, -1.4802197
        %v5677 = vadd.f32 %v5621, -1.4802197
        %v5678 = vadd.f32 %v5622, -1.4802197
        %v5679 = vadd.f32 %v5623, -1.4802197
        %v5680 = vadd.f32 %v5624, -1.4802197
        %v5681 = vadd.f32 %v5625, -1.4802197
        %v5682 = vadd.f32 %v5626, -1.4802197
        %v5683 = vadd.f32 %v5627, -1.4802197
        %v5684 = vadd.f32 %v5628, -1.4802197
        %v5685 = vadd.f32 %v5629, -1.4802197
        %v5686 = vadd.f32 %v5630, -1.4802197
        %v5687 = vadd.f32 %v5631, -1.4802197
        %v5688 = vadd.f32 %v5632, -1.4802197
        %v5689 = vadd.f32 %v5633, -1.4802197
        %v5690 = vadd.f32 %v5634, -1.4802197
        %v5691 = vadd.f32 %v5635, -1.4802197
        %v5692 = vadd.f32 %v5636, -1.4802197
        %v5693 = vadd.f32 %v5637, -1.4802197
        %v5694 = vadd.f32 %v5638, -1.4802197
        %v5695 = vadd.f32 %v5639, -1.4802197
        %v5696 = vadd.f32 %v5640, -1.4802197
        %v5697 = vadd.f32 %v5641, -1.4802197
        %v5698 = vadd.f32 %v5642, -1.4802197
        %v5699 = vadd.f32 %v5643, -1.4802197
        %v5700 = vadd.f32 %v5644, -1.4802197
        %v5701 = vadd.f32 %v5645, -1.4802197
        %v5702 = vadd.f32 %v5646, -1.4802197
        %v5703 = vadd.f32 %v5647, -1.4802197
        %v5704 = vadd.f32 %v5648, -1.4802197
        %v5705 = vadd.f32 %v5649, -1.4802197
        %v5706 = vadd.f32 %v5650, -1.4802197
        %v5707 = vadd.f32 %v5651, -1.4802197
        %v5708 = vadd.f32 %v5652, -1.4802197
        %v5709 = vadd.f32 %v5653, -1.4802197
        %v5710 = vadd.f32 %v5654, -1.4802197
        %v5711 = vadd.f32 %v5655, -1.4802197
        %v5712 = vadd.f32 %v5656, -1.4802197
        %v5713 = vadd.f32 %v5657, -1.4802197
        %v5714 = vadd.f32 %v5658, -1.4802197
        %v5715 = vadd.f32 %v5659, -1.4802197
        %v5716 = vadd.f32 %v5660, -1.4802197
        %v5717 = vadd.f32 %v5661, -1.4802197
        %v5718 = vadd.f32 %v5662, -1.4802197
        %v5719 = vadd.f32 %v5663, -1.4802197
        %v5720 = vadd.f32 %v5664, -1.4802197
        %v5721 = vadd.f32 %v5665, -1.4802197
        %v5722 = vadd.f32 %v5666, -1.4802197
        %v5723 = vadd.f32 %v5667, -1.4802197
        %v5724 = vadd.f32 %v5668, -1.4802197
        %v5725 = vadd.f32 %v5669, -1.4802197
        %v5726 = vadd.f32 %v5670, -1.4802197
        %v5727 = vadd.f32 %v5671, -1.4802197
        %v5728 = vadd.f32 %v5672, -1.4802197
        %v5729 = vadd.f32 %v5673, -1.4802197
        %v5730 = vadd.f32 %v5674, -1.4802197
        %s5731 = scalar_lea.vmem %s208, 896 [#allocation8]
        %5732 = vst [vmem:[%s5731] sm:$0xff] %v5675
        %5733 = vst.msk [vmem:[%s5731 + $0x8] sm:$0xff] %vm1744, %v5676
        %5734 = vst [vmem:[%s5731 + $0x10] sm:$0xff] %v5677
        %5735 = vst.msk [vmem:[%s5731 + $0x18] sm:$0xff] %vm1744, %v5678
        %5736 = vst [vmem:[%s5731 + $0x20] sm:$0xff] %v5679
        %5737 = vst.msk [vmem:[%s5731 + $0x28] sm:$0xff] %vm1744, %v5680
        %5738 = vst [vmem:[%s5731 + $0x30] sm:$0xff] %v5681
        %5739 = vst.msk [vmem:[%s5731 + $0x38] sm:$0xff] %vm1744, %v5682
        %5740 = vst [vmem:[%s5731 + $0x40] sm:$0xff] %v5683
        %5741 = vst.msk [vmem:[%s5731 + $0x48] sm:$0xff] %vm1744, %v5684
        %5742 = vst [vmem:[%s5731 + $0x50] sm:$0xff] %v5685
        %5743 = vst.msk [vmem:[%s5731 + $0x58] sm:$0xff] %vm1744, %v5686
        %5744 = vst [vmem:[%s5731 + $0x60] sm:$0xff] %v5687
        %5745 = vst.msk [vmem:[%s5731 + $0x68] sm:$0xff] %vm1744, %v5688
        %5746 = vst [vmem:[%s5731 + $0x70] sm:$0xff] %v5689
        %5747 = vst.msk [vmem:[%s5731 + $0x78] sm:$0xff] %vm1744, %v5690
        %5748 = vst [vmem:[%s5731 + $0x80] sm:$0xff] %v5691
        %5749 = vst.msk [vmem:[%s5731 + $0x88] sm:$0xff] %vm1744, %v5692
        %5750 = vst [vmem:[%s5731 + $0x90] sm:$0xff] %v5693
        %5751 = vst.msk [vmem:[%s5731 + $0x98] sm:$0xff] %vm1744, %v5694
        %5752 = vst [vmem:[%s5731 + $0xa0] sm:$0xff] %v5695
        %5753 = vst.msk [vmem:[%s5731 + $0xa8] sm:$0xff] %vm1744, %v5696
        %5754 = vst [vmem:[%s5731 + $0xb0] sm:$0xff] %v5697
        %5755 = vst.msk [vmem:[%s5731 + $0xb8] sm:$0xff] %vm1744, %v5698
        %5756 = vst [vmem:[%s5731 + $0xc0] sm:$0xff] %v5699
        %5757 = vst.msk [vmem:[%s5731 + $0xc8] sm:$0xff] %vm1744, %v5700
        %5758 = vst [vmem:[%s5731 + $0xd0] sm:$0xff] %v5701
        %5759 = vst.msk [vmem:[%s5731 + $0xd8] sm:$0xff] %vm1744, %v5702
        %5760 = vst [vmem:[%s5731 + $0xe0] sm:$0xff] %v5703
        %5761 = vst.msk [vmem:[%s5731 + $0xe8] sm:$0xff] %vm1744, %v5704
        %5762 = vst [vmem:[%s5731 + $0xf0] sm:$0xff] %v5705
        %5763 = vst.msk [vmem:[%s5731 + $0xf8] sm:$0xff] %vm1744, %v5706
        %5764 = vst [vmem:[%s5731 + $0x100] sm:$0xff] %v5707
        %5765 = vst.msk [vmem:[%s5731 + $0x108] sm:$0xff] %vm1744, %v5708
        %5766 = vst [vmem:[%s5731 + $0x110] sm:$0xff] %v5709
        %5767 = vst.msk [vmem:[%s5731 + $0x118] sm:$0xff] %vm1744, %v5710
        %5768 = vst [vmem:[%s5731 + $0x120] sm:$0xff] %v5711
        %5769 = vst.msk [vmem:[%s5731 + $0x128] sm:$0xff] %vm1744, %v5712
        %5770 = vst [vmem:[%s5731 + $0x130] sm:$0xff] %v5713
        %5771 = vst.msk [vmem:[%s5731 + $0x138] sm:$0xff] %vm1744, %v5714
        %5772 = vst [vmem:[%s5731 + $0x140] sm:$0xff] %v5715
        %5773 = vst.msk [vmem:[%s5731 + $0x148] sm:$0xff] %vm1744, %v5716
        %5774 = vst [vmem:[%s5731 + $0x150] sm:$0xff] %v5717
        %5775 = vst.msk [vmem:[%s5731 + $0x158] sm:$0xff] %vm1744, %v5718
        %5776 = vst [vmem:[%s5731 + $0x160] sm:$0xff] %v5719
        %5777 = vst.msk [vmem:[%s5731 + $0x168] sm:$0xff] %vm1744, %v5720
        %5778 = vst [vmem:[%s5731 + $0x170] sm:$0xff] %v5721
        %5779 = vst.msk [vmem:[%s5731 + $0x178] sm:$0xff] %vm1744, %v5722
        %5780 = vst [vmem:[%s5731 + $0x180] sm:$0xff] %v5723
        %5781 = vst.msk [vmem:[%s5731 + $0x188] sm:$0xff] %vm1744, %v5724
        %5782 = vst [vmem:[%s5731 + $0x190] sm:$0xff] %v5725
        %5783 = vst.msk [vmem:[%s5731 + $0x198] sm:$0xff] %vm1744, %v5726
        %5784 = vst [vmem:[%s5731 + $0x1a0] sm:$0xff] %v5727
        %5785 = vst.msk [vmem:[%s5731 + $0x1a8] sm:$0xff] %vm1744, %v5728
        %5786 = vst [vmem:[%s5731 + $0x1b0] sm:$0xff] %v5729
        %5787 = vst.msk [vmem:[%s5731 + $0x1b8] sm:$0xff] %vm1744, %v5730
        %v5788 = vld [vmem:[%s3349] sm:$0xff]
        %v5789 = vld [vmem:[%s3349 + $0x8] sm:$0xff]
        %v5790 = vld [vmem:[%s3349 + $0x10] sm:$0xff]
        %v5791 = vld [vmem:[%s3349 + $0x18] sm:$0xff]
        %v5792 = vld [vmem:[%s3349 + $0x20] sm:$0xff]
        %v5793 = vld [vmem:[%s3349 + $0x28] sm:$0xff]
        %v5794 = vld [vmem:[%s3349 + $0x30] sm:$0xff]
        %v5795 = vld [vmem:[%s3349 + $0x38] sm:$0xff]
        %v5796 = vld [vmem:[%s3349 + $0x40] sm:$0xff]
        %v5797 = vld [vmem:[%s3349 + $0x48] sm:$0xff]
        %v5798 = vld [vmem:[%s3349 + $0x50] sm:$0xff]
        %v5799 = vld [vmem:[%s3349 + $0x58] sm:$0xff]
        %v5800 = vld [vmem:[%s3349 + $0x60] sm:$0xff]
        %v5801 = vld [vmem:[%s3349 + $0x68] sm:$0xff]
        %v5802 = vld [vmem:[%s3349 + $0x70] sm:$0xff]
        %v5803 = vld [vmem:[%s3349 + $0x78] sm:$0xff]
        %v5804 = vld [vmem:[%s3349 + $0x80] sm:$0xff]
        %v5805 = vld [vmem:[%s3349 + $0x88] sm:$0xff]
        %v5806 = vld [vmem:[%s3349 + $0x90] sm:$0xff]
        %v5807 = vld [vmem:[%s3349 + $0x98] sm:$0xff]
        %v5808 = vld [vmem:[%s3349 + $0xa0] sm:$0xff]
        %v5809 = vld [vmem:[%s3349 + $0xa8] sm:$0xff]
        %v5810 = vld [vmem:[%s3349 + $0xb0] sm:$0xff]
        %v5811 = vld [vmem:[%s3349 + $0xb8] sm:$0xff]
        %v5812 = vld [vmem:[%s3349 + $0xc0] sm:$0xff]
        %v5813 = vld [vmem:[%s3349 + $0xc8] sm:$0xff]
        %v5814 = vld [vmem:[%s3349 + $0xd0] sm:$0xff]
        %v5815 = vld [vmem:[%s3349 + $0xd8] sm:$0xff]
        %v5816 = vld [vmem:[%s3349 + $0xe0] sm:$0xff]
        %v5817 = vld [vmem:[%s3349 + $0xe8] sm:$0xff]
        %v5818 = vld [vmem:[%s3349 + $0xf0] sm:$0xff]
        %v5819 = vld [vmem:[%s3349 + $0xf8] sm:$0xff]
        %v5820 = vld [vmem:[%s3349 + $0x100] sm:$0xff]
        %v5821 = vld [vmem:[%s3349 + $0x108] sm:$0xff]
        %v5822 = vld [vmem:[%s3349 + $0x110] sm:$0xff]
        %v5823 = vld [vmem:[%s3349 + $0x118] sm:$0xff]
        %v5824 = vld [vmem:[%s3349 + $0x120] sm:$0xff]
        %v5825 = vld [vmem:[%s3349 + $0x128] sm:$0xff]
        %v5826 = vld [vmem:[%s3349 + $0x130] sm:$0xff]
        %v5827 = vld [vmem:[%s3349 + $0x138] sm:$0xff]
        %v5828 = vld [vmem:[%s3349 + $0x140] sm:$0xff]
        %v5829 = vld [vmem:[%s3349 + $0x148] sm:$0xff]
        %v5830 = vld [vmem:[%s3349 + $0x150] sm:$0xff]
        %v5831 = vld [vmem:[%s3349 + $0x158] sm:$0xff]
        %v5832 = vld [vmem:[%s3349 + $0x160] sm:$0xff]
        %v5833 = vld [vmem:[%s3349 + $0x168] sm:$0xff]
        %v5834 = vld [vmem:[%s3349 + $0x170] sm:$0xff]
        %v5835 = vld [vmem:[%s3349 + $0x178] sm:$0xff]
        %v5836 = vld [vmem:[%s3349 + $0x180] sm:$0xff]
        %v5837 = vld [vmem:[%s3349 + $0x188] sm:$0xff]
        %v5838 = vld [vmem:[%s3349 + $0x190] sm:$0xff]
        %v5839 = vld [vmem:[%s3349 + $0x198] sm:$0xff]
        %v5840 = vld [vmem:[%s3349 + $0x1a0] sm:$0xff]
        %v5841 = vld [vmem:[%s3349 + $0x1a8] sm:$0xff]
        %v5842 = vld [vmem:[%s3349 + $0x1b0] sm:$0xff]
        %v5843 = vld [vmem:[%s3349 + $0x1b8] sm:$0xff]
        %v5844 = vld [vmem:[%s3349 + $0x1c0] sm:$0xff]
        %v5845 = vld [vmem:[%s3349 + $0x1c8] sm:$0xff]
        %v5846 = vld [vmem:[%s3349 + $0x1d0] sm:$0xff]
        %v5847 = vld [vmem:[%s3349 + $0x1d8] sm:$0xff]
        %v5848 = vld [vmem:[%s3349 + $0x1e0] sm:$0xff]
        %v5849 = vld [vmem:[%s3349 + $0x1e8] sm:$0xff]
        %v5850 = vld [vmem:[%s3349 + $0x1f0] sm:$0xff]
        %v5851 = vld [vmem:[%s3349 + $0x1f8] sm:$0xff]
        %5852 = vmatpush.msra.mxu0 %v5818
        %5853 = vmatpush.msra.mxu0 %v5816
        %5854 = vmatpush.msra.mxu0 %v5814
        %5855 = vmatpush.msra.mxu0 %v5812
        %5856 = vmatpush.msra.mxu0 %v5810
        %5857 = vmatpush.msra.mxu0 %v5808
        %5858 = vmatpush.msra.mxu0 %v5806
        %5859 = vmatpush.msra.mxu0 %v5804
        %5860 = vmatpush.msra.mxu0 %v5802
        %5861 = vmatpush.msra.mxu0 %v5800
        %5862 = vmatpush.msra.mxu0 %v5798
        %5863 = vmatpush.msra.mxu0 %v5796
        %5864 = vmatpush.msra.mxu0 %v5794
        %5865 = vmatpush.msra.mxu0 %v5792
        %5866 = vmatpush.msra.mxu0 %v5790
        %5867 = vmatpush.msra.mxu0 %v5788
        %5868 = vmatmul.f32.gmra.mxu0 %v275
        %v5869 = vpop.f32.mrf.mxu0
        %v5870 = vadd.f32 0.0, %v5869
        %5871 = vmatmul.f32.gmra.mxu0 %v277
        %v5872 = vpop.f32.mrf.mxu0
        %v5873 = vadd.f32 0.0, %v5872
        %5874 = vmatmul.f32.gmra.mxu0 %v279
        %v5875 = vpop.f32.mrf.mxu0
        %v5876 = vadd.f32 0.0, %v5875
        %5877 = vmatmul.f32.gmra.mxu0 %v281
        %v5878 = vpop.f32.mrf.mxu0
        %v5879 = vadd.f32 0.0, %v5878
        %5880 = vmatmul.f32.gmra.mxu0 %v283
        %v5881 = vpop.f32.mrf.mxu0
        %v5882 = vadd.f32 0.0, %v5881
        %5883 = vmatmul.f32.gmra.mxu0 %v285
        %v5884 = vpop.f32.mrf.mxu0
        %v5885 = vadd.f32 0.0, %v5884
        %5886 = vmatmul.f32.gmra.mxu0 %v287
        %v5887 = vpop.f32.mrf.mxu0
        %v5888 = vadd.f32 0.0, %v5887
        %5889 = vmatmul.f32.gmra.mxu0 %v289
        %v5890 = vpop.f32.mrf.mxu0
        %v5891 = vadd.f32 0.0, %v5890
        %5892 = vmatmul.f32.gmra.mxu0 %v291
        %v5893 = vpop.f32.mrf.mxu0
        %v5894 = vadd.f32 0.0, %v5893
        %5895 = vmatmul.f32.gmra.mxu0 %v293
        %v5896 = vpop.f32.mrf.mxu0
        %v5897 = vadd.f32 0.0, %v5896
        %5898 = vmatmul.f32.gmra.mxu0 %v295
        %v5899 = vpop.f32.mrf.mxu0
        %v5900 = vadd.f32 0.0, %v5899
        %5901 = vmatmul.f32.gmra.mxu0 %v297
        %v5902 = vpop.f32.mrf.mxu0
        %v5903 = vadd.f32 0.0, %v5902
        %5904 = vmatmul.f32.gmra.mxu0 %v299
        %v5905 = vpop.f32.mrf.mxu0
        %v5906 = vadd.f32 0.0, %v5905
        %5907 = vmatmul.f32.gmra.mxu0 %v301
        %v5908 = vpop.f32.mrf.mxu0
        %v5909 = vadd.f32 0.0, %v5908
        %5910 = vmatmul.f32.gmra.mxu0 %v303
        %v5911 = vpop.f32.mrf.mxu0
        %v5912 = vadd.f32 0.0, %v5911
        %5913 = vmatmul.f32.gmra.mxu0 %v305
        %v5914 = vpop.f32.mrf.mxu0
        %v5915 = vadd.f32 0.0, %v5914
        %5916 = vmatmul.f32.gmra.mxu0 %v307
        %v5917 = vpop.f32.mrf.mxu0
        %v5918 = vadd.f32 0.0, %v5917
        %5919 = vmatmul.f32.gmra.mxu0 %v309
        %v5920 = vpop.f32.mrf.mxu0
        %v5921 = vadd.f32 0.0, %v5920
        %5922 = vmatmul.f32.gmra.mxu0 %v311
        %v5923 = vpop.f32.mrf.mxu0
        %v5924 = vadd.f32 0.0, %v5923
        %5925 = vmatmul.f32.gmra.mxu0 %v313
        %v5926 = vpop.f32.mrf.mxu0
        %v5927 = vadd.f32 0.0, %v5926
        %5928 = vmatmul.f32.gmra.mxu0 %v315
        %v5929 = vpop.f32.mrf.mxu0
        %v5930 = vadd.f32 0.0, %v5929
        %5931 = vmatmul.f32.gmra.mxu0 %v317
        %v5932 = vpop.f32.mrf.mxu0
        %v5933 = vadd.f32 0.0, %v5932
        %5934 = vmatmul.f32.gmra.mxu0 %v319
        %v5935 = vpop.f32.mrf.mxu0
        %v5936 = vadd.f32 0.0, %v5935
        %5937 = vmatmul.f32.gmra.mxu0 %v321
        %v5938 = vpop.f32.mrf.mxu0
        %v5939 = vadd.f32 0.0, %v5938
        %5940 = vmatmul.f32.gmra.mxu0 %v323
        %v5941 = vpop.f32.mrf.mxu0
        %v5942 = vadd.f32 0.0, %v5941
        %5943 = vmatmul.f32.gmra.mxu0 %v325
        %v5944 = vpop.f32.mrf.mxu0
        %v5945 = vadd.f32 0.0, %v5944
        %5946 = vmatmul.f32.gmra.mxu0 %v327
        %v5947 = vpop.f32.mrf.mxu0
        %v5948 = vadd.f32 0.0, %v5947
        %5949 = vmatmul.f32.gmra.mxu0 %v329
        %v5950 = vpop.f32.mrf.mxu0
        %v5951 = vadd.f32 0.0, %v5950
        %5952 = vdwg.mxu0
        %5953 = vmatpush.msra.mxu0 %v5850
        %5954 = vmatpush.msra.mxu0 %v5848
        %5955 = vmatpush.msra.mxu0 %v5846
        %5956 = vmatpush.msra.mxu0 %v5844
        %5957 = vmatpush.msra.mxu0 %v5842
        %5958 = vmatpush.msra.mxu0 %v5840
        %5959 = vmatpush.msra.mxu0 %v5838
        %5960 = vmatpush.msra.mxu0 %v5836
        %5961 = vmatpush.msra.mxu0 %v5834
        %5962 = vmatpush.msra.mxu0 %v5832
        %5963 = vmatpush.msra.mxu0 %v5830
        %5964 = vmatpush.msra.mxu0 %v5828
        %5965 = vmatpush.msra.mxu0 %v5826
        %5966 = vmatpush.msra.mxu0 %v5824
        %5967 = vmatpush.msra.mxu0 %v5822
        %5968 = vmatpush.msra.mxu0 %v5820
        %5969 = vmatmul.f32.gmra.mxu0 %v276
        %v5970 = vpop.f32.mrf.mxu0
        %v5971 = vadd.f32 %v5870, %v5970
        %5972 = vmatmul.f32.gmra.mxu0 %v278
        %v5973 = vpop.f32.mrf.mxu0
        %v5974 = vadd.f32 %v5873, %v5973
        %5975 = vmatmul.f32.gmra.mxu0 %v280
        %v5976 = vpop.f32.mrf.mxu0
        %v5977 = vadd.f32 %v5876, %v5976
        %5978 = vmatmul.f32.gmra.mxu0 %v282
        %v5979 = vpop.f32.mrf.mxu0
        %v5980 = vadd.f32 %v5879, %v5979
        %5981 = vmatmul.f32.gmra.mxu0 %v284
        %v5982 = vpop.f32.mrf.mxu0
        %v5983 = vadd.f32 %v5882, %v5982
        %5984 = vmatmul.f32.gmra.mxu0 %v286
        %v5985 = vpop.f32.mrf.mxu0
        %v5986 = vadd.f32 %v5885, %v5985
        %5987 = vmatmul.f32.gmra.mxu0 %v288
        %v5988 = vpop.f32.mrf.mxu0
        %v5989 = vadd.f32 %v5888, %v5988
        %5990 = vmatmul.f32.gmra.mxu0 %v290
        %v5991 = vpop.f32.mrf.mxu0
        %v5992 = vadd.f32 %v5891, %v5991
        %5993 = vmatmul.f32.gmra.mxu0 %v292
        %v5994 = vpop.f32.mrf.mxu0
        %v5995 = vadd.f32 %v5894, %v5994
        %5996 = vmatmul.f32.gmra.mxu0 %v294
        %v5997 = vpop.f32.mrf.mxu0
        %v5998 = vadd.f32 %v5897, %v5997
        %5999 = vmatmul.f32.gmra.mxu0 %v296
        %v6000 = vpop.f32.mrf.mxu0
        %v6001 = vadd.f32 %v5900, %v6000
        %6002 = vmatmul.f32.gmra.mxu0 %v298
        %v6003 = vpop.f32.mrf.mxu0
        %v6004 = vadd.f32 %v5903, %v6003
        %6005 = vmatmul.f32.gmra.mxu0 %v300
        %v6006 = vpop.f32.mrf.mxu0
        %v6007 = vadd.f32 %v5906, %v6006
        %6008 = vmatmul.f32.gmra.mxu0 %v302
        %v6009 = vpop.f32.mrf.mxu0
        %v6010 = vadd.f32 %v5909, %v6009
        %6011 = vmatmul.f32.gmra.mxu0 %v304
        %v6012 = vpop.f32.mrf.mxu0
        %v6013 = vadd.f32 %v5912, %v6012
        %6014 = vmatmul.f32.gmra.mxu0 %v306
        %v6015 = vpop.f32.mrf.mxu0
        %v6016 = vadd.f32 %v5915, %v6015
        %6017 = vmatmul.f32.gmra.mxu0 %v308
        %v6018 = vpop.f32.mrf.mxu0
        %v6019 = vadd.f32 %v5918, %v6018
        %6020 = vmatmul.f32.gmra.mxu0 %v310
        %v6021 = vpop.f32.mrf.mxu0
        %v6022 = vadd.f32 %v5921, %v6021
        %6023 = vmatmul.f32.gmra.mxu0 %v312
        %v6024 = vpop.f32.mrf.mxu0
        %v6025 = vadd.f32 %v5924, %v6024
        %6026 = vmatmul.f32.gmra.mxu0 %v314
        %v6027 = vpop.f32.mrf.mxu0
        %v6028 = vadd.f32 %v5927, %v6027
        %6029 = vmatmul.f32.gmra.mxu0 %v316
        %v6030 = vpop.f32.mrf.mxu0
        %v6031 = vadd.f32 %v5930, %v6030
        %6032 = vmatmul.f32.gmra.mxu0 %v318
        %v6033 = vpop.f32.mrf.mxu0
        %v6034 = vadd.f32 %v5933, %v6033
        %6035 = vmatmul.f32.gmra.mxu0 %v320
        %v6036 = vpop.f32.mrf.mxu0
        %v6037 = vadd.f32 %v5936, %v6036
        %6038 = vmatmul.f32.gmra.mxu0 %v322
        %v6039 = vpop.f32.mrf.mxu0
        %v6040 = vadd.f32 %v5939, %v6039
        %6041 = vmatmul.f32.gmra.mxu0 %v324
        %v6042 = vpop.f32.mrf.mxu0
        %v6043 = vadd.f32 %v5942, %v6042
        %6044 = vmatmul.f32.gmra.mxu0 %v326
        %v6045 = vpop.f32.mrf.mxu0
        %v6046 = vadd.f32 %v5945, %v6045
        %6047 = vmatmul.f32.gmra.mxu0 %v328
        %v6048 = vpop.f32.mrf.mxu0
        %v6049 = vadd.f32 %v5948, %v6048
        %6050 = vmatmul.f32.gmra.mxu0 %v330
        %v6051 = vpop.f32.mrf.mxu0
        %v6052 = vadd.f32 %v5951, %v6051
        %6053 = vdwg.mxu0
        %6054 = vmatpush.msra.mxu0 %v5819
        %6055 = vmatpush.msra.mxu0 %v5817
        %6056 = vmatpush.msra.mxu0 %v5815
        %6057 = vmatpush.msra.mxu0 %v5813
        %6058 = vmatpush.msra.mxu0 %v5811
        %6059 = vmatpush.msra.mxu0 %v5809
        %6060 = vmatpush.msra.mxu0 %v5807
        %6061 = vmatpush.msra.mxu0 %v5805
        %6062 = vmatpush.msra.mxu0 %v5803
        %6063 = vmatpush.msra.mxu0 %v5801
        %6064 = vmatpush.msra.mxu0 %v5799
        %6065 = vmatpush.msra.mxu0 %v5797
        %6066 = vmatpush.msra.mxu0 %v5795
        %6067 = vmatpush.msra.mxu0 %v5793
        %6068 = vmatpush.msra.mxu0 %v5791
        %6069 = vmatpush.msra.mxu0 %v5789
        %6070 = vmatmul.f32.gmra.mxu0 %v275
        %v6071 = vpop.f32.mrf.mxu0
        %v6072 = vadd.f32 0.0, %v6071
        %6073 = vmatmul.f32.gmra.mxu0 %v277
        %v6074 = vpop.f32.mrf.mxu0
        %v6075 = vadd.f32 0.0, %v6074
        %6076 = vmatmul.f32.gmra.mxu0 %v279
        %v6077 = vpop.f32.mrf.mxu0
        %v6078 = vadd.f32 0.0, %v6077
        %6079 = vmatmul.f32.gmra.mxu0 %v281
        %v6080 = vpop.f32.mrf.mxu0
        %v6081 = vadd.f32 0.0, %v6080
        %6082 = vmatmul.f32.gmra.mxu0 %v283
        %v6083 = vpop.f32.mrf.mxu0
        %v6084 = vadd.f32 0.0, %v6083
        %6085 = vmatmul.f32.gmra.mxu0 %v285
        %v6086 = vpop.f32.mrf.mxu0
        %v6087 = vadd.f32 0.0, %v6086
        %6088 = vmatmul.f32.gmra.mxu0 %v287
        %v6089 = vpop.f32.mrf.mxu0
        %v6090 = vadd.f32 0.0, %v6089
        %6091 = vmatmul.f32.gmra.mxu0 %v289
        %v6092 = vpop.f32.mrf.mxu0
        %v6093 = vadd.f32 0.0, %v6092
        %6094 = vmatmul.f32.gmra.mxu0 %v291
        %v6095 = vpop.f32.mrf.mxu0
        %v6096 = vadd.f32 0.0, %v6095
        %6097 = vmatmul.f32.gmra.mxu0 %v293
        %v6098 = vpop.f32.mrf.mxu0
        %v6099 = vadd.f32 0.0, %v6098
        %6100 = vmatmul.f32.gmra.mxu0 %v295
        %v6101 = vpop.f32.mrf.mxu0
        %v6102 = vadd.f32 0.0, %v6101
        %6103 = vmatmul.f32.gmra.mxu0 %v297
        %v6104 = vpop.f32.mrf.mxu0
        %v6105 = vadd.f32 0.0, %v6104
        %6106 = vmatmul.f32.gmra.mxu0 %v299
        %v6107 = vpop.f32.mrf.mxu0
        %v6108 = vadd.f32 0.0, %v6107
        %6109 = vmatmul.f32.gmra.mxu0 %v301
        %v6110 = vpop.f32.mrf.mxu0
        %v6111 = vadd.f32 0.0, %v6110
        %6112 = vmatmul.f32.gmra.mxu0 %v303
        %v6113 = vpop.f32.mrf.mxu0
        %v6114 = vadd.f32 0.0, %v6113
        %6115 = vmatmul.f32.gmra.mxu0 %v305
        %v6116 = vpop.f32.mrf.mxu0
        %v6117 = vadd.f32 0.0, %v6116
        %6118 = vmatmul.f32.gmra.mxu0 %v307
        %v6119 = vpop.f32.mrf.mxu0
        %v6120 = vadd.f32 0.0, %v6119
        %6121 = vmatmul.f32.gmra.mxu0 %v309
        %v6122 = vpop.f32.mrf.mxu0
        %v6123 = vadd.f32 0.0, %v6122
        %6124 = vmatmul.f32.gmra.mxu0 %v311
        %v6125 = vpop.f32.mrf.mxu0
        %v6126 = vadd.f32 0.0, %v6125
        %6127 = vmatmul.f32.gmra.mxu0 %v313
        %v6128 = vpop.f32.mrf.mxu0
        %v6129 = vadd.f32 0.0, %v6128
        %6130 = vmatmul.f32.gmra.mxu0 %v315
        %v6131 = vpop.f32.mrf.mxu0
        %v6132 = vadd.f32 0.0, %v6131
        %6133 = vmatmul.f32.gmra.mxu0 %v317
        %v6134 = vpop.f32.mrf.mxu0
        %v6135 = vadd.f32 0.0, %v6134
        %6136 = vmatmul.f32.gmra.mxu0 %v319
        %v6137 = vpop.f32.mrf.mxu0
        %v6138 = vadd.f32 0.0, %v6137
        %6139 = vmatmul.f32.gmra.mxu0 %v321
        %v6140 = vpop.f32.mrf.mxu0
        %v6141 = vadd.f32 0.0, %v6140
        %6142 = vmatmul.f32.gmra.mxu0 %v323
        %v6143 = vpop.f32.mrf.mxu0
        %v6144 = vadd.f32 0.0, %v6143
        %6145 = vmatmul.f32.gmra.mxu0 %v325
        %v6146 = vpop.f32.mrf.mxu0
        %v6147 = vadd.f32 0.0, %v6146
        %6148 = vmatmul.f32.gmra.mxu0 %v327
        %v6149 = vpop.f32.mrf.mxu0
        %v6150 = vadd.f32 0.0, %v6149
        %6151 = vmatmul.f32.gmra.mxu0 %v329
        %v6152 = vpop.f32.mrf.mxu0
        %v6153 = vadd.f32 0.0, %v6152
        %6154 = vdwg.mxu0
        %6155 = vmatpush.msra.mxu0 %v5851
        %6156 = vmatpush.msra.mxu0 %v5849
        %6157 = vmatpush.msra.mxu0 %v5847
        %6158 = vmatpush.msra.mxu0 %v5845
        %6159 = vmatpush.msra.mxu0 %v5843
        %6160 = vmatpush.msra.mxu0 %v5841
        %6161 = vmatpush.msra.mxu0 %v5839
        %6162 = vmatpush.msra.mxu0 %v5837
        %6163 = vmatpush.msra.mxu0 %v5835
        %6164 = vmatpush.msra.mxu0 %v5833
        %6165 = vmatpush.msra.mxu0 %v5831
        %6166 = vmatpush.msra.mxu0 %v5829
        %6167 = vmatpush.msra.mxu0 %v5827
        %6168 = vmatpush.msra.mxu0 %v5825
        %6169 = vmatpush.msra.mxu0 %v5823
        %6170 = vmatpush.msra.mxu0 %v5821
        %6171 = vmatmul.f32.gmra.mxu0 %v276
        %v6172 = vpop.f32.mrf.mxu0
        %v6173 = vadd.f32 %v6072, %v6172
        %6174 = vmatmul.f32.gmra.mxu0 %v278
        %v6175 = vpop.f32.mrf.mxu0
        %v6176 = vadd.f32 %v6075, %v6175
        %6177 = vmatmul.f32.gmra.mxu0 %v280
        %v6178 = vpop.f32.mrf.mxu0
        %v6179 = vadd.f32 %v6078, %v6178
        %6180 = vmatmul.f32.gmra.mxu0 %v282
        %v6181 = vpop.f32.mrf.mxu0
        %v6182 = vadd.f32 %v6081, %v6181
        %6183 = vmatmul.f32.gmra.mxu0 %v284
        %v6184 = vpop.f32.mrf.mxu0
        %v6185 = vadd.f32 %v6084, %v6184
        %6186 = vmatmul.f32.gmra.mxu0 %v286
        %v6187 = vpop.f32.mrf.mxu0
        %v6188 = vadd.f32 %v6087, %v6187
        %6189 = vmatmul.f32.gmra.mxu0 %v288
        %v6190 = vpop.f32.mrf.mxu0
        %v6191 = vadd.f32 %v6090, %v6190
        %6192 = vmatmul.f32.gmra.mxu0 %v290
        %v6193 = vpop.f32.mrf.mxu0
        %v6194 = vadd.f32 %v6093, %v6193
        %6195 = vmatmul.f32.gmra.mxu0 %v292
        %v6196 = vpop.f32.mrf.mxu0
        %v6197 = vadd.f32 %v6096, %v6196
        %6198 = vmatmul.f32.gmra.mxu0 %v294
        %v6199 = vpop.f32.mrf.mxu0
        %v6200 = vadd.f32 %v6099, %v6199
        %6201 = vmatmul.f32.gmra.mxu0 %v296
        %v6202 = vpop.f32.mrf.mxu0
        %v6203 = vadd.f32 %v6102, %v6202
        %6204 = vmatmul.f32.gmra.mxu0 %v298
        %v6205 = vpop.f32.mrf.mxu0
        %v6206 = vadd.f32 %v6105, %v6205
        %6207 = vmatmul.f32.gmra.mxu0 %v300
        %v6208 = vpop.f32.mrf.mxu0
        %v6209 = vadd.f32 %v6108, %v6208
        %6210 = vmatmul.f32.gmra.mxu0 %v302
        %v6211 = vpop.f32.mrf.mxu0
        %v6212 = vadd.f32 %v6111, %v6211
        %6213 = vmatmul.f32.gmra.mxu0 %v304
        %v6214 = vpop.f32.mrf.mxu0
        %v6215 = vadd.f32 %v6114, %v6214
        %6216 = vmatmul.f32.gmra.mxu0 %v306
        %v6217 = vpop.f32.mrf.mxu0
        %v6218 = vadd.f32 %v6117, %v6217
        %6219 = vmatmul.f32.gmra.mxu0 %v308
        %v6220 = vpop.f32.mrf.mxu0
        %v6221 = vadd.f32 %v6120, %v6220
        %6222 = vmatmul.f32.gmra.mxu0 %v310
        %v6223 = vpop.f32.mrf.mxu0
        %v6224 = vadd.f32 %v6123, %v6223
        %6225 = vmatmul.f32.gmra.mxu0 %v312
        %v6226 = vpop.f32.mrf.mxu0
        %v6227 = vadd.f32 %v6126, %v6226
        %6228 = vmatmul.f32.gmra.mxu0 %v314
        %v6229 = vpop.f32.mrf.mxu0
        %v6230 = vadd.f32 %v6129, %v6229
        %6231 = vmatmul.f32.gmra.mxu0 %v316
        %v6232 = vpop.f32.mrf.mxu0
        %v6233 = vadd.f32 %v6132, %v6232
        %6234 = vmatmul.f32.gmra.mxu0 %v318
        %v6235 = vpop.f32.mrf.mxu0
        %v6236 = vadd.f32 %v6135, %v6235
        %6237 = vmatmul.f32.gmra.mxu0 %v320
        %v6238 = vpop.f32.mrf.mxu0
        %v6239 = vadd.f32 %v6138, %v6238
        %6240 = vmatmul.f32.gmra.mxu0 %v322
        %v6241 = vpop.f32.mrf.mxu0
        %v6242 = vadd.f32 %v6141, %v6241
        %6243 = vmatmul.f32.gmra.mxu0 %v324
        %v6244 = vpop.f32.mrf.mxu0
        %v6245 = vadd.f32 %v6144, %v6244
        %6246 = vmatmul.f32.gmra.mxu0 %v326
        %v6247 = vpop.f32.mrf.mxu0
        %v6248 = vadd.f32 %v6147, %v6247
        %6249 = vmatmul.f32.gmra.mxu0 %v328
        %v6250 = vpop.f32.mrf.mxu0
        %v6251 = vadd.f32 %v6150, %v6250
        %6252 = vmatmul.f32.gmra.mxu0 %v330
        %v6253 = vpop.f32.mrf.mxu0
        %v6254 = vadd.f32 %v6153, %v6253
        %6255 = vdwg.mxu0
        %v6256 = vmax.f32 %v5971, 0.0
        %v6257 = vmax.f32 %v6173, 0.0
        %v6258 = vmax.f32 %v5974, 0.0
        %v6259 = vmax.f32 %v6176, 0.0
        %v6260 = vmax.f32 %v5977, 0.0
        %v6261 = vmax.f32 %v6179, 0.0
        %v6262 = vmax.f32 %v5980, 0.0
        %v6263 = vmax.f32 %v6182, 0.0
        %v6264 = vmax.f32 %v5983, 0.0
        %v6265 = vmax.f32 %v6185, 0.0
        %v6266 = vmax.f32 %v5986, 0.0
        %v6267 = vmax.f32 %v6188, 0.0
        %v6268 = vmax.f32 %v5989, 0.0
        %v6269 = vmax.f32 %v6191, 0.0
        %v6270 = vmax.f32 %v5992, 0.0
        %v6271 = vmax.f32 %v6194, 0.0
        %v6272 = vmax.f32 %v5995, 0.0
        %v6273 = vmax.f32 %v6197, 0.0
        %v6274 = vmax.f32 %v5998, 0.0
        %v6275 = vmax.f32 %v6200, 0.0
        %v6276 = vmax.f32 %v6001, 0.0
        %v6277 = vmax.f32 %v6203, 0.0
        %v6278 = vmax.f32 %v6004, 0.0
        %v6279 = vmax.f32 %v6206, 0.0
        %v6280 = vmax.f32 %v6007, 0.0
        %v6281 = vmax.f32 %v6209, 0.0
        %v6282 = vmax.f32 %v6010, 0.0
        %v6283 = vmax.f32 %v6212, 0.0
        %v6284 = vmax.f32 %v6013, 0.0
        %v6285 = vmax.f32 %v6215, 0.0
        %v6286 = vmax.f32 %v6016, 0.0
        %v6287 = vmax.f32 %v6218, 0.0
        %v6288 = vmax.f32 %v6019, 0.0
        %v6289 = vmax.f32 %v6221, 0.0
        %v6290 = vmax.f32 %v6022, 0.0
        %v6291 = vmax.f32 %v6224, 0.0
        %v6292 = vmax.f32 %v6025, 0.0
        %v6293 = vmax.f32 %v6227, 0.0
        %v6294 = vmax.f32 %v6028, 0.0
        %v6295 = vmax.f32 %v6230, 0.0
        %v6296 = vmax.f32 %v6031, 0.0
        %v6297 = vmax.f32 %v6233, 0.0
        %v6298 = vmax.f32 %v6034, 0.0
        %v6299 = vmax.f32 %v6236, 0.0
        %v6300 = vmax.f32 %v6037, 0.0
        %v6301 = vmax.f32 %v6239, 0.0
        %v6302 = vmax.f32 %v6040, 0.0
        %v6303 = vmax.f32 %v6242, 0.0
        %v6304 = vmax.f32 %v6043, 0.0
        %v6305 = vmax.f32 %v6245, 0.0
        %v6306 = vmax.f32 %v6046, 0.0
        %v6307 = vmax.f32 %v6248, 0.0
        %v6308 = vmax.f32 %v6049, 0.0
        %v6309 = vmax.f32 %v6251, 0.0
        %v6310 = vmax.f32 %v6052, 0.0
        %v6311 = vmax.f32 %v6254, 0.0
        %v6312 = vmin.f32 %v6256, 1.0
        %v6313 = vmin.f32 %v6257, 1.0
        %v6314 = vmin.f32 %v6258, 1.0
        %v6315 = vmin.f32 %v6259, 1.0
        %v6316 = vmin.f32 %v6260, 1.0
        %v6317 = vmin.f32 %v6261, 1.0
        %v6318 = vmin.f32 %v6262, 1.0
        %v6319 = vmin.f32 %v6263, 1.0
        %v6320 = vmin.f32 %v6264, 1.0
        %v6321 = vmin.f32 %v6265, 1.0
        %v6322 = vmin.f32 %v6266, 1.0
        %v6323 = vmin.f32 %v6267, 1.0
        %v6324 = vmin.f32 %v6268, 1.0
        %v6325 = vmin.f32 %v6269, 1.0
        %v6326 = vmin.f32 %v6270, 1.0
        %v6327 = vmin.f32 %v6271, 1.0
        %v6328 = vmin.f32 %v6272, 1.0
        %v6329 = vmin.f32 %v6273, 1.0
        %v6330 = vmin.f32 %v6274, 1.0
        %v6331 = vmin.f32 %v6275, 1.0
        %v6332 = vmin.f32 %v6276, 1.0
        %v6333 = vmin.f32 %v6277, 1.0
        %v6334 = vmin.f32 %v6278, 1.0
        %v6335 = vmin.f32 %v6279, 1.0
        %v6336 = vmin.f32 %v6280, 1.0
        %v6337 = vmin.f32 %v6281, 1.0
        %v6338 = vmin.f32 %v6282, 1.0
        %v6339 = vmin.f32 %v6283, 1.0
        %v6340 = vmin.f32 %v6284, 1.0
        %v6341 = vmin.f32 %v6285, 1.0
        %v6342 = vmin.f32 %v6286, 1.0
        %v6343 = vmin.f32 %v6287, 1.0
        %v6344 = vmin.f32 %v6288, 1.0
        %v6345 = vmin.f32 %v6289, 1.0
        %v6346 = vmin.f32 %v6290, 1.0
        %v6347 = vmin.f32 %v6291, 1.0
        %v6348 = vmin.f32 %v6292, 1.0
        %v6349 = vmin.f32 %v6293, 1.0
        %v6350 = vmin.f32 %v6294, 1.0
        %v6351 = vmin.f32 %v6295, 1.0
        %v6352 = vmin.f32 %v6296, 1.0
        %v6353 = vmin.f32 %v6297, 1.0
        %v6354 = vmin.f32 %v6298, 1.0
        %v6355 = vmin.f32 %v6299, 1.0
        %v6356 = vmin.f32 %v6300, 1.0
        %v6357 = vmin.f32 %v6301, 1.0
        %v6358 = vmin.f32 %v6302, 1.0
        %v6359 = vmin.f32 %v6303, 1.0
        %v6360 = vmin.f32 %v6304, 1.0
        %v6361 = vmin.f32 %v6305, 1.0
        %v6362 = vmin.f32 %v6306, 1.0
        %v6363 = vmin.f32 %v6307, 1.0
        %v6364 = vmin.f32 %v6308, 1.0
        %v6365 = vmin.f32 %v6309, 1.0
        %v6366 = vmin.f32 %v6310, 1.0
        %v6367 = vmin.f32 %v6311, 1.0
        %v6368 = vmul.f32 %v6312, 3.7225988
        %v6369 = vmul.f32 %v6313, 3.7225988
        %v6370 = vmul.f32 %v6314, 3.7225988
        %v6371 = vmul.f32 %v6315, 3.7225988
        %v6372 = vmul.f32 %v6316, 3.7225988
        %v6373 = vmul.f32 %v6317, 3.7225988
        %v6374 = vmul.f32 %v6318, 3.7225988
        %v6375 = vmul.f32 %v6319, 3.7225988
        %v6376 = vmul.f32 %v6320, 3.7225988
        %v6377 = vmul.f32 %v6321, 3.7225988
        %v6378 = vmul.f32 %v6322, 3.7225988
        %v6379 = vmul.f32 %v6323, 3.7225988
        %v6380 = vmul.f32 %v6324, 3.7225988
        %v6381 = vmul.f32 %v6325, 3.7225988
        %v6382 = vmul.f32 %v6326, 3.7225988
        %v6383 = vmul.f32 %v6327, 3.7225988
        %v6384 = vmul.f32 %v6328, 3.7225988
        %v6385 = vmul.f32 %v6329, 3.7225988
        %v6386 = vmul.f32 %v6330, 3.7225988
        %v6387 = vmul.f32 %v6331, 3.7225988
        %v6388 = vmul.f32 %v6332, 3.7225988
        %v6389 = vmul.f32 %v6333, 3.7225988
        %v6390 = vmul.f32 %v6334, 3.7225988
        %v6391 = vmul.f32 %v6335, 3.7225988
        %v6392 = vmul.f32 %v6336, 3.7225988
        %v6393 = vmul.f32 %v6337, 3.7225988
        %v6394 = vmul.f32 %v6338, 3.7225988
        %v6395 = vmul.f32 %v6339, 3.7225988
        %v6396 = vmul.f32 %v6340, 3.7225988
        %v6397 = vmul.f32 %v6341, 3.7225988
        %v6398 = vmul.f32 %v6342, 3.7225988
        %v6399 = vmul.f32 %v6343, 3.7225988
        %v6400 = vmul.f32 %v6344, 3.7225988
        %v6401 = vmul.f32 %v6345, 3.7225988
        %v6402 = vmul.f32 %v6346, 3.7225988
        %v6403 = vmul.f32 %v6347, 3.7225988
        %v6404 = vmul.f32 %v6348, 3.7225988
        %v6405 = vmul.f32 %v6349, 3.7225988
        %v6406 = vmul.f32 %v6350, 3.7225988
        %v6407 = vmul.f32 %v6351, 3.7225988
        %v6408 = vmul.f32 %v6352, 3.7225988
        %v6409 = vmul.f32 %v6353, 3.7225988
        %v6410 = vmul.f32 %v6354, 3.7225988
        %v6411 = vmul.f32 %v6355, 3.7225988
        %v6412 = vmul.f32 %v6356, 3.7225988
        %v6413 = vmul.f32 %v6357, 3.7225988
        %v6414 = vmul.f32 %v6358, 3.7225988
        %v6415 = vmul.f32 %v6359, 3.7225988
        %v6416 = vmul.f32 %v6360, 3.7225988
        %v6417 = vmul.f32 %v6361, 3.7225988
        %v6418 = vmul.f32 %v6362, 3.7225988
        %v6419 = vmul.f32 %v6363, 3.7225988
        %v6420 = vmul.f32 %v6364, 3.7225988
        %v6421 = vmul.f32 %v6365, 3.7225988
        %v6422 = vmul.f32 %v6366, 3.7225988
        %v6423 = vmul.f32 %v6367, 3.7225988
        %v6424 = vadd.f32 %v6368, -1.7922626
        %v6425 = vadd.f32 %v6369, -1.7922626
        %v6426 = vadd.f32 %v6370, -1.7922626
        %v6427 = vadd.f32 %v6371, -1.7922626
        %v6428 = vadd.f32 %v6372, -1.7922626
        %v6429 = vadd.f32 %v6373, -1.7922626
        %v6430 = vadd.f32 %v6374, -1.7922626
        %v6431 = vadd.f32 %v6375, -1.7922626
        %v6432 = vadd.f32 %v6376, -1.7922626
        %v6433 = vadd.f32 %v6377, -1.7922626
        %v6434 = vadd.f32 %v6378, -1.7922626
        %v6435 = vadd.f32 %v6379, -1.7922626
        %v6436 = vadd.f32 %v6380, -1.7922626
        %v6437 = vadd.f32 %v6381, -1.7922626
        %v6438 = vadd.f32 %v6382, -1.7922626
        %v6439 = vadd.f32 %v6383, -1.7922626
        %v6440 = vadd.f32 %v6384, -1.7922626
        %v6441 = vadd.f32 %v6385, -1.7922626
        %v6442 = vadd.f32 %v6386, -1.7922626
        %v6443 = vadd.f32 %v6387, -1.7922626
        %v6444 = vadd.f32 %v6388, -1.7922626
        %v6445 = vadd.f32 %v6389, -1.7922626
        %v6446 = vadd.f32 %v6390, -1.7922626
        %v6447 = vadd.f32 %v6391, -1.7922626
        %v6448 = vadd.f32 %v6392, -1.7922626
        %v6449 = vadd.f32 %v6393, -1.7922626
        %v6450 = vadd.f32 %v6394, -1.7922626
        %v6451 = vadd.f32 %v6395, -1.7922626
        %v6452 = vadd.f32 %v6396, -1.7922626
        %v6453 = vadd.f32 %v6397, -1.7922626
        %v6454 = vadd.f32 %v6398, -1.7922626
        %v6455 = vadd.f32 %v6399, -1.7922626
        %v6456 = vadd.f32 %v6400, -1.7922626
        %v6457 = vadd.f32 %v6401, -1.7922626
        %v6458 = vadd.f32 %v6402, -1.7922626
        %v6459 = vadd.f32 %v6403, -1.7922626
        %v6460 = vadd.f32 %v6404, -1.7922626
        %v6461 = vadd.f32 %v6405, -1.7922626
        %v6462 = vadd.f32 %v6406, -1.7922626
        %v6463 = vadd.f32 %v6407, -1.7922626
        %v6464 = vadd.f32 %v6408, -1.7922626
        %v6465 = vadd.f32 %v6409, -1.7922626
        %v6466 = vadd.f32 %v6410, -1.7922626
        %v6467 = vadd.f32 %v6411, -1.7922626
        %v6468 = vadd.f32 %v6412, -1.7922626
        %v6469 = vadd.f32 %v6413, -1.7922626
        %v6470 = vadd.f32 %v6414, -1.7922626
        %v6471 = vadd.f32 %v6415, -1.7922626
        %v6472 = vadd.f32 %v6416, -1.7922626
        %v6473 = vadd.f32 %v6417, -1.7922626
        %v6474 = vadd.f32 %v6418, -1.7922626
        %v6475 = vadd.f32 %v6419, -1.7922626
        %v6476 = vadd.f32 %v6420, -1.7922626
        %v6477 = vadd.f32 %v6421, -1.7922626
        %v6478 = vadd.f32 %v6422, -1.7922626
        %v6479 = vadd.f32 %v6423, -1.7922626
        %s6480 = scalar_lea.vmem %s208, 1344 [#allocation8]
        %6481 = vst [vmem:[%s6480] sm:$0xff] %v6424
        %6482 = vst.msk [vmem:[%s6480 + $0x8] sm:$0xff] %vm1744, %v6425
        %6483 = vst [vmem:[%s6480 + $0x10] sm:$0xff] %v6426
        %6484 = vst.msk [vmem:[%s6480 + $0x18] sm:$0xff] %vm1744, %v6427
        %6485 = vst [vmem:[%s6480 + $0x20] sm:$0xff] %v6428
        %6486 = vst.msk [vmem:[%s6480 + $0x28] sm:$0xff] %vm1744, %v6429
        %6487 = vst [vmem:[%s6480 + $0x30] sm:$0xff] %v6430
        %6488 = vst.msk [vmem:[%s6480 + $0x38] sm:$0xff] %vm1744, %v6431
        %6489 = vst [vmem:[%s6480 + $0x40] sm:$0xff] %v6432
        %6490 = vst.msk [vmem:[%s6480 + $0x48] sm:$0xff] %vm1744, %v6433
        %6491 = vst [vmem:[%s6480 + $0x50] sm:$0xff] %v6434
        %6492 = vst.msk [vmem:[%s6480 + $0x58] sm:$0xff] %vm1744, %v6435
        %6493 = vst [vmem:[%s6480 + $0x60] sm:$0xff] %v6436
        %6494 = vst.msk [vmem:[%s6480 + $0x68] sm:$0xff] %vm1744, %v6437
        %6495 = vst [vmem:[%s6480 + $0x70] sm:$0xff] %v6438
        %6496 = vst.msk [vmem:[%s6480 + $0x78] sm:$0xff] %vm1744, %v6439
        %6497 = vst [vmem:[%s6480 + $0x80] sm:$0xff] %v6440
        %6498 = vst.msk [vmem:[%s6480 + $0x88] sm:$0xff] %vm1744, %v6441
        %6499 = vst [vmem:[%s6480 + $0x90] sm:$0xff] %v6442
        %6500 = vst.msk [vmem:[%s6480 + $0x98] sm:$0xff] %vm1744, %v6443
        %6501 = vst [vmem:[%s6480 + $0xa0] sm:$0xff] %v6444
        %6502 = vst.msk [vmem:[%s6480 + $0xa8] sm:$0xff] %vm1744, %v6445
        %6503 = vst [vmem:[%s6480 + $0xb0] sm:$0xff] %v6446
        %6504 = vst.msk [vmem:[%s6480 + $0xb8] sm:$0xff] %vm1744, %v6447
        %6505 = vst [vmem:[%s6480 + $0xc0] sm:$0xff] %v6448
        %6506 = vst.msk [vmem:[%s6480 + $0xc8] sm:$0xff] %vm1744, %v6449
        %6507 = vst [vmem:[%s6480 + $0xd0] sm:$0xff] %v6450
        %6508 = vst.msk [vmem:[%s6480 + $0xd8] sm:$0xff] %vm1744, %v6451
        %6509 = vst [vmem:[%s6480 + $0xe0] sm:$0xff] %v6452
        %6510 = vst.msk [vmem:[%s6480 + $0xe8] sm:$0xff] %vm1744, %v6453
        %6511 = vst [vmem:[%s6480 + $0xf0] sm:$0xff] %v6454
        %6512 = vst.msk [vmem:[%s6480 + $0xf8] sm:$0xff] %vm1744, %v6455
        %6513 = vst [vmem:[%s6480 + $0x100] sm:$0xff] %v6456
        %6514 = vst.msk [vmem:[%s6480 + $0x108] sm:$0xff] %vm1744, %v6457
        %6515 = vst [vmem:[%s6480 + $0x110] sm:$0xff] %v6458
        %6516 = vst.msk [vmem:[%s6480 + $0x118] sm:$0xff] %vm1744, %v6459
        %6517 = vst [vmem:[%s6480 + $0x120] sm:$0xff] %v6460
        %6518 = vst.msk [vmem:[%s6480 + $0x128] sm:$0xff] %vm1744, %v6461
        %6519 = vst [vmem:[%s6480 + $0x130] sm:$0xff] %v6462
        %6520 = vst.msk [vmem:[%s6480 + $0x138] sm:$0xff] %vm1744, %v6463
        %6521 = vst [vmem:[%s6480 + $0x140] sm:$0xff] %v6464
        %6522 = vst.msk [vmem:[%s6480 + $0x148] sm:$0xff] %vm1744, %v6465
        %6523 = vst [vmem:[%s6480 + $0x150] sm:$0xff] %v6466
        %6524 = vst.msk [vmem:[%s6480 + $0x158] sm:$0xff] %vm1744, %v6467
        %6525 = vst [vmem:[%s6480 + $0x160] sm:$0xff] %v6468
        %6526 = vst.msk [vmem:[%s6480 + $0x168] sm:$0xff] %vm1744, %v6469
        %6527 = vst [vmem:[%s6480 + $0x170] sm:$0xff] %v6470
        %6528 = vst.msk [vmem:[%s6480 + $0x178] sm:$0xff] %vm1744, %v6471
        %6529 = vst [vmem:[%s6480 + $0x180] sm:$0xff] %v6472
        %6530 = vst.msk [vmem:[%s6480 + $0x188] sm:$0xff] %vm1744, %v6473
        %6531 = vst [vmem:[%s6480 + $0x190] sm:$0xff] %v6474
        %6532 = vst.msk [vmem:[%s6480 + $0x198] sm:$0xff] %vm1744, %v6475
        %6533 = vst [vmem:[%s6480 + $0x1a0] sm:$0xff] %v6476
        %6534 = vst.msk [vmem:[%s6480 + $0x1a8] sm:$0xff] %vm1744, %v6477
        %6535 = vst [vmem:[%s6480 + $0x1b0] sm:$0xff] %v6478
        %6536 = vst.msk [vmem:[%s6480 + $0x1b8] sm:$0xff] %vm1744, %v6479
        %v6537 = vld [vmem:[%s3349 + $0x200] sm:$0xff]
        %v6538 = vld [vmem:[%s3349 + $0x208] sm:$0xff]
        %v6539 = vld [vmem:[%s3349 + $0x210] sm:$0xff]
        %v6540 = vld [vmem:[%s3349 + $0x218] sm:$0xff]
        %v6541 = vld [vmem:[%s3349 + $0x220] sm:$0xff]
        %v6542 = vld [vmem:[%s3349 + $0x228] sm:$0xff]
        %v6543 = vld [vmem:[%s3349 + $0x230] sm:$0xff]
        %v6544 = vld [vmem:[%s3349 + $0x238] sm:$0xff]
        %v6545 = vld [vmem:[%s3349 + $0x240] sm:$0xff]
        %v6546 = vld [vmem:[%s3349 + $0x248] sm:$0xff]
        %v6547 = vld [vmem:[%s3349 + $0x250] sm:$0xff]
        %v6548 = vld [vmem:[%s3349 + $0x258] sm:$0xff]
        %v6549 = vld [vmem:[%s3349 + $0x260] sm:$0xff]
        %v6550 = vld [vmem:[%s3349 + $0x268] sm:$0xff]
        %v6551 = vld [vmem:[%s3349 + $0x270] sm:$0xff]
        %v6552 = vld [vmem:[%s3349 + $0x278] sm:$0xff]
        %v6553 = vld [vmem:[%s3349 + $0x280] sm:$0xff]
        %v6554 = vld [vmem:[%s3349 + $0x288] sm:$0xff]
        %v6555 = vld [vmem:[%s3349 + $0x290] sm:$0xff]
        %v6556 = vld [vmem:[%s3349 + $0x298] sm:$0xff]
        %v6557 = vld [vmem:[%s3349 + $0x2a0] sm:$0xff]
        %v6558 = vld [vmem:[%s3349 + $0x2a8] sm:$0xff]
        %v6559 = vld [vmem:[%s3349 + $0x2b0] sm:$0xff]
        %v6560 = vld [vmem:[%s3349 + $0x2b8] sm:$0xff]
        %v6561 = vld [vmem:[%s3349 + $0x2c0] sm:$0xff]
        %v6562 = vld [vmem:[%s3349 + $0x2c8] sm:$0xff]
        %v6563 = vld [vmem:[%s3349 + $0x2d0] sm:$0xff]
        %v6564 = vld [vmem:[%s3349 + $0x2d8] sm:$0xff]
        %v6565 = vld [vmem:[%s3349 + $0x2e0] sm:$0xff]
        %v6566 = vld [vmem:[%s3349 + $0x2e8] sm:$0xff]
        %v6567 = vld [vmem:[%s3349 + $0x2f0] sm:$0xff]
        %v6568 = vld [vmem:[%s3349 + $0x2f8] sm:$0xff]
        %v6569 = vld [vmem:[%s3349 + $0x300] sm:$0xff]
        %v6570 = vld [vmem:[%s3349 + $0x308] sm:$0xff]
        %v6571 = vld [vmem:[%s3349 + $0x310] sm:$0xff]
        %v6572 = vld [vmem:[%s3349 + $0x318] sm:$0xff]
        %v6573 = vld [vmem:[%s3349 + $0x320] sm:$0xff]
        %v6574 = vld [vmem:[%s3349 + $0x328] sm:$0xff]
        %v6575 = vld [vmem:[%s3349 + $0x330] sm:$0xff]
        %v6576 = vld [vmem:[%s3349 + $0x338] sm:$0xff]
        %v6577 = vld [vmem:[%s3349 + $0x340] sm:$0xff]
        %v6578 = vld [vmem:[%s3349 + $0x348] sm:$0xff]
        %v6579 = vld [vmem:[%s3349 + $0x350] sm:$0xff]
        %v6580 = vld [vmem:[%s3349 + $0x358] sm:$0xff]
        %v6581 = vld [vmem:[%s3349 + $0x360] sm:$0xff]
        %v6582 = vld [vmem:[%s3349 + $0x368] sm:$0xff]
        %v6583 = vld [vmem:[%s3349 + $0x370] sm:$0xff]
        %v6584 = vld [vmem:[%s3349 + $0x378] sm:$0xff]
        %v6585 = vld [vmem:[%s3349 + $0x380] sm:$0xff]
        %v6586 = vld [vmem:[%s3349 + $0x388] sm:$0xff]
        %v6587 = vld [vmem:[%s3349 + $0x390] sm:$0xff]
        %v6588 = vld [vmem:[%s3349 + $0x398] sm:$0xff]
        %v6589 = vld [vmem:[%s3349 + $0x3a0] sm:$0xff]
        %v6590 = vld [vmem:[%s3349 + $0x3a8] sm:$0xff]
        %v6591 = vld [vmem:[%s3349 + $0x3b0] sm:$0xff]
        %v6592 = vld [vmem:[%s3349 + $0x3b8] sm:$0xff]
        %v6593 = vld [vmem:[%s3349 + $0x3c0] sm:$0xff]
        %v6594 = vld [vmem:[%s3349 + $0x3c8] sm:$0xff]
        %v6595 = vld [vmem:[%s3349 + $0x3d0] sm:$0xff]
        %v6596 = vld [vmem:[%s3349 + $0x3d8] sm:$0xff]
        %v6597 = vld [vmem:[%s3349 + $0x3e0] sm:$0xff]
        %v6598 = vld [vmem:[%s3349 + $0x3e8] sm:$0xff]
        %v6599 = vld [vmem:[%s3349 + $0x3f0] sm:$0xff]
        %v6600 = vld [vmem:[%s3349 + $0x3f8] sm:$0xff]
        %6601 = vmatpush.msra.mxu0 %v6567
        %6602 = vmatpush.msra.mxu0 %v6565
        %6603 = vmatpush.msra.mxu0 %v6563
        %6604 = vmatpush.msra.mxu0 %v6561
        %6605 = vmatpush.msra.mxu0 %v6559
        %6606 = vmatpush.msra.mxu0 %v6557
        %6607 = vmatpush.msra.mxu0 %v6555
        %6608 = vmatpush.msra.mxu0 %v6553
        %6609 = vmatpush.msra.mxu0 %v6551
        %6610 = vmatpush.msra.mxu0 %v6549
        %6611 = vmatpush.msra.mxu0 %v6547
        %6612 = vmatpush.msra.mxu0 %v6545
        %6613 = vmatpush.msra.mxu0 %v6543
        %6614 = vmatpush.msra.mxu0 %v6541
        %6615 = vmatpush.msra.mxu0 %v6539
        %6616 = vmatpush.msra.mxu0 %v6537
        %6617 = vmatmul.f32.gmra.mxu0 %v275
        %v6618 = vpop.f32.mrf.mxu0
        %v6619 = vadd.f32 0.0, %v6618
        %6620 = vmatmul.f32.gmra.mxu0 %v277
        %v6621 = vpop.f32.mrf.mxu0
        %v6622 = vadd.f32 0.0, %v6621
        %6623 = vmatmul.f32.gmra.mxu0 %v279
        %v6624 = vpop.f32.mrf.mxu0
        %v6625 = vadd.f32 0.0, %v6624
        %6626 = vmatmul.f32.gmra.mxu0 %v281
        %v6627 = vpop.f32.mrf.mxu0
        %v6628 = vadd.f32 0.0, %v6627
        %6629 = vmatmul.f32.gmra.mxu0 %v283
        %v6630 = vpop.f32.mrf.mxu0
        %v6631 = vadd.f32 0.0, %v6630
        %6632 = vmatmul.f32.gmra.mxu0 %v285
        %v6633 = vpop.f32.mrf.mxu0
        %v6634 = vadd.f32 0.0, %v6633
        %6635 = vmatmul.f32.gmra.mxu0 %v287
        %v6636 = vpop.f32.mrf.mxu0
        %v6637 = vadd.f32 0.0, %v6636
        %6638 = vmatmul.f32.gmra.mxu0 %v289
        %v6639 = vpop.f32.mrf.mxu0
        %v6640 = vadd.f32 0.0, %v6639
        %6641 = vmatmul.f32.gmra.mxu0 %v291
        %v6642 = vpop.f32.mrf.mxu0
        %v6643 = vadd.f32 0.0, %v6642
        %6644 = vmatmul.f32.gmra.mxu0 %v293
        %v6645 = vpop.f32.mrf.mxu0
        %v6646 = vadd.f32 0.0, %v6645
        %6647 = vmatmul.f32.gmra.mxu0 %v295
        %v6648 = vpop.f32.mrf.mxu0
        %v6649 = vadd.f32 0.0, %v6648
        %6650 = vmatmul.f32.gmra.mxu0 %v297
        %v6651 = vpop.f32.mrf.mxu0
        %v6652 = vadd.f32 0.0, %v6651
        %6653 = vmatmul.f32.gmra.mxu0 %v299
        %v6654 = vpop.f32.mrf.mxu0
        %v6655 = vadd.f32 0.0, %v6654
        %6656 = vmatmul.f32.gmra.mxu0 %v301
        %v6657 = vpop.f32.mrf.mxu0
        %v6658 = vadd.f32 0.0, %v6657
        %6659 = vmatmul.f32.gmra.mxu0 %v303
        %v6660 = vpop.f32.mrf.mxu0
        %v6661 = vadd.f32 0.0, %v6660
        %6662 = vmatmul.f32.gmra.mxu0 %v305
        %v6663 = vpop.f32.mrf.mxu0
        %v6664 = vadd.f32 0.0, %v6663
        %6665 = vmatmul.f32.gmra.mxu0 %v307
        %v6666 = vpop.f32.mrf.mxu0
        %v6667 = vadd.f32 0.0, %v6666
        %6668 = vmatmul.f32.gmra.mxu0 %v309
        %v6669 = vpop.f32.mrf.mxu0
        %v6670 = vadd.f32 0.0, %v6669
        %6671 = vmatmul.f32.gmra.mxu0 %v311
        %v6672 = vpop.f32.mrf.mxu0
        %v6673 = vadd.f32 0.0, %v6672
        %6674 = vmatmul.f32.gmra.mxu0 %v313
        %v6675 = vpop.f32.mrf.mxu0
        %v6676 = vadd.f32 0.0, %v6675
        %6677 = vmatmul.f32.gmra.mxu0 %v315
        %v6678 = vpop.f32.mrf.mxu0
        %v6679 = vadd.f32 0.0, %v6678
        %6680 = vmatmul.f32.gmra.mxu0 %v317
        %v6681 = vpop.f32.mrf.mxu0
        %v6682 = vadd.f32 0.0, %v6681
        %6683 = vmatmul.f32.gmra.mxu0 %v319
        %v6684 = vpop.f32.mrf.mxu0
        %v6685 = vadd.f32 0.0, %v6684
        %6686 = vmatmul.f32.gmra.mxu0 %v321
        %v6687 = vpop.f32.mrf.mxu0
        %v6688 = vadd.f32 0.0, %v6687
        %6689 = vmatmul.f32.gmra.mxu0 %v323
        %v6690 = vpop.f32.mrf.mxu0
        %v6691 = vadd.f32 0.0, %v6690
        %6692 = vmatmul.f32.gmra.mxu0 %v325
        %v6693 = vpop.f32.mrf.mxu0
        %v6694 = vadd.f32 0.0, %v6693
        %6695 = vmatmul.f32.gmra.mxu0 %v327
        %v6696 = vpop.f32.mrf.mxu0
        %v6697 = vadd.f32 0.0, %v6696
        %6698 = vmatmul.f32.gmra.mxu0 %v329
        %v6699 = vpop.f32.mrf.mxu0
        %v6700 = vadd.f32 0.0, %v6699
        %6701 = vdwg.mxu0
        %6702 = vmatpush.msra.mxu0 %v6599
        %6703 = vmatpush.msra.mxu0 %v6597
        %6704 = vmatpush.msra.mxu0 %v6595
        %6705 = vmatpush.msra.mxu0 %v6593
        %6706 = vmatpush.msra.mxu0 %v6591
        %6707 = vmatpush.msra.mxu0 %v6589
        %6708 = vmatpush.msra.mxu0 %v6587
        %6709 = vmatpush.msra.mxu0 %v6585
        %6710 = vmatpush.msra.mxu0 %v6583
        %6711 = vmatpush.msra.mxu0 %v6581
        %6712 = vmatpush.msra.mxu0 %v6579
        %6713 = vmatpush.msra.mxu0 %v6577
        %6714 = vmatpush.msra.mxu0 %v6575
        %6715 = vmatpush.msra.mxu0 %v6573
        %6716 = vmatpush.msra.mxu0 %v6571
        %6717 = vmatpush.msra.mxu0 %v6569
        %6718 = vmatmul.f32.gmra.mxu0 %v276
        %v6719 = vpop.f32.mrf.mxu0
        %v6720 = vadd.f32 %v6619, %v6719
        %6721 = vmatmul.f32.gmra.mxu0 %v278
        %v6722 = vpop.f32.mrf.mxu0
        %v6723 = vadd.f32 %v6622, %v6722
        %6724 = vmatmul.f32.gmra.mxu0 %v280
        %v6725 = vpop.f32.mrf.mxu0
        %v6726 = vadd.f32 %v6625, %v6725
        %6727 = vmatmul.f32.gmra.mxu0 %v282
        %v6728 = vpop.f32.mrf.mxu0
        %v6729 = vadd.f32 %v6628, %v6728
        %6730 = vmatmul.f32.gmra.mxu0 %v284
        %v6731 = vpop.f32.mrf.mxu0
        %v6732 = vadd.f32 %v6631, %v6731
        %6733 = vmatmul.f32.gmra.mxu0 %v286
        %v6734 = vpop.f32.mrf.mxu0
        %v6735 = vadd.f32 %v6634, %v6734
        %6736 = vmatmul.f32.gmra.mxu0 %v288
        %v6737 = vpop.f32.mrf.mxu0
        %v6738 = vadd.f32 %v6637, %v6737
        %6739 = vmatmul.f32.gmra.mxu0 %v290
        %v6740 = vpop.f32.mrf.mxu0
        %v6741 = vadd.f32 %v6640, %v6740
        %6742 = vmatmul.f32.gmra.mxu0 %v292
        %v6743 = vpop.f32.mrf.mxu0
        %v6744 = vadd.f32 %v6643, %v6743
        %6745 = vmatmul.f32.gmra.mxu0 %v294
        %v6746 = vpop.f32.mrf.mxu0
        %v6747 = vadd.f32 %v6646, %v6746
        %6748 = vmatmul.f32.gmra.mxu0 %v296
        %v6749 = vpop.f32.mrf.mxu0
        %v6750 = vadd.f32 %v6649, %v6749
        %6751 = vmatmul.f32.gmra.mxu0 %v298
        %v6752 = vpop.f32.mrf.mxu0
        %v6753 = vadd.f32 %v6652, %v6752
        %6754 = vmatmul.f32.gmra.mxu0 %v300
        %v6755 = vpop.f32.mrf.mxu0
        %v6756 = vadd.f32 %v6655, %v6755
        %6757 = vmatmul.f32.gmra.mxu0 %v302
        %v6758 = vpop.f32.mrf.mxu0
        %v6759 = vadd.f32 %v6658, %v6758
        %6760 = vmatmul.f32.gmra.mxu0 %v304
        %v6761 = vpop.f32.mrf.mxu0
        %v6762 = vadd.f32 %v6661, %v6761
        %6763 = vmatmul.f32.gmra.mxu0 %v306
        %v6764 = vpop.f32.mrf.mxu0
        %v6765 = vadd.f32 %v6664, %v6764
        %6766 = vmatmul.f32.gmra.mxu0 %v308
        %v6767 = vpop.f32.mrf.mxu0
        %v6768 = vadd.f32 %v6667, %v6767
        %6769 = vmatmul.f32.gmra.mxu0 %v310
        %v6770 = vpop.f32.mrf.mxu0
        %v6771 = vadd.f32 %v6670, %v6770
        %6772 = vmatmul.f32.gmra.mxu0 %v312
        %v6773 = vpop.f32.mrf.mxu0
        %v6774 = vadd.f32 %v6673, %v6773
        %6775 = vmatmul.f32.gmra.mxu0 %v314
        %v6776 = vpop.f32.mrf.mxu0
        %v6777 = vadd.f32 %v6676, %v6776
        %6778 = vmatmul.f32.gmra.mxu0 %v316
        %v6779 = vpop.f32.mrf.mxu0
        %v6780 = vadd.f32 %v6679, %v6779
        %6781 = vmatmul.f32.gmra.mxu0 %v318
        %v6782 = vpop.f32.mrf.mxu0
        %v6783 = vadd.f32 %v6682, %v6782
        %6784 = vmatmul.f32.gmra.mxu0 %v320
        %v6785 = vpop.f32.mrf.mxu0
        %v6786 = vadd.f32 %v6685, %v6785
        %6787 = vmatmul.f32.gmra.mxu0 %v322
        %v6788 = vpop.f32.mrf.mxu0
        %v6789 = vadd.f32 %v6688, %v6788
        %6790 = vmatmul.f32.gmra.mxu0 %v324
        %v6791 = vpop.f32.mrf.mxu0
        %v6792 = vadd.f32 %v6691, %v6791
        %6793 = vmatmul.f32.gmra.mxu0 %v326
        %v6794 = vpop.f32.mrf.mxu0
        %v6795 = vadd.f32 %v6694, %v6794
        %6796 = vmatmul.f32.gmra.mxu0 %v328
        %v6797 = vpop.f32.mrf.mxu0
        %v6798 = vadd.f32 %v6697, %v6797
        %6799 = vmatmul.f32.gmra.mxu0 %v330
        %v6800 = vpop.f32.mrf.mxu0
        %v6801 = vadd.f32 %v6700, %v6800
        %6802 = vdwg.mxu0
        %6803 = vmatpush.msra.mxu0 %v6568
        %6804 = vmatpush.msra.mxu0 %v6566
        %6805 = vmatpush.msra.mxu0 %v6564
        %6806 = vmatpush.msra.mxu0 %v6562
        %6807 = vmatpush.msra.mxu0 %v6560
        %6808 = vmatpush.msra.mxu0 %v6558
        %6809 = vmatpush.msra.mxu0 %v6556
        %6810 = vmatpush.msra.mxu0 %v6554
        %6811 = vmatpush.msra.mxu0 %v6552
        %6812 = vmatpush.msra.mxu0 %v6550
        %6813 = vmatpush.msra.mxu0 %v6548
        %6814 = vmatpush.msra.mxu0 %v6546
        %6815 = vmatpush.msra.mxu0 %v6544
        %6816 = vmatpush.msra.mxu0 %v6542
        %6817 = vmatpush.msra.mxu0 %v6540
        %6818 = vmatpush.msra.mxu0 %v6538
        %6819 = vmatmul.f32.gmra.mxu0 %v275
        %v6820 = vpop.f32.mrf.mxu0
        %v6821 = vadd.f32 0.0, %v6820
        %6822 = vmatmul.f32.gmra.mxu0 %v277
        %v6823 = vpop.f32.mrf.mxu0
        %v6824 = vadd.f32 0.0, %v6823
        %6825 = vmatmul.f32.gmra.mxu0 %v279
        %v6826 = vpop.f32.mrf.mxu0
        %v6827 = vadd.f32 0.0, %v6826
        %6828 = vmatmul.f32.gmra.mxu0 %v281
        %v6829 = vpop.f32.mrf.mxu0
        %v6830 = vadd.f32 0.0, %v6829
        %6831 = vmatmul.f32.gmra.mxu0 %v283
        %v6832 = vpop.f32.mrf.mxu0
        %v6833 = vadd.f32 0.0, %v6832
        %6834 = vmatmul.f32.gmra.mxu0 %v285
        %v6835 = vpop.f32.mrf.mxu0
        %v6836 = vadd.f32 0.0, %v6835
        %6837 = vmatmul.f32.gmra.mxu0 %v287
        %v6838 = vpop.f32.mrf.mxu0
        %v6839 = vadd.f32 0.0, %v6838
        %6840 = vmatmul.f32.gmra.mxu0 %v289
        %v6841 = vpop.f32.mrf.mxu0
        %v6842 = vadd.f32 0.0, %v6841
        %6843 = vmatmul.f32.gmra.mxu0 %v291
        %v6844 = vpop.f32.mrf.mxu0
        %v6845 = vadd.f32 0.0, %v6844
        %6846 = vmatmul.f32.gmra.mxu0 %v293
        %v6847 = vpop.f32.mrf.mxu0
        %v6848 = vadd.f32 0.0, %v6847
        %6849 = vmatmul.f32.gmra.mxu0 %v295
        %v6850 = vpop.f32.mrf.mxu0
        %v6851 = vadd.f32 0.0, %v6850
        %6852 = vmatmul.f32.gmra.mxu0 %v297
        %v6853 = vpop.f32.mrf.mxu0
        %v6854 = vadd.f32 0.0, %v6853
        %6855 = vmatmul.f32.gmra.mxu0 %v299
        %v6856 = vpop.f32.mrf.mxu0
        %v6857 = vadd.f32 0.0, %v6856
        %6858 = vmatmul.f32.gmra.mxu0 %v301
        %v6859 = vpop.f32.mrf.mxu0
        %v6860 = vadd.f32 0.0, %v6859
        %6861 = vmatmul.f32.gmra.mxu0 %v303
        %v6862 = vpop.f32.mrf.mxu0
        %v6863 = vadd.f32 0.0, %v6862
        %6864 = vmatmul.f32.gmra.mxu0 %v305
        %v6865 = vpop.f32.mrf.mxu0
        %v6866 = vadd.f32 0.0, %v6865
        %6867 = vmatmul.f32.gmra.mxu0 %v307
        %v6868 = vpop.f32.mrf.mxu0
        %v6869 = vadd.f32 0.0, %v6868
        %6870 = vmatmul.f32.gmra.mxu0 %v309
        %v6871 = vpop.f32.mrf.mxu0
        %v6872 = vadd.f32 0.0, %v6871
        %6873 = vmatmul.f32.gmra.mxu0 %v311
        %v6874 = vpop.f32.mrf.mxu0
        %v6875 = vadd.f32 0.0, %v6874
        %6876 = vmatmul.f32.gmra.mxu0 %v313
        %v6877 = vpop.f32.mrf.mxu0
        %v6878 = vadd.f32 0.0, %v6877
        %6879 = vmatmul.f32.gmra.mxu0 %v315
        %v6880 = vpop.f32.mrf.mxu0
        %v6881 = vadd.f32 0.0, %v6880
        %6882 = vmatmul.f32.gmra.mxu0 %v317
        %v6883 = vpop.f32.mrf.mxu0
        %v6884 = vadd.f32 0.0, %v6883
        %6885 = vmatmul.f32.gmra.mxu0 %v319
        %v6886 = vpop.f32.mrf.mxu0
        %v6887 = vadd.f32 0.0, %v6886
        %6888 = vmatmul.f32.gmra.mxu0 %v321
        %v6889 = vpop.f32.mrf.mxu0
        %v6890 = vadd.f32 0.0, %v6889
        %6891 = vmatmul.f32.gmra.mxu0 %v323
        %v6892 = vpop.f32.mrf.mxu0
        %v6893 = vadd.f32 0.0, %v6892
        %6894 = vmatmul.f32.gmra.mxu0 %v325
        %v6895 = vpop.f32.mrf.mxu0
        %v6896 = vadd.f32 0.0, %v6895
        %6897 = vmatmul.f32.gmra.mxu0 %v327
        %v6898 = vpop.f32.mrf.mxu0
        %v6899 = vadd.f32 0.0, %v6898
        %6900 = vmatmul.f32.gmra.mxu0 %v329
        %v6901 = vpop.f32.mrf.mxu0
        %v6902 = vadd.f32 0.0, %v6901
        %6903 = vdwg.mxu0
        %6904 = vmatpush.msra.mxu0 %v6600
        %6905 = vmatpush.msra.mxu0 %v6598
        %6906 = vmatpush.msra.mxu0 %v6596
        %6907 = vmatpush.msra.mxu0 %v6594
        %6908 = vmatpush.msra.mxu0 %v6592
        %6909 = vmatpush.msra.mxu0 %v6590
        %6910 = vmatpush.msra.mxu0 %v6588
        %6911 = vmatpush.msra.mxu0 %v6586
        %6912 = vmatpush.msra.mxu0 %v6584
        %6913 = vmatpush.msra.mxu0 %v6582
        %6914 = vmatpush.msra.mxu0 %v6580
        %6915 = vmatpush.msra.mxu0 %v6578
        %6916 = vmatpush.msra.mxu0 %v6576
        %6917 = vmatpush.msra.mxu0 %v6574
        %6918 = vmatpush.msra.mxu0 %v6572
        %6919 = vmatpush.msra.mxu0 %v6570
        %6920 = vmatmul.f32.gmra.mxu0 %v276
        %v6921 = vpop.f32.mrf.mxu0
        %v6922 = vadd.f32 %v6821, %v6921
        %6923 = vmatmul.f32.gmra.mxu0 %v278
        %v6924 = vpop.f32.mrf.mxu0
        %v6925 = vadd.f32 %v6824, %v6924
        %6926 = vmatmul.f32.gmra.mxu0 %v280
        %v6927 = vpop.f32.mrf.mxu0
        %v6928 = vadd.f32 %v6827, %v6927
        %6929 = vmatmul.f32.gmra.mxu0 %v282
        %v6930 = vpop.f32.mrf.mxu0
        %v6931 = vadd.f32 %v6830, %v6930
        %6932 = vmatmul.f32.gmra.mxu0 %v284
        %v6933 = vpop.f32.mrf.mxu0
        %v6934 = vadd.f32 %v6833, %v6933
        %6935 = vmatmul.f32.gmra.mxu0 %v286
        %v6936 = vpop.f32.mrf.mxu0
        %v6937 = vadd.f32 %v6836, %v6936
        %6938 = vmatmul.f32.gmra.mxu0 %v288
        %v6939 = vpop.f32.mrf.mxu0
        %v6940 = vadd.f32 %v6839, %v6939
        %6941 = vmatmul.f32.gmra.mxu0 %v290
        %v6942 = vpop.f32.mrf.mxu0
        %v6943 = vadd.f32 %v6842, %v6942
        %6944 = vmatmul.f32.gmra.mxu0 %v292
        %v6945 = vpop.f32.mrf.mxu0
        %v6946 = vadd.f32 %v6845, %v6945
        %6947 = vmatmul.f32.gmra.mxu0 %v294
        %v6948 = vpop.f32.mrf.mxu0
        %v6949 = vadd.f32 %v6848, %v6948
        %6950 = vmatmul.f32.gmra.mxu0 %v296
        %v6951 = vpop.f32.mrf.mxu0
        %v6952 = vadd.f32 %v6851, %v6951
        %6953 = vmatmul.f32.gmra.mxu0 %v298
        %v6954 = vpop.f32.mrf.mxu0
        %v6955 = vadd.f32 %v6854, %v6954
        %6956 = vmatmul.f32.gmra.mxu0 %v300
        %v6957 = vpop.f32.mrf.mxu0
        %v6958 = vadd.f32 %v6857, %v6957
        %6959 = vmatmul.f32.gmra.mxu0 %v302
        %v6960 = vpop.f32.mrf.mxu0
        %v6961 = vadd.f32 %v6860, %v6960
        %6962 = vmatmul.f32.gmra.mxu0 %v304
        %v6963 = vpop.f32.mrf.mxu0
        %v6964 = vadd.f32 %v6863, %v6963
        %6965 = vmatmul.f32.gmra.mxu0 %v306
        %v6966 = vpop.f32.mrf.mxu0
        %v6967 = vadd.f32 %v6866, %v6966
        %6968 = vmatmul.f32.gmra.mxu0 %v308
        %v6969 = vpop.f32.mrf.mxu0
        %v6970 = vadd.f32 %v6869, %v6969
        %6971 = vmatmul.f32.gmra.mxu0 %v310
        %v6972 = vpop.f32.mrf.mxu0
        %v6973 = vadd.f32 %v6872, %v6972
        %6974 = vmatmul.f32.gmra.mxu0 %v312
        %v6975 = vpop.f32.mrf.mxu0
        %v6976 = vadd.f32 %v6875, %v6975
        %6977 = vmatmul.f32.gmra.mxu0 %v314
        %v6978 = vpop.f32.mrf.mxu0
        %v6979 = vadd.f32 %v6878, %v6978
        %6980 = vmatmul.f32.gmra.mxu0 %v316
        %v6981 = vpop.f32.mrf.mxu0
        %v6982 = vadd.f32 %v6881, %v6981
        %6983 = vmatmul.f32.gmra.mxu0 %v318
        %v6984 = vpop.f32.mrf.mxu0
        %v6985 = vadd.f32 %v6884, %v6984
        %6986 = vmatmul.f32.gmra.mxu0 %v320
        %v6987 = vpop.f32.mrf.mxu0
        %v6988 = vadd.f32 %v6887, %v6987
        %6989 = vmatmul.f32.gmra.mxu0 %v322
        %v6990 = vpop.f32.mrf.mxu0
        %v6991 = vadd.f32 %v6890, %v6990
        %6992 = vmatmul.f32.gmra.mxu0 %v324
        %v6993 = vpop.f32.mrf.mxu0
        %v6994 = vadd.f32 %v6893, %v6993
        %6995 = vmatmul.f32.gmra.mxu0 %v326
        %v6996 = vpop.f32.mrf.mxu0
        %v6997 = vadd.f32 %v6896, %v6996
        %6998 = vmatmul.f32.gmra.mxu0 %v328
        %v6999 = vpop.f32.mrf.mxu0
        %v7000 = vadd.f32 %v6899, %v6999
        %7001 = vmatmul.f32.gmra.mxu0 %v330
        %v7002 = vpop.f32.mrf.mxu0
        %v7003 = vadd.f32 %v6902, %v7002
        %7004 = vdwg.mxu0
        %v7005 = vmax.f32 %v6720, 0.0
        %v7006 = vmax.f32 %v6922, 0.0
        %v7007 = vmax.f32 %v6723, 0.0
        %v7008 = vmax.f32 %v6925, 0.0
        %v7009 = vmax.f32 %v6726, 0.0
        %v7010 = vmax.f32 %v6928, 0.0
        %v7011 = vmax.f32 %v6729, 0.0
        %v7012 = vmax.f32 %v6931, 0.0
        %v7013 = vmax.f32 %v6732, 0.0
        %v7014 = vmax.f32 %v6934, 0.0
        %v7015 = vmax.f32 %v6735, 0.0
        %v7016 = vmax.f32 %v6937, 0.0
        %v7017 = vmax.f32 %v6738, 0.0
        %v7018 = vmax.f32 %v6940, 0.0
        %v7019 = vmax.f32 %v6741, 0.0
        %v7020 = vmax.f32 %v6943, 0.0
        %v7021 = vmax.f32 %v6744, 0.0
        %v7022 = vmax.f32 %v6946, 0.0
        %v7023 = vmax.f32 %v6747, 0.0
        %v7024 = vmax.f32 %v6949, 0.0
        %v7025 = vmax.f32 %v6750, 0.0
        %v7026 = vmax.f32 %v6952, 0.0
        %v7027 = vmax.f32 %v6753, 0.0
        %v7028 = vmax.f32 %v6955, 0.0
        %v7029 = vmax.f32 %v6756, 0.0
        %v7030 = vmax.f32 %v6958, 0.0
        %v7031 = vmax.f32 %v6759, 0.0
        %v7032 = vmax.f32 %v6961, 0.0
        %v7033 = vmax.f32 %v6762, 0.0
        %v7034 = vmax.f32 %v6964, 0.0
        %v7035 = vmax.f32 %v6765, 0.0
        %v7036 = vmax.f32 %v6967, 0.0
        %v7037 = vmax.f32 %v6768, 0.0
        %v7038 = vmax.f32 %v6970, 0.0
        %v7039 = vmax.f32 %v6771, 0.0
        %v7040 = vmax.f32 %v6973, 0.0
        %v7041 = vmax.f32 %v6774, 0.0
        %v7042 = vmax.f32 %v6976, 0.0
        %v7043 = vmax.f32 %v6777, 0.0
        %v7044 = vmax.f32 %v6979, 0.0
        %v7045 = vmax.f32 %v6780, 0.0
        %v7046 = vmax.f32 %v6982, 0.0
        %v7047 = vmax.f32 %v6783, 0.0
        %v7048 = vmax.f32 %v6985, 0.0
        %v7049 = vmax.f32 %v6786, 0.0
        %v7050 = vmax.f32 %v6988, 0.0
        %v7051 = vmax.f32 %v6789, 0.0
        %v7052 = vmax.f32 %v6991, 0.0
        %v7053 = vmax.f32 %v6792, 0.0
        %v7054 = vmax.f32 %v6994, 0.0
        %v7055 = vmax.f32 %v6795, 0.0
        %v7056 = vmax.f32 %v6997, 0.0
        %v7057 = vmax.f32 %v6798, 0.0
        %v7058 = vmax.f32 %v7000, 0.0
        %v7059 = vmax.f32 %v6801, 0.0
        %v7060 = vmax.f32 %v7003, 0.0
        %v7061 = vmin.f32 %v7005, 1.0
        %v7062 = vmin.f32 %v7006, 1.0
        %v7063 = vmin.f32 %v7007, 1.0
        %v7064 = vmin.f32 %v7008, 1.0
        %v7065 = vmin.f32 %v7009, 1.0
        %v7066 = vmin.f32 %v7010, 1.0
        %v7067 = vmin.f32 %v7011, 1.0
        %v7068 = vmin.f32 %v7012, 1.0
        %v7069 = vmin.f32 %v7013, 1.0
        %v7070 = vmin.f32 %v7014, 1.0
        %v7071 = vmin.f32 %v7015, 1.0
        %v7072 = vmin.f32 %v7016, 1.0
        %v7073 = vmin.f32 %v7017, 1.0
        %v7074 = vmin.f32 %v7018, 1.0
        %v7075 = vmin.f32 %v7019, 1.0
        %v7076 = vmin.f32 %v7020, 1.0
        %v7077 = vmin.f32 %v7021, 1.0
        %v7078 = vmin.f32 %v7022, 1.0
        %v7079 = vmin.f32 %v7023, 1.0
        %v7080 = vmin.f32 %v7024, 1.0
        %v7081 = vmin.f32 %v7025, 1.0
        %v7082 = vmin.f32 %v7026, 1.0
        %v7083 = vmin.f32 %v7027, 1.0
        %v7084 = vmin.f32 %v7028, 1.0
        %v7085 = vmin.f32 %v7029, 1.0
        %v7086 = vmin.f32 %v7030, 1.0
        %v7087 = vmin.f32 %v7031, 1.0
        %v7088 = vmin.f32 %v7032, 1.0
        %v7089 = vmin.f32 %v7033, 1.0
        %v7090 = vmin.f32 %v7034, 1.0
        %v7091 = vmin.f32 %v7035, 1.0
        %v7092 = vmin.f32 %v7036, 1.0
        %v7093 = vmin.f32 %v7037, 1.0
        %v7094 = vmin.f32 %v7038, 1.0
        %v7095 = vmin.f32 %v7039, 1.0
        %v7096 = vmin.f32 %v7040, 1.0
        %v7097 = vmin.f32 %v7041, 1.0
        %v7098 = vmin.f32 %v7042, 1.0
        %v7099 = vmin.f32 %v7043, 1.0
        %v7100 = vmin.f32 %v7044, 1.0
        %v7101 = vmin.f32 %v7045, 1.0
        %v7102 = vmin.f32 %v7046, 1.0
        %v7103 = vmin.f32 %v7047, 1.0
        %v7104 = vmin.f32 %v7048, 1.0
        %v7105 = vmin.f32 %v7049, 1.0
        %v7106 = vmin.f32 %v7050, 1.0
        %v7107 = vmin.f32 %v7051, 1.0
        %v7108 = vmin.f32 %v7052, 1.0
        %v7109 = vmin.f32 %v7053, 1.0
        %v7110 = vmin.f32 %v7054, 1.0
        %v7111 = vmin.f32 %v7055, 1.0
        %v7112 = vmin.f32 %v7056, 1.0
        %v7113 = vmin.f32 %v7057, 1.0
        %v7114 = vmin.f32 %v7058, 1.0
        %v7115 = vmin.f32 %v7059, 1.0
        %v7116 = vmin.f32 %v7060, 1.0
        %v7117 = vmul.f32 %v7061, 3.826981
        %v7118 = vmul.f32 %v7062, 3.826981
        %v7119 = vmul.f32 %v7063, 3.826981
        %v7120 = vmul.f32 %v7064, 3.826981
        %v7121 = vmul.f32 %v7065, 3.826981
        %v7122 = vmul.f32 %v7066, 3.826981
        %v7123 = vmul.f32 %v7067, 3.826981
        %v7124 = vmul.f32 %v7068, 3.826981
        %v7125 = vmul.f32 %v7069, 3.826981
        %v7126 = vmul.f32 %v7070, 3.826981
        %v7127 = vmul.f32 %v7071, 3.826981
        %v7128 = vmul.f32 %v7072, 3.826981
        %v7129 = vmul.f32 %v7073, 3.826981
        %v7130 = vmul.f32 %v7074, 3.826981
        %v7131 = vmul.f32 %v7075, 3.826981
        %v7132 = vmul.f32 %v7076, 3.826981
        %v7133 = vmul.f32 %v7077, 3.826981
        %v7134 = vmul.f32 %v7078, 3.826981
        %v7135 = vmul.f32 %v7079, 3.826981
        %v7136 = vmul.f32 %v7080, 3.826981
        %v7137 = vmul.f32 %v7081, 3.826981
        %v7138 = vmul.f32 %v7082, 3.826981
        %v7139 = vmul.f32 %v7083, 3.826981
        %v7140 = vmul.f32 %v7084, 3.826981
        %v7141 = vmul.f32 %v7085, 3.826981
        %v7142 = vmul.f32 %v7086, 3.826981
        %v7143 = vmul.f32 %v7087, 3.826981
        %v7144 = vmul.f32 %v7088, 3.826981
        %v7145 = vmul.f32 %v7089, 3.826981
        %v7146 = vmul.f32 %v7090, 3.826981
        %v7147 = vmul.f32 %v7091, 3.826981
        %v7148 = vmul.f32 %v7092, 3.826981
        %v7149 = vmul.f32 %v7093, 3.826981
        %v7150 = vmul.f32 %v7094, 3.826981
        %v7151 = vmul.f32 %v7095, 3.826981
        %v7152 = vmul.f32 %v7096, 3.826981
        %v7153 = vmul.f32 %v7097, 3.826981
        %v7154 = vmul.f32 %v7098, 3.826981
        %v7155 = vmul.f32 %v7099, 3.826981
        %v7156 = vmul.f32 %v7100, 3.826981
        %v7157 = vmul.f32 %v7101, 3.826981
        %v7158 = vmul.f32 %v7102, 3.826981
        %v7159 = vmul.f32 %v7103, 3.826981
        %v7160 = vmul.f32 %v7104, 3.826981
        %v7161 = vmul.f32 %v7105, 3.826981
        %v7162 = vmul.f32 %v7106, 3.826981
        %v7163 = vmul.f32 %v7107, 3.826981
        %v7164 = vmul.f32 %v7108, 3.826981
        %v7165 = vmul.f32 %v7109, 3.826981
        %v7166 = vmul.f32 %v7110, 3.826981
        %v7167 = vmul.f32 %v7111, 3.826981
        %v7168 = vmul.f32 %v7112, 3.826981
        %v7169 = vmul.f32 %v7113, 3.826981
        %v7170 = vmul.f32 %v7114, 3.826981
        %v7171 = vmul.f32 %v7115, 3.826981
        %v7172 = vmul.f32 %v7116, 3.826981
        %v7173 = vadd.f32 %v7117, -1.7520971
        %v7174 = vadd.f32 %v7118, -1.7520971
        %v7175 = vadd.f32 %v7119, -1.7520971
        %v7176 = vadd.f32 %v7120, -1.7520971
        %v7177 = vadd.f32 %v7121, -1.7520971
        %v7178 = vadd.f32 %v7122, -1.7520971
        %v7179 = vadd.f32 %v7123, -1.7520971
        %v7180 = vadd.f32 %v7124, -1.7520971
        %v7181 = vadd.f32 %v7125, -1.7520971
        %v7182 = vadd.f32 %v7126, -1.7520971
        %v7183 = vadd.f32 %v7127, -1.7520971
        %v7184 = vadd.f32 %v7128, -1.7520971
        %v7185 = vadd.f32 %v7129, -1.7520971
        %v7186 = vadd.f32 %v7130, -1.7520971
        %v7187 = vadd.f32 %v7131, -1.7520971
        %v7188 = vadd.f32 %v7132, -1.7520971
        %v7189 = vadd.f32 %v7133, -1.7520971
        %v7190 = vadd.f32 %v7134, -1.7520971
        %v7191 = vadd.f32 %v7135, -1.7520971
        %v7192 = vadd.f32 %v7136, -1.7520971
        %v7193 = vadd.f32 %v7137, -1.7520971
        %v7194 = vadd.f32 %v7138, -1.7520971
        %v7195 = vadd.f32 %v7139, -1.7520971
        %v7196 = vadd.f32 %v7140, -1.7520971
        %v7197 = vadd.f32 %v7141, -1.7520971
        %v7198 = vadd.f32 %v7142, -1.7520971
        %v7199 = vadd.f32 %v7143, -1.7520971
        %v7200 = vadd.f32 %v7144, -1.7520971
        %v7201 = vadd.f32 %v7145, -1.7520971
        %v7202 = vadd.f32 %v7146, -1.7520971
        %v7203 = vadd.f32 %v7147, -1.7520971
        %v7204 = vadd.f32 %v7148, -1.7520971
        %v7205 = vadd.f32 %v7149, -1.7520971
        %v7206 = vadd.f32 %v7150, -1.7520971
        %v7207 = vadd.f32 %v7151, -1.7520971
        %v7208 = vadd.f32 %v7152, -1.7520971
        %v7209 = vadd.f32 %v7153, -1.7520971
        %v7210 = vadd.f32 %v7154, -1.7520971
        %v7211 = vadd.f32 %v7155, -1.7520971
        %v7212 = vadd.f32 %v7156, -1.7520971
        %v7213 = vadd.f32 %v7157, -1.7520971
        %v7214 = vadd.f32 %v7158, -1.7520971
        %v7215 = vadd.f32 %v7159, -1.7520971
        %v7216 = vadd.f32 %v7160, -1.7520971
        %v7217 = vadd.f32 %v7161, -1.7520971
        %v7218 = vadd.f32 %v7162, -1.7520971
        %v7219 = vadd.f32 %v7163, -1.7520971
        %v7220 = vadd.f32 %v7164, -1.7520971
        %v7221 = vadd.f32 %v7165, -1.7520971
        %v7222 = vadd.f32 %v7166, -1.7520971
        %v7223 = vadd.f32 %v7167, -1.7520971
        %v7224 = vadd.f32 %v7168, -1.7520971
        %v7225 = vadd.f32 %v7169, -1.7520971
        %v7226 = vadd.f32 %v7170, -1.7520971
        %v7227 = vadd.f32 %v7171, -1.7520971
        %v7228 = vadd.f32 %v7172, -1.7520971
        %s7229 = scalar_lea.vmem %s208, 1792 [#allocation8]
        %7230 = vst [vmem:[%s7229] sm:$0xff] %v7173
        %7231 = vst.msk [vmem:[%s7229 + $0x8] sm:$0xff] %vm1744, %v7174
        %7232 = vst [vmem:[%s7229 + $0x10] sm:$0xff] %v7175
        %7233 = vst.msk [vmem:[%s7229 + $0x18] sm:$0xff] %vm1744, %v7176
        %7234 = vst [vmem:[%s7229 + $0x20] sm:$0xff] %v7177
        %7235 = vst.msk [vmem:[%s7229 + $0x28] sm:$0xff] %vm1744, %v7178
        %7236 = vst [vmem:[%s7229 + $0x30] sm:$0xff] %v7179
        %7237 = vst.msk [vmem:[%s7229 + $0x38] sm:$0xff] %vm1744, %v7180
        %7238 = vst [vmem:[%s7229 + $0x40] sm:$0xff] %v7181
        %7239 = vst.msk [vmem:[%s7229 + $0x48] sm:$0xff] %vm1744, %v7182
        %7240 = vst [vmem:[%s7229 + $0x50] sm:$0xff] %v7183
        %7241 = vst.msk [vmem:[%s7229 + $0x58] sm:$0xff] %vm1744, %v7184
        %7242 = vst [vmem:[%s7229 + $0x60] sm:$0xff] %v7185
        %7243 = vst.msk [vmem:[%s7229 + $0x68] sm:$0xff] %vm1744, %v7186
        %7244 = vst [vmem:[%s7229 + $0x70] sm:$0xff] %v7187
        %7245 = vst.msk [vmem:[%s7229 + $0x78] sm:$0xff] %vm1744, %v7188
        %7246 = vst [vmem:[%s7229 + $0x80] sm:$0xff] %v7189
        %7247 = vst.msk [vmem:[%s7229 + $0x88] sm:$0xff] %vm1744, %v7190
        %7248 = vst [vmem:[%s7229 + $0x90] sm:$0xff] %v7191
        %7249 = vst.msk [vmem:[%s7229 + $0x98] sm:$0xff] %vm1744, %v7192
        %7250 = vst [vmem:[%s7229 + $0xa0] sm:$0xff] %v7193
        %7251 = vst.msk [vmem:[%s7229 + $0xa8] sm:$0xff] %vm1744, %v7194
        %7252 = vst [vmem:[%s7229 + $0xb0] sm:$0xff] %v7195
        %7253 = vst.msk [vmem:[%s7229 + $0xb8] sm:$0xff] %vm1744, %v7196
        %7254 = vst [vmem:[%s7229 + $0xc0] sm:$0xff] %v7197
        %7255 = vst.msk [vmem:[%s7229 + $0xc8] sm:$0xff] %vm1744, %v7198
        %7256 = vst [vmem:[%s7229 + $0xd0] sm:$0xff] %v7199
        %7257 = vst.msk [vmem:[%s7229 + $0xd8] sm:$0xff] %vm1744, %v7200
        %7258 = vst [vmem:[%s7229 + $0xe0] sm:$0xff] %v7201
        %7259 = vst.msk [vmem:[%s7229 + $0xe8] sm:$0xff] %vm1744, %v7202
        %7260 = vst [vmem:[%s7229 + $0xf0] sm:$0xff] %v7203
        %7261 = vst.msk [vmem:[%s7229 + $0xf8] sm:$0xff] %vm1744, %v7204
        %7262 = vst [vmem:[%s7229 + $0x100] sm:$0xff] %v7205
        %7263 = vst.msk [vmem:[%s7229 + $0x108] sm:$0xff] %vm1744, %v7206
        %7264 = vst [vmem:[%s7229 + $0x110] sm:$0xff] %v7207
        %7265 = vst.msk [vmem:[%s7229 + $0x118] sm:$0xff] %vm1744, %v7208
        %7266 = vst [vmem:[%s7229 + $0x120] sm:$0xff] %v7209
        %7267 = vst.msk [vmem:[%s7229 + $0x128] sm:$0xff] %vm1744, %v7210
        %7268 = vst [vmem:[%s7229 + $0x130] sm:$0xff] %v7211
        %7269 = vst.msk [vmem:[%s7229 + $0x138] sm:$0xff] %vm1744, %v7212
        %7270 = vst [vmem:[%s7229 + $0x140] sm:$0xff] %v7213
        %7271 = vst.msk [vmem:[%s7229 + $0x148] sm:$0xff] %vm1744, %v7214
        %7272 = vst [vmem:[%s7229 + $0x150] sm:$0xff] %v7215
        %7273 = vst.msk [vmem:[%s7229 + $0x158] sm:$0xff] %vm1744, %v7216
        %7274 = vst [vmem:[%s7229 + $0x160] sm:$0xff] %v7217
        %7275 = vst.msk [vmem:[%s7229 + $0x168] sm:$0xff] %vm1744, %v7218
        %7276 = vst [vmem:[%s7229 + $0x170] sm:$0xff] %v7219
        %7277 = vst.msk [vmem:[%s7229 + $0x178] sm:$0xff] %vm1744, %v7220
        %7278 = vst [vmem:[%s7229 + $0x180] sm:$0xff] %v7221
        %7279 = vst.msk [vmem:[%s7229 + $0x188] sm:$0xff] %vm1744, %v7222
        %7280 = vst [vmem:[%s7229 + $0x190] sm:$0xff] %v7223
        %7281 = vst.msk [vmem:[%s7229 + $0x198] sm:$0xff] %vm1744, %v7224
        %7282 = vst [vmem:[%s7229 + $0x1a0] sm:$0xff] %v7225
        %7283 = vst.msk [vmem:[%s7229 + $0x1a8] sm:$0xff] %vm1744, %v7226
        %7284 = vst [vmem:[%s7229 + $0x1b0] sm:$0xff] %v7227
        %7285 = vst.msk [vmem:[%s7229 + $0x1b8] sm:$0xff] %vm1744, %v7228
        %v7286 = vld [vmem:[%s3349 + $0x400] sm:$0xff]
        %v7287 = vld [vmem:[%s3349 + $0x408] sm:$0xff]
        %v7288 = vld [vmem:[%s3349 + $0x410] sm:$0xff]
        %v7289 = vld [vmem:[%s3349 + $0x418] sm:$0xff]
        %v7290 = vld [vmem:[%s3349 + $0x420] sm:$0xff]
        %v7291 = vld [vmem:[%s3349 + $0x428] sm:$0xff]
        %v7292 = vld [vmem:[%s3349 + $0x430] sm:$0xff]
        %v7293 = vld [vmem:[%s3349 + $0x438] sm:$0xff]
        %v7294 = vld [vmem:[%s3349 + $0x440] sm:$0xff]
        %v7295 = vld [vmem:[%s3349 + $0x448] sm:$0xff]
        %v7296 = vld [vmem:[%s3349 + $0x450] sm:$0xff]
        %v7297 = vld [vmem:[%s3349 + $0x458] sm:$0xff]
        %v7298 = vld [vmem:[%s3349 + $0x460] sm:$0xff]
        %v7299 = vld [vmem:[%s3349 + $0x468] sm:$0xff]
        %v7300 = vld [vmem:[%s3349 + $0x470] sm:$0xff]
        %v7301 = vld [vmem:[%s3349 + $0x478] sm:$0xff]
        %v7302 = vld [vmem:[%s3349 + $0x480] sm:$0xff]
        %v7303 = vld [vmem:[%s3349 + $0x488] sm:$0xff]
        %v7304 = vld [vmem:[%s3349 + $0x490] sm:$0xff]
        %v7305 = vld [vmem:[%s3349 + $0x498] sm:$0xff]
        %v7306 = vld [vmem:[%s3349 + $0x4a0] sm:$0xff]
        %v7307 = vld [vmem:[%s3349 + $0x4a8] sm:$0xff]
        %v7308 = vld [vmem:[%s3349 + $0x4b0] sm:$0xff]
        %v7309 = vld [vmem:[%s3349 + $0x4b8] sm:$0xff]
        %v7310 = vld [vmem:[%s3349 + $0x4c0] sm:$0xff]
        %v7311 = vld [vmem:[%s3349 + $0x4c8] sm:$0xff]
        %v7312 = vld [vmem:[%s3349 + $0x4d0] sm:$0xff]
        %v7313 = vld [vmem:[%s3349 + $0x4d8] sm:$0xff]
        %v7314 = vld [vmem:[%s3349 + $0x4e0] sm:$0xff]
        %v7315 = vld [vmem:[%s3349 + $0x4e8] sm:$0xff]
        %v7316 = vld [vmem:[%s3349 + $0x4f0] sm:$0xff]
        %v7317 = vld [vmem:[%s3349 + $0x4f8] sm:$0xff]
        %v7318 = vld [vmem:[%s3349 + $0x500] sm:$0xff]
        %v7319 = vld [vmem:[%s3349 + $0x508] sm:$0xff]
        %v7320 = vld [vmem:[%s3349 + $0x510] sm:$0xff]
        %v7321 = vld [vmem:[%s3349 + $0x518] sm:$0xff]
        %v7322 = vld [vmem:[%s3349 + $0x520] sm:$0xff]
        %v7323 = vld [vmem:[%s3349 + $0x528] sm:$0xff]
        %v7324 = vld [vmem:[%s3349 + $0x530] sm:$0xff]
        %v7325 = vld [vmem:[%s3349 + $0x538] sm:$0xff]
        %v7326 = vld [vmem:[%s3349 + $0x540] sm:$0xff]
        %v7327 = vld [vmem:[%s3349 + $0x548] sm:$0xff]
        %v7328 = vld [vmem:[%s3349 + $0x550] sm:$0xff]
        %v7329 = vld [vmem:[%s3349 + $0x558] sm:$0xff]
        %v7330 = vld [vmem:[%s3349 + $0x560] sm:$0xff]
        %v7331 = vld [vmem:[%s3349 + $0x568] sm:$0xff]
        %v7332 = vld [vmem:[%s3349 + $0x570] sm:$0xff]
        %v7333 = vld [vmem:[%s3349 + $0x578] sm:$0xff]
        %v7334 = vld [vmem:[%s3349 + $0x580] sm:$0xff]
        %v7335 = vld [vmem:[%s3349 + $0x588] sm:$0xff]
        %v7336 = vld [vmem:[%s3349 + $0x590] sm:$0xff]
        %v7337 = vld [vmem:[%s3349 + $0x598] sm:$0xff]
        %v7338 = vld [vmem:[%s3349 + $0x5a0] sm:$0xff]
        %v7339 = vld [vmem:[%s3349 + $0x5a8] sm:$0xff]
        %v7340 = vld [vmem:[%s3349 + $0x5b0] sm:$0xff]
        %v7341 = vld [vmem:[%s3349 + $0x5b8] sm:$0xff]
        %v7342 = vld [vmem:[%s3349 + $0x5c0] sm:$0xff]
        %v7343 = vld [vmem:[%s3349 + $0x5c8] sm:$0xff]
        %v7344 = vld [vmem:[%s3349 + $0x5d0] sm:$0xff]
        %v7345 = vld [vmem:[%s3349 + $0x5d8] sm:$0xff]
        %v7346 = vld [vmem:[%s3349 + $0x5e0] sm:$0xff]
        %v7347 = vld [vmem:[%s3349 + $0x5e8] sm:$0xff]
        %v7348 = vld [vmem:[%s3349 + $0x5f0] sm:$0xff]
        %v7349 = vld [vmem:[%s3349 + $0x5f8] sm:$0xff]
        %7350 = vmatpush.msra.mxu0 %v7316
        %7351 = vmatpush.msra.mxu0 %v7314
        %7352 = vmatpush.msra.mxu0 %v7312
        %7353 = vmatpush.msra.mxu0 %v7310
        %7354 = vmatpush.msra.mxu0 %v7308
        %7355 = vmatpush.msra.mxu0 %v7306
        %7356 = vmatpush.msra.mxu0 %v7304
        %7357 = vmatpush.msra.mxu0 %v7302
        %7358 = vmatpush.msra.mxu0 %v7300
        %7359 = vmatpush.msra.mxu0 %v7298
        %7360 = vmatpush.msra.mxu0 %v7296
        %7361 = vmatpush.msra.mxu0 %v7294
        %7362 = vmatpush.msra.mxu0 %v7292
        %7363 = vmatpush.msra.mxu0 %v7290
        %7364 = vmatpush.msra.mxu0 %v7288
        %7365 = vmatpush.msra.mxu0 %v7286
        %7366 = vmatmul.f32.gmra.mxu0 %v275
        %v7367 = vpop.f32.mrf.mxu0
        %v7368 = vadd.f32 0.0, %v7367
        %7369 = vmatmul.f32.gmra.mxu0 %v277
        %v7370 = vpop.f32.mrf.mxu0
        %v7371 = vadd.f32 0.0, %v7370
        %7372 = vmatmul.f32.gmra.mxu0 %v279
        %v7373 = vpop.f32.mrf.mxu0
        %v7374 = vadd.f32 0.0, %v7373
        %7375 = vmatmul.f32.gmra.mxu0 %v281
        %v7376 = vpop.f32.mrf.mxu0
        %v7377 = vadd.f32 0.0, %v7376
        %7378 = vmatmul.f32.gmra.mxu0 %v283
        %v7379 = vpop.f32.mrf.mxu0
        %v7380 = vadd.f32 0.0, %v7379
        %7381 = vmatmul.f32.gmra.mxu0 %v285
        %v7382 = vpop.f32.mrf.mxu0
        %v7383 = vadd.f32 0.0, %v7382
        %7384 = vmatmul.f32.gmra.mxu0 %v287
        %v7385 = vpop.f32.mrf.mxu0
        %v7386 = vadd.f32 0.0, %v7385
        %7387 = vmatmul.f32.gmra.mxu0 %v289
        %v7388 = vpop.f32.mrf.mxu0
        %v7389 = vadd.f32 0.0, %v7388
        %7390 = vmatmul.f32.gmra.mxu0 %v291
        %v7391 = vpop.f32.mrf.mxu0
        %v7392 = vadd.f32 0.0, %v7391
        %7393 = vmatmul.f32.gmra.mxu0 %v293
        %v7394 = vpop.f32.mrf.mxu0
        %v7395 = vadd.f32 0.0, %v7394
        %7396 = vmatmul.f32.gmra.mxu0 %v295
        %v7397 = vpop.f32.mrf.mxu0
        %v7398 = vadd.f32 0.0, %v7397
        %7399 = vmatmul.f32.gmra.mxu0 %v297
        %v7400 = vpop.f32.mrf.mxu0
        %v7401 = vadd.f32 0.0, %v7400
        %7402 = vmatmul.f32.gmra.mxu0 %v299
        %v7403 = vpop.f32.mrf.mxu0
        %v7404 = vadd.f32 0.0, %v7403
        %7405 = vmatmul.f32.gmra.mxu0 %v301
        %v7406 = vpop.f32.mrf.mxu0
        %v7407 = vadd.f32 0.0, %v7406
        %7408 = vmatmul.f32.gmra.mxu0 %v303
        %v7409 = vpop.f32.mrf.mxu0
        %v7410 = vadd.f32 0.0, %v7409
        %7411 = vmatmul.f32.gmra.mxu0 %v305
        %v7412 = vpop.f32.mrf.mxu0
        %v7413 = vadd.f32 0.0, %v7412
        %7414 = vmatmul.f32.gmra.mxu0 %v307
        %v7415 = vpop.f32.mrf.mxu0
        %v7416 = vadd.f32 0.0, %v7415
        %7417 = vmatmul.f32.gmra.mxu0 %v309
        %v7418 = vpop.f32.mrf.mxu0
        %v7419 = vadd.f32 0.0, %v7418
        %7420 = vmatmul.f32.gmra.mxu0 %v311
        %v7421 = vpop.f32.mrf.mxu0
        %v7422 = vadd.f32 0.0, %v7421
        %7423 = vmatmul.f32.gmra.mxu0 %v313
        %v7424 = vpop.f32.mrf.mxu0
        %v7425 = vadd.f32 0.0, %v7424
        %7426 = vmatmul.f32.gmra.mxu0 %v315
        %v7427 = vpop.f32.mrf.mxu0
        %v7428 = vadd.f32 0.0, %v7427
        %7429 = vmatmul.f32.gmra.mxu0 %v317
        %v7430 = vpop.f32.mrf.mxu0
        %v7431 = vadd.f32 0.0, %v7430
        %7432 = vmatmul.f32.gmra.mxu0 %v319
        %v7433 = vpop.f32.mrf.mxu0
        %v7434 = vadd.f32 0.0, %v7433
        %7435 = vmatmul.f32.gmra.mxu0 %v321
        %v7436 = vpop.f32.mrf.mxu0
        %v7437 = vadd.f32 0.0, %v7436
        %7438 = vmatmul.f32.gmra.mxu0 %v323
        %v7439 = vpop.f32.mrf.mxu0
        %v7440 = vadd.f32 0.0, %v7439
        %7441 = vmatmul.f32.gmra.mxu0 %v325
        %v7442 = vpop.f32.mrf.mxu0
        %v7443 = vadd.f32 0.0, %v7442
        %7444 = vmatmul.f32.gmra.mxu0 %v327
        %v7445 = vpop.f32.mrf.mxu0
        %v7446 = vadd.f32 0.0, %v7445
        %7447 = vmatmul.f32.gmra.mxu0 %v329
        %v7448 = vpop.f32.mrf.mxu0
        %v7449 = vadd.f32 0.0, %v7448
        %7450 = vdwg.mxu0
        %7451 = vmatpush.msra.mxu0 %v7348
        %7452 = vmatpush.msra.mxu0 %v7346
        %7453 = vmatpush.msra.mxu0 %v7344
        %7454 = vmatpush.msra.mxu0 %v7342
        %7455 = vmatpush.msra.mxu0 %v7340
        %7456 = vmatpush.msra.mxu0 %v7338
        %7457 = vmatpush.msra.mxu0 %v7336
        %7458 = vmatpush.msra.mxu0 %v7334
        %7459 = vmatpush.msra.mxu0 %v7332
        %7460 = vmatpush.msra.mxu0 %v7330
        %7461 = vmatpush.msra.mxu0 %v7328
        %7462 = vmatpush.msra.mxu0 %v7326
        %7463 = vmatpush.msra.mxu0 %v7324
        %7464 = vmatpush.msra.mxu0 %v7322
        %7465 = vmatpush.msra.mxu0 %v7320
        %7466 = vmatpush.msra.mxu0 %v7318
        %7467 = vmatmul.f32.gmra.mxu0 %v276
        %v7468 = vpop.f32.mrf.mxu0
        %v7469 = vadd.f32 %v7368, %v7468
        %7470 = vmatmul.f32.gmra.mxu0 %v278
        %v7471 = vpop.f32.mrf.mxu0
        %v7472 = vadd.f32 %v7371, %v7471
        %7473 = vmatmul.f32.gmra.mxu0 %v280
        %v7474 = vpop.f32.mrf.mxu0
        %v7475 = vadd.f32 %v7374, %v7474
        %7476 = vmatmul.f32.gmra.mxu0 %v282
        %v7477 = vpop.f32.mrf.mxu0
        %v7478 = vadd.f32 %v7377, %v7477
        %7479 = vmatmul.f32.gmra.mxu0 %v284
        %v7480 = vpop.f32.mrf.mxu0
        %v7481 = vadd.f32 %v7380, %v7480
        %7482 = vmatmul.f32.gmra.mxu0 %v286
        %v7483 = vpop.f32.mrf.mxu0
        %v7484 = vadd.f32 %v7383, %v7483
        %7485 = vmatmul.f32.gmra.mxu0 %v288
        %v7486 = vpop.f32.mrf.mxu0
        %v7487 = vadd.f32 %v7386, %v7486
        %7488 = vmatmul.f32.gmra.mxu0 %v290
        %v7489 = vpop.f32.mrf.mxu0
        %v7490 = vadd.f32 %v7389, %v7489
        %7491 = vmatmul.f32.gmra.mxu0 %v292
        %v7492 = vpop.f32.mrf.mxu0
        %v7493 = vadd.f32 %v7392, %v7492
        %7494 = vmatmul.f32.gmra.mxu0 %v294
        %v7495 = vpop.f32.mrf.mxu0
        %v7496 = vadd.f32 %v7395, %v7495
        %7497 = vmatmul.f32.gmra.mxu0 %v296
        %v7498 = vpop.f32.mrf.mxu0
        %v7499 = vadd.f32 %v7398, %v7498
        %7500 = vmatmul.f32.gmra.mxu0 %v298
        %v7501 = vpop.f32.mrf.mxu0
        %v7502 = vadd.f32 %v7401, %v7501
        %7503 = vmatmul.f32.gmra.mxu0 %v300
        %v7504 = vpop.f32.mrf.mxu0
        %v7505 = vadd.f32 %v7404, %v7504
        %7506 = vmatmul.f32.gmra.mxu0 %v302
        %v7507 = vpop.f32.mrf.mxu0
        %v7508 = vadd.f32 %v7407, %v7507
        %7509 = vmatmul.f32.gmra.mxu0 %v304
        %v7510 = vpop.f32.mrf.mxu0
        %v7511 = vadd.f32 %v7410, %v7510
        %7512 = vmatmul.f32.gmra.mxu0 %v306
        %v7513 = vpop.f32.mrf.mxu0
        %v7514 = vadd.f32 %v7413, %v7513
        %7515 = vmatmul.f32.gmra.mxu0 %v308
        %v7516 = vpop.f32.mrf.mxu0
        %v7517 = vadd.f32 %v7416, %v7516
        %7518 = vmatmul.f32.gmra.mxu0 %v310
        %v7519 = vpop.f32.mrf.mxu0
        %v7520 = vadd.f32 %v7419, %v7519
        %7521 = vmatmul.f32.gmra.mxu0 %v312
        %v7522 = vpop.f32.mrf.mxu0
        %v7523 = vadd.f32 %v7422, %v7522
        %7524 = vmatmul.f32.gmra.mxu0 %v314
        %v7525 = vpop.f32.mrf.mxu0
        %v7526 = vadd.f32 %v7425, %v7525
        %7527 = vmatmul.f32.gmra.mxu0 %v316
        %v7528 = vpop.f32.mrf.mxu0
        %v7529 = vadd.f32 %v7428, %v7528
        %7530 = vmatmul.f32.gmra.mxu0 %v318
        %v7531 = vpop.f32.mrf.mxu0
        %v7532 = vadd.f32 %v7431, %v7531
        %7533 = vmatmul.f32.gmra.mxu0 %v320
        %v7534 = vpop.f32.mrf.mxu0
        %v7535 = vadd.f32 %v7434, %v7534
        %7536 = vmatmul.f32.gmra.mxu0 %v322
        %v7537 = vpop.f32.mrf.mxu0
        %v7538 = vadd.f32 %v7437, %v7537
        %7539 = vmatmul.f32.gmra.mxu0 %v324
        %v7540 = vpop.f32.mrf.mxu0
        %v7541 = vadd.f32 %v7440, %v7540
        %7542 = vmatmul.f32.gmra.mxu0 %v326
        %v7543 = vpop.f32.mrf.mxu0
        %v7544 = vadd.f32 %v7443, %v7543
        %7545 = vmatmul.f32.gmra.mxu0 %v328
        %v7546 = vpop.f32.mrf.mxu0
        %v7547 = vadd.f32 %v7446, %v7546
        %7548 = vmatmul.f32.gmra.mxu0 %v330
        %v7549 = vpop.f32.mrf.mxu0
        %v7550 = vadd.f32 %v7449, %v7549
        %7551 = vdwg.mxu0
        %7552 = vmatpush.msra.mxu0 %v7317
        %7553 = vmatpush.msra.mxu0 %v7315
        %7554 = vmatpush.msra.mxu0 %v7313
        %7555 = vmatpush.msra.mxu0 %v7311
        %7556 = vmatpush.msra.mxu0 %v7309
        %7557 = vmatpush.msra.mxu0 %v7307
        %7558 = vmatpush.msra.mxu0 %v7305
        %7559 = vmatpush.msra.mxu0 %v7303
        %7560 = vmatpush.msra.mxu0 %v7301
        %7561 = vmatpush.msra.mxu0 %v7299
        %7562 = vmatpush.msra.mxu0 %v7297
        %7563 = vmatpush.msra.mxu0 %v7295
        %7564 = vmatpush.msra.mxu0 %v7293
        %7565 = vmatpush.msra.mxu0 %v7291
        %7566 = vmatpush.msra.mxu0 %v7289
        %7567 = vmatpush.msra.mxu0 %v7287
        %7568 = vmatmul.f32.gmra.mxu0 %v275
        %v7569 = vpop.f32.mrf.mxu0
        %v7570 = vadd.f32 0.0, %v7569
        %7571 = vmatmul.f32.gmra.mxu0 %v277
        %v7572 = vpop.f32.mrf.mxu0
        %v7573 = vadd.f32 0.0, %v7572
        %7574 = vmatmul.f32.gmra.mxu0 %v279
        %v7575 = vpop.f32.mrf.mxu0
        %v7576 = vadd.f32 0.0, %v7575
        %7577 = vmatmul.f32.gmra.mxu0 %v281
        %v7578 = vpop.f32.mrf.mxu0
        %v7579 = vadd.f32 0.0, %v7578
        %7580 = vmatmul.f32.gmra.mxu0 %v283
        %v7581 = vpop.f32.mrf.mxu0
        %v7582 = vadd.f32 0.0, %v7581
        %7583 = vmatmul.f32.gmra.mxu0 %v285
        %v7584 = vpop.f32.mrf.mxu0
        %v7585 = vadd.f32 0.0, %v7584
        %7586 = vmatmul.f32.gmra.mxu0 %v287
        %v7587 = vpop.f32.mrf.mxu0
        %v7588 = vadd.f32 0.0, %v7587
        %7589 = vmatmul.f32.gmra.mxu0 %v289
        %v7590 = vpop.f32.mrf.mxu0
        %v7591 = vadd.f32 0.0, %v7590
        %7592 = vmatmul.f32.gmra.mxu0 %v291
        %v7593 = vpop.f32.mrf.mxu0
        %v7594 = vadd.f32 0.0, %v7593
        %7595 = vmatmul.f32.gmra.mxu0 %v293
        %v7596 = vpop.f32.mrf.mxu0
        %v7597 = vadd.f32 0.0, %v7596
        %7598 = vmatmul.f32.gmra.mxu0 %v295
        %v7599 = vpop.f32.mrf.mxu0
        %v7600 = vadd.f32 0.0, %v7599
        %7601 = vmatmul.f32.gmra.mxu0 %v297
        %v7602 = vpop.f32.mrf.mxu0
        %v7603 = vadd.f32 0.0, %v7602
        %7604 = vmatmul.f32.gmra.mxu0 %v299
        %v7605 = vpop.f32.mrf.mxu0
        %v7606 = vadd.f32 0.0, %v7605
        %7607 = vmatmul.f32.gmra.mxu0 %v301
        %v7608 = vpop.f32.mrf.mxu0
        %v7609 = vadd.f32 0.0, %v7608
        %7610 = vmatmul.f32.gmra.mxu0 %v303
        %v7611 = vpop.f32.mrf.mxu0
        %v7612 = vadd.f32 0.0, %v7611
        %7613 = vmatmul.f32.gmra.mxu0 %v305
        %v7614 = vpop.f32.mrf.mxu0
        %v7615 = vadd.f32 0.0, %v7614
        %7616 = vmatmul.f32.gmra.mxu0 %v307
        %v7617 = vpop.f32.mrf.mxu0
        %v7618 = vadd.f32 0.0, %v7617
        %7619 = vmatmul.f32.gmra.mxu0 %v309
        %v7620 = vpop.f32.mrf.mxu0
        %v7621 = vadd.f32 0.0, %v7620
        %7622 = vmatmul.f32.gmra.mxu0 %v311
        %v7623 = vpop.f32.mrf.mxu0
        %v7624 = vadd.f32 0.0, %v7623
        %7625 = vmatmul.f32.gmra.mxu0 %v313
        %v7626 = vpop.f32.mrf.mxu0
        %v7627 = vadd.f32 0.0, %v7626
        %7628 = vmatmul.f32.gmra.mxu0 %v315
        %v7629 = vpop.f32.mrf.mxu0
        %v7630 = vadd.f32 0.0, %v7629
        %7631 = vmatmul.f32.gmra.mxu0 %v317
        %v7632 = vpop.f32.mrf.mxu0
        %v7633 = vadd.f32 0.0, %v7632
        %7634 = vmatmul.f32.gmra.mxu0 %v319
        %v7635 = vpop.f32.mrf.mxu0
        %v7636 = vadd.f32 0.0, %v7635
        %7637 = vmatmul.f32.gmra.mxu0 %v321
        %v7638 = vpop.f32.mrf.mxu0
        %v7639 = vadd.f32 0.0, %v7638
        %7640 = vmatmul.f32.gmra.mxu0 %v323
        %v7641 = vpop.f32.mrf.mxu0
        %v7642 = vadd.f32 0.0, %v7641
        %7643 = vmatmul.f32.gmra.mxu0 %v325
        %v7644 = vpop.f32.mrf.mxu0
        %v7645 = vadd.f32 0.0, %v7644
        %7646 = vmatmul.f32.gmra.mxu0 %v327
        %v7647 = vpop.f32.mrf.mxu0
        %v7648 = vadd.f32 0.0, %v7647
        %7649 = vmatmul.f32.gmra.mxu0 %v329
        %v7650 = vpop.f32.mrf.mxu0
        %v7651 = vadd.f32 0.0, %v7650
        %7652 = vdwg.mxu0
        %7653 = vmatpush.msra.mxu0 %v7349
        %7654 = vmatpush.msra.mxu0 %v7347
        %7655 = vmatpush.msra.mxu0 %v7345
        %7656 = vmatpush.msra.mxu0 %v7343
        %7657 = vmatpush.msra.mxu0 %v7341
        %7658 = vmatpush.msra.mxu0 %v7339
        %7659 = vmatpush.msra.mxu0 %v7337
        %7660 = vmatpush.msra.mxu0 %v7335
        %7661 = vmatpush.msra.mxu0 %v7333
        %7662 = vmatpush.msra.mxu0 %v7331
        %7663 = vmatpush.msra.mxu0 %v7329
        %7664 = vmatpush.msra.mxu0 %v7327
        %7665 = vmatpush.msra.mxu0 %v7325
        %7666 = vmatpush.msra.mxu0 %v7323
        %7667 = vmatpush.msra.mxu0 %v7321
        %7668 = vmatpush.msra.mxu0 %v7319
        %7669 = vmatmul.f32.gmra.mxu0 %v276
        %v7670 = vpop.f32.mrf.mxu0
        %v7671 = vadd.f32 %v7570, %v7670
        %7672 = vmatmul.f32.gmra.mxu0 %v278
        %v7673 = vpop.f32.mrf.mxu0
        %v7674 = vadd.f32 %v7573, %v7673
        %7675 = vmatmul.f32.gmra.mxu0 %v280
        %v7676 = vpop.f32.mrf.mxu0
        %v7677 = vadd.f32 %v7576, %v7676
        %7678 = vmatmul.f32.gmra.mxu0 %v282
        %v7679 = vpop.f32.mrf.mxu0
        %v7680 = vadd.f32 %v7579, %v7679
        %7681 = vmatmul.f32.gmra.mxu0 %v284
        %v7682 = vpop.f32.mrf.mxu0
        %v7683 = vadd.f32 %v7582, %v7682
        %7684 = vmatmul.f32.gmra.mxu0 %v286
        %v7685 = vpop.f32.mrf.mxu0
        %v7686 = vadd.f32 %v7585, %v7685
        %7687 = vmatmul.f32.gmra.mxu0 %v288
        %v7688 = vpop.f32.mrf.mxu0
        %v7689 = vadd.f32 %v7588, %v7688
        %7690 = vmatmul.f32.gmra.mxu0 %v290
        %v7691 = vpop.f32.mrf.mxu0
        %v7692 = vadd.f32 %v7591, %v7691
        %7693 = vmatmul.f32.gmra.mxu0 %v292
        %v7694 = vpop.f32.mrf.mxu0
        %v7695 = vadd.f32 %v7594, %v7694
        %7696 = vmatmul.f32.gmra.mxu0 %v294
        %v7697 = vpop.f32.mrf.mxu0
        %v7698 = vadd.f32 %v7597, %v7697
        %7699 = vmatmul.f32.gmra.mxu0 %v296
        %v7700 = vpop.f32.mrf.mxu0
        %v7701 = vadd.f32 %v7600, %v7700
        %7702 = vmatmul.f32.gmra.mxu0 %v298
        %v7703 = vpop.f32.mrf.mxu0
        %v7704 = vadd.f32 %v7603, %v7703
        %7705 = vmatmul.f32.gmra.mxu0 %v300
        %v7706 = vpop.f32.mrf.mxu0
        %v7707 = vadd.f32 %v7606, %v7706
        %7708 = vmatmul.f32.gmra.mxu0 %v302
        %v7709 = vpop.f32.mrf.mxu0
        %v7710 = vadd.f32 %v7609, %v7709
        %7711 = vmatmul.f32.gmra.mxu0 %v304
        %v7712 = vpop.f32.mrf.mxu0
        %v7713 = vadd.f32 %v7612, %v7712
        %7714 = vmatmul.f32.gmra.mxu0 %v306
        %v7715 = vpop.f32.mrf.mxu0
        %v7716 = vadd.f32 %v7615, %v7715
        %7717 = vmatmul.f32.gmra.mxu0 %v308
        %v7718 = vpop.f32.mrf.mxu0
        %v7719 = vadd.f32 %v7618, %v7718
        %7720 = vmatmul.f32.gmra.mxu0 %v310
        %v7721 = vpop.f32.mrf.mxu0
        %v7722 = vadd.f32 %v7621, %v7721
        %7723 = vmatmul.f32.gmra.mxu0 %v312
        %v7724 = vpop.f32.mrf.mxu0
        %v7725 = vadd.f32 %v7624, %v7724
        %7726 = vmatmul.f32.gmra.mxu0 %v314
        %v7727 = vpop.f32.mrf.mxu0
        %v7728 = vadd.f32 %v7627, %v7727
        %7729 = vmatmul.f32.gmra.mxu0 %v316
        %v7730 = vpop.f32.mrf.mxu0
        %v7731 = vadd.f32 %v7630, %v7730
        %7732 = vmatmul.f32.gmra.mxu0 %v318
        %v7733 = vpop.f32.mrf.mxu0
        %v7734 = vadd.f32 %v7633, %v7733
        %7735 = vmatmul.f32.gmra.mxu0 %v320
        %v7736 = vpop.f32.mrf.mxu0
        %v7737 = vadd.f32 %v7636, %v7736
        %7738 = vmatmul.f32.gmra.mxu0 %v322
        %v7739 = vpop.f32.mrf.mxu0
        %v7740 = vadd.f32 %v7639, %v7739
        %7741 = vmatmul.f32.gmra.mxu0 %v324
        %v7742 = vpop.f32.mrf.mxu0
        %v7743 = vadd.f32 %v7642, %v7742
        %7744 = vmatmul.f32.gmra.mxu0 %v326
        %v7745 = vpop.f32.mrf.mxu0
        %v7746 = vadd.f32 %v7645, %v7745
        %7747 = vmatmul.f32.gmra.mxu0 %v328
        %v7748 = vpop.f32.mrf.mxu0
        %v7749 = vadd.f32 %v7648, %v7748
        %7750 = vmatmul.f32.gmra.mxu0 %v330
        %v7751 = vpop.f32.mrf.mxu0
        %v7752 = vadd.f32 %v7651, %v7751
        %7753 = vdwg.mxu0
        %v7754 = vmax.f32 %v7469, 0.0
        %v7755 = vmax.f32 %v7671, 0.0
        %v7756 = vmax.f32 %v7472, 0.0
        %v7757 = vmax.f32 %v7674, 0.0
        %v7758 = vmax.f32 %v7475, 0.0
        %v7759 = vmax.f32 %v7677, 0.0
        %v7760 = vmax.f32 %v7478, 0.0
        %v7761 = vmax.f32 %v7680, 0.0
        %v7762 = vmax.f32 %v7481, 0.0
        %v7763 = vmax.f32 %v7683, 0.0
        %v7764 = vmax.f32 %v7484, 0.0
        %v7765 = vmax.f32 %v7686, 0.0
        %v7766 = vmax.f32 %v7487, 0.0
        %v7767 = vmax.f32 %v7689, 0.0
        %v7768 = vmax.f32 %v7490, 0.0
        %v7769 = vmax.f32 %v7692, 0.0
        %v7770 = vmax.f32 %v7493, 0.0
        %v7771 = vmax.f32 %v7695, 0.0
        %v7772 = vmax.f32 %v7496, 0.0
        %v7773 = vmax.f32 %v7698, 0.0
        %v7774 = vmax.f32 %v7499, 0.0
        %v7775 = vmax.f32 %v7701, 0.0
        %v7776 = vmax.f32 %v7502, 0.0
        %v7777 = vmax.f32 %v7704, 0.0
        %v7778 = vmax.f32 %v7505, 0.0
        %v7779 = vmax.f32 %v7707, 0.0
        %v7780 = vmax.f32 %v7508, 0.0
        %v7781 = vmax.f32 %v7710, 0.0
        %v7782 = vmax.f32 %v7511, 0.0
        %v7783 = vmax.f32 %v7713, 0.0
        %v7784 = vmax.f32 %v7514, 0.0
        %v7785 = vmax.f32 %v7716, 0.0
        %v7786 = vmax.f32 %v7517, 0.0
        %v7787 = vmax.f32 %v7719, 0.0
        %v7788 = vmax.f32 %v7520, 0.0
        %v7789 = vmax.f32 %v7722, 0.0
        %v7790 = vmax.f32 %v7523, 0.0
        %v7791 = vmax.f32 %v7725, 0.0
        %v7792 = vmax.f32 %v7526, 0.0
        %v7793 = vmax.f32 %v7728, 0.0
        %v7794 = vmax.f32 %v7529, 0.0
        %v7795 = vmax.f32 %v7731, 0.0
        %v7796 = vmax.f32 %v7532, 0.0
        %v7797 = vmax.f32 %v7734, 0.0
        %v7798 = vmax.f32 %v7535, 0.0
        %v7799 = vmax.f32 %v7737, 0.0
        %v7800 = vmax.f32 %v7538, 0.0
        %v7801 = vmax.f32 %v7740, 0.0
        %v7802 = vmax.f32 %v7541, 0.0
        %v7803 = vmax.f32 %v7743, 0.0
        %v7804 = vmax.f32 %v7544, 0.0
        %v7805 = vmax.f32 %v7746, 0.0
        %v7806 = vmax.f32 %v7547, 0.0
        %v7807 = vmax.f32 %v7749, 0.0
        %v7808 = vmax.f32 %v7550, 0.0
        %v7809 = vmax.f32 %v7752, 0.0
        %v7810 = vmin.f32 %v7754, 1.0
        %v7811 = vmin.f32 %v7755, 1.0
        %v7812 = vmin.f32 %v7756, 1.0
        %v7813 = vmin.f32 %v7757, 1.0
        %v7814 = vmin.f32 %v7758, 1.0
        %v7815 = vmin.f32 %v7759, 1.0
        %v7816 = vmin.f32 %v7760, 1.0
        %v7817 = vmin.f32 %v7761, 1.0
        %v7818 = vmin.f32 %v7762, 1.0
        %v7819 = vmin.f32 %v7763, 1.0
        %v7820 = vmin.f32 %v7764, 1.0
        %v7821 = vmin.f32 %v7765, 1.0
        %v7822 = vmin.f32 %v7766, 1.0
        %v7823 = vmin.f32 %v7767, 1.0
        %v7824 = vmin.f32 %v7768, 1.0
        %v7825 = vmin.f32 %v7769, 1.0
        %v7826 = vmin.f32 %v7770, 1.0
        %v7827 = vmin.f32 %v7771, 1.0
        %v7828 = vmin.f32 %v7772, 1.0
        %v7829 = vmin.f32 %v7773, 1.0
        %v7830 = vmin.f32 %v7774, 1.0
        %v7831 = vmin.f32 %v7775, 1.0
        %v7832 = vmin.f32 %v7776, 1.0
        %v7833 = vmin.f32 %v7777, 1.0
        %v7834 = vmin.f32 %v7778, 1.0
        %v7835 = vmin.f32 %v7779, 1.0
        %v7836 = vmin.f32 %v7780, 1.0
        %v7837 = vmin.f32 %v7781, 1.0
        %v7838 = vmin.f32 %v7782, 1.0
        %v7839 = vmin.f32 %v7783, 1.0
        %v7840 = vmin.f32 %v7784, 1.0
        %v7841 = vmin.f32 %v7785, 1.0
        %v7842 = vmin.f32 %v7786, 1.0
        %v7843 = vmin.f32 %v7787, 1.0
        %v7844 = vmin.f32 %v7788, 1.0
        %v7845 = vmin.f32 %v7789, 1.0
        %v7846 = vmin.f32 %v7790, 1.0
        %v7847 = vmin.f32 %v7791, 1.0
        %v7848 = vmin.f32 %v7792, 1.0
        %v7849 = vmin.f32 %v7793, 1.0
        %v7850 = vmin.f32 %v7794, 1.0
        %v7851 = vmin.f32 %v7795, 1.0
        %v7852 = vmin.f32 %v7796, 1.0
        %v7853 = vmin.f32 %v7797, 1.0
        %v7854 = vmin.f32 %v7798, 1.0
        %v7855 = vmin.f32 %v7799, 1.0
        %v7856 = vmin.f32 %v7800, 1.0
        %v7857 = vmin.f32 %v7801, 1.0
        %v7858 = vmin.f32 %v7802, 1.0
        %v7859 = vmin.f32 %v7803, 1.0
        %v7860 = vmin.f32 %v7804, 1.0
        %v7861 = vmin.f32 %v7805, 1.0
        %v7862 = vmin.f32 %v7806, 1.0
        %v7863 = vmin.f32 %v7807, 1.0
        %v7864 = vmin.f32 %v7808, 1.0
        %v7865 = vmin.f32 %v7809, 1.0
        %v7866 = vmul.f32 %v7810, 3.6261168
        %v7867 = vmul.f32 %v7811, 3.6261168
        %v7868 = vmul.f32 %v7812, 3.6261168
        %v7869 = vmul.f32 %v7813, 3.6261168
        %v7870 = vmul.f32 %v7814, 3.6261168
        %v7871 = vmul.f32 %v7815, 3.6261168
        %v7872 = vmul.f32 %v7816, 3.6261168
        %v7873 = vmul.f32 %v7817, 3.6261168
        %v7874 = vmul.f32 %v7818, 3.6261168
        %v7875 = vmul.f32 %v7819, 3.6261168
        %v7876 = vmul.f32 %v7820, 3.6261168
        %v7877 = vmul.f32 %v7821, 3.6261168
        %v7878 = vmul.f32 %v7822, 3.6261168
        %v7879 = vmul.f32 %v7823, 3.6261168
        %v7880 = vmul.f32 %v7824, 3.6261168
        %v7881 = vmul.f32 %v7825, 3.6261168
        %v7882 = vmul.f32 %v7826, 3.6261168
        %v7883 = vmul.f32 %v7827, 3.6261168
        %v7884 = vmul.f32 %v7828, 3.6261168
        %v7885 = vmul.f32 %v7829, 3.6261168
        %v7886 = vmul.f32 %v7830, 3.6261168
        %v7887 = vmul.f32 %v7831, 3.6261168
        %v7888 = vmul.f32 %v7832, 3.6261168
        %v7889 = vmul.f32 %v7833, 3.6261168
        %v7890 = vmul.f32 %v7834, 3.6261168
        %v7891 = vmul.f32 %v7835, 3.6261168
        %v7892 = vmul.f32 %v7836, 3.6261168
        %v7893 = vmul.f32 %v7837, 3.6261168
        %v7894 = vmul.f32 %v7838, 3.6261168
        %v7895 = vmul.f32 %v7839, 3.6261168
        %v7896 = vmul.f32 %v7840, 3.6261168
        %v7897 = vmul.f32 %v7841, 3.6261168
        %v7898 = vmul.f32 %v7842, 3.6261168
        %v7899 = vmul.f32 %v7843, 3.6261168
        %v7900 = vmul.f32 %v7844, 3.6261168
        %v7901 = vmul.f32 %v7845, 3.6261168
        %v7902 = vmul.f32 %v7846, 3.6261168
        %v7903 = vmul.f32 %v7847, 3.6261168
        %v7904 = vmul.f32 %v7848, 3.6261168
        %v7905 = vmul.f32 %v7849, 3.6261168
        %v7906 = vmul.f32 %v7850, 3.6261168
        %v7907 = vmul.f32 %v7851, 3.6261168
        %v7908 = vmul.f32 %v7852, 3.6261168
        %v7909 = vmul.f32 %v7853, 3.6261168
        %v7910 = vmul.f32 %v7854, 3.6261168
        %v7911 = vmul.f32 %v7855, 3.6261168
        %v7912 = vmul.f32 %v7856, 3.6261168
        %v7913 = vmul.f32 %v7857, 3.6261168
        %v7914 = vmul.f32 %v7858, 3.6261168
        %v7915 = vmul.f32 %v7859, 3.6261168
        %v7916 = vmul.f32 %v7860, 3.6261168
        %v7917 = vmul.f32 %v7861, 3.6261168
        %v7918 = vmul.f32 %v7862, 3.6261168
        %v7919 = vmul.f32 %v7863, 3.6261168
        %v7920 = vmul.f32 %v7864, 3.6261168
        %v7921 = vmul.f32 %v7865, 3.6261168
        %v7922 = vadd.f32 %v7866, -1.4802197
        %v7923 = vadd.f32 %v7867, -1.4802197
        %v7924 = vadd.f32 %v7868, -1.4802197
        %v7925 = vadd.f32 %v7869, -1.4802197
        %v7926 = vadd.f32 %v7870, -1.4802197
        %v7927 = vadd.f32 %v7871, -1.4802197
        %v7928 = vadd.f32 %v7872, -1.4802197
        %v7929 = vadd.f32 %v7873, -1.4802197
        %v7930 = vadd.f32 %v7874, -1.4802197
        %v7931 = vadd.f32 %v7875, -1.4802197
        %v7932 = vadd.f32 %v7876, -1.4802197
        %v7933 = vadd.f32 %v7877, -1.4802197
        %v7934 = vadd.f32 %v7878, -1.4802197
        %v7935 = vadd.f32 %v7879, -1.4802197
        %v7936 = vadd.f32 %v7880, -1.4802197
        %v7937 = vadd.f32 %v7881, -1.4802197
        %v7938 = vadd.f32 %v7882, -1.4802197
        %v7939 = vadd.f32 %v7883, -1.4802197
        %v7940 = vadd.f32 %v7884, -1.4802197
        %v7941 = vadd.f32 %v7885, -1.4802197
        %v7942 = vadd.f32 %v7886, -1.4802197
        %v7943 = vadd.f32 %v7887, -1.4802197
        %v7944 = vadd.f32 %v7888, -1.4802197
        %v7945 = vadd.f32 %v7889, -1.4802197
        %v7946 = vadd.f32 %v7890, -1.4802197
        %v7947 = vadd.f32 %v7891, -1.4802197
        %v7948 = vadd.f32 %v7892, -1.4802197
        %v7949 = vadd.f32 %v7893, -1.4802197
        %v7950 = vadd.f32 %v7894, -1.4802197
        %v7951 = vadd.f32 %v7895, -1.4802197
        %v7952 = vadd.f32 %v7896, -1.4802197
        %v7953 = vadd.f32 %v7897, -1.4802197
        %v7954 = vadd.f32 %v7898, -1.4802197
        %v7955 = vadd.f32 %v7899, -1.4802197
        %v7956 = vadd.f32 %v7900, -1.4802197
        %v7957 = vadd.f32 %v7901, -1.4802197
        %v7958 = vadd.f32 %v7902, -1.4802197
        %v7959 = vadd.f32 %v7903, -1.4802197
        %v7960 = vadd.f32 %v7904, -1.4802197
        %v7961 = vadd.f32 %v7905, -1.4802197
        %v7962 = vadd.f32 %v7906, -1.4802197
        %v7963 = vadd.f32 %v7907, -1.4802197
        %v7964 = vadd.f32 %v7908, -1.4802197
        %v7965 = vadd.f32 %v7909, -1.4802197
        %v7966 = vadd.f32 %v7910, -1.4802197
        %v7967 = vadd.f32 %v7911, -1.4802197
        %v7968 = vadd.f32 %v7912, -1.4802197
        %v7969 = vadd.f32 %v7913, -1.4802197
        %v7970 = vadd.f32 %v7914, -1.4802197
        %v7971 = vadd.f32 %v7915, -1.4802197
        %v7972 = vadd.f32 %v7916, -1.4802197
        %v7973 = vadd.f32 %v7917, -1.4802197
        %v7974 = vadd.f32 %v7918, -1.4802197
        %v7975 = vadd.f32 %v7919, -1.4802197
        %v7976 = vadd.f32 %v7920, -1.4802197
        %v7977 = vadd.f32 %v7921, -1.4802197
        %s7978 = scalar_lea.vmem %s208, 2240 [#allocation8]
        %7979 = vst [vmem:[%s7978] sm:$0xff] %v7922
        %7980 = vst.msk [vmem:[%s7978 + $0x8] sm:$0xff] %vm1744, %v7923
        %7981 = vst [vmem:[%s7978 + $0x10] sm:$0xff] %v7924
        %7982 = vst.msk [vmem:[%s7978 + $0x18] sm:$0xff] %vm1744, %v7925
        %7983 = vst [vmem:[%s7978 + $0x20] sm:$0xff] %v7926
        %7984 = vst.msk [vmem:[%s7978 + $0x28] sm:$0xff] %vm1744, %v7927
        %7985 = vst [vmem:[%s7978 + $0x30] sm:$0xff] %v7928
        %7986 = vst.msk [vmem:[%s7978 + $0x38] sm:$0xff] %vm1744, %v7929
        %7987 = vst [vmem:[%s7978 + $0x40] sm:$0xff] %v7930
        %7988 = vst.msk [vmem:[%s7978 + $0x48] sm:$0xff] %vm1744, %v7931
        %7989 = vst [vmem:[%s7978 + $0x50] sm:$0xff] %v7932
        %7990 = vst.msk [vmem:[%s7978 + $0x58] sm:$0xff] %vm1744, %v7933
        %7991 = vst [vmem:[%s7978 + $0x60] sm:$0xff] %v7934
        %7992 = vst.msk [vmem:[%s7978 + $0x68] sm:$0xff] %vm1744, %v7935
        %7993 = vst [vmem:[%s7978 + $0x70] sm:$0xff] %v7936
        %7994 = vst.msk [vmem:[%s7978 + $0x78] sm:$0xff] %vm1744, %v7937
        %7995 = vst [vmem:[%s7978 + $0x80] sm:$0xff] %v7938
        %7996 = vst.msk [vmem:[%s7978 + $0x88] sm:$0xff] %vm1744, %v7939
        %7997 = vst [vmem:[%s7978 + $0x90] sm:$0xff] %v7940
        %7998 = vst.msk [vmem:[%s7978 + $0x98] sm:$0xff] %vm1744, %v7941
        %7999 = vst [vmem:[%s7978 + $0xa0] sm:$0xff] %v7942
        %8000 = vst.msk [vmem:[%s7978 + $0xa8] sm:$0xff] %vm1744, %v7943
        %8001 = vst [vmem:[%s7978 + $0xb0] sm:$0xff] %v7944
        %8002 = vst.msk [vmem:[%s7978 + $0xb8] sm:$0xff] %vm1744, %v7945
        %8003 = vst [vmem:[%s7978 + $0xc0] sm:$0xff] %v7946
        %8004 = vst.msk [vmem:[%s7978 + $0xc8] sm:$0xff] %vm1744, %v7947
        %8005 = vst [vmem:[%s7978 + $0xd0] sm:$0xff] %v7948
        %8006 = vst.msk [vmem:[%s7978 + $0xd8] sm:$0xff] %vm1744, %v7949
        %8007 = vst [vmem:[%s7978 + $0xe0] sm:$0xff] %v7950
        %8008 = vst.msk [vmem:[%s7978 + $0xe8] sm:$0xff] %vm1744, %v7951
        %8009 = vst [vmem:[%s7978 + $0xf0] sm:$0xff] %v7952
        %8010 = vst.msk [vmem:[%s7978 + $0xf8] sm:$0xff] %vm1744, %v7953
        %8011 = vst [vmem:[%s7978 + $0x100] sm:$0xff] %v7954
        %8012 = vst.msk [vmem:[%s7978 + $0x108] sm:$0xff] %vm1744, %v7955
        %8013 = vst [vmem:[%s7978 + $0x110] sm:$0xff] %v7956
        %8014 = vst.msk [vmem:[%s7978 + $0x118] sm:$0xff] %vm1744, %v7957
        %8015 = vst [vmem:[%s7978 + $0x120] sm:$0xff] %v7958
        %8016 = vst.msk [vmem:[%s7978 + $0x128] sm:$0xff] %vm1744, %v7959
        %8017 = vst [vmem:[%s7978 + $0x130] sm:$0xff] %v7960
        %8018 = vst.msk [vmem:[%s7978 + $0x138] sm:$0xff] %vm1744, %v7961
        %8019 = vst [vmem:[%s7978 + $0x140] sm:$0xff] %v7962
        %8020 = vst.msk [vmem:[%s7978 + $0x148] sm:$0xff] %vm1744, %v7963
        %8021 = vst [vmem:[%s7978 + $0x150] sm:$0xff] %v7964
        %8022 = vst.msk [vmem:[%s7978 + $0x158] sm:$0xff] %vm1744, %v7965
        %8023 = vst [vmem:[%s7978 + $0x160] sm:$0xff] %v7966
        %8024 = vst.msk [vmem:[%s7978 + $0x168] sm:$0xff] %vm1744, %v7967
        %8025 = vst [vmem:[%s7978 + $0x170] sm:$0xff] %v7968
        %8026 = vst.msk [vmem:[%s7978 + $0x178] sm:$0xff] %vm1744, %v7969
        %8027 = vst [vmem:[%s7978 + $0x180] sm:$0xff] %v7970
        %8028 = vst.msk [vmem:[%s7978 + $0x188] sm:$0xff] %vm1744, %v7971
        %8029 = vst [vmem:[%s7978 + $0x190] sm:$0xff] %v7972
        %8030 = vst.msk [vmem:[%s7978 + $0x198] sm:$0xff] %vm1744, %v7973
        %8031 = vst [vmem:[%s7978 + $0x1a0] sm:$0xff] %v7974
        %8032 = vst.msk [vmem:[%s7978 + $0x1a8] sm:$0xff] %vm1744, %v7975
        %8033 = vst [vmem:[%s7978 + $0x1b0] sm:$0xff] %v7976
        %8034 = vst.msk [vmem:[%s7978 + $0x1b8] sm:$0xff] %vm1744, %v7977
        %s8035 = sand.u32 %s97, 1
        %s8036 = scalar_lea.sflag [#allocation5], %s8035
        %s8037 = sand.u32 %s97, 1
        %s8038 = smul.addr %s8037, 2688
        %s8039 = scalar_lea.vmem [#allocation8], %s8038
        // Predicated region
        $region41: #{tpu_custom_call.1} parent=31 // pred_check
          %p8040 = pneg %p107
        $region42: #{tpu_custom_call.1} parent=31 // pred_check_branch
          %8042 = sbr.rel (%p8040) target = $region44
        $region43: #{tpu_custom_call.1} parent=31 // pred_region
          %s8043 = smul.u32 2, %s21
          %8045 = vsyncadd %s8036, 0
          %s8046 = smul.addr %s8043, 168
          %s8047 = smul.addr %s8046, 8
          %s8048 = scalar_lea.hbm %s3, %s8047
          %s8049 = sshll.u32 %s8039, 4
          %s8050 = int_to_ptr.vmem [resolvable:$true] %s8049
          %s8051 = sshll.u32 %s8048, 4
          %s8052 = int_to_ptr.hbm [resolvable:$true] %s8051
          %8057 = dma.vmem_to_hbm [thread:$0]  %s8050, 43008, %s8052, %s8036, 256, 256, 16
        $region44: #{tpu_custom_call.1} parent=31 // pred_fallthru
          _
      $region32: #{tpu_custom_call.1} parent=5 // pred_fallthru
        _
      %p8058 = scmp.le.s32.totalorder 2, %s16
      // Predicated region
      $region45: #{tpu_custom_call.1} parent=5 // pred_check
        %p8059 = pneg %p8058
      $region46: #{tpu_custom_call.1} parent=5 // pred_check_branch
        %8061 = sbr.rel (%p8059) target = $region48
      $region47: #{tpu_custom_call.1} parent=5 // pred_region
        %s8062 = ssub.s32 %s16, 2
        // Predicated region
        $region49: #{tpu_custom_call.1} parent=47 // pred_check
          %p8063 = pneg %p113
        $region50: #{tpu_custom_call.1} parent=47 // pred_check_branch
          %8065 = sbr.rel (%p8063) target = $region52
        $region51: #{tpu_custom_call.1} parent=47 // pred_region
          %s8066 = sand.u32 %s98, 1
          %s8067 = scalar_lea.sflag [#allocation5], %s8066
          %s8068 = sand.u32 %s98, 1
          %s8069 = smul.addr %s8068, 2688
          %s8070 = scalar_lea.vmem [#allocation8], %s8069
          %8072 = dma.done %s8067, 43008
        $region52: #{tpu_custom_call.1} parent=47 // pred_fallthru
          _
      $region48: #{tpu_custom_call.1} parent=5 // pred_fallthru
        _
    $region6: #{tpu_custom_call.1} parent=1 // loop_footer
      %s20 = sadd.s32 1, %s16
    $region7: #{tpu_custom_call.1} parent=1 // loop_footer_branch
      %15 = sbr.rel target = $region3
    $region8: #{tpu_custom_call.1} parent=1 // loop_exit
      _
    %8073 = vsyncpa [#allocation4], 1
    %s8074 = scalar_lea.sflag [#allocation4], 1
    %8075 = vsyncpa %s8074, 1
    %8076 = vsyncpa [#allocation7], 1
    %8077 = vsyncpa [#allocation5], 1
    %s8078 = scalar_lea.sflag [#allocation5], 1
    %8079 = vsyncpa %s8078, 1

</llo_original>
